<compile_context>
chip_gen: v6e
topology: v6e:2x2x1
jax: 0.10.0
libtpu: 0.0.40
codegen_flags: <defaults>
</compile_context>

<pallas_src>
import jax
import jax.numpy as jnp
from jax.experimental import pallas as pl
from jax.experimental.pallas import tpu as pltpu

EPS = 1e-10


# ---------------------------------------------------------------------------
# Pallas kernel: a full ConvGRU cell *sequence* (all T steps, fused).
#   update = sigmoid(conv3x3([x, h]))
#   reset  = sigmoid(conv3x3([x, h]))
#   out    = tanh   (conv3x3([x, h * reset]))
#   h_new  = h * (1 - update) + out * update
# The 3x3 "same" conv is a band matmul: y-shifts / y-boundary zeros (and the
# folded x-rows for grouped layouts) live in the block-banded weights; the
# three x(-group) shifts are stacked along K.
# ---------------------------------------------------------------------------
def _convgru_seq_kernel(x_ref, h0_ref, wx_ref, wh_ref, wo_ref, b_ref,
                        out_ref, h_scr, hpad_scr):
    t = pl.program_id(0)
    M, LH = h_scr.shape                    # M = B * X / G rows, LH = G*Y*Ch lanes
    Bb, NGp, _ = hpad_scr.shape            # row-padded (along x-groups) hidden
    NG = NGp - 2
    bf16, f32 = jnp.bfloat16, jnp.float32

    @pl.when(t == 0)
    def _():
        h_scr[...] = h0_ref[...]           # initial hidden state
        hpad_scr[...] = jnp.zeros_like(hpad_scr)   # zero pad borders once

    def h_slab3():
        # three x-group-shifted views of the padded hidden, stacked along K
        # (all slices land on full 128-lane tiles); single bf16 cast.
        return jnp.concatenate(
            [hpad_scr[:, dg:dg + NG, :].reshape(M, LH) for dg in (0, 1, 2)],
            axis=-1).astype(bf16)

    # input path: all three gates in one K = 3*Lx matmul (x slab pre-built,
    # pre-shifted and pre-cast to bf16 in the wrapper).
    gx = jnp.dot(x_ref[...], wx_ref[...],
                 preferred_element_type=f32) + b_ref[...]

    h = h_scr[...]                                           # (M, LH) f32
    hpad_scr[:, 1:NG + 1, :] = h.reshape(Bb, NG, LH)
    gh = jnp.dot(h_slab3(), wh_ref[...], preferred_element_type=f32)

    update = jax.nn.sigmoid(gx[:, 0:LH] + gh[:, 0:LH])
    reset = jax.nn.sigmoid(gx[:, LH:2 * LH] + gh[:, LH:2 * LH])

    # out gate convolves (h * reset): reuse the padded scratch interior.
    hpad_scr[:, 1:NG + 1, :] = (h * reset).reshape(Bb, NG, LH)
    go = jnp.dot(h_slab3(), wo_ref[...], preferred_element_type=f32)
    out_gate = jnp.tanh(gx[:, 2 * LH:3 * LH] + go)

    h_new = h * (1.0 - update) + out_gate * update
    h_scr[...] = h_new                      # carry to next time step
    out_ref[...] = h_new                    # per-step hidden to HBM slab


def convgru_cell_seq(x_slab, h0, w, batch):
    """Run one ConvGRU cell over the whole sequence in a single pallas_call.

    x_slab : (T, M, 3*Lx) bf16 -- per-step input, already x-padded,
             3-shift-stacked along K and lane-flattened (built in wrapper).
    h0     : (M, Lh) f32 -- initial hidden, lane-dense grouped layout.
    w      : block-banded, gate-stacked bf16 weights + tiled f32 bias.
    Returns (T, M, Lh) f32: hidden state after every time step.
    """
    T, M, Kx = x_slab.shape
    Lh = h0.shape[-1]
    NG = M // batch
    wx, wh, wo, b = w['wx'], w['wh'], w['wo'], w['b']
    return pl.pallas_call(
        _convgru_seq_kernel,
        out_shape=jax.ShapeDtypeStruct((T, M, Lh), jnp.float32),
        grid=(T,),
        in_specs=[
            pl.BlockSpec((None, M, Kx), lambda t: (t, 0, 0)),
            # constant block index -> fetched once, stays resident in VMEM
            pl.BlockSpec((M, Lh), lambda t: (0, 0)),
            pl.BlockSpec(wx.shape, lambda t: (0, 0)),
            pl.BlockSpec(wh.shape, lambda t: (0, 0)),
            pl.BlockSpec(wo.shape, lambda t: (0, 0)),
            pl.BlockSpec(b.shape, lambda t: (0, 0)),
        ],
        out_specs=pl.BlockSpec((None, M, Lh), lambda t: (t, 0, 0)),
        scratch_shapes=[
            pltpu.VMEM((M, Lh), jnp.float32),          # running hidden state
            pltpu.VMEM((batch, NG + 2, Lh), jnp.float32),  # x-padded hidden
        ],
        compiler_params=pltpu.CompilerParams(
            dimension_semantics=("arbitrary",)),       # sequential recurrence
    )(x_slab, h0, wx, wh, wo, b)


# ---------------------------------------------------------------------------
# Wrapper-side weight packing: 3x3 conv taps -> block-banded, gate-stacked
# matmul weights with the 3 x(-group) shifts stacked along K (built once).
# ---------------------------------------------------------------------------
def _band_matrix(w_taps, Y, G):
    """w_taps: (3, 3, Cin, Cout) conv taps indexed [dx, dy].
    Activation layout: rows = (batch, x-group), lanes = (r, y, c) with r the
    x-row inside a group of G rows.  For each group shift dg in {0,1,2} a
    (G*Y*Cin, G*Y*Cout) block-banded matrix encodes the (x, y) taps reaching
    from source group g+dg-1 into output group g (zeros outside the band);
    the three dg blocks are stacked along K -> (3*G*Y*Cin, G*Y*Cout)."""
    _, _, cin, cout = w_taps.shape
    rp = jnp.arange(G)[:, None, None, None]     # source x-row in group
    jp = jnp.arange(Y)[None, :, None, None]     # source y
    r = jnp.arange(G)[None, None, :, None]      # output x-row in group
    j = jnp.arange(Y)[None, None, None, :]      # output y
    dy = jp - j + 1
    mats = []
    for dg in range(3):
        dx = rp + G * (dg - 1) - r + 1
        valid = ((dx >= 0) & (dx <= 2) & (dy >= 0) & (dy <= 2))
        blocks = w_taps[jnp.clip(dx, 0, 2), jnp.clip(dy, 0, 2)]
        blocks = blocks * valid[..., None, None].astype(w_taps.dtype)
        # blocks: (G, Y, G, Y, Cin, Cout) indexed [rp, jp, r, j, c, o]
        mats.append(jnp.transpose(blocks, (0, 1, 4, 2, 3, 5))
                    .reshape(G * Y * cin, G * Y * cout))
    # TODO(synk): the band is mostly structural zeros; Y/group tiling is
    # required before scaling resolution (weights grow O(Y^2)).
    return jnp.concatenate(mats, axis=0)


def pack_cell_weights(raw, Y, G):
    """Pack per-gate 3x3 conv taps into block-banded, gate-stacked bf16
    matmul weights ([update | reset | out] along N, 3 shifts along K) and a
    tiled f32 bias."""
    wx = jnp.concatenate([_band_matrix(raw['wux'], Y, G),
                          _band_matrix(raw['wrx'], Y, G),
                          _band_matrix(raw['wox'], Y, G)], axis=-1)
    wh = jnp.concatenate([_band_matrix(raw['wuh'], Y, G),
                          _band_matrix(raw['wrh'], Y, G)], axis=-1)
    wo = _band_matrix(raw['woh'], Y, G)
    b = jnp.concatenate([jnp.tile(raw['bu'], G * Y),
                         jnp.tile(raw['br'], G * Y),
                         jnp.tile(raw['bo'], G * Y)])[None, :]
    return {'wx': wx.astype(jnp.bfloat16), 'wh': wh.astype(jnp.bfloat16),
            'wo': wo.astype(jnp.bfloat16), 'b': b.astype(jnp.float32)}


def init_cell_weights(key, cin, ch, scale=0.1):
    # TODO(synk): GRUGate_KSpace / GRUGate_ISpace are undefined in the source;
    # realised as a single 3x3 conv (+bias) per gate, the canonical ConvGRU gate.
    ks = jax.random.split(key, 9)
    w = lambda k, ci: scale * jax.random.normal(k, (3, 3, ci, ch), jnp.float32)
    b = lambda k: scale * jax.random.normal(k, (ch,), jnp.float32)
    return {'wux': w(ks[0], cin), 'wrx': w(ks[1], cin), 'wox': w(ks[2], cin),
            'wuh': w(ks[3], ch), 'wrh': w(ks[4], ch), 'woh': w(ks[5], ch),
            'bu': b(ks[6]), 'br': b(ks[7]), 'bo': b(ks[8])}


def _ispace_group(X, Y, ch=2):
    """x-rows folded into the lane axis so the i-space hidden lane width
    reaches >=128 (lane-dense stores / aligned gate slices)."""
    g = max(1, 128 // (Y * ch))
    g = min(g, X)
    while X % g != 0:
        g -= 1
    return g


def init_mdcnngru_weights(key, num_coils, X, Y):
    # MDCNNGRU1: hidden_chans = [num_coils, 1], hidden_reals = [False, False]
    # complex dims folded into channels -> kspace Ch = 2*C, ispace Ch = 2.
    kk, ki = jax.random.split(key, 2)
    raw_k = init_cell_weights(kk, cin=2 * num_coils, ch=2 * num_coils)
    raw_i = init_cell_weights(ki, cin=2 * num_coils, ch=2)
    gi = _ispace_group(X, Y)
    return {'kspace': pack_cell_weights(raw_k, Y, 1),
            'ispace': pack_cell_weights(raw_i, Y, gi)}


# ---------------------------------------------------------------------------
# Hoisted input prep: pad along x-groups, stack the 3 shifts along the lane
# (K) axis, cast once to bf16.  Built once per sequence, outside any loop.
# ---------------------------------------------------------------------------
def _shift3_slab(x_gl):
    """x_gl: (T, B, NG, L) f32 -> (T, B*NG, 3*L) bf16."""
    T, B, NG, L = x_gl.shape
    xp = jnp.pad(x_gl, ((0, 0), (0, 0), (1, 1), (0, 0)))
    slab = jnp.stack([xp[:, :, dg:dg + NG, :] for dg in range(3)], axis=3)
    return slab.reshape(T, B * NG, 3 * L).astype(jnp.bfloat16)


# ---------------------------------------------------------------------------
# Full forward pass (MDCNNGRU1).
# ---------------------------------------------------------------------------
def mdcnn_gru_forward(x, target_batch, target_ft_batch, weights, hidden=None):
    """
    x:               (B, T, C, X, Y, 2)   k-space input (complex as last dim)
    target_batch:    (B, T, X, Y)
    target_ft_batch: (B, T, X, Y)
    hidden (opt.):   [ (B, C, X, Y, 2), (B, 1, X, Y, 2) ]  (PyTorch layout)
    """
    B, T, C, X, Y, _ = x.shape
    Gi = _ispace_group(X, Y)
    NGi = X // Gi

    # --- hoisted layout work: channels-last, lane-flattened, 3-shift, bf16 ---
    x_cl = jnp.transpose(x, (1, 0, 3, 4, 2, 5)).reshape(T, B, X, Y * 2 * C)
    xk_slab = _shift3_slab(x_cl)                      # (T, B*X, 3*Y*2C)

    if hidden is None:
        h0 = jnp.zeros((B * X, Y * 2 * C), jnp.float32)       # k-space hidden
        h1 = jnp.zeros((B * NGi, Gi * Y * 2), jnp.float32)    # i-space hidden
    else:
        h0 = jnp.transpose(hidden[0], (0, 2, 3, 1, 4)).reshape(B * X, Y * 2 * C)
        h1 = hidden[1].reshape(B, X, Y, 2).reshape(B * NGi, Gi * Y * 2)

    wk, wi = weights['kspace'], weights['ispace']

    # --- k-space ConvGRU cell: all T steps in one fused Pallas kernel ---
    hk_seq = convgru_cell_seq(xk_slab, h0, wk, B)     # (T, B*X, Y*2C)

    # --- IFFT module: per-coil 2D inverse FFT, batched over T ---
    k = hk_seq.reshape(T, B, X, Y, C, 2)
    kc = k[..., 0] + 1j * k[..., 1]                   # (T, B, X, Y, C)
    img = jnp.fft.ifft2(kc, axes=(2, 3))
    ii = jnp.stack([jnp.real(img), jnp.imag(img)], axis=-1)   # (T,B,X,Y,C,2)
    ii = ii.reshape(T, B, NGi, Gi * Y * 2 * C)
    xi_slab = _shift3_slab(ii)                        # (T, B*NGi, 3*Gi*Y*2C)

    # --- image-space ConvGRU cell: all T steps in one fused Pallas kernel ---
    hi_seq = convgru_cell_seq(xi_slab, h1, wi, B)     # (T, B*NGi, Gi*Y*2)

    # --- IUnet is identity (MDCNNGRU1); magnitude over the complex dim ---
    hi = hi_seq.reshape(T, B, X, Y, 2)
    outp = jnp.sqrt(jnp.sum(hi ** 2, axis=-1))        # (T, B, X, Y)

    tgt = jnp.moveaxis(target_batch, 1, 0)            # (T, B, X, Y)
    tgtft = jnp.moveaxis(target_ft_batch, 1, 0)       # (T, B, X, Y)

    # TODO(synk): fetch_loss_function is undefined in the source; simple
    # L2 / L1 / log-FFT-L1 stand-ins, all batched over T (FFTs hoisted).
    loss_recons = jnp.mean((outp - tgt) ** 2, axis=(1, 2, 3))
    loss_fts = jnp.mean(jnp.abs(jnp.abs(jnp.fft.fft2(outp)) - tgtft),
                        axis=(1, 2, 3))
    predfft = jnp.log(jnp.fft.fft2(EPS + outp) + EPS)
    targetfft = jnp.log(jnp.fft.fft2(EPS + tgt) + EPS)
    diff = (jnp.stack([predfft.real, predfft.imag], -1)
            - jnp.stack([targetfft.real, targetfft.imag], -1))
    loss_reconfts = jnp.mean(jnp.abs(diff), axis=(1, 2, 3, 4))
    score_l1s = jnp.mean(jnp.abs(outp - tgt), axis=(1, 2, 3))
    score_l2s = loss_recons

    ans = jnp.transpose(outp, (1, 0, 2, 3))           # (B, T, X, Y)

    # TODO(synk): SSIM metric has no dependency-free equivalent here; zeros.
    score_ssims = jnp.zeros((T,), jnp.float32)

    # hiddens converted back to the PyTorch (B, C, X, Y, 2) layout
    hid0 = jnp.transpose(hk_seq[-1].reshape(B, X, Y, C, 2), (0, 3, 1, 2, 4))
    hid1 = hi_seq[-1].reshape(B, X, Y, 2)[:, None]    # (B, 1, X, Y, 2)

    return (ans, [hid0, hid1], loss_recons, loss_fts, loss_reconfts,
            score_ssims, score_l1s, score_l2s)


# ---------------------------------------------------------------------------
if __name__ == "__main__":
    key = jax.random.PRNGKey(0)
    B, T, C, X, Y = 2, 4, 4, 16, 16   # batch, video length, coils, resolution

    k_x, k_t, k_ft, k_w = jax.random.split(key, 4)
    x = jax.random.normal(k_x, (B, T, C, X, Y, 2), jnp.float32)
    target_batch = jax.random.normal(k_t, (B, T, X, Y), jnp.float32)
    target_ft_batch = jnp.abs(jax.random.normal(k_ft, (B, T, X, Y), jnp.float32))

    weights = init_mdcnngru_weights(k_w, num_coils=C, X=X, Y=Y)

    fwd = jax.jit(mdcnn_gru_forward)
    result = fwd(x, target_batch, target_ft_batch, weights)
    result = jax.tree_util.tree_map(jax.block_until_ready, result)

    ans = result[0]
    assert ans.shape == (B, T, X, Y)
    assert result[1][0].shape == (B, C, X, Y, 2)
    assert result[1][1].shape == (B, 1, X, Y, 2)
    assert all(r.shape == (T,) for r in result[2:])
    print("KERNEL_OK")
</pallas_src>

<mosaic_0001>
module attributes {stable_mosaic.version = 11 : i64} {
  func.func @_convgru_seq_kernel(%arg0: i32, %arg1: memref<1x32x384xbf16, #tpu.memory_space<vmem>>, %arg2: memref<32x128xf32, #tpu.memory_space<vmem>>, %arg3: memref<384x384xbf16, #tpu.memory_space<vmem>>, %arg4: memref<384x256xbf16, #tpu.memory_space<vmem>>, %arg5: memref<384x128xbf16, #tpu.memory_space<vmem>>, %arg6: memref<1x384xf32, #tpu.memory_space<vmem>>, %arg7: memref<1x32x128xf32, #tpu.memory_space<vmem>>, %arg8: memref<32x128xf32, #tpu.memory_space<vmem>>, %arg9: memref<2x18x128xf32, #tpu.memory_space<vmem>>) attributes {dimension_semantics = [#tpu.dimension_semantics<arbitrary>], iteration_bounds = array<i64: 4>, scalar_prefetch = 0 : i64, scratch_operands = 2 : i64, tpu.core_type = #tpu.core_type<tc>, window_params = [{transform_indices = @transform_0, window_bounds = array<i64: 1, 32, 384>}, {pipeline_mode = #tpu.pipeline_mode<synchronous>, transform_indices = @transform_1, window_bounds = array<i64: 32, 128>}, {pipeline_mode = #tpu.pipeline_mode<synchronous>, transform_indices = @transform_2, window_bounds = array<i64: 384, 384>}, {pipeline_mode = #tpu.pipeline_mode<synchronous>, transform_indices = @transform_3, window_bounds = array<i64: 384, 256>}, {pipeline_mode = #tpu.pipeline_mode<synchronous>, transform_indices = @transform_4, window_bounds = array<i64: 384, 128>}, {pipeline_mode = #tpu.pipeline_mode<synchronous>, transform_indices = @transform_5, window_bounds = array<i64: 1, 384>}, {transform_indices = @transform_6, window_bounds = array<i64: 1, 32, 128>}]} {
    %c0_i32 = arith.constant 0 : i32
    %0 = arith.cmpi eq, %arg0, %c0_i32 : i32
    %1 = arith.extui %0 : i1 to i32
    %c0_i32_0 = arith.constant 0 : i32
    %2 = arith.cmpi ne, %1, %c0_i32_0 : i32
    scf.if %2 {
      %c0_45 = arith.constant 0 : index
      %c0_46 = arith.constant 0 : index
      %64 = vector.load %arg2[%c0_45, %c0_46] : memref<32x128xf32, #tpu.memory_space<vmem>>, vector<32x128xf32>
      %c0_47 = arith.constant 0 : index
      %c0_48 = arith.constant 0 : index
      %65 = vector.load %arg8[%c0_47, %c0_48] : memref<32x128xf32, #tpu.memory_space<vmem>>, vector<32x128xf32>
      tpu.vector_store %arg8[%c0_47, %c0_48], %64 {strides = array<i32>} : memref<32x128xf32, #tpu.memory_space<vmem>>, vector<32x128xf32>,
      %cst_49 = arith.constant 0.000000e+00 : f32
      %66 = vector.broadcast %cst_49 : f32 to vector<2x18x128xf32>
      %c0_50 = arith.constant 0 : index
      %c0_51 = arith.constant 0 : index
      %c0_52 = arith.constant 0 : index
      %67 = vector.load %arg9[%c0_50, %c0_51, %c0_52] : memref<2x18x128xf32, #tpu.memory_space<vmem>>, vector<2x18x128xf32>
      tpu.vector_store %arg9[%c0_50, %c0_51, %c0_52], %66 {strides = array<i32>} : memref<2x18x128xf32, #tpu.memory_space<vmem>>, vector<2x18x128xf32>,
    } else {
    }
    %c0 = arith.constant 0 : index
    %c0_1 = arith.constant 0 : index
    %c0_2 = arith.constant 0 : index
    %3 = vector.load %arg1[%c0, %c0_1, %c0_2] : memref<1x32x384xbf16, #tpu.memory_space<vmem>>, vector<1x32x384xbf16>
    %4 = vector.shape_cast %3 : vector<1x32x384xbf16> to vector<32x384xbf16>
    %c0_3 = arith.constant 0 : index
    %c0_4 = arith.constant 0 : index
    %5 = vector.load %arg3[%c0_3, %c0_4] : memref<384x384xbf16, #tpu.memory_space<vmem>>, vector<384x384xbf16>
    %cst = arith.constant dense<0.000000e+00> : vector<32x384xf32>
    %6 = tpu.matmul %4, %5, %cst {dimension_numbers = #tpu.dot_dimension_numbers<[1], [0], [0], [1], [0, 0, 1, 1], [], []>} : vector<32x384xbf16>, vector<384x384xbf16>, vector<32x384xf32> -> vector<32x384xf32>
    %c0_5 = arith.constant 0 : index
    %c0_6 = arith.constant 0 : index
    %7 = vector.load %arg6[%c0_5, %c0_6] : memref<1x384xf32, #tpu.memory_space<vmem>>, vector<1x384xf32>
    %8 = vector.broadcast %7 : vector<1x384xf32> to vector<32x384xf32>
    %9 = arith.addf %6, %8 : vector<32x384xf32>
    %c0_7 = arith.constant 0 : index
    %c0_8 = arith.constant 0 : index
    %10 = vector.load %arg8[%c0_7, %c0_8] : memref<32x128xf32, #tpu.memory_space<vmem>>, vector<32x128xf32>
    %11 = vector.shape_cast %10 : vector<32x128xf32> to vector<2x16x128xf32>
    %c0_9 = arith.constant 0 : index
    %c1 = arith.constant 1 : index
    %c0_10 = arith.constant 0 : index
    %12 = vector.load %arg9[%c0_9, %c1, %c0_10] : memref<2x18x128xf32, #tpu.memory_space<vmem>>, vector<2x16x128xf32>
    tpu.vector_store %arg9[%c0_9, %c1, %c0_10], %11 {strides = array<i32>} : memref<2x18x128xf32, #tpu.memory_space<vmem>>, vector<2x16x128xf32>,
    %c0_11 = arith.constant 0 : index
    %c0_12 = arith.constant 0 : index
    %c0_13 = arith.constant 0 : index
    %13 = vector.load %arg9[%c0_11, %c0_12, %c0_13] : memref<2x18x128xf32, #tpu.memory_space<vmem>>, vector<2x16x128xf32>
    %14 = vector.shape_cast %13 : vector<2x16x128xf32> to vector<32x128xf32>
    %c0_14 = arith.constant 0 : index
    %c1_15 = arith.constant 1 : index
    %c0_16 = arith.constant 0 : index
    %15 = vector.load %arg9[%c0_14, %c1_15, %c0_16] : memref<2x18x128xf32, #tpu.memory_space<vmem>>, vector<2x16x128xf32>
    %16 = vector.shape_cast %15 : vector<2x16x128xf32> to vector<32x128xf32>
    %c0_17 = arith.constant 0 : index
    %c2 = arith.constant 2 : index
    %c0_18 = arith.constant 0 : index
    %17 = vector.load %arg9[%c0_17, %c2, %c0_18] : memref<2x18x128xf32, #tpu.memory_space<vmem>>, vector<2x16x128xf32>
    %18 = vector.shape_cast %17 : vector<2x16x128xf32> to vector<32x128xf32>
    %19 = tpu.concatenate %14, %16, %18 in 1 : vector<32x128xf32>, vector<32x128xf32>, vector<32x128xf32> -> vector<32x384xf32>
    %20 = arith.truncf %19 : vector<32x384xf32> to vector<32x384xbf16>
    %c0_19 = arith.constant 0 : index
    %c0_20 = arith.constant 0 : index
    %21 = vector.load %arg4[%c0_19, %c0_20] : memref<384x256xbf16, #tpu.memory_space<vmem>>, vector<384x256xbf16>
    %cst_21 = arith.constant dense<0.000000e+00> : vector<32x256xf32>
    %22 = tpu.matmul %20, %21, %cst_21 {dimension_numbers = #tpu.dot_dimension_numbers<[1], [0], [0], [1], [0, 0, 1, 1], [], []>} : vector<32x384xbf16>, vector<384x256xbf16>, vector<32x256xf32> -> vector<32x256xf32>
    %23 = vector.extract_strided_slice %9 {offsets = [0, 0], sizes = [32, 128], strides = [1, 1]} : vector<32x384xf32> to vector<32x128xf32>
    %24 = vector.extract_strided_slice %22 {offsets = [0, 0], sizes = [32, 128], strides = [1, 1]} : vector<32x256xf32> to vector<32x128xf32>
    %25 = arith.addf %23, %24 : vector<32x128xf32>
    %26 = arith.negf %25 : vector<32x128xf32>
    %27 = math.exp %26 : vector<32x128xf32>
    %cst_22 = arith.constant 1.000000e+00 : f32
    %28 = vector.broadcast %cst_22 : f32 to vector<32x128xf32>
    %29 = arith.addf %28, %27 : vector<32x128xf32>
    %30 = arith.divf %28, %29 : vector<32x128xf32>
    %31 = vector.extract_strided_slice %9 {offsets = [0, 128], sizes = [32, 128], strides = [1, 1]} : vector<32x384xf32> to vector<32x128xf32>
    %32 = vector.extract_strided_slice %22 {offsets = [0, 128], sizes = [32, 128], strides = [1, 1]} : vector<32x256xf32> to vector<32x128xf32>
    %33 = arith.addf %31, %32 : vector<32x128xf32>
    %34 = arith.negf %33 : vector<32x128xf32>
    %35 = math.exp %34 : vector<32x128xf32>
    %cst_23 = arith.constant 1.000000e+00 : f32
    %36 = vector.broadcast %cst_23 : f32 to vector<32x128xf32>
    %37 = arith.addf %36, %35 : vector<32x128xf32>
    %38 = arith.divf %36, %37 : vector<32x128xf32>
    %39 = arith.mulf %10, %38 : vector<32x128xf32>
    %40 = vector.shape_cast %39 : vector<32x128xf32> to vector<2x16x128xf32>
    %c0_24 = arith.constant 0 : index
    %c1_25 = arith.constant 1 : index
    %c0_26 = arith.constant 0 : index
    %41 = vector.load %arg9[%c0_24, %c1_25, %c0_26] : memref<2x18x128xf32, #tpu.memory_space<vmem>>, vector<2x16x128xf32>
    tpu.vector_store %arg9[%c0_24, %c1_25, %c0_26], %40 {strides = array<i32>} : memref<2x18x128xf32, #tpu.memory_space<vmem>>, vector<2x16x128xf32>,
    %c0_27 = arith.constant 0 : index
    %c0_28 = arith.constant 0 : index
    %c0_29 = arith.constant 0 : index
    %42 = vector.load %arg9[%c0_27, %c0_28, %c0_29] : memref<2x18x128xf32, #tpu.memory_space<vmem>>, vector<2x16x128xf32>
    %43 = vector.shape_cast %42 : vector<2x16x128xf32> to vector<32x128xf32>
    %c0_30 = arith.constant 0 : index
    %c1_31 = arith.constant 1 : index
    %c0_32 = arith.constant 0 : index
    %44 = vector.load %arg9[%c0_30, %c1_31, %c0_32] : memref<2x18x128xf32, #tpu.memory_space<vmem>>, vector<2x16x128xf32>
    %45 = vector.shape_cast %44 : vector<2x16x128xf32> to vector<32x128xf32>
    %c0_33 = arith.constant 0 : index
    %c2_34 = arith.constant 2 : index
    %c0_35 = arith.constant 0 : index
    %46 = vector.load %arg9[%c0_33, %c2_34, %c0_35] : memref<2x18x128xf32, #tpu.memory_space<vmem>>, vector<2x16x128xf32>
    %47 = vector.shape_cast %46 : vector<2x16x128xf32> to vector<32x128xf32>
    %48 = tpu.concatenate %43, %45, %47 in 1 : vector<32x128xf32>, vector<32x128xf32>, vector<32x128xf32> -> vector<32x384xf32>
    %49 = arith.truncf %48 : vector<32x384xf32> to vector<32x384xbf16>
    %c0_36 = arith.constant 0 : index
    %c0_37 = arith.constant 0 : index
    %50 = vector.load %arg5[%c0_36, %c0_37] : memref<384x128xbf16, #tpu.memory_space<vmem>>, vector<384x128xbf16>
    %cst_38 = arith.constant dense<0.000000e+00> : vector<32x128xf32>
    %51 = tpu.matmul %49, %50, %cst_38 {dimension_numbers = #tpu.dot_dimension_numbers<[1], [0], [0], [1], [0, 0, 1, 1], [], []>} : vector<32x384xbf16>, vector<384x128xbf16>, vector<32x128xf32> -> vector<32x128xf32>
    %52 = vector.extract_strided_slice %9 {offsets = [0, 256], sizes = [32, 128], strides = [1, 1]} : vector<32x384xf32> to vector<32x128xf32>
    %53 = arith.addf %52, %51 : vector<32x128xf32>
    %54 = math.tanh %53 : vector<32x128xf32>
    %cst_39 = arith.constant 1.000000e+00 : f32
    %55 = vector.broadcast %cst_39 : f32 to vector<32x128xf32>
    %56 = arith.subf %55, %30 : vector<32x128xf32>
    %57 = arith.mulf %10, %56 : vector<32x128xf32>
    %58 = arith.mulf %54, %30 : vector<32x128xf32>
    %59 = arith.addf %57, %58 : vector<32x128xf32>
    %c0_40 = arith.constant 0 : index
    %c0_41 = arith.constant 0 : index
    %60 = vector.load %arg8[%c0_40, %c0_41] : memref<32x128xf32, #tpu.memory_space<vmem>>, vector<32x128xf32>
    tpu.vector_store %arg8[%c0_40, %c0_41], %59 {strides = array<i32>} : memref<32x128xf32, #tpu.memory_space<vmem>>, vector<32x128xf32>,
    %c0_42 = arith.constant 0 : index
    %c0_43 = arith.constant 0 : index
    %c0_44 = arith.constant 0 : index
    %61 = vector.load %arg7[%c0_42, %c0_43, %c0_44] : memref<1x32x128xf32, #tpu.memory_space<vmem>>, vector<1x32x128xf32>
    %62 = vector.shape_cast %61 : vector<1x32x128xf32> to vector<32x128xf32>
    %63 = vector.shape_cast %59 : vector<32x128xf32> to vector<1x32x128xf32>
    tpu.vector_store %arg7[%c0_42, %c0_43, %c0_44], %63 {strides = array<i32>} : memref<1x32x128xf32, #tpu.memory_space<vmem>>, vector<1x32x128xf32>,
    return
  }
  func.func @transform_0(%arg0: i32) -> (i32, i32, i32) {
    %c0_i32 = arith.constant 0 : i32
    %c0_i32_0 = arith.constant 0 : i32
    %c0_i32_1 = arith.constant 0 : i32
    return %arg0, %c0_i32, %c0_i32_0 : i32, i32, i32
  }
  func.func @transform_1(%arg0: i32) -> (i32, i32) {
    %c0_i32 = arith.constant 0 : i32
    %c0_i32_0 = arith.constant 0 : i32
    %c0_i32_1 = arith.constant 0 : i32
    return %c0_i32, %c0_i32_0 : i32, i32
  }
  func.func @transform_2(%arg0: i32) -> (i32, i32) {
    %c0_i32 = arith.constant 0 : i32
    %c0_i32_0 = arith.constant 0 : i32
    %c0_i32_1 = arith.constant 0 : i32
    return %c0_i32, %c0_i32_0 : i32, i32
  }
  func.func @transform_3(%arg0: i32) -> (i32, i32) {
    %c0_i32 = arith.constant 0 : i32
    %c0_i32_0 = arith.constant 0 : i32
    %c0_i32_1 = arith.constant 0 : i32
    return %c0_i32, %c0_i32_0 : i32, i32
  }
  func.func @transform_4(%arg0: i32) -> (i32, i32) {
    %c0_i32 = arith.constant 0 : i32
    %c0_i32_0 = arith.constant 0 : i32
    %c0_i32_1 = arith.constant 0 : i32
    return %c0_i32, %c0_i32_0 : i32, i32
  }
  func.func @transform_5(%arg0: i32) -> (i32, i32) {
    %c0_i32 = arith.constant 0 : i32
    %c0_i32_0 = arith.constant 0 : i32
    %c0_i32_1 = arith.constant 0 : i32
    return %c0_i32, %c0_i32_0 : i32, i32
  }
  func.func @transform_6(%arg0: i32) -> (i32, i32, i32) {
    %c0_i32 = arith.constant 0 : i32
    %c0_i32_0 = arith.constant 0 : i32
    %c0_i32_1 = arith.constant 0 : i32
    return %arg0, %c0_i32, %c0_i32_0 : i32, i32, i32
  }
}

module attributes {stable_mosaic.version = 11 : i64} {
  func.func @_convgru_seq_kernel(%arg0: i32, %arg1: memref<1x8x1536xbf16, #tpu.memory_space<vmem>>, %arg2: memref<8x128xf32, #tpu.memory_space<vmem>>, %arg3: memref<1536x384xbf16, #tpu.memory_space<vmem>>, %arg4: memref<384x256xbf16, #tpu.memory_space<vmem>>, %arg5: memref<384x128xbf16, #tpu.memory_space<vmem>>, %arg6: memref<1x384xf32, #tpu.memory_space<vmem>>, %arg7: memref<1x8x128xf32, #tpu.memory_space<vmem>>, %arg8: memref<8x128xf32, #tpu.memory_space<vmem>>, %arg9: memref<2x6x128xf32, #tpu.memory_space<vmem>>) attributes {dimension_semantics = [#tpu.dimension_semantics<arbitrary>], iteration_bounds = array<i64: 4>, scalar_prefetch = 0 : i64, scratch_operands = 2 : i64, tpu.core_type = #tpu.core_type<tc>, window_params = [{transform_indices = @transform_0, window_bounds = array<i64: 1, 8, 1536>}, {pipeline_mode = #tpu.pipeline_mode<synchronous>, transform_indices = @transform_1, window_bounds = array<i64: 8, 128>}, {pipeline_mode = #tpu.pipeline_mode<synchronous>, transform_indices = @transform_2, window_bounds = array<i64: 1536, 384>}, {pipeline_mode = #tpu.pipeline_mode<synchronous>, transform_indices = @transform_3, window_bounds = array<i64: 384, 256>}, {pipeline_mode = #tpu.pipeline_mode<synchronous>, transform_indices = @transform_4, window_bounds = array<i64: 384, 128>}, {pipeline_mode = #tpu.pipeline_mode<synchronous>, transform_indices = @transform_5, window_bounds = array<i64: 1, 384>}, {transform_indices = @transform_6, window_bounds = array<i64: 1, 8, 128>}]} {
    %c0_i32 = arith.constant 0 : i32
    %0 = arith.cmpi eq, %arg0, %c0_i32 : i32
    %1 = arith.extui %0 : i1 to i32
    %c0_i32_0 = arith.constant 0 : i32
    %2 = arith.cmpi ne, %1, %c0_i32_0 : i32
    scf.if %2 {
      %c0_45 = arith.constant 0 : index
      %c0_46 = arith.constant 0 : index
      %64 = vector.load %arg2[%c0_45, %c0_46] : memref<8x128xf32, #tpu.memory_space<vmem>>, vector<8x128xf32>
      %c0_47 = arith.constant 0 : index
      %c0_48 = arith.constant 0 : index
      %65 = vector.load %arg8[%c0_47, %c0_48] : memref<8x128xf32, #tpu.memory_space<vmem>>, vector<8x128xf32>
      tpu.vector_store %arg8[%c0_47, %c0_48], %64 {strides = array<i32>} : memref<8x128xf32, #tpu.memory_space<vmem>>, vector<8x128xf32>,
      %cst_49 = arith.constant 0.000000e+00 : f32
      %66 = vector.broadcast %cst_49 : f32 to vector<2x6x128xf32>
      %c0_50 = arith.constant 0 : index
      %c0_51 = arith.constant 0 : index
      %c0_52 = arith.constant 0 : index
      %67 = vector.load %arg9[%c0_50, %c0_51, %c0_52] : memref<2x6x128xf32, #tpu.memory_space<vmem>>, vector<2x6x128xf32>
      tpu.vector_store %arg9[%c0_50, %c0_51, %c0_52], %66 {strides = array<i32>} : memref<2x6x128xf32, #tpu.memory_space<vmem>>, vector<2x6x128xf32>,
    } else {
    }
    %c0 = arith.constant 0 : index
    %c0_1 = arith.constant 0 : index
    %c0_2 = arith.constant 0 : index
    %3 = vector.load %arg1[%c0, %c0_1, %c0_2] : memref<1x8x1536xbf16, #tpu.memory_space<vmem>>, vector<1x8x1536xbf16>
    %4 = vector.shape_cast %3 : vector<1x8x1536xbf16> to vector<8x1536xbf16>
    %c0_3 = arith.constant 0 : index
    %c0_4 = arith.constant 0 : index
    %5 = vector.load %arg3[%c0_3, %c0_4] : memref<1536x384xbf16, #tpu.memory_space<vmem>>, vector<1536x384xbf16>
    %cst = arith.constant dense<0.000000e+00> : vector<8x384xf32>
    %6 = tpu.matmul %4, %5, %cst {dimension_numbers = #tpu.dot_dimension_numbers<[1], [0], [0], [1], [0, 0, 1, 1], [], []>} : vector<8x1536xbf16>, vector<1536x384xbf16>, vector<8x384xf32> -> vector<8x384xf32>
    %c0_5 = arith.constant 0 : index
    %c0_6 = arith.constant 0 : index
    %7 = vector.load %arg6[%c0_5, %c0_6] : memref<1x384xf32, #tpu.memory_space<vmem>>, vector<1x384xf32>
    %8 = vector.broadcast %7 : vector<1x384xf32> to vector<8x384xf32>
    %9 = arith.addf %6, %8 : vector<8x384xf32>
    %c0_7 = arith.constant 0 : index
    %c0_8 = arith.constant 0 : index
    %10 = vector.load %arg8[%c0_7, %c0_8] : memref<8x128xf32, #tpu.memory_space<vmem>>, vector<8x128xf32>
    %11 = vector.shape_cast %10 : vector<8x128xf32> to vector<2x4x128xf32>
    %c0_9 = arith.constant 0 : index
    %c1 = arith.constant 1 : index
    %c0_10 = arith.constant 0 : index
    %12 = vector.load %arg9[%c0_9, %c1, %c0_10] : memref<2x6x128xf32, #tpu.memory_space<vmem>>, vector<2x4x128xf32>
    tpu.vector_store %arg9[%c0_9, %c1, %c0_10], %11 {strides = array<i32>} : memref<2x6x128xf32, #tpu.memory_space<vmem>>, vector<2x4x128xf32>,
    %c0_11 = arith.constant 0 : index
    %c0_12 = arith.constant 0 : index
    %c0_13 = arith.constant 0 : index
    %13 = vector.load %arg9[%c0_11, %c0_12, %c0_13] : memref<2x6x128xf32, #tpu.memory_space<vmem>>, vector<2x4x128xf32>
    %14 = vector.shape_cast %13 : vector<2x4x128xf32> to vector<8x128xf32>
    %c0_14 = arith.constant 0 : index
    %c1_15 = arith.constant 1 : index
    %c0_16 = arith.constant 0 : index
    %15 = vector.load %arg9[%c0_14, %c1_15, %c0_16] : memref<2x6x128xf32, #tpu.memory_space<vmem>>, vector<2x4x128xf32>
    %16 = vector.shape_cast %15 : vector<2x4x128xf32> to vector<8x128xf32>
    %c0_17 = arith.constant 0 : index
    %c2 = arith.constant 2 : index
    %c0_18 = arith.constant 0 : index
    %17 = vector.load %arg9[%c0_17, %c2, %c0_18] : memref<2x6x128xf32, #tpu.memory_space<vmem>>, vector<2x4x128xf32>
    %18 = vector.shape_cast %17 : vector<2x4x128xf32> to vector<8x128xf32>
    %19 = tpu.concatenate %14, %16, %18 in 1 : vector<8x128xf32>, vector<8x128xf32>, vector<8x128xf32> -> vector<8x384xf32>
    %20 = arith.truncf %19 : vector<8x384xf32> to vector<8x384xbf16>
    %c0_19 = arith.constant 0 : index
    %c0_20 = arith.constant 0 : index
    %21 = vector.load %arg4[%c0_19, %c0_20] : memref<384x256xbf16, #tpu.memory_space<vmem>>, vector<384x256xbf16>
    %cst_21 = arith.constant dense<0.000000e+00> : vector<8x256xf32>
    %22 = tpu.matmul %20, %21, %cst_21 {dimension_numbers = #tpu.dot_dimension_numbers<[1], [0], [0], [1], [0, 0, 1, 1], [], []>} : vector<8x384xbf16>, vector<384x256xbf16>, vector<8x256xf32> -> vector<8x256xf32>
    %23 = vector.extract_strided_slice %9 {offsets = [0, 0], sizes = [8, 128], strides = [1, 1]} : vector<8x384xf32> to vector<8x128xf32>
    %24 = vector.extract_strided_slice %22 {offsets = [0, 0], sizes = [8, 128], strides = [1, 1]} : vector<8x256xf32> to vector<8x128xf32>
    %25 = arith.addf %23, %24 : vector<8x128xf32>
    %26 = arith.negf %25 : vector<8x128xf32>
    %27 = math.exp %26 : vector<8x128xf32>
    %cst_22 = arith.constant 1.000000e+00 : f32
    %28 = vector.broadcast %cst_22 : f32 to vector<8x128xf32>
    %29 = arith.addf %28, %27 : vector<8x128xf32>
    %30 = arith.divf %28, %29 : vector<8x128xf32>
    %31 = vector.extract_strided_slice %9 {offsets = [0, 128], sizes = [8, 128], strides = [1, 1]} : vector<8x384xf32> to vector<8x128xf32>
    %32 = vector.extract_strided_slice %22 {offsets = [0, 128], sizes = [8, 128], strides = [1, 1]} : vector<8x256xf32> to vector<8x128xf32>
    %33 = arith.addf %31, %32 : vector<8x128xf32>
    %34 = arith.negf %33 : vector<8x128xf32>
    %35 = math.exp %34 : vector<8x128xf32>
    %cst_23 = arith.constant 1.000000e+00 : f32
    %36 = vector.broadcast %cst_23 : f32 to vector<8x128xf32>
    %37 = arith.addf %36, %35 : vector<8x128xf32>
    %38 = arith.divf %36, %37 : vector<8x128xf32>
    %39 = arith.mulf %10, %38 : vector<8x128xf32>
    %40 = vector.shape_cast %39 : vector<8x128xf32> to vector<2x4x128xf32>
    %c0_24 = arith.constant 0 : index
    %c1_25 = arith.constant 1 : index
    %c0_26 = arith.constant 0 : index
    %41 = vector.load %arg9[%c0_24, %c1_25, %c0_26] : memref<2x6x128xf32, #tpu.memory_space<vmem>>, vector<2x4x128xf32>
    tpu.vector_store %arg9[%c0_24, %c1_25, %c0_26], %40 {strides = array<i32>} : memref<2x6x128xf32, #tpu.memory_space<vmem>>, vector<2x4x128xf32>,
    %c0_27 = arith.constant 0 : index
    %c0_28 = arith.constant 0 : index
    %c0_29 = arith.constant 0 : index
    %42 = vector.load %arg9[%c0_27, %c0_28, %c0_29] : memref<2x6x128xf32, #tpu.memory_space<vmem>>, vector<2x4x128xf32>
    %43 = vector.shape_cast %42 : vector<2x4x128xf32> to vector<8x128xf32>
    %c0_30 = arith.constant 0 : index
    %c1_31 = arith.constant 1 : index
    %c0_32 = arith.constant 0 : index
    %44 = vector.load %arg9[%c0_30, %c1_31, %c0_32] : memref<2x6x128xf32, #tpu.memory_space<vmem>>, vector<2x4x128xf32>
    %45 = vector.shape_cast %44 : vector<2x4x128xf32> to vector<8x128xf32>
    %c0_33 = arith.constant 0 : index
    %c2_34 = arith.constant 2 : index
    %c0_35 = arith.constant 0 : index
    %46 = vector.load %arg9[%c0_33, %c2_34, %c0_35] : memref<2x6x128xf32, #tpu.memory_space<vmem>>, vector<2x4x128xf32>
    %47 = vector.shape_cast %46 : vector<2x4x128xf32> to vector<8x128xf32>
    %48 = tpu.concatenate %43, %45, %47 in 1 : vector<8x128xf32>, vector<8x128xf32>, vector<8x128xf32> -> vector<8x384xf32>
    %49 = arith.truncf %48 : vector<8x384xf32> to vector<8x384xbf16>
    %c0_36 = arith.constant 0 : index
    %c0_37 = arith.constant 0 : index
    %50 = vector.load %arg5[%c0_36, %c0_37] : memref<384x128xbf16, #tpu.memory_space<vmem>>, vector<384x128xbf16>
    %cst_38 = arith.constant dense<0.000000e+00> : vector<8x128xf32>
    %51 = tpu.matmul %49, %50, %cst_38 {dimension_numbers = #tpu.dot_dimension_numbers<[1], [0], [0], [1], [0, 0, 1, 1], [], []>} : vector<8x384xbf16>, vector<384x128xbf16>, vector<8x128xf32> -> vector<8x128xf32>
    %52 = vector.extract_strided_slice %9 {offsets = [0, 256], sizes = [8, 128], strides = [1, 1]} : vector<8x384xf32> to vector<8x128xf32>
    %53 = arith.addf %52, %51 : vector<8x128xf32>
    %54 = math.tanh %53 : vector<8x128xf32>
    %cst_39 = arith.constant 1.000000e+00 : f32
    %55 = vector.broadcast %cst_39 : f32 to vector<8x128xf32>
    %56 = arith.subf %55, %30 : vector<8x128xf32>
    %57 = arith.mulf %10, %56 : vector<8x128xf32>
    %58 = arith.mulf %54, %30 : vector<8x128xf32>
    %59 = arith.addf %57, %58 : vector<8x128xf32>
    %c0_40 = arith.constant 0 : index
    %c0_41 = arith.constant 0 : index
    %60 = vector.load %arg8[%c0_40, %c0_41] : memref<8x128xf32, #tpu.memory_space<vmem>>, vector<8x128xf32>
    tpu.vector_store %arg8[%c0_40, %c0_41], %59 {strides = array<i32>} : memref<8x128xf32, #tpu.memory_space<vmem>>, vector<8x128xf32>,
    %c0_42 = arith.constant 0 : index
    %c0_43 = arith.constant 0 : index
    %c0_44 = arith.constant 0 : index
    %61 = vector.load %arg7[%c0_42, %c0_43, %c0_44] : memref<1x8x128xf32, #tpu.memory_space<vmem>>, vector<1x8x128xf32>
    %62 = vector.shape_cast %61 : vector<1x8x128xf32> to vector<8x128xf32>
    %63 = vector.shape_cast %59 : vector<8x128xf32> to vector<1x8x128xf32>
    tpu.vector_store %arg7[%c0_42, %c0_43, %c0_44], %63 {strides = array<i32>} : memref<1x8x128xf32, #tpu.memory_space<vmem>>, vector<1x8x128xf32>,
    return
  }
  func.func @transform_0(%arg0: i32) -> (i32, i32, i32) {
    %c0_i32 = arith.constant 0 : i32
    %c0_i32_0 = arith.constant 0 : i32
    %c0_i32_1 = arith.constant 0 : i32
    return %arg0, %c0_i32, %c0_i32_0 : i32, i32, i32
  }
  func.func @transform_1(%arg0: i32) -> (i32, i32) {
    %c0_i32 = arith.constant 0 : i32
    %c0_i32_0 = arith.constant 0 : i32
    %c0_i32_1 = arith.constant 0 : i32
    return %c0_i32, %c0_i32_0 : i32, i32
  }
  func.func @transform_2(%arg0: i32) -> (i32, i32) {
    %c0_i32 = arith.constant 0 : i32
    %c0_i32_0 = arith.constant 0 : i32
    %c0_i32_1 = arith.constant 0 : i32
    return %c0_i32, %c0_i32_0 : i32, i32
  }
  func.func @transform_3(%arg0: i32) -> (i32, i32) {
    %c0_i32 = arith.constant 0 : i32
    %c0_i32_0 = arith.constant 0 : i32
    %c0_i32_1 = arith.constant 0 : i32
    return %c0_i32, %c0_i32_0 : i32, i32
  }
  func.func @transform_4(%arg0: i32) -> (i32, i32) {
    %c0_i32 = arith.constant 0 : i32
    %c0_i32_0 = arith.constant 0 : i32
    %c0_i32_1 = arith.constant 0 : i32
    return %c0_i32, %c0_i32_0 : i32, i32
  }
  func.func @transform_5(%arg0: i32) -> (i32, i32) {
    %c0_i32 = arith.constant 0 : i32
    %c0_i32_0 = arith.constant 0 : i32
    %c0_i32_1 = arith.constant 0 : i32
    return %c0_i32, %c0_i32_0 : i32, i32
  }
  func.func @transform_6(%arg0: i32) -> (i32, i32, i32) {
    %c0_i32 = arith.constant 0 : i32
    %c0_i32_0 = arith.constant 0 : i32
    %c0_i32_1 = arith.constant 0 : i32
    return %arg0, %c0_i32, %c0_i32_0 : i32, i32, i32
  }
}

</mosaic_0001>

<llo_original>
// kernel: mdcnn_gru_forward.2
$region0: #{mdcnn_gru_forward.2}
  #allocation0 [shape = 'u32[]', space=smem, size = 0x4, offset = 0x4, fixed_abs, tag = 'smem constant byte address 0x4 - core index']
  #allocation1 [shape = 'u32[144,128]{1,0:T(1,128)}', space=vmem, size = 0x12000, scoped, tag = 'internal scratch']
  #allocation2 [shape = 'f32[32,128]{1,0:T(8,128)}', space=vmem, size = 0x4000, scoped, tag = 'scratch operand']
  #allocation3 [shape = 'f32[2,18,128]{2,1,0:T(8,128)}', space=vmem, size = 0x6000, scoped, tag = 'scratch operand']
  %s0 = inlined_call_operand.vmem [shape: bf16[4,32,384], index: 0, kind: input, shape index: {}]
  %s1 = inlined_call_operand.vmem [shape: f32[32,128], index: 1, kind: input, shape index: {}]
  %s2 = inlined_call_operand.vmem [shape: bf16[384,384], index: 2, kind: input, shape index: {}]
  %s3 = inlined_call_operand.vmem [shape: bf16[384,256], index: 3, kind: input, shape index: {}]
  %s4 = inlined_call_operand.vmem [shape: bf16[384,128], index: 4, kind: input, shape index: {}]
  %s5 = inlined_call_operand.vmem [shape: f32[1,384], index: 5, kind: input, shape index: {}]
  %s6 = inlined_call_operand.vmem [shape: f32[4,32,128], index: 6, kind: output, shape index: {}]
  %s7 = sld [smem:[#allocation0]]
  $region61: #{mdcnn_gru_forward.2} parent=0
    _
  %s9 = ssub.s32 1, %s7
  %s10 = scalar_select 0, %s9, %s7
  loop: start=0, step=1, limit=6
  $region2: #{mdcnn_gru_forward.2} parent=0 // loop_pre_header
    _
  $region3: #{mdcnn_gru_forward.2} parent=0 // loop_header
    %s12 = sphi 0, %s16
    %p13 = scmp.ge.s32.totalorder %s12, 6
    %s22 = sphi 0, %s24
    %s25 = sphi 0, %s22
    %s26 = sphi 0, %s25
    %s42 = sphi 0, %s26
    %s46 = sphi 0, %s46
    %s48 = sphi 0, %s46
    %s49 = sphi 0, %s48
    %s63 = sphi 0, %s49
    %s67 = sphi 0, %s67
    %s69 = sphi 0, %s67
    %s70 = sphi 0, %s69
    %s84 = sphi 0, %s70
    %s88 = sphi 0, %s88
    %s90 = sphi 0, %s88
    %s91 = sphi 0, %s90
    %s105 = sphi 0, %s91
    %s109 = sphi 0, %s109
    %s111 = sphi 0, %s109
    %s112 = sphi 0, %s111
    %s126 = sphi 0, %s112
    %s130 = sphi 0, %s130
    %s132 = sphi 0, %s130
    %s133 = sphi 0, %s132
    %s147 = sphi 0, %s133
    %s153 = sphi 0, %s155
    %s156 = sphi 0, %s153
    %s157 = sphi 0, %s156
    %s173 = sphi 0, %s157
  $region4: #{mdcnn_gru_forward.2} parent=0 // loop_header_branch
    %15 = sbr.rel (%p13) target = $region8
  $region5: #{mdcnn_gru_forward.2} parent=0 // loop_body
    %s17 = ssub.s32 %s12, 1
    %s18 = ssub.s32 %s12, 2
    %s19 = sadd.s32 %s12, 1
    %s20 = ssub.s32 %s12, %s19
    %p21 = scmp.eq.s32.totalorder %s20, 0
    %s23 = sadd.s32 %s22, 1
    %s24 = scalar_select %p21, %s22, %s23
    %p27 = pneg %p21
    %p28 = scmp.eq.s32.totalorder %s12, 3
    %p29 = por %p27, %p28
    %p30 = scmp.ne.s32.totalorder %s22, %s25
    %p31 = scmp.eq.s32.totalorder %s12, 0
    %p32 = por %p30, %p31
    %p33 = scmp.ne.s32.totalorder %s22, %s25
    %p34 = scmp.eq.s32.totalorder %s17, 3
    %p35 = por %p33, %p34
    %p36 = scmp.ne.s32.totalorder %s25, %s26
    %p37 = scmp.eq.s32.totalorder %s17, 0
    %p38 = por %p36, %p37
    %p39 = scmp.ne.s32.totalorder %s25, %s26
    %p40 = scmp.eq.s32.totalorder %s18, 3
    %p41 = por %p39, %p40
    %p43 = scmp.ne.s32.totalorder %s26, %s42
    %p44 = scmp.eq.s32.totalorder %s18, 0
    %p45 = por %p43, %p44
    %s47 = sadd.s32 %s46, 1
    %p50 = scmp.eq.s32.totalorder %s12, 3
    %p51 = scmp.ne.s32.totalorder %s46, %s48
    %p52 = scmp.eq.s32.totalorder %s12, 0
    %p53 = por %p51, %p52
    %p54 = scmp.ne.s32.totalorder %s46, %s48
    %p55 = scmp.eq.s32.totalorder %s17, 3
    %p56 = por %p54, %p55
    %p57 = scmp.ne.s32.totalorder %s48, %s49
    %p58 = scmp.eq.s32.totalorder %s17, 0
    %p59 = por %p57, %p58
    %p60 = scmp.ne.s32.totalorder %s48, %s49
    %p61 = scmp.eq.s32.totalorder %s18, 3
    %p62 = por %p60, %p61
    %p64 = scmp.ne.s32.totalorder %s49, %s63
    %p65 = scmp.eq.s32.totalorder %s18, 0
    %p66 = por %p64, %p65
    %s68 = sadd.s32 %s67, 1
    %p71 = scmp.eq.s32.totalorder %s12, 3
    %p72 = scmp.ne.s32.totalorder %s67, %s69
    %p73 = scmp.eq.s32.totalorder %s12, 0
    %p74 = por %p72, %p73
    %p75 = scmp.ne.s32.totalorder %s67, %s69
    %p76 = scmp.eq.s32.totalorder %s17, 3
    %p77 = por %p75, %p76
    %p78 = scmp.ne.s32.totalorder %s69, %s70
    %p79 = scmp.eq.s32.totalorder %s17, 0
    %p80 = por %p78, %p79
    %p81 = scmp.ne.s32.totalorder %s69, %s70
    %p82 = scmp.eq.s32.totalorder %s18, 3
    %p83 = por %p81, %p82
    %p85 = scmp.ne.s32.totalorder %s70, %s84
    %p86 = scmp.eq.s32.totalorder %s18, 0
    %p87 = por %p85, %p86
    %s89 = sadd.s32 %s88, 1
    %p92 = scmp.eq.s32.totalorder %s12, 3
    %p93 = scmp.ne.s32.totalorder %s88, %s90
    %p94 = scmp.eq.s32.totalorder %s12, 0
    %p95 = por %p93, %p94
    %p96 = scmp.ne.s32.totalorder %s88, %s90
    %p97 = scmp.eq.s32.totalorder %s17, 3
    %p98 = por %p96, %p97
    %p99 = scmp.ne.s32.totalorder %s90, %s91
    %p100 = scmp.eq.s32.totalorder %s17, 0
    %p101 = por %p99, %p100
    %p102 = scmp.ne.s32.totalorder %s90, %s91
    %p103 = scmp.eq.s32.totalorder %s18, 3
    %p104 = por %p102, %p103
    %p106 = scmp.ne.s32.totalorder %s91, %s105
    %p107 = scmp.eq.s32.totalorder %s18, 0
    %p108 = por %p106, %p107
    %s110 = sadd.s32 %s109, 1
    %p113 = scmp.eq.s32.totalorder %s12, 3
    %p114 = scmp.ne.s32.totalorder %s109, %s111
    %p115 = scmp.eq.s32.totalorder %s12, 0
    %p116 = por %p114, %p115
    %p117 = scmp.ne.s32.totalorder %s109, %s111
    %p118 = scmp.eq.s32.totalorder %s17, 3
    %p119 = por %p117, %p118
    %p120 = scmp.ne.s32.totalorder %s111, %s112
    %p121 = scmp.eq.s32.totalorder %s17, 0
    %p122 = por %p120, %p121
    %p123 = scmp.ne.s32.totalorder %s111, %s112
    %p124 = scmp.eq.s32.totalorder %s18, 3
    %p125 = por %p123, %p124
    %p127 = scmp.ne.s32.totalorder %s112, %s126
    %p128 = scmp.eq.s32.totalorder %s18, 0
    %p129 = por %p127, %p128
    %s131 = sadd.s32 %s130, 1
    %p134 = scmp.eq.s32.totalorder %s12, 3
    %p135 = scmp.ne.s32.totalorder %s130, %s132
    %p136 = scmp.eq.s32.totalorder %s12, 0
    %p137 = por %p135, %p136
    %p138 = scmp.ne.s32.totalorder %s130, %s132
    %p139 = scmp.eq.s32.totalorder %s17, 3
    %p140 = por %p138, %p139
    %p141 = scmp.ne.s32.totalorder %s132, %s133
    %p142 = scmp.eq.s32.totalorder %s17, 0
    %p143 = por %p141, %p142
    %p144 = scmp.ne.s32.totalorder %s132, %s133
    %p145 = scmp.eq.s32.totalorder %s18, 3
    %p146 = por %p144, %p145
    %p148 = scmp.ne.s32.totalorder %s133, %s147
    %p149 = scmp.eq.s32.totalorder %s18, 0
    %p150 = por %p148, %p149
    %s151 = ssub.s32 %s12, %s19
    %p152 = scmp.eq.s32.totalorder %s151, 0
    %s154 = sadd.s32 %s153, 1
    %s155 = scalar_select %p152, %s153, %s154
    %p158 = pneg %p152
    %p159 = scmp.eq.s32.totalorder %s12, 3
    %p160 = por %p158, %p159
    %p161 = scmp.ne.s32.totalorder %s153, %s156
    %p162 = scmp.eq.s32.totalorder %s12, 0
    %p163 = por %p161, %p162
    %p164 = scmp.ne.s32.totalorder %s153, %s156
    %p165 = scmp.eq.s32.totalorder %s17, 3
    %p166 = por %p164, %p165
    %p167 = scmp.ne.s32.totalorder %s156, %s157
    %p168 = scmp.eq.s32.totalorder %s17, 0
    %p169 = por %p167, %p168
    %p170 = scmp.ne.s32.totalorder %s156, %s157
    %p171 = scmp.eq.s32.totalorder %s18, 3
    %p172 = por %p170, %p171
    %p174 = scmp.ne.s32.totalorder %s157, %s173
    %p175 = scmp.eq.s32.totalorder %s18, 0
    %p176 = por %p174, %p175
    %p177 = scmp.le.s32.totalorder 1, %s12
    %p178 = scmp.lt.s32.totalorder %s12, 5
    %p179 = pnand %p177, %p178
    %p180 = pneg %p179
    // Predicated region
    $region9: #{mdcnn_gru_forward.2} parent=5 // pred_check
      _
    $region10: #{mdcnn_gru_forward.2} parent=5 // pred_check_branch
      %182 = sbr.rel (%p179) target = $region12
    $region11: #{mdcnn_gru_forward.2} parent=5 // pred_region
      %s183 = ssub.s32 %s12, 1
      // Predicated region
      $region13: #{mdcnn_gru_forward.2} parent=11 // pred_check
        %p184 = pneg %p59
      $region14: #{mdcnn_gru_forward.2} parent=11 // pred_check_branch
        %186 = sbr.rel (%p184) target = $region16
      $region15: #{mdcnn_gru_forward.2} parent=11 // pred_region
        _
      $region16: #{mdcnn_gru_forward.2} parent=11 // pred_fallthru
        _
      // Predicated region
      $region17: #{mdcnn_gru_forward.2} parent=11 // pred_check
        %p187 = pneg %p80
      $region18: #{mdcnn_gru_forward.2} parent=11 // pred_check_branch
        %189 = sbr.rel (%p187) target = $region20
      $region19: #{mdcnn_gru_forward.2} parent=11 // pred_region
        _
      $region20: #{mdcnn_gru_forward.2} parent=11 // pred_fallthru
        _
      // Predicated region
      $region21: #{mdcnn_gru_forward.2} parent=11 // pred_check
        %p190 = pneg %p101
      $region22: #{mdcnn_gru_forward.2} parent=11 // pred_check_branch
        %192 = sbr.rel (%p190) target = $region24
      $region23: #{mdcnn_gru_forward.2} parent=11 // pred_region
        _
      $region24: #{mdcnn_gru_forward.2} parent=11 // pred_fallthru
        _
      // Predicated region
      $region25: #{mdcnn_gru_forward.2} parent=11 // pred_check
        %p193 = pneg %p122
      $region26: #{mdcnn_gru_forward.2} parent=11 // pred_check_branch
        %195 = sbr.rel (%p193) target = $region28
      $region27: #{mdcnn_gru_forward.2} parent=11 // pred_region
        _
      $region28: #{mdcnn_gru_forward.2} parent=11 // pred_fallthru
        _
      // Predicated region
      $region29: #{mdcnn_gru_forward.2} parent=11 // pred_check
        %p196 = pneg %p143
      $region30: #{mdcnn_gru_forward.2} parent=11 // pred_check_branch
        %198 = sbr.rel (%p196) target = $region32
      $region31: #{mdcnn_gru_forward.2} parent=11 // pred_region
        _
      $region32: #{mdcnn_gru_forward.2} parent=11 // pred_fallthru
        _
    $region12: #{mdcnn_gru_forward.2} parent=5 // pred_fallthru
      _
    %p199 = scmp.lt.s32.totalorder %s12, 4
    // Predicated region
    $region33: #{mdcnn_gru_forward.2} parent=5 // pred_check
      %p200 = pneg %p199
    $region34: #{mdcnn_gru_forward.2} parent=5 // pred_check_branch
      %202 = sbr.rel (%p200) target = $region36
    $region35: #{mdcnn_gru_forward.2} parent=5 // pred_region
      // Predicated region
      $region37: #{mdcnn_gru_forward.2} parent=35 // pred_check
        %p203 = pneg %p32
      $region38: #{mdcnn_gru_forward.2} parent=35 // pred_check_branch
        %205 = sbr.rel (%p203) target = $region40
      $region39: #{mdcnn_gru_forward.2} parent=35 // pred_region
        %p206 = scmp.lt.s32.totalorder %s12, 3
        %s207 = scalar_select %p206, %s12, 3
        %s208 = smul.addr %s207, 12
        %s209 = smul.addr %s208, 4
        %s210 = scalar_lea.vmem %s0, %s209
      $region40: #{mdcnn_gru_forward.2} parent=35 // pred_fallthru
        _
    $region36: #{mdcnn_gru_forward.2} parent=5 // pred_fallthru
      _
    %p211 = scmp.le.s32.totalorder 1, %s12
    %p212 = scmp.lt.s32.totalorder %s12, 5
    %p213 = pnand %p211, %p212
    %p214 = pneg %p213
    // Predicated region
    $region41: #{mdcnn_gru_forward.2} parent=5 // pred_check
      _
    $region42: #{mdcnn_gru_forward.2} parent=5 // pred_check_branch
      %216 = sbr.rel (%p213) target = $region44
    $region43: #{mdcnn_gru_forward.2} parent=5 // pred_region
      %s217 = ssub.s32 %s12, 1
      %p218 = scmp.lt.s32.totalorder %s17, 3
      %s219 = scalar_select %p218, %s17, 3
      %s220 = smul.addr %s219, 12
      %s221 = smul.addr %s220, 4
      %s222 = scalar_lea.vmem %s0, %s221
      %p223 = pneg %p38
      %p224 = pneg %p35
      %p225 = pneg %p59
      %p226 = pneg %p56
      %p227 = pneg %p80
      %p228 = pneg %p77
      %p229 = pneg %p101
      %p230 = pneg %p98
      %p231 = pneg %p122
      %p232 = pneg %p119
      %p233 = pneg %p143
      %p234 = pneg %p140
      %p235 = pneg %p169
      %p236 = pneg %p166
      %p237 = scmp.lt.s32.totalorder %s17, 3
      %s238 = scalar_select %p237, %s17, 3
      %s239 = smul.addr %s238, 4
      %s240 = smul.addr %s239, 8
      %s241 = scalar_lea.vmem %s6, %s240
      %p242 = scmp.lt.s32.totalorder %s17, 3
      %s243 = scalar_select %p242, %s17, 3
      %s244 = smul.addr %s243, 12
      %s245 = smul.addr %s244, 4
      %s246 = scalar_lea.vmem %s0, %s245
      %p247 = scmp.lt.s32.totalorder %s17, 3
      %s248 = scalar_select %p247, %s17, 3
      %s249 = smul.addr %s248, 4
      %s250 = smul.addr %s249, 8
      %s251 = scalar_lea.vmem %s6, %s250
      %p253 = scmp.eq.s32.totalorder %s17, 0
      // Predicated region
      $region45: #{mdcnn_gru_forward.2} parent=43 // pred_check
        %p254 = pneg %p253
      $region46: #{mdcnn_gru_forward.2} parent=43 // pred_check_branch
        %256 = sbr.rel (%p254) target = $region48
      $region47: #{mdcnn_gru_forward.2} parent=43 // pred_region
        %v257 = vld [vmem:[%s1] sm:$0xff]
        %v258 = vld [vmem:[%s1 + $0x8] sm:$0xff]
        %v259 = vld [vmem:[%s1 + $0x10] sm:$0xff]
        %v260 = vld [vmem:[%s1 + $0x18] sm:$0xff]
        %261 = vst [vmem:[#allocation2] sm:$0xff] %v257
        %262 = vst [vmem:[#allocation2 + $0x8] sm:$0xff] %v258
        %263 = vst [vmem:[#allocation2 + $0x10] sm:$0xff] %v259
        %264 = vst [vmem:[#allocation2 + $0x18] sm:$0xff] %v260
        %265 = vst [vmem:[#allocation3] sm:$0xff] 0.0
        %266 = vst [vmem:[#allocation3 + $0x8] sm:$0xff] 0.0
        %267 = vst [vmem:[#allocation3 + $0x10] sm:$0x3] 0.0
        %268 = vst [vmem:[#allocation3 + $0x18] sm:$0xff] 0.0
        %269 = vst [vmem:[#allocation3 + $0x20] sm:$0xff] 0.0
        %270 = vst [vmem:[#allocation3 + $0x28] sm:$0x3] 0.0
      $region48: #{mdcnn_gru_forward.2} parent=43 // pred_fallthru
        _
      %v271 = vld [vmem:[%s246] sm:$0xff]
      %v272 = vld [vmem:[%s246 + $0x8] sm:$0xf]
      %v273 = vld [vmem:[%s246 + $0xc] sm:$0xff]
      %v274 = vld [vmem:[%s246 + $0x14] sm:$0xf]
      %v275 = vld [vmem:[%s246 + $0x18] sm:$0xff]
      %v276 = vld [vmem:[%s246 + $0x20] sm:$0xf]
      %v277 = vld [vmem:[%s246 + $0x24] sm:$0xff]
      %v278 = vld [vmem:[%s246 + $0x2c] sm:$0xf]
      %v279 = vld [vmem:[%s2] sm:$0xff]
      %v280 = vld [vmem:[%s2 + $0x8] sm:$0xf]
      %v281 = vld [vmem:[%s2 + $0xc] sm:$0xff]
      %v282 = vld [vmem:[%s2 + $0x14] sm:$0xf]
      %v283 = vld [vmem:[%s2 + $0x18] sm:$0xff]
      %v284 = vld [vmem:[%s2 + $0x20] sm:$0xf]
      %v285 = vld [vmem:[%s2 + $0x24] sm:$0xff]
      %v286 = vld [vmem:[%s2 + $0x2c] sm:$0xf]
      %v287 = vld [vmem:[%s2 + $0x30] sm:$0xff]
      %v288 = vld [vmem:[%s2 + $0x38] sm:$0xf]
      %v289 = vld [vmem:[%s2 + $0x3c] sm:$0xff]
      %v290 = vld [vmem:[%s2 + $0x44] sm:$0xf]
      %v291 = vld [vmem:[%s2 + $0x48] sm:$0xff]
      %v292 = vld [vmem:[%s2 + $0x50] sm:$0xf]
      %v293 = vld [vmem:[%s2 + $0x54] sm:$0xff]
      %v294 = vld [vmem:[%s2 + $0x5c] sm:$0xf]
      %v295 = vld [vmem:[%s2 + $0x60] sm:$0xff]
      %v296 = vld [vmem:[%s2 + $0x68] sm:$0xf]
      %v297 = vld [vmem:[%s2 + $0x6c] sm:$0xff]
      %v298 = vld [vmem:[%s2 + $0x74] sm:$0xf]
      %v299 = vld [vmem:[%s2 + $0x78] sm:$0xff]
      %v300 = vld [vmem:[%s2 + $0x80] sm:$0xf]
      %v301 = vld [vmem:[%s2 + $0x84] sm:$0xff]
      %v302 = vld [vmem:[%s2 + $0x8c] sm:$0xf]
      %v303 = vld [vmem:[%s2 + $0x90] sm:$0xff]
      %v304 = vld [vmem:[%s2 + $0x98] sm:$0xf]
      %v305 = vld [vmem:[%s2 + $0x9c] sm:$0xff]
      %v306 = vld [vmem:[%s2 + $0xa4] sm:$0xf]
      %v307 = vld [vmem:[%s2 + $0xa8] sm:$0xff]
      %v308 = vld [vmem:[%s2 + $0xb0] sm:$0xf]
      %v309 = vld [vmem:[%s2 + $0xb4] sm:$0xff]
      %v310 = vld [vmem:[%s2 + $0xbc] sm:$0xf]
      %v311 = vld [vmem:[%s2 + $0xc0] sm:$0xff]
      %v312 = vld [vmem:[%s2 + $0xc8] sm:$0xf]
      %v313 = vld [vmem:[%s2 + $0xcc] sm:$0xff]
      %v314 = vld [vmem:[%s2 + $0xd4] sm:$0xf]
      %v315 = vld [vmem:[%s2 + $0xd8] sm:$0xff]
      %v316 = vld [vmem:[%s2 + $0xe0] sm:$0xf]
      %v317 = vld [vmem:[%s2 + $0xe4] sm:$0xff]
      %v318 = vld [vmem:[%s2 + $0xec] sm:$0xf]
      %v319 = vld [vmem:[%s2 + $0xf0] sm:$0xff]
      %v320 = vld [vmem:[%s2 + $0xf8] sm:$0xf]
      %v321 = vld [vmem:[%s2 + $0xfc] sm:$0xff]
      %v322 = vld [vmem:[%s2 + $0x104] sm:$0xf]
      %v323 = vld [vmem:[%s2 + $0x108] sm:$0xff]
      %v324 = vld [vmem:[%s2 + $0x110] sm:$0xf]
      %v325 = vld [vmem:[%s2 + $0x114] sm:$0xff]
      %v326 = vld [vmem:[%s2 + $0x11c] sm:$0xf]
      %v327 = vld [vmem:[%s2 + $0x120] sm:$0xff]
      %v328 = vld [vmem:[%s2 + $0x128] sm:$0xf]
      %v329 = vld [vmem:[%s2 + $0x12c] sm:$0xff]
      %v330 = vld [vmem:[%s2 + $0x134] sm:$0xf]
      %v331 = vld [vmem:[%s2 + $0x138] sm:$0xff]
      %v332 = vld [vmem:[%s2 + $0x140] sm:$0xf]
      %v333 = vld [vmem:[%s2 + $0x144] sm:$0xff]
      %v334 = vld [vmem:[%s2 + $0x14c] sm:$0xf]
      %v335 = vld [vmem:[%s2 + $0x150] sm:$0xff]
      %v336 = vld [vmem:[%s2 + $0x158] sm:$0xf]
      %v337 = vld [vmem:[%s2 + $0x15c] sm:$0xff]
      %v338 = vld [vmem:[%s2 + $0x164] sm:$0xf]
      %v339 = vld [vmem:[%s2 + $0x168] sm:$0xff]
      %v340 = vld [vmem:[%s2 + $0x170] sm:$0xf]
      %v341 = vld [vmem:[%s2 + $0x174] sm:$0xff]
      %v342 = vld [vmem:[%s2 + $0x17c] sm:$0xf]
      %v343 = vld [vmem:[%s2 + $0x180] sm:$0xff]
      %v344 = vld [vmem:[%s2 + $0x188] sm:$0xf]
      %v345 = vld [vmem:[%s2 + $0x18c] sm:$0xff]
      %v346 = vld [vmem:[%s2 + $0x194] sm:$0xf]
      %v347 = vld [vmem:[%s2 + $0x198] sm:$0xff]
      %v348 = vld [vmem:[%s2 + $0x1a0] sm:$0xf]
      %v349 = vld [vmem:[%s2 + $0x1a4] sm:$0xff]
      %v350 = vld [vmem:[%s2 + $0x1ac] sm:$0xf]
      %v351 = vld [vmem:[%s2 + $0x1b0] sm:$0xff]
      %v352 = vld [vmem:[%s2 + $0x1b8] sm:$0xf]
      %v353 = vld [vmem:[%s2 + $0x1bc] sm:$0xff]
      %v354 = vld [vmem:[%s2 + $0x1c4] sm:$0xf]
      %v355 = vld [vmem:[%s2 + $0x1c8] sm:$0xff]
      %v356 = vld [vmem:[%s2 + $0x1d0] sm:$0xf]
      %v357 = vld [vmem:[%s2 + $0x1d4] sm:$0xff]
      %v358 = vld [vmem:[%s2 + $0x1dc] sm:$0xf]
      %v359 = vld [vmem:[%s2 + $0x1e0] sm:$0xff]
      %v360 = vld [vmem:[%s2 + $0x1e8] sm:$0xf]
      %v361 = vld [vmem:[%s2 + $0x1ec] sm:$0xff]
      %v362 = vld [vmem:[%s2 + $0x1f4] sm:$0xf]
      %v363 = vld [vmem:[%s2 + $0x1f8] sm:$0xff]
      %v364 = vld [vmem:[%s2 + $0x200] sm:$0xf]
      %v365 = vld [vmem:[%s2 + $0x204] sm:$0xff]
      %v366 = vld [vmem:[%s2 + $0x20c] sm:$0xf]
      %v367 = vld [vmem:[%s2 + $0x210] sm:$0xff]
      %v368 = vld [vmem:[%s2 + $0x218] sm:$0xf]
      %v369 = vld [vmem:[%s2 + $0x21c] sm:$0xff]
      %v370 = vld [vmem:[%s2 + $0x224] sm:$0xf]
      %v371 = vld [vmem:[%s2 + $0x228] sm:$0xff]
      %v372 = vld [vmem:[%s2 + $0x230] sm:$0xf]
      %v373 = vld [vmem:[%s2 + $0x234] sm:$0xff]
      %v374 = vld [vmem:[%s2 + $0x23c] sm:$0xf]
      %v375 = vld [vmem:[%s5] sm:$0x7]
      %v377 = vlaneseq
      %v378 = vshrl.u32 %v377, 7
      %v379 = vsub.s32 0, %v378
      %v380 = vrot.slane %v375, %v379
      %v381 = vlaneseq
      %v382 = vshrl.u32 %v381, 7
      %v383 = vsub.s32 1, %v382
      %v384 = vrot.slane %v375, %v383
      %v385 = vlaneseq
      %v386 = vshrl.u32 %v385, 7
      %v387 = vsub.s32 2, %v386
      %v388 = vrot.slane %v375, %v387
      %v400 = vunpack.c.l.b16 %v271
      %v401 = vunpack.c.h.b16 %v271
      %v402 = vunpack.c.l.b16 %v272
      %v403 = vunpack.c.l.b16 %v273
      %v404 = vunpack.c.h.b16 %v273
      %v405 = vunpack.c.l.b16 %v274
      %v406 = vunpack.c.l.b16 %v275
      %v407 = vunpack.c.h.b16 %v275
      %v408 = vunpack.c.l.b16 %v276
      %v409 = vunpack.c.l.b16 %v277
      %v410 = vunpack.c.h.b16 %v277
      %v411 = vunpack.c.l.b16 %v278
      %v412 = vpack.c.b16 %v403, %v400
      %v413 = vpack.c.b16 %v404, %v401
      %v414 = vpack.c.b16 %v405, %v402
      %v415 = vpack.c.b16 %v409, %v406
      %v416 = vpack.c.b16 %v410, %v407
      %v417 = vpack.c.b16 %v411, %v408
      %v520 = vunpack.c.l.b16 %v279
      %v521 = vunpack.c.h.b16 %v279
      %v522 = vunpack.c.l.b16 %v280
      %v523 = vunpack.c.l.b16 %v281
      %v524 = vunpack.c.h.b16 %v281
      %v525 = vunpack.c.l.b16 %v282
      %v526 = vunpack.c.l.b16 %v283
      %v527 = vunpack.c.h.b16 %v283
      %v528 = vunpack.c.l.b16 %v284
      %v529 = vunpack.c.l.b16 %v285
      %v530 = vunpack.c.h.b16 %v285
      %v531 = vunpack.c.l.b16 %v286
      %v532 = vunpack.c.l.b16 %v287
      %v533 = vunpack.c.h.b16 %v287
      %v534 = vunpack.c.l.b16 %v288
      %v535 = vunpack.c.l.b16 %v289
      %v536 = vunpack.c.h.b16 %v289
      %v537 = vunpack.c.l.b16 %v290
      %v538 = vunpack.c.l.b16 %v291
      %v539 = vunpack.c.h.b16 %v291
      %v540 = vunpack.c.l.b16 %v292
      %v541 = vunpack.c.l.b16 %v293
      %v542 = vunpack.c.h.b16 %v293
      %v543 = vunpack.c.l.b16 %v294
      %v544 = vunpack.c.l.b16 %v295
      %v545 = vunpack.c.h.b16 %v295
      %v546 = vunpack.c.l.b16 %v296
      %v547 = vunpack.c.l.b16 %v297
      %v548 = vunpack.c.h.b16 %v297
      %v549 = vunpack.c.l.b16 %v298
      %v550 = vunpack.c.l.b16 %v299
      %v551 = vunpack.c.h.b16 %v299
      %v552 = vunpack.c.l.b16 %v300
      %v553 = vunpack.c.l.b16 %v301
      %v554 = vunpack.c.h.b16 %v301
      %v555 = vunpack.c.l.b16 %v302
      %v556 = vunpack.c.l.b16 %v303
      %v557 = vunpack.c.h.b16 %v303
      %v558 = vunpack.c.l.b16 %v304
      %v559 = vunpack.c.l.b16 %v305
      %v560 = vunpack.c.h.b16 %v305
      %v561 = vunpack.c.l.b16 %v306
      %v562 = vunpack.c.l.b16 %v307
      %v563 = vunpack.c.h.b16 %v307
      %v564 = vunpack.c.l.b16 %v308
      %v565 = vunpack.c.l.b16 %v309
      %v566 = vunpack.c.h.b16 %v309
      %v567 = vunpack.c.l.b16 %v310
      %v568 = vunpack.c.l.b16 %v311
      %v569 = vunpack.c.h.b16 %v311
      %v570 = vunpack.c.l.b16 %v312
      %v571 = vunpack.c.l.b16 %v313
      %v572 = vunpack.c.h.b16 %v313
      %v573 = vunpack.c.l.b16 %v314
      %v574 = vunpack.c.l.b16 %v315
      %v575 = vunpack.c.h.b16 %v315
      %v576 = vunpack.c.l.b16 %v316
      %v577 = vunpack.c.l.b16 %v317
      %v578 = vunpack.c.h.b16 %v317
      %v579 = vunpack.c.l.b16 %v318
      %v580 = vunpack.c.l.b16 %v319
      %v581 = vunpack.c.h.b16 %v319
      %v582 = vunpack.c.l.b16 %v320
      %v583 = vunpack.c.l.b16 %v321
      %v584 = vunpack.c.h.b16 %v321
      %v585 = vunpack.c.l.b16 %v322
      %v586 = vunpack.c.l.b16 %v323
      %v587 = vunpack.c.h.b16 %v323
      %v588 = vunpack.c.l.b16 %v324
      %v589 = vunpack.c.l.b16 %v325
      %v590 = vunpack.c.h.b16 %v325
      %v591 = vunpack.c.l.b16 %v326
      %v592 = vunpack.c.l.b16 %v327
      %v593 = vunpack.c.h.b16 %v327
      %v594 = vunpack.c.l.b16 %v328
      %v595 = vunpack.c.l.b16 %v329
      %v596 = vunpack.c.h.b16 %v329
      %v597 = vunpack.c.l.b16 %v330
      %v598 = vunpack.c.l.b16 %v331
      %v599 = vunpack.c.h.b16 %v331
      %v600 = vunpack.c.l.b16 %v332
      %v601 = vunpack.c.l.b16 %v333
      %v602 = vunpack.c.h.b16 %v333
      %v603 = vunpack.c.l.b16 %v334
      %v604 = vunpack.c.l.b16 %v335
      %v605 = vunpack.c.h.b16 %v335
      %v606 = vunpack.c.l.b16 %v336
      %v607 = vunpack.c.l.b16 %v337
      %v608 = vunpack.c.h.b16 %v337
      %v609 = vunpack.c.l.b16 %v338
      %v610 = vunpack.c.l.b16 %v339
      %v611 = vunpack.c.h.b16 %v339
      %v612 = vunpack.c.l.b16 %v340
      %v613 = vunpack.c.l.b16 %v341
      %v614 = vunpack.c.h.b16 %v341
      %v615 = vunpack.c.l.b16 %v342
      %v616 = vunpack.c.l.b16 %v343
      %v617 = vunpack.c.h.b16 %v343
      %v618 = vunpack.c.l.b16 %v344
      %v619 = vunpack.c.l.b16 %v345
      %v620 = vunpack.c.h.b16 %v345
      %v621 = vunpack.c.l.b16 %v346
      %v622 = vunpack.c.l.b16 %v347
      %v623 = vunpack.c.h.b16 %v347
      %v624 = vunpack.c.l.b16 %v348
      %v625 = vunpack.c.l.b16 %v349
      %v626 = vunpack.c.h.b16 %v349
      %v627 = vunpack.c.l.b16 %v350
      %v628 = vunpack.c.l.b16 %v351
      %v629 = vunpack.c.h.b16 %v351
      %v630 = vunpack.c.l.b16 %v352
      %v631 = vunpack.c.l.b16 %v353
      %v632 = vunpack.c.h.b16 %v353
      %v633 = vunpack.c.l.b16 %v354
      %v634 = vunpack.c.l.b16 %v355
      %v635 = vunpack.c.h.b16 %v355
      %v636 = vunpack.c.l.b16 %v356
      %v637 = vunpack.c.l.b16 %v357
      %v638 = vunpack.c.h.b16 %v357
      %v639 = vunpack.c.l.b16 %v358
      %v640 = vunpack.c.l.b16 %v359
      %v641 = vunpack.c.h.b16 %v359
      %v642 = vunpack.c.l.b16 %v360
      %v643 = vunpack.c.l.b16 %v361
      %v644 = vunpack.c.h.b16 %v361
      %v645 = vunpack.c.l.b16 %v362
      %v646 = vunpack.c.l.b16 %v363
      %v647 = vunpack.c.h.b16 %v363
      %v648 = vunpack.c.l.b16 %v364
      %v649 = vunpack.c.l.b16 %v365
      %v650 = vunpack.c.h.b16 %v365
      %v651 = vunpack.c.l.b16 %v366
      %v652 = vunpack.c.l.b16 %v367
      %v653 = vunpack.c.h.b16 %v367
      %v654 = vunpack.c.l.b16 %v368
      %v655 = vunpack.c.l.b16 %v369
      %v656 = vunpack.c.h.b16 %v369
      %v657 = vunpack.c.l.b16 %v370
      %v658 = vunpack.c.l.b16 %v371
      %v659 = vunpack.c.h.b16 %v371
      %v660 = vunpack.c.l.b16 %v372
      %v661 = vunpack.c.l.b16 %v373
      %v662 = vunpack.c.h.b16 %v373
      %v663 = vunpack.c.l.b16 %v374
      %v664 = vpack.c.b16 %v523, %v520
      %v665 = vpack.c.b16 %v524, %v521
      %v666 = vpack.c.b16 %v525, %v522
      %v667 = vpack.c.b16 %v529, %v526
      %v668 = vpack.c.b16 %v530, %v527
      %v669 = vpack.c.b16 %v531, %v528
      %v670 = vpack.c.b16 %v535, %v532
      %v671 = vpack.c.b16 %v536, %v533
      %v672 = vpack.c.b16 %v537, %v534
      %v673 = vpack.c.b16 %v541, %v538
      %v674 = vpack.c.b16 %v542, %v539
      %v675 = vpack.c.b16 %v543, %v540
      %v676 = vpack.c.b16 %v547, %v544
      %v677 = vpack.c.b16 %v548, %v545
      %v678 = vpack.c.b16 %v549, %v546
      %v679 = vpack.c.b16 %v553, %v550
      %v680 = vpack.c.b16 %v554, %v551
      %v681 = vpack.c.b16 %v555, %v552
      %v682 = vpack.c.b16 %v559, %v556
      %v683 = vpack.c.b16 %v560, %v557
      %v684 = vpack.c.b16 %v561, %v558
      %v685 = vpack.c.b16 %v565, %v562
      %v686 = vpack.c.b16 %v566, %v563
      %v687 = vpack.c.b16 %v567, %v564
      %v688 = vpack.c.b16 %v571, %v568
      %v689 = vpack.c.b16 %v572, %v569
      %v690 = vpack.c.b16 %v573, %v570
      %v691 = vpack.c.b16 %v577, %v574
      %v692 = vpack.c.b16 %v578, %v575
      %v693 = vpack.c.b16 %v579, %v576
      %v694 = vpack.c.b16 %v583, %v580
      %v695 = vpack.c.b16 %v584, %v581
      %v696 = vpack.c.b16 %v585, %v582
      %v697 = vpack.c.b16 %v589, %v586
      %v698 = vpack.c.b16 %v590, %v587
      %v699 = vpack.c.b16 %v591, %v588
      %v700 = vpack.c.b16 %v595, %v592
      %v701 = vpack.c.b16 %v596, %v593
      %v702 = vpack.c.b16 %v597, %v594
      %v703 = vpack.c.b16 %v601, %v598
      %v704 = vpack.c.b16 %v602, %v599
      %v705 = vpack.c.b16 %v603, %v600
      %v706 = vpack.c.b16 %v607, %v604
      %v707 = vpack.c.b16 %v608, %v605
      %v708 = vpack.c.b16 %v609, %v606
      %v709 = vpack.c.b16 %v613, %v610
      %v710 = vpack.c.b16 %v614, %v611
      %v711 = vpack.c.b16 %v615, %v612
      %v712 = vpack.c.b16 %v619, %v616
      %v713 = vpack.c.b16 %v620, %v617
      %v714 = vpack.c.b16 %v621, %v618
      %v715 = vpack.c.b16 %v625, %v622
      %v716 = vpack.c.b16 %v626, %v623
      %v717 = vpack.c.b16 %v627, %v624
      %v718 = vpack.c.b16 %v631, %v628
      %v719 = vpack.c.b16 %v632, %v629
      %v720 = vpack.c.b16 %v633, %v630
      %v721 = vpack.c.b16 %v637, %v634
      %v722 = vpack.c.b16 %v638, %v635
      %v723 = vpack.c.b16 %v639, %v636
      %v724 = vpack.c.b16 %v643, %v640
      %v725 = vpack.c.b16 %v644, %v641
      %v726 = vpack.c.b16 %v645, %v642
      %v727 = vpack.c.b16 %v649, %v646
      %v728 = vpack.c.b16 %v650, %v647
      %v729 = vpack.c.b16 %v651, %v648
      %v730 = vpack.c.b16 %v655, %v652
      %v731 = vpack.c.b16 %v656, %v653
      %v732 = vpack.c.b16 %v657, %v654
      %v733 = vpack.c.b16 %v661, %v658
      %v734 = vpack.c.b16 %v662, %v659
      %v735 = vpack.c.b16 %v663, %v660
      %808 = vmatprep.subr.bf16.mxu0 %v686
      %809 = vmatpush1.bf16.msra.mxu0 %v685
      %810 = vmatprep.subr.bf16.mxu0 %v683
      %811 = vmatpush1.bf16.msra.mxu0 %v682
      %812 = vmatprep.subr.bf16.mxu0 %v680
      %813 = vmatpush1.bf16.msra.mxu0 %v679
      %814 = vmatprep.subr.bf16.mxu0 %v677
      %815 = vmatpush1.bf16.msra.mxu0 %v676
      %816 = vmatprep.subr.bf16.mxu0 %v674
      %817 = vmatpush1.bf16.msra.mxu0 %v673
      %818 = vmatprep.subr.bf16.mxu0 %v671
      %819 = vmatpush1.bf16.msra.mxu0 %v670
      %820 = vmatprep.subr.bf16.mxu0 %v668
      %821 = vmatpush1.bf16.msra.mxu0 %v667
      %822 = vmatprep.subr.bf16.mxu0 %v665
      %823 = vmatpush1.bf16.msra.mxu0 %v664
      %824 = vmatprep.subr.bf16.mxu0 %v710
      %825 = vmatpush2.bf16.msra.mxu0 %v709
      %826 = vmatprep.subr.bf16.mxu0 %v707
      %827 = vmatpush2.bf16.msra.mxu0 %v706
      %828 = vmatprep.subr.bf16.mxu0 %v704
      %829 = vmatpush2.bf16.msra.mxu0 %v703
      %830 = vmatprep.subr.bf16.mxu0 %v701
      %831 = vmatpush2.bf16.msra.mxu0 %v700
      %832 = vmatprep.subr.bf16.mxu0 %v698
      %833 = vmatpush2.bf16.msra.mxu0 %v697
      %834 = vmatprep.subr.bf16.mxu0 %v695
      %835 = vmatpush2.bf16.msra.mxu0 %v694
      %836 = vmatprep.subr.bf16.mxu0 %v692
      %837 = vmatpush2.bf16.msra.mxu0 %v691
      %838 = vmatprep.subr.bf16.mxu0 %v689
      %839 = vmatpush2.bf16.msra.mxu0 %v688
      %840 = vmatprep.mubr.bf16.mxu0 %v413
      %841 = vmatmul.mubr.bf16.gmra.mxu0 %v412
      %v842 = vpop.f32.mrf.mxu0
      %v843 = vadd.f32 %v380, %v842
      %v844 = vpop.f32.mrf.mxu0
      %v845 = vadd.f32 %v384, %v844
      %v846 = vpop.f32.mrf.mxu0
      %v847 = vadd.f32 %v380, %v846
      %v848 = vpop.f32.mrf.mxu0
      %v849 = vadd.f32 %v384, %v848
      %850 = vmatprep.mubr.bf16.mxu0 %v416
      %851 = vmatmul.mubr.bf16.gmra.mxu0 %v415
      %v852 = vpop.f32.mrf.mxu0
      %v853 = vadd.f32 %v380, %v852
      %v854 = vpop.f32.mrf.mxu0
      %v855 = vadd.f32 %v384, %v854
      %v856 = vpop.f32.mrf.mxu0
      %v857 = vadd.f32 %v380, %v856
      %v858 = vpop.f32.mrf.mxu0
      %v859 = vadd.f32 %v384, %v858
      %860 = vdwg.mxu0
      %861 = vmatprep.subr.bf16.mxu0 %v734
      %862 = vmatpush1.bf16.msra.mxu0 %v733
      %863 = vmatprep.subr.bf16.mxu0 %v731
      %864 = vmatpush1.bf16.msra.mxu0 %v730
      %865 = vmatprep.subr.bf16.mxu0 %v728
      %866 = vmatpush1.bf16.msra.mxu0 %v727
      %867 = vmatprep.subr.bf16.mxu0 %v725
      %868 = vmatpush1.bf16.msra.mxu0 %v724
      %869 = vmatprep.subr.bf16.mxu0 %v722
      %870 = vmatpush1.bf16.msra.mxu0 %v721
      %871 = vmatprep.subr.bf16.mxu0 %v719
      %872 = vmatpush1.bf16.msra.mxu0 %v718
      %873 = vmatprep.subr.bf16.mxu0 %v716
      %874 = vmatpush1.bf16.msra.mxu0 %v715
      %875 = vmatprep.subr.bf16.mxu0 %v713
      %876 = vmatpush1.bf16.msra.mxu0 %v712
      %877 = vmatprep.subr.bf16.mxu0 0
      %878 = vmatpush2.bf16.msra.mxu0 0
      %879 = vmatprep.subr.bf16.mxu0 0
      %880 = vmatpush2.bf16.msra.mxu0 0
      %881 = vmatprep.subr.bf16.mxu0 0
      %882 = vmatpush2.bf16.msra.mxu0 0
      %883 = vmatprep.subr.bf16.mxu0 0
      %884 = vmatpush2.bf16.msra.mxu0 0
      %885 = vmatprep.subr.bf16.mxu0 0
      %886 = vmatpush2.bf16.msra.mxu0 0
      %887 = vmatprep.subr.bf16.mxu0 0
      %888 = vmatpush2.bf16.msra.mxu0 0
      %889 = vmatprep.subr.bf16.mxu0 0
      %890 = vmatpush2.bf16.msra.mxu0 0
      %891 = vmatprep.subr.bf16.mxu0 0
      %892 = vmatpush2.bf16.msra.mxu0 0
      %893 = vmatprep.mubr.bf16.mxu0 0
      %894 = vmatmul.mubr.bf16.gmra.mxu0 %v414
      %v895 = vpop.f32.mrf.mxu0
      %v896 = vadd.f32 %v843, %v895
      %v897 = vpop.f32.mrf.mxu0
      %v898 = vadd.f32 %v845, %v897
      %v899 = vpop.f32.mrf.mxu0
      %v900 = vadd.f32 %v847, %v899
      %v901 = vpop.f32.mrf.mxu0
      %v902 = vadd.f32 %v849, %v901
      %903 = vmatprep.mubr.bf16.mxu0 0
      %904 = vmatmul.mubr.bf16.gmra.mxu0 %v417
      %v905 = vpop.f32.mrf.mxu0
      %v906 = vadd.f32 %v853, %v905
      %v907 = vpop.f32.mrf.mxu0
      %v908 = vadd.f32 %v855, %v907
      %v909 = vpop.f32.mrf.mxu0
      %v910 = vadd.f32 %v857, %v909
      %v911 = vpop.f32.mrf.mxu0
      %v912 = vadd.f32 %v859, %v911
      %913 = vdwg.mxu0
      %914 = vmatprep.subr.bf16.mxu0 0
      %915 = vmatpush1.bf16.msra.mxu0 %v687
      %916 = vmatprep.subr.bf16.mxu0 0
      %917 = vmatpush1.bf16.msra.mxu0 %v684
      %918 = vmatprep.subr.bf16.mxu0 0
      %919 = vmatpush1.bf16.msra.mxu0 %v681
      %920 = vmatprep.subr.bf16.mxu0 0
      %921 = vmatpush1.bf16.msra.mxu0 %v678
      %922 = vmatprep.subr.bf16.mxu0 0
      %923 = vmatpush1.bf16.msra.mxu0 %v675
      %924 = vmatprep.subr.bf16.mxu0 0
      %925 = vmatpush1.bf16.msra.mxu0 %v672
      %926 = vmatprep.subr.bf16.mxu0 0
      %927 = vmatpush1.bf16.msra.mxu0 %v669
      %928 = vmatprep.subr.bf16.mxu0 0
      %929 = vmatpush1.bf16.msra.mxu0 %v666
      %930 = vmatprep.subr.bf16.mxu0 0
      %931 = vmatpush2.bf16.msra.mxu0 %v711
      %932 = vmatprep.subr.bf16.mxu0 0
      %933 = vmatpush2.bf16.msra.mxu0 %v708
      %934 = vmatprep.subr.bf16.mxu0 0
      %935 = vmatpush2.bf16.msra.mxu0 %v705
      %936 = vmatprep.subr.bf16.mxu0 0
      %937 = vmatpush2.bf16.msra.mxu0 %v702
      %938 = vmatprep.subr.bf16.mxu0 0
      %939 = vmatpush2.bf16.msra.mxu0 %v699
      %940 = vmatprep.subr.bf16.mxu0 0
      %941 = vmatpush2.bf16.msra.mxu0 %v696
      %942 = vmatprep.subr.bf16.mxu0 0
      %943 = vmatpush2.bf16.msra.mxu0 %v693
      %944 = vmatprep.subr.bf16.mxu0 0
      %945 = vmatpush2.bf16.msra.mxu0 %v690
      %946 = vmatprep.mubr.bf16.mxu0 %v413
      %947 = vmatmul.mubr.bf16.gmra.mxu0 %v412
      %v948 = vpop.f32.mrf.mxu0
      %v949 = vadd.f32 %v388, %v948
      %v950 = vpop.f32.mrf.mxu0
      %v951 = vpop.f32.mrf.mxu0
      %v952 = vadd.f32 %v388, %v951
      %v953 = vpop.f32.mrf.mxu0
      %954 = vmatprep.mubr.bf16.mxu0 %v416
      %955 = vmatmul.mubr.bf16.gmra.mxu0 %v415
      %v956 = vpop.f32.mrf.mxu0
      %v957 = vadd.f32 %v388, %v956
      %v958 = vpop.f32.mrf.mxu0
      %v959 = vpop.f32.mrf.mxu0
      %v960 = vadd.f32 %v388, %v959
      %v961 = vpop.f32.mrf.mxu0
      %962 = vdwg.mxu0
      %963 = vmatprep.subr.bf16.mxu0 0
      %964 = vmatpush1.bf16.msra.mxu0 %v735
      %965 = vmatprep.subr.bf16.mxu0 0
      %966 = vmatpush1.bf16.msra.mxu0 %v732
      %967 = vmatprep.subr.bf16.mxu0 0
      %968 = vmatpush1.bf16.msra.mxu0 %v729
      %969 = vmatprep.subr.bf16.mxu0 0
      %970 = vmatpush1.bf16.msra.mxu0 %v726
      %971 = vmatprep.subr.bf16.mxu0 0
      %972 = vmatpush1.bf16.msra.mxu0 %v723
      %973 = vmatprep.subr.bf16.mxu0 0
      %974 = vmatpush1.bf16.msra.mxu0 %v720
      %975 = vmatprep.subr.bf16.mxu0 0
      %976 = vmatpush1.bf16.msra.mxu0 %v717
      %977 = vmatprep.subr.bf16.mxu0 0
      %978 = vmatpush1.bf16.msra.mxu0 %v714
      %979 = vmatprep.subr.bf16.mxu0 0
      %980 = vmatpush2.bf16.msra.mxu0 0
      %981 = vmatprep.subr.bf16.mxu0 0
      %982 = vmatpush2.bf16.msra.mxu0 0
      %983 = vmatprep.subr.bf16.mxu0 0
      %984 = vmatpush2.bf16.msra.mxu0 0
      %985 = vmatprep.subr.bf16.mxu0 0
      %986 = vmatpush2.bf16.msra.mxu0 0
      %987 = vmatprep.subr.bf16.mxu0 0
      %988 = vmatpush2.bf16.msra.mxu0 0
      %989 = vmatprep.subr.bf16.mxu0 0
      %990 = vmatpush2.bf16.msra.mxu0 0
      %991 = vmatprep.subr.bf16.mxu0 0
      %992 = vmatpush2.bf16.msra.mxu0 0
      %993 = vmatprep.subr.bf16.mxu0 0
      %994 = vmatpush2.bf16.msra.mxu0 0
      %995 = vmatprep.mubr.bf16.mxu0 0
      %996 = vmatmul.mubr.bf16.gmra.mxu0 %v414
      %v997 = vpop.f32.mrf.mxu0
      %v998 = vadd.f32 %v949, %v997
      %v999 = vpop.f32.mrf.mxu0
      %v1000 = vpop.f32.mrf.mxu0
      %v1001 = vadd.f32 %v952, %v1000
      %v1002 = vpop.f32.mrf.mxu0
      %1003 = vmatprep.mubr.bf16.mxu0 0
      %1004 = vmatmul.mubr.bf16.gmra.mxu0 %v417
      %v1005 = vpop.f32.mrf.mxu0
      %v1006 = vadd.f32 %v957, %v1005
      %v1007 = vpop.f32.mrf.mxu0
      %v1008 = vpop.f32.mrf.mxu0
      %v1009 = vadd.f32 %v960, %v1008
      %v1010 = vpop.f32.mrf.mxu0
      %1011 = vdwg.mxu0
      %v1012 = vld [vmem:[#allocation2] sm:$0xff]
      %v1013 = vld [vmem:[#allocation2 + $0x8] sm:$0xff]
      %v1014 = vld [vmem:[#allocation2 + $0x10] sm:$0xff]
      %v1015 = vld [vmem:[#allocation2 + $0x18] sm:$0xff]
      %1016 = vst [vmem:[#allocation3 + $0x1] sm:$0xff] %v1012
      %1017 = vst [vmem:[#allocation3 + $0x9] sm:$0xff] %v1013
      %1018 = vst [vmem:[#allocation3 + $0x19] sm:$0xff] %v1014
      %1019 = vst [vmem:[#allocation3 + $0x21] sm:$0xff] %v1015
      %v1020 = vld [vmem:[#allocation3] sm:$0xff]
      %v1021 = vld [vmem:[#allocation3 + $0x8] sm:$0xff]
      %v1022 = vld [vmem:[#allocation3 + $0x18] sm:$0xff]
      %v1023 = vld [vmem:[#allocation3 + $0x20] sm:$0xff]
      %v1024 = vld [vmem:[#allocation3 + $0x1] sm:$0xff]
      %v1025 = vld [vmem:[#allocation3 + $0x9] sm:$0xff]
      %v1026 = vld [vmem:[#allocation3 + $0x19] sm:$0xff]
      %v1027 = vld [vmem:[#allocation3 + $0x21] sm:$0xff]
      %v1028 = vld [vmem:[#allocation3 + $0x2] sm:$0xff]
      %v1029 = vld [vmem:[#allocation3 + $0xa] sm:$0xff]
      %v1030 = vld [vmem:[#allocation3 + $0x1a] sm:$0xff]
      %v1031 = vld [vmem:[#allocation3 + $0x22] sm:$0xff]
      %v1032 = vpack.c.bf16 %v1021, %v1020
      %v1033 = vpack.c.bf16 %v1025, %v1024
      %v1034 = vpack.c.bf16 %v1029, %v1028
      %v1035 = vpack.c.bf16 %v1023, %v1022
      %v1036 = vpack.c.bf16 %v1027, %v1026
      %v1037 = vpack.c.bf16 %v1031, %v1030
      %v1038 = vld [vmem:[%s3] sm:$0xff]
      %v1039 = vld [vmem:[%s3 + $0x8] sm:$0xff]
      %v1040 = vld [vmem:[%s3 + $0x10] sm:$0xff]
      %v1041 = vld [vmem:[%s3 + $0x18] sm:$0xff]
      %v1042 = vld [vmem:[%s3 + $0x20] sm:$0xff]
      %v1043 = vld [vmem:[%s3 + $0x28] sm:$0xff]
      %v1044 = vld [vmem:[%s3 + $0x30] sm:$0xff]
      %v1045 = vld [vmem:[%s3 + $0x38] sm:$0xff]
      %v1046 = vld [vmem:[%s3 + $0x40] sm:$0xff]
      %v1047 = vld [vmem:[%s3 + $0x48] sm:$0xff]
      %v1048 = vld [vmem:[%s3 + $0x50] sm:$0xff]
      %v1049 = vld [vmem:[%s3 + $0x58] sm:$0xff]
      %v1050 = vld [vmem:[%s3 + $0x60] sm:$0xff]
      %v1051 = vld [vmem:[%s3 + $0x68] sm:$0xff]
      %v1052 = vld [vmem:[%s3 + $0x70] sm:$0xff]
      %v1053 = vld [vmem:[%s3 + $0x78] sm:$0xff]
      %v1054 = vld [vmem:[%s3 + $0x80] sm:$0xff]
      %v1055 = vld [vmem:[%s3 + $0x88] sm:$0xff]
      %v1056 = vld [vmem:[%s3 + $0x90] sm:$0xff]
      %v1057 = vld [vmem:[%s3 + $0x98] sm:$0xff]
      %v1058 = vld [vmem:[%s3 + $0xa0] sm:$0xff]
      %v1059 = vld [vmem:[%s3 + $0xa8] sm:$0xff]
      %v1060 = vld [vmem:[%s3 + $0xb0] sm:$0xff]
      %v1061 = vld [vmem:[%s3 + $0xb8] sm:$0xff]
      %v1062 = vld [vmem:[%s3 + $0xc0] sm:$0xff]
      %v1063 = vld [vmem:[%s3 + $0xc8] sm:$0xff]
      %v1064 = vld [vmem:[%s3 + $0xd0] sm:$0xff]
      %v1065 = vld [vmem:[%s3 + $0xd8] sm:$0xff]
      %v1066 = vld [vmem:[%s3 + $0xe0] sm:$0xff]
      %v1067 = vld [vmem:[%s3 + $0xe8] sm:$0xff]
      %v1068 = vld [vmem:[%s3 + $0xf0] sm:$0xff]
      %v1069 = vld [vmem:[%s3 + $0xf8] sm:$0xff]
      %v1070 = vld [vmem:[%s3 + $0x100] sm:$0xff]
      %v1071 = vld [vmem:[%s3 + $0x108] sm:$0xff]
      %v1072 = vld [vmem:[%s3 + $0x110] sm:$0xff]
      %v1073 = vld [vmem:[%s3 + $0x118] sm:$0xff]
      %v1074 = vld [vmem:[%s3 + $0x120] sm:$0xff]
      %v1075 = vld [vmem:[%s3 + $0x128] sm:$0xff]
      %v1076 = vld [vmem:[%s3 + $0x130] sm:$0xff]
      %v1077 = vld [vmem:[%s3 + $0x138] sm:$0xff]
      %v1078 = vld [vmem:[%s3 + $0x140] sm:$0xff]
      %v1079 = vld [vmem:[%s3 + $0x148] sm:$0xff]
      %v1080 = vld [vmem:[%s3 + $0x150] sm:$0xff]
      %v1081 = vld [vmem:[%s3 + $0x158] sm:$0xff]
      %v1082 = vld [vmem:[%s3 + $0x160] sm:$0xff]
      %v1083 = vld [vmem:[%s3 + $0x168] sm:$0xff]
      %v1084 = vld [vmem:[%s3 + $0x170] sm:$0xff]
      %v1085 = vld [vmem:[%s3 + $0x178] sm:$0xff]
      %v1134 = vunpack.c.l.b16 %v1038
      %v1135 = vunpack.c.h.b16 %v1038
      %v1136 = vunpack.c.l.b16 %v1039
      %v1137 = vunpack.c.h.b16 %v1039
      %v1138 = vunpack.c.l.b16 %v1040
      %v1139 = vunpack.c.h.b16 %v1040
      %v1140 = vunpack.c.l.b16 %v1041
      %v1141 = vunpack.c.h.b16 %v1041
      %v1142 = vunpack.c.l.b16 %v1042
      %v1143 = vunpack.c.h.b16 %v1042
      %v1144 = vunpack.c.l.b16 %v1043
      %v1145 = vunpack.c.h.b16 %v1043
      %v1146 = vunpack.c.l.b16 %v1044
      %v1147 = vunpack.c.h.b16 %v1044
      %v1148 = vunpack.c.l.b16 %v1045
      %v1149 = vunpack.c.h.b16 %v1045
      %v1150 = vunpack.c.l.b16 %v1046
      %v1151 = vunpack.c.h.b16 %v1046
      %v1152 = vunpack.c.l.b16 %v1047
      %v1153 = vunpack.c.h.b16 %v1047
      %v1154 = vunpack.c.l.b16 %v1048
      %v1155 = vunpack.c.h.b16 %v1048
      %v1156 = vunpack.c.l.b16 %v1049
      %v1157 = vunpack.c.h.b16 %v1049
      %v1158 = vunpack.c.l.b16 %v1050
      %v1159 = vunpack.c.h.b16 %v1050
      %v1160 = vunpack.c.l.b16 %v1051
      %v1161 = vunpack.c.h.b16 %v1051
      %v1162 = vunpack.c.l.b16 %v1052
      %v1163 = vunpack.c.h.b16 %v1052
      %v1164 = vunpack.c.l.b16 %v1053
      %v1165 = vunpack.c.h.b16 %v1053
      %v1166 = vunpack.c.l.b16 %v1054
      %v1167 = vunpack.c.h.b16 %v1054
      %v1168 = vunpack.c.l.b16 %v1055
      %v1169 = vunpack.c.h.b16 %v1055
      %v1170 = vunpack.c.l.b16 %v1056
      %v1171 = vunpack.c.h.b16 %v1056
      %v1172 = vunpack.c.l.b16 %v1057
      %v1173 = vunpack.c.h.b16 %v1057
      %v1174 = vunpack.c.l.b16 %v1058
      %v1175 = vunpack.c.h.b16 %v1058
      %v1176 = vunpack.c.l.b16 %v1059
      %v1177 = vunpack.c.h.b16 %v1059
      %v1178 = vunpack.c.l.b16 %v1060
      %v1179 = vunpack.c.h.b16 %v1060
      %v1180 = vunpack.c.l.b16 %v1061
      %v1181 = vunpack.c.h.b16 %v1061
      %v1182 = vunpack.c.l.b16 %v1062
      %v1183 = vunpack.c.h.b16 %v1062
      %v1184 = vunpack.c.l.b16 %v1063
      %v1185 = vunpack.c.h.b16 %v1063
      %v1186 = vunpack.c.l.b16 %v1064
      %v1187 = vunpack.c.h.b16 %v1064
      %v1188 = vunpack.c.l.b16 %v1065
      %v1189 = vunpack.c.h.b16 %v1065
      %v1190 = vunpack.c.l.b16 %v1066
      %v1191 = vunpack.c.h.b16 %v1066
      %v1192 = vunpack.c.l.b16 %v1067
      %v1193 = vunpack.c.h.b16 %v1067
      %v1194 = vunpack.c.l.b16 %v1068
      %v1195 = vunpack.c.h.b16 %v1068
      %v1196 = vunpack.c.l.b16 %v1069
      %v1197 = vunpack.c.h.b16 %v1069
      %v1198 = vunpack.c.l.b16 %v1070
      %v1199 = vunpack.c.h.b16 %v1070
      %v1200 = vunpack.c.l.b16 %v1071
      %v1201 = vunpack.c.h.b16 %v1071
      %v1202 = vunpack.c.l.b16 %v1072
      %v1203 = vunpack.c.h.b16 %v1072
      %v1204 = vunpack.c.l.b16 %v1073
      %v1205 = vunpack.c.h.b16 %v1073
      %v1206 = vunpack.c.l.b16 %v1074
      %v1207 = vunpack.c.h.b16 %v1074
      %v1208 = vunpack.c.l.b16 %v1075
      %v1209 = vunpack.c.h.b16 %v1075
      %v1210 = vunpack.c.l.b16 %v1076
      %v1211 = vunpack.c.h.b16 %v1076
      %v1212 = vunpack.c.l.b16 %v1077
      %v1213 = vunpack.c.h.b16 %v1077
      %v1214 = vunpack.c.l.b16 %v1078
      %v1215 = vunpack.c.h.b16 %v1078
      %v1216 = vunpack.c.l.b16 %v1079
      %v1217 = vunpack.c.h.b16 %v1079
      %v1218 = vunpack.c.l.b16 %v1080
      %v1219 = vunpack.c.h.b16 %v1080
      %v1220 = vunpack.c.l.b16 %v1081
      %v1221 = vunpack.c.h.b16 %v1081
      %v1222 = vunpack.c.l.b16 %v1082
      %v1223 = vunpack.c.h.b16 %v1082
      %v1224 = vunpack.c.l.b16 %v1083
      %v1225 = vunpack.c.h.b16 %v1083
      %v1226 = vunpack.c.l.b16 %v1084
      %v1227 = vunpack.c.h.b16 %v1084
      %v1228 = vunpack.c.l.b16 %v1085
      %v1229 = vunpack.c.h.b16 %v1085
      %v1230 = vpack.c.b16 %v1136, %v1134
      %v1231 = vpack.c.b16 %v1137, %v1135
      %v1232 = vpack.c.b16 %v1140, %v1138
      %v1233 = vpack.c.b16 %v1141, %v1139
      %v1234 = vpack.c.b16 %v1144, %v1142
      %v1235 = vpack.c.b16 %v1145, %v1143
      %v1236 = vpack.c.b16 %v1148, %v1146
      %v1237 = vpack.c.b16 %v1149, %v1147
      %v1238 = vpack.c.b16 %v1152, %v1150
      %v1239 = vpack.c.b16 %v1153, %v1151
      %v1240 = vpack.c.b16 %v1156, %v1154
      %v1241 = vpack.c.b16 %v1157, %v1155
      %v1242 = vpack.c.b16 %v1160, %v1158
      %v1243 = vpack.c.b16 %v1161, %v1159
      %v1244 = vpack.c.b16 %v1164, %v1162
      %v1245 = vpack.c.b16 %v1165, %v1163
      %v1246 = vpack.c.b16 %v1168, %v1166
      %v1247 = vpack.c.b16 %v1169, %v1167
      %v1248 = vpack.c.b16 %v1172, %v1170
      %v1249 = vpack.c.b16 %v1173, %v1171
      %v1250 = vpack.c.b16 %v1176, %v1174
      %v1251 = vpack.c.b16 %v1177, %v1175
      %v1252 = vpack.c.b16 %v1180, %v1178
      %v1253 = vpack.c.b16 %v1181, %v1179
      %v1254 = vpack.c.b16 %v1184, %v1182
      %v1255 = vpack.c.b16 %v1185, %v1183
      %v1256 = vpack.c.b16 %v1188, %v1186
      %v1257 = vpack.c.b16 %v1189, %v1187
      %v1258 = vpack.c.b16 %v1192, %v1190
      %v1259 = vpack.c.b16 %v1193, %v1191
      %v1260 = vpack.c.b16 %v1196, %v1194
      %v1261 = vpack.c.b16 %v1197, %v1195
      %v1262 = vpack.c.b16 %v1200, %v1198
      %v1263 = vpack.c.b16 %v1201, %v1199
      %v1264 = vpack.c.b16 %v1204, %v1202
      %v1265 = vpack.c.b16 %v1205, %v1203
      %v1266 = vpack.c.b16 %v1208, %v1206
      %v1267 = vpack.c.b16 %v1209, %v1207
      %v1268 = vpack.c.b16 %v1212, %v1210
      %v1269 = vpack.c.b16 %v1213, %v1211
      %v1270 = vpack.c.b16 %v1216, %v1214
      %v1271 = vpack.c.b16 %v1217, %v1215
      %v1272 = vpack.c.b16 %v1220, %v1218
      %v1273 = vpack.c.b16 %v1221, %v1219
      %v1274 = vpack.c.b16 %v1224, %v1222
      %v1275 = vpack.c.b16 %v1225, %v1223
      %v1276 = vpack.c.b16 %v1228, %v1226
      %v1277 = vpack.c.b16 %v1229, %v1227
      %1326 = vmatprep.subr.bf16.mxu0 %v1245
      %1327 = vmatpush1.bf16.msra.mxu0 %v1244
      %1328 = vmatprep.subr.bf16.mxu0 %v1243
      %1329 = vmatpush1.bf16.msra.mxu0 %v1242
      %1330 = vmatprep.subr.bf16.mxu0 %v1241
      %1331 = vmatpush1.bf16.msra.mxu0 %v1240
      %1332 = vmatprep.subr.bf16.mxu0 %v1239
      %1333 = vmatpush1.bf16.msra.mxu0 %v1238
      %1334 = vmatprep.subr.bf16.mxu0 %v1237
      %1335 = vmatpush1.bf16.msra.mxu0 %v1236
      %1336 = vmatprep.subr.bf16.mxu0 %v1235
      %1337 = vmatpush1.bf16.msra.mxu0 %v1234
      %1338 = vmatprep.subr.bf16.mxu0 %v1233
      %1339 = vmatpush1.bf16.msra.mxu0 %v1232
      %1340 = vmatprep.subr.bf16.mxu0 %v1231
      %1341 = vmatpush1.bf16.msra.mxu0 %v1230
      %1342 = vmatprep.subr.bf16.mxu0 %v1261
      %1343 = vmatpush2.bf16.msra.mxu0 %v1260
      %1344 = vmatprep.subr.bf16.mxu0 %v1259
      %1345 = vmatpush2.bf16.msra.mxu0 %v1258
      %1346 = vmatprep.subr.bf16.mxu0 %v1257
      %1347 = vmatpush2.bf16.msra.mxu0 %v1256
      %1348 = vmatprep.subr.bf16.mxu0 %v1255
      %1349 = vmatpush2.bf16.msra.mxu0 %v1254
      %1350 = vmatprep.subr.bf16.mxu0 %v1253
      %1351 = vmatpush2.bf16.msra.mxu0 %v1252
      %1352 = vmatprep.subr.bf16.mxu0 %v1251
      %1353 = vmatpush2.bf16.msra.mxu0 %v1250
      %1354 = vmatprep.subr.bf16.mxu0 %v1249
      %1355 = vmatpush2.bf16.msra.mxu0 %v1248
      %1356 = vmatprep.subr.bf16.mxu0 %v1247
      %1357 = vmatpush2.bf16.msra.mxu0 %v1246
      %1358 = vmatprep.mubr.bf16.mxu0 %v1033
      %1359 = vmatmul.mubr.bf16.gmra.mxu0 %v1032
      %v1360 = vpop.f32.mrf.mxu0
      %v1361 = vadd.f32 0.0, %v1360
      %v1362 = vpop.f32.mrf.mxu0
      %v1363 = vadd.f32 0.0, %v1362
      %v1364 = vpop.f32.mrf.mxu0
      %v1365 = vadd.f32 0.0, %v1364
      %v1366 = vpop.f32.mrf.mxu0
      %v1367 = vadd.f32 0.0, %v1366
      %1368 = vmatprep.mubr.bf16.mxu0 %v1036
      %1369 = vmatmul.mubr.bf16.gmra.mxu0 %v1035
      %v1370 = vpop.f32.mrf.mxu0
      %v1371 = vadd.f32 0.0, %v1370
      %v1372 = vpop.f32.mrf.mxu0
      %v1373 = vadd.f32 0.0, %v1372
      %v1374 = vpop.f32.mrf.mxu0
      %v1375 = vadd.f32 0.0, %v1374
      %v1376 = vpop.f32.mrf.mxu0
      %v1377 = vadd.f32 0.0, %v1376
      %1378 = vdwg.mxu0
      %1379 = vmatprep.subr.bf16.mxu0 %v1277
      %1380 = vmatpush1.bf16.msra.mxu0 %v1276
      %1381 = vmatprep.subr.bf16.mxu0 %v1275
      %1382 = vmatpush1.bf16.msra.mxu0 %v1274
      %1383 = vmatprep.subr.bf16.mxu0 %v1273
      %1384 = vmatpush1.bf16.msra.mxu0 %v1272
      %1385 = vmatprep.subr.bf16.mxu0 %v1271
      %1386 = vmatpush1.bf16.msra.mxu0 %v1270
      %1387 = vmatprep.subr.bf16.mxu0 %v1269
      %1388 = vmatpush1.bf16.msra.mxu0 %v1268
      %1389 = vmatprep.subr.bf16.mxu0 %v1267
      %1390 = vmatpush1.bf16.msra.mxu0 %v1266
      %1391 = vmatprep.subr.bf16.mxu0 %v1265
      %1392 = vmatpush1.bf16.msra.mxu0 %v1264
      %1393 = vmatprep.subr.bf16.mxu0 %v1263
      %1394 = vmatpush1.bf16.msra.mxu0 %v1262
      %1395 = vmatprep.subr.bf16.mxu0 0
      %1396 = vmatpush2.bf16.msra.mxu0 0
      %1397 = vmatprep.subr.bf16.mxu0 0
      %1398 = vmatpush2.bf16.msra.mxu0 0
      %1399 = vmatprep.subr.bf16.mxu0 0
      %1400 = vmatpush2.bf16.msra.mxu0 0
      %1401 = vmatprep.subr.bf16.mxu0 0
      %1402 = vmatpush2.bf16.msra.mxu0 0
      %1403 = vmatprep.subr.bf16.mxu0 0
      %1404 = vmatpush2.bf16.msra.mxu0 0
      %1405 = vmatprep.subr.bf16.mxu0 0
      %1406 = vmatpush2.bf16.msra.mxu0 0
      %1407 = vmatprep.subr.bf16.mxu0 0
      %1408 = vmatpush2.bf16.msra.mxu0 0
      %1409 = vmatprep.subr.bf16.mxu0 0
      %1410 = vmatpush2.bf16.msra.mxu0 0
      %1411 = vmatprep.mubr.bf16.mxu0 0
      %1412 = vmatmul.mubr.bf16.gmra.mxu0 %v1034
      %v1413 = vpop.f32.mrf.mxu0
      %v1414 = vadd.f32 %v1361, %v1413
      %v1415 = vpop.f32.mrf.mxu0
      %v1416 = vadd.f32 %v1363, %v1415
      %v1417 = vpop.f32.mrf.mxu0
      %v1418 = vadd.f32 %v1365, %v1417
      %v1419 = vpop.f32.mrf.mxu0
      %v1420 = vadd.f32 %v1367, %v1419
      %1421 = vmatprep.mubr.bf16.mxu0 0
      %1422 = vmatmul.mubr.bf16.gmra.mxu0 %v1037
      %v1423 = vpop.f32.mrf.mxu0
      %v1424 = vadd.f32 %v1371, %v1423
      %v1425 = vpop.f32.mrf.mxu0
      %v1426 = vadd.f32 %v1373, %v1425
      %v1427 = vpop.f32.mrf.mxu0
      %v1428 = vadd.f32 %v1375, %v1427
      %v1429 = vpop.f32.mrf.mxu0
      %v1430 = vadd.f32 %v1377, %v1429
      %1431 = vdwg.mxu0
      %v1432 = vadd.f32 %v896, %v1414
      %v1433 = vadd.f32 %v900, %v1418
      %v1434 = vadd.f32 %v906, %v1424
      %v1435 = vadd.f32 %v910, %v1428
      %v1436 = vxor.u32 %v1432, 2147483648
      %v1437 = vxor.u32 %v1433, 2147483648
      %v1438 = vxor.u32 %v1434, 2147483648
      %v1439 = vxor.u32 %v1435, 2147483648
      %v1440 = vmul.f32 %v1436, 1.442695
      %v1441 = vpow.pop %v1440
      %v1442 = vmul.f32 %v1437, 1.442695
      %v1443 = vpow.pop %v1442
      %v1444 = vmul.f32 %v1438, 1.442695
      %v1445 = vpow.pop %v1444
      %v1446 = vmul.f32 %v1439, 1.442695
      %v1447 = vpow.pop %v1446
      %v1448 = vadd.f32 %v1441, 1.0
      %v1449 = vadd.f32 %v1443, 1.0
      %v1450 = vadd.f32 %v1445, 1.0
      %v1451 = vadd.f32 %v1447, 1.0
      %v1452 = vrcp.pop %v1448
      %v1453 = vmul.f32 1.0, %v1452
      %v1454 = vrcp.pop %v1449
      %v1455 = vmul.f32 1.0, %v1454
      %v1456 = vrcp.pop %v1450
      %v1457 = vmul.f32 1.0, %v1456
      %v1458 = vrcp.pop %v1451
      %v1459 = vmul.f32 1.0, %v1458
      %v1460 = vadd.f32 %v898, %v1416
      %v1461 = vadd.f32 %v902, %v1420
      %v1462 = vadd.f32 %v908, %v1426
      %v1463 = vadd.f32 %v912, %v1430
      %v1464 = vxor.u32 %v1460, 2147483648
      %v1465 = vxor.u32 %v1461, 2147483648
      %v1466 = vxor.u32 %v1462, 2147483648
      %v1467 = vxor.u32 %v1463, 2147483648
      %v1468 = vmul.f32 %v1464, 1.442695
      %v1469 = vpow.pop %v1468
      %v1470 = vmul.f32 %v1465, 1.442695
      %v1471 = vpow.pop %v1470
      %v1472 = vmul.f32 %v1466, 1.442695
      %v1473 = vpow.pop %v1472
      %v1474 = vmul.f32 %v1467, 1.442695
      %v1475 = vpow.pop %v1474
      %v1476 = vadd.f32 %v1469, 1.0
      %v1477 = vadd.f32 %v1471, 1.0
      %v1478 = vadd.f32 %v1473, 1.0
      %v1479 = vadd.f32 %v1475, 1.0
      %v1480 = vrcp.pop %v1476
      %v1481 = vmul.f32 1.0, %v1480
      %v1482 = vrcp.pop %v1477
      %v1483 = vmul.f32 1.0, %v1482
      %v1484 = vrcp.pop %v1478
      %v1485 = vmul.f32 1.0, %v1484
      %v1486 = vrcp.pop %v1479
      %v1487 = vmul.f32 1.0, %v1486
      %v1488 = vmul.f32 %v1012, %v1481
      %v1489 = vmul.f32 %v1013, %v1483
      %v1490 = vmul.f32 %v1014, %v1485
      %v1491 = vmul.f32 %v1015, %v1487
      %1492 = vst [vmem:[#allocation3 + $0x1] sm:$0xff] %v1488
      %1493 = vst [vmem:[#allocation3 + $0x9] sm:$0xff] %v1489
      %1494 = vst [vmem:[#allocation3 + $0x19] sm:$0xff] %v1490
      %1495 = vst [vmem:[#allocation3 + $0x21] sm:$0xff] %v1491
      %v1496 = vld [vmem:[#allocation3] sm:$0xff]
      %v1497 = vld [vmem:[#allocation3 + $0x8] sm:$0xff]
      %v1498 = vld [vmem:[#allocation3 + $0x18] sm:$0xff]
      %v1499 = vld [vmem:[#allocation3 + $0x20] sm:$0xff]
      %v1500 = vld [vmem:[#allocation3 + $0x1] sm:$0xff]
      %v1501 = vld [vmem:[#allocation3 + $0x9] sm:$0xff]
      %v1502 = vld [vmem:[#allocation3 + $0x19] sm:$0xff]
      %v1503 = vld [vmem:[#allocation3 + $0x21] sm:$0xff]
      %v1504 = vld [vmem:[#allocation3 + $0x2] sm:$0xff]
      %v1505 = vld [vmem:[#allocation3 + $0xa] sm:$0xff]
      %v1506 = vld [vmem:[#allocation3 + $0x1a] sm:$0xff]
      %v1507 = vld [vmem:[#allocation3 + $0x22] sm:$0xff]
      %v1508 = vpack.c.bf16 %v1497, %v1496
      %v1509 = vpack.c.bf16 %v1501, %v1500
      %v1510 = vpack.c.bf16 %v1505, %v1504
      %v1511 = vpack.c.bf16 %v1499, %v1498
      %v1512 = vpack.c.bf16 %v1503, %v1502
      %v1513 = vpack.c.bf16 %v1507, %v1506
      %v1514 = vld [vmem:[%s4] sm:$0xf]
      %v1515 = vld [vmem:[%s4 + $0x4] sm:$0xf]
      %v1516 = vld [vmem:[%s4 + $0x8] sm:$0xf]
      %v1517 = vld [vmem:[%s4 + $0xc] sm:$0xf]
      %v1518 = vld [vmem:[%s4 + $0x10] sm:$0xf]
      %v1519 = vld [vmem:[%s4 + $0x14] sm:$0xf]
      %v1520 = vld [vmem:[%s4 + $0x18] sm:$0xf]
      %v1521 = vld [vmem:[%s4 + $0x1c] sm:$0xf]
      %v1522 = vld [vmem:[%s4 + $0x20] sm:$0xf]
      %v1523 = vld [vmem:[%s4 + $0x24] sm:$0xf]
      %v1524 = vld [vmem:[%s4 + $0x28] sm:$0xf]
      %v1525 = vld [vmem:[%s4 + $0x2c] sm:$0xf]
      %v1526 = vld [vmem:[%s4 + $0x30] sm:$0xf]
      %v1527 = vld [vmem:[%s4 + $0x34] sm:$0xf]
      %v1528 = vld [vmem:[%s4 + $0x38] sm:$0xf]
      %v1529 = vld [vmem:[%s4 + $0x3c] sm:$0xf]
      %v1530 = vld [vmem:[%s4 + $0x40] sm:$0xf]
      %v1531 = vld [vmem:[%s4 + $0x44] sm:$0xf]
      %v1532 = vld [vmem:[%s4 + $0x48] sm:$0xf]
      %v1533 = vld [vmem:[%s4 + $0x4c] sm:$0xf]
      %v1534 = vld [vmem:[%s4 + $0x50] sm:$0xf]
      %v1535 = vld [vmem:[%s4 + $0x54] sm:$0xf]
      %v1536 = vld [vmem:[%s4 + $0x58] sm:$0xf]
      %v1537 = vld [vmem:[%s4 + $0x5c] sm:$0xf]
      %v1538 = vld [vmem:[%s4 + $0x60] sm:$0xf]
      %v1539 = vld [vmem:[%s4 + $0x64] sm:$0xf]
      %v1540 = vld [vmem:[%s4 + $0x68] sm:$0xf]
      %v1541 = vld [vmem:[%s4 + $0x6c] sm:$0xf]
      %v1542 = vld [vmem:[%s4 + $0x70] sm:$0xf]
      %v1543 = vld [vmem:[%s4 + $0x74] sm:$0xf]
      %v1544 = vld [vmem:[%s4 + $0x78] sm:$0xf]
      %v1545 = vld [vmem:[%s4 + $0x7c] sm:$0xf]
      %v1546 = vld [vmem:[%s4 + $0x80] sm:$0xf]
      %v1547 = vld [vmem:[%s4 + $0x84] sm:$0xf]
      %v1548 = vld [vmem:[%s4 + $0x88] sm:$0xf]
      %v1549 = vld [vmem:[%s4 + $0x8c] sm:$0xf]
      %v1550 = vld [vmem:[%s4 + $0x90] sm:$0xf]
      %v1551 = vld [vmem:[%s4 + $0x94] sm:$0xf]
      %v1552 = vld [vmem:[%s4 + $0x98] sm:$0xf]
      %v1553 = vld [vmem:[%s4 + $0x9c] sm:$0xf]
      %v1554 = vld [vmem:[%s4 + $0xa0] sm:$0xf]
      %v1555 = vld [vmem:[%s4 + $0xa4] sm:$0xf]
      %v1556 = vld [vmem:[%s4 + $0xa8] sm:$0xf]
      %v1557 = vld [vmem:[%s4 + $0xac] sm:$0xf]
      %v1558 = vld [vmem:[%s4 + $0xb0] sm:$0xf]
      %v1559 = vld [vmem:[%s4 + $0xb4] sm:$0xf]
      %v1560 = vld [vmem:[%s4 + $0xb8] sm:$0xf]
      %v1561 = vld [vmem:[%s4 + $0xbc] sm:$0xf]
      %v1610 = vunpack.c.l.b16 %v1514
      %v1611 = vunpack.c.l.b16 %v1515
      %v1612 = vunpack.c.l.b16 %v1516
      %v1613 = vunpack.c.l.b16 %v1517
      %v1614 = vunpack.c.l.b16 %v1518
      %v1615 = vunpack.c.l.b16 %v1519
      %v1616 = vunpack.c.l.b16 %v1520
      %v1617 = vunpack.c.l.b16 %v1521
      %v1618 = vunpack.c.l.b16 %v1522
      %v1619 = vunpack.c.l.b16 %v1523
      %v1620 = vunpack.c.l.b16 %v1524
      %v1621 = vunpack.c.l.b16 %v1525
      %v1622 = vunpack.c.l.b16 %v1526
      %v1623 = vunpack.c.l.b16 %v1527
      %v1624 = vunpack.c.l.b16 %v1528
      %v1625 = vunpack.c.l.b16 %v1529
      %v1626 = vunpack.c.l.b16 %v1530
      %v1627 = vunpack.c.l.b16 %v1531
      %v1628 = vunpack.c.l.b16 %v1532
      %v1629 = vunpack.c.l.b16 %v1533
      %v1630 = vunpack.c.l.b16 %v1534
      %v1631 = vunpack.c.l.b16 %v1535
      %v1632 = vunpack.c.l.b16 %v1536
      %v1633 = vunpack.c.l.b16 %v1537
      %v1634 = vunpack.c.l.b16 %v1538
      %v1635 = vunpack.c.l.b16 %v1539
      %v1636 = vunpack.c.l.b16 %v1540
      %v1637 = vunpack.c.l.b16 %v1541
      %v1638 = vunpack.c.l.b16 %v1542
      %v1639 = vunpack.c.l.b16 %v1543
      %v1640 = vunpack.c.l.b16 %v1544
      %v1641 = vunpack.c.l.b16 %v1545
      %v1642 = vunpack.c.l.b16 %v1546
      %v1643 = vunpack.c.l.b16 %v1547
      %v1644 = vunpack.c.l.b16 %v1548
      %v1645 = vunpack.c.l.b16 %v1549
      %v1646 = vunpack.c.l.b16 %v1550
      %v1647 = vunpack.c.l.b16 %v1551
      %v1648 = vunpack.c.l.b16 %v1552
      %v1649 = vunpack.c.l.b16 %v1553
      %v1650 = vunpack.c.l.b16 %v1554
      %v1651 = vunpack.c.l.b16 %v1555
      %v1652 = vunpack.c.l.b16 %v1556
      %v1653 = vunpack.c.l.b16 %v1557
      %v1654 = vunpack.c.l.b16 %v1558
      %v1655 = vunpack.c.l.b16 %v1559
      %v1656 = vunpack.c.l.b16 %v1560
      %v1657 = vunpack.c.l.b16 %v1561
      %v1658 = vpack.c.b16 %v1611, %v1610
      %v1659 = vpack.c.b16 %v1613, %v1612
      %v1660 = vpack.c.b16 %v1615, %v1614
      %v1661 = vpack.c.b16 %v1617, %v1616
      %v1662 = vpack.c.b16 %v1619, %v1618
      %v1663 = vpack.c.b16 %v1621, %v1620
      %v1664 = vpack.c.b16 %v1623, %v1622
      %v1665 = vpack.c.b16 %v1625, %v1624
      %v1666 = vpack.c.b16 %v1627, %v1626
      %v1667 = vpack.c.b16 %v1629, %v1628
      %v1668 = vpack.c.b16 %v1631, %v1630
      %v1669 = vpack.c.b16 %v1633, %v1632
      %v1670 = vpack.c.b16 %v1635, %v1634
      %v1671 = vpack.c.b16 %v1637, %v1636
      %v1672 = vpack.c.b16 %v1639, %v1638
      %v1673 = vpack.c.b16 %v1641, %v1640
      %v1674 = vpack.c.b16 %v1643, %v1642
      %v1675 = vpack.c.b16 %v1645, %v1644
      %v1676 = vpack.c.b16 %v1647, %v1646
      %v1677 = vpack.c.b16 %v1649, %v1648
      %v1678 = vpack.c.b16 %v1651, %v1650
      %v1679 = vpack.c.b16 %v1653, %v1652
      %v1680 = vpack.c.b16 %v1655, %v1654
      %v1681 = vpack.c.b16 %v1657, %v1656
      %1706 = vmatprep.subr.bf16.mxu0 0
      %1707 = vmatpush1.bf16.msra.mxu0 %v1665
      %1708 = vmatprep.subr.bf16.mxu0 0
      %1709 = vmatpush1.bf16.msra.mxu0 %v1664
      %1710 = vmatprep.subr.bf16.mxu0 0
      %1711 = vmatpush1.bf16.msra.mxu0 %v1663
      %1712 = vmatprep.subr.bf16.mxu0 0
      %1713 = vmatpush1.bf16.msra.mxu0 %v1662
      %1714 = vmatprep.subr.bf16.mxu0 0
      %1715 = vmatpush1.bf16.msra.mxu0 %v1661
      %1716 = vmatprep.subr.bf16.mxu0 0
      %1717 = vmatpush1.bf16.msra.mxu0 %v1660
      %1718 = vmatprep.subr.bf16.mxu0 0
      %1719 = vmatpush1.bf16.msra.mxu0 %v1659
      %1720 = vmatprep.subr.bf16.mxu0 0
      %1721 = vmatpush1.bf16.msra.mxu0 %v1658
      %1722 = vmatprep.subr.bf16.mxu0 0
      %1723 = vmatpush2.bf16.msra.mxu0 %v1673
      %1724 = vmatprep.subr.bf16.mxu0 0
      %1725 = vmatpush2.bf16.msra.mxu0 %v1672
      %1726 = vmatprep.subr.bf16.mxu0 0
      %1727 = vmatpush2.bf16.msra.mxu0 %v1671
      %1728 = vmatprep.subr.bf16.mxu0 0
      %1729 = vmatpush2.bf16.msra.mxu0 %v1670
      %1730 = vmatprep.subr.bf16.mxu0 0
      %1731 = vmatpush2.bf16.msra.mxu0 %v1669
      %1732 = vmatprep.subr.bf16.mxu0 0
      %1733 = vmatpush2.bf16.msra.mxu0 %v1668
      %1734 = vmatprep.subr.bf16.mxu0 0
      %1735 = vmatpush2.bf16.msra.mxu0 %v1667
      %1736 = vmatprep.subr.bf16.mxu0 0
      %1737 = vmatpush2.bf16.msra.mxu0 %v1666
      %1738 = vmatprep.mubr.bf16.mxu0 %v1509
      %1739 = vmatmul.mubr.bf16.gmra.mxu0 %v1508
      %v1740 = vpop.f32.mrf.mxu0
      %v1741 = vadd.f32 0.0, %v1740
      %v1742 = vpop.f32.mrf.mxu0
      %v1743 = vpop.f32.mrf.mxu0
      %v1744 = vadd.f32 0.0, %v1743
      %v1745 = vpop.f32.mrf.mxu0
      %1746 = vmatprep.mubr.bf16.mxu0 %v1512
      %1747 = vmatmul.mubr.bf16.gmra.mxu0 %v1511
      %v1748 = vpop.f32.mrf.mxu0
      %v1749 = vadd.f32 0.0, %v1748
      %v1750 = vpop.f32.mrf.mxu0
      %v1751 = vpop.f32.mrf.mxu0
      %v1752 = vadd.f32 0.0, %v1751
      %v1753 = vpop.f32.mrf.mxu0
      %1754 = vdwg.mxu0
      %1755 = vmatprep.subr.bf16.mxu0 0
      %1756 = vmatpush1.bf16.msra.mxu0 %v1681
      %1757 = vmatprep.subr.bf16.mxu0 0
      %1758 = vmatpush1.bf16.msra.mxu0 %v1680
      %1759 = vmatprep.subr.bf16.mxu0 0
      %1760 = vmatpush1.bf16.msra.mxu0 %v1679
      %1761 = vmatprep.subr.bf16.mxu0 0
      %1762 = vmatpush1.bf16.msra.mxu0 %v1678
      %1763 = vmatprep.subr.bf16.mxu0 0
      %1764 = vmatpush1.bf16.msra.mxu0 %v1677
      %1765 = vmatprep.subr.bf16.mxu0 0
      %1766 = vmatpush1.bf16.msra.mxu0 %v1676
      %1767 = vmatprep.subr.bf16.mxu0 0
      %1768 = vmatpush1.bf16.msra.mxu0 %v1675
      %1769 = vmatprep.subr.bf16.mxu0 0
      %1770 = vmatpush1.bf16.msra.mxu0 %v1674
      %1771 = vmatprep.subr.bf16.mxu0 0
      %1772 = vmatpush2.bf16.msra.mxu0 0
      %1773 = vmatprep.subr.bf16.mxu0 0
      %1774 = vmatpush2.bf16.msra.mxu0 0
      %1775 = vmatprep.subr.bf16.mxu0 0
      %1776 = vmatpush2.bf16.msra.mxu0 0
      %1777 = vmatprep.subr.bf16.mxu0 0
      %1778 = vmatpush2.bf16.msra.mxu0 0
      %1779 = vmatprep.subr.bf16.mxu0 0
      %1780 = vmatpush2.bf16.msra.mxu0 0
      %1781 = vmatprep.subr.bf16.mxu0 0
      %1782 = vmatpush2.bf16.msra.mxu0 0
      %1783 = vmatprep.subr.bf16.mxu0 0
      %1784 = vmatpush2.bf16.msra.mxu0 0
      %1785 = vmatprep.subr.bf16.mxu0 0
      %1786 = vmatpush2.bf16.msra.mxu0 0
      %1787 = vmatprep.mubr.bf16.mxu0 0
      %1788 = vmatmul.mubr.bf16.gmra.mxu0 %v1510
      %v1789 = vpop.f32.mrf.mxu0
      %v1790 = vadd.f32 %v1741, %v1789
      %v1791 = vpop.f32.mrf.mxu0
      %v1792 = vpop.f32.mrf.mxu0
      %v1793 = vadd.f32 %v1744, %v1792
      %v1794 = vpop.f32.mrf.mxu0
      %1795 = vmatprep.mubr.bf16.mxu0 0
      %1796 = vmatmul.mubr.bf16.gmra.mxu0 %v1513
      %v1797 = vpop.f32.mrf.mxu0
      %v1798 = vadd.f32 %v1749, %v1797
      %v1799 = vpop.f32.mrf.mxu0
      %v1800 = vpop.f32.mrf.mxu0
      %v1801 = vadd.f32 %v1752, %v1800
      %v1802 = vpop.f32.mrf.mxu0
      %1803 = vdwg.mxu0
      %v1804 = vadd.f32 %v998, %v1790
      %v1805 = vadd.f32 %v1001, %v1793
      %v1806 = vadd.f32 %v1006, %v1798
      %v1807 = vadd.f32 %v1009, %v1801
      %v1808 = vtanh.pop %v1804
      %v1809 = vtanh.pop %v1805
      %v1810 = vtanh.pop %v1806
      %v1811 = vtanh.pop %v1807
      %v1812 = vsub.f32 1.0, %v1453
      %v1813 = vsub.f32 1.0, %v1455
      %v1814 = vsub.f32 1.0, %v1457
      %v1815 = vsub.f32 1.0, %v1459
      %v1816 = vmul.f32 %v1012, %v1812
      %v1817 = vmul.f32 %v1013, %v1813
      %v1818 = vmul.f32 %v1014, %v1814
      %v1819 = vmul.f32 %v1015, %v1815
      %v1820 = vmul.f32 %v1808, %v1453
      %v1821 = vmul.f32 %v1809, %v1455
      %v1822 = vmul.f32 %v1810, %v1457
      %v1823 = vmul.f32 %v1811, %v1459
      %v1824 = vadd.f32 %v1816, %v1820
      %v1825 = vadd.f32 %v1817, %v1821
      %v1826 = vadd.f32 %v1818, %v1822
      %v1827 = vadd.f32 %v1819, %v1823
      %1828 = vst [vmem:[#allocation2] sm:$0xff] %v1824
      %1829 = vst [vmem:[#allocation2 + $0x8] sm:$0xff] %v1825
      %1830 = vst [vmem:[#allocation2 + $0x10] sm:$0xff] %v1826
      %1831 = vst [vmem:[#allocation2 + $0x18] sm:$0xff] %v1827
      %1832 = vst [vmem:[%s251] sm:$0xff] %v1824
      %1833 = vst [vmem:[%s251 + $0x8] sm:$0xff] %v1825
      %1834 = vst [vmem:[%s251 + $0x10] sm:$0xff] %v1826
      %1835 = vst [vmem:[%s251 + $0x18] sm:$0xff] %v1827
      %p1836 = scmp.lt.s32.totalorder %s17, 3
      %s1837 = scalar_select %p1836, %s17, 3
      %s1838 = smul.addr %s1837, 4
      %s1839 = smul.addr %s1838, 8
      %s1840 = scalar_lea.vmem %s6, %s1839
      // Predicated region
      $region49: #{mdcnn_gru_forward.2} parent=43 // pred_check
        %p1841 = pneg %p166
      $region50: #{mdcnn_gru_forward.2} parent=43 // pred_check_branch
        %1843 = sbr.rel (%p1841) target = $region52
      $region51: #{mdcnn_gru_forward.2} parent=43 // pred_region
        _
      $region52: #{mdcnn_gru_forward.2} parent=43 // pred_fallthru
        _
    $region44: #{mdcnn_gru_forward.2} parent=5 // pred_fallthru
      _
    %p1844 = scmp.le.s32.totalorder 2, %s12
    // Predicated region
    $region53: #{mdcnn_gru_forward.2} parent=5 // pred_check
      %p1845 = pneg %p1844
    $region54: #{mdcnn_gru_forward.2} parent=5 // pred_check_branch
      %1847 = sbr.rel (%p1845) target = $region56
    $region55: #{mdcnn_gru_forward.2} parent=5 // pred_region
      %s1848 = ssub.s32 %s12, 2
      // Predicated region
      $region57: #{mdcnn_gru_forward.2} parent=55 // pred_check
        %p1849 = pneg %p172
      $region58: #{mdcnn_gru_forward.2} parent=55 // pred_check_branch
        %1851 = sbr.rel (%p1849) target = $region60
      $region59: #{mdcnn_gru_forward.2} parent=55 // pred_region
        %p1852 = scmp.lt.s32.totalorder %s18, 3
        %s1853 = scalar_select %p1852, %s18, 3
        %s1854 = smul.addr %s1853, 4
        %s1855 = smul.addr %s1854, 8
        %s1856 = scalar_lea.vmem %s6, %s1855
      $region60: #{mdcnn_gru_forward.2} parent=55 // pred_fallthru
        _
    $region56: #{mdcnn_gru_forward.2} parent=5 // pred_fallthru
      _
  $region6: #{mdcnn_gru_forward.2} parent=0 // loop_footer
    %s16 = sadd.s32 1, %s12
  $region7: #{mdcnn_gru_forward.2} parent=0 // loop_footer_branch
    %11 = sbr.rel target = $region3
  $region8: #{mdcnn_gru_forward.2} parent=0 // loop_exit
    _

// kernel: integer_pow.0
$region0: #{integer_pow.0}
  #allocation0 [shape = 's32[1]{0}', space=sflag, size = 0x4, scoped, tag = 'scoped memory for integer_pow.0']
  %s0 = inlined_call_operand.vmem [shape: f32[4,8,128], index: 0, kind: input, shape index: {}, may-alias: {0,1}]
  %s1 = inlined_call_operand.vmem [shape: f32[4,8,128], index: 1, kind: input, shape index: {}, may-alias: {0,1}]
  %s2 = inlined_call_operand.vmem [shape: f32[4,8,128], index: 2, kind: output, shape index: {}]
  %v3 = vld [vmem:[%s0] sm:$0xff]
  %v4 = vld [vmem:[%s1] sm:$0xff]
  %5 = xla_tuple %v3, %v4
  %6 = xla_tuple %5
  %v7 = vmul.f32 %v3, %v4
  %8 = xla_tuple %v7
  %9 = vst [vmem:[%s2] sm:$0xff] %v7
  %s10 = scalar_lea.vmem %s0, 8
  %v11 = vld [vmem:[%s10] sm:$0xff]
  %s12 = scalar_lea.vmem %s1, 8
  %v13 = vld [vmem:[%s12] sm:$0xff]
  %14 = xla_tuple %v11, %v13
  %15 = xla_tuple %14
  %v16 = vmul.f32 %v11, %v13
  %17 = xla_tuple %v16
  %s18 = scalar_lea.vmem %s2, 8
  %19 = vst [vmem:[%s18] sm:$0xff] %v16
  %s20 = scalar_lea.vmem %s0, 16
  %v21 = vld [vmem:[%s20] sm:$0xff]
  %s22 = scalar_lea.vmem %s1, 16
  %v23 = vld [vmem:[%s22] sm:$0xff]
  %24 = xla_tuple %v21, %v23
  %25 = xla_tuple %24
  %v26 = vmul.f32 %v21, %v23
  %27 = xla_tuple %v26
  %s28 = scalar_lea.vmem %s2, 16
  %29 = vst [vmem:[%s28] sm:$0xff] %v26
  %s30 = scalar_lea.vmem %s0, 24
  %v31 = vld [vmem:[%s30] sm:$0xff]
  %s32 = scalar_lea.vmem %s1, 24
  %v33 = vld [vmem:[%s32] sm:$0xff]
  %34 = xla_tuple %v31, %v33
  %35 = xla_tuple %34
  %v36 = vmul.f32 %v31, %v33
  %37 = xla_tuple %v36
  %s38 = scalar_lea.vmem %s2, 24
  %39 = vst [vmem:[%s38] sm:$0xff] %v36

// kernel: mdcnn_gru_forward.3
$region0: #{mdcnn_gru_forward.3}
  #allocation0 [shape = 'u32[]', space=smem, size = 0x4, offset = 0x4, fixed_abs, tag = 'smem constant byte address 0x4 - core index']
  #allocation1 [shape = 'u32[144,128]{1,0:T(1,128)}', space=vmem, size = 0x12000, scoped, tag = 'internal scratch']
  #allocation2 [shape = 'f32[8,128]{1,0:T(8,128)}', space=vmem, size = 0x1000, scoped, tag = 'scratch operand']
  #allocation3 [shape = 'f32[2,6,128]{2,1,0:T(8,128)}', space=vmem, size = 0x2000, scoped, tag = 'scratch operand']
  %s0 = inlined_call_operand.vmem [shape: bf16[4,8,1536], index: 0, kind: input, shape index: {}]
  %s1 = inlined_call_operand.vmem [shape: f32[8,128], index: 1, kind: input, shape index: {}]
  %s2 = inlined_call_operand.vmem [shape: bf16[1536,384], index: 2, kind: input, shape index: {}]
  %s3 = inlined_call_operand.vmem [shape: bf16[384,256], index: 3, kind: input, shape index: {}]
  %s4 = inlined_call_operand.vmem [shape: bf16[384,128], index: 4, kind: input, shape index: {}]
  %s5 = inlined_call_operand.vmem [shape: f32[1,384], index: 5, kind: input, shape index: {}]
  %s6 = inlined_call_operand.vmem [shape: f32[4,8,128], index: 6, kind: output, shape index: {}]
  %s7 = sld [smem:[#allocation0]]
  $region61: #{mdcnn_gru_forward.3} parent=0
    _
  %s9 = ssub.s32 1, %s7
  %s10 = scalar_select 0, %s9, %s7
  loop: start=0, step=1, limit=6
  $region2: #{mdcnn_gru_forward.3} parent=0 // loop_pre_header
    _
  $region3: #{mdcnn_gru_forward.3} parent=0 // loop_header
    %s12 = sphi 0, %s16
    %p13 = scmp.ge.s32.totalorder %s12, 6
    %s22 = sphi 0, %s24
    %s25 = sphi 0, %s22
    %s26 = sphi 0, %s25
    %s42 = sphi 0, %s26
    %s46 = sphi 0, %s46
    %s48 = sphi 0, %s46
    %s49 = sphi 0, %s48
    %s63 = sphi 0, %s49
    %s67 = sphi 0, %s67
    %s69 = sphi 0, %s67
    %s70 = sphi 0, %s69
    %s84 = sphi 0, %s70
    %s88 = sphi 0, %s88
    %s90 = sphi 0, %s88
    %s91 = sphi 0, %s90
    %s105 = sphi 0, %s91
    %s109 = sphi 0, %s109
    %s111 = sphi 0, %s109
    %s112 = sphi 0, %s111
    %s126 = sphi 0, %s112
    %s130 = sphi 0, %s130
    %s132 = sphi 0, %s130
    %s133 = sphi 0, %s132
    %s147 = sphi 0, %s133
    %s153 = sphi 0, %s155
    %s156 = sphi 0, %s153
    %s157 = sphi 0, %s156
    %s173 = sphi 0, %s157
  $region4: #{mdcnn_gru_forward.3} parent=0 // loop_header_branch
    %15 = sbr.rel (%p13) target = $region8
  $region5: #{mdcnn_gru_forward.3} parent=0 // loop_body
    %s17 = ssub.s32 %s12, 1
    %s18 = ssub.s32 %s12, 2
    %s19 = sadd.s32 %s12, 1
    %s20 = ssub.s32 %s12, %s19
    %p21 = scmp.eq.s32.totalorder %s20, 0
    %s23 = sadd.s32 %s22, 1
    %s24 = scalar_select %p21, %s22, %s23
    %p27 = pneg %p21
    %p28 = scmp.eq.s32.totalorder %s12, 3
    %p29 = por %p27, %p28
    %p30 = scmp.ne.s32.totalorder %s22, %s25
    %p31 = scmp.eq.s32.totalorder %s12, 0
    %p32 = por %p30, %p31
    %p33 = scmp.ne.s32.totalorder %s22, %s25
    %p34 = scmp.eq.s32.totalorder %s17, 3
    %p35 = por %p33, %p34
    %p36 = scmp.ne.s32.totalorder %s25, %s26
    %p37 = scmp.eq.s32.totalorder %s17, 0
    %p38 = por %p36, %p37
    %p39 = scmp.ne.s32.totalorder %s25, %s26
    %p40 = scmp.eq.s32.totalorder %s18, 3
    %p41 = por %p39, %p40
    %p43 = scmp.ne.s32.totalorder %s26, %s42
    %p44 = scmp.eq.s32.totalorder %s18, 0
    %p45 = por %p43, %p44
    %s47 = sadd.s32 %s46, 1
    %p50 = scmp.eq.s32.totalorder %s12, 3
    %p51 = scmp.ne.s32.totalorder %s46, %s48
    %p52 = scmp.eq.s32.totalorder %s12, 0
    %p53 = por %p51, %p52
    %p54 = scmp.ne.s32.totalorder %s46, %s48
    %p55 = scmp.eq.s32.totalorder %s17, 3
    %p56 = por %p54, %p55
    %p57 = scmp.ne.s32.totalorder %s48, %s49
    %p58 = scmp.eq.s32.totalorder %s17, 0
    %p59 = por %p57, %p58
    %p60 = scmp.ne.s32.totalorder %s48, %s49
    %p61 = scmp.eq.s32.totalorder %s18, 3
    %p62 = por %p60, %p61
    %p64 = scmp.ne.s32.totalorder %s49, %s63
    %p65 = scmp.eq.s32.totalorder %s18, 0
    %p66 = por %p64, %p65
    %s68 = sadd.s32 %s67, 1
    %p71 = scmp.eq.s32.totalorder %s12, 3
    %p72 = scmp.ne.s32.totalorder %s67, %s69
    %p73 = scmp.eq.s32.totalorder %s12, 0
    %p74 = por %p72, %p73
    %p75 = scmp.ne.s32.totalorder %s67, %s69
    %p76 = scmp.eq.s32.totalorder %s17, 3
    %p77 = por %p75, %p76
    %p78 = scmp.ne.s32.totalorder %s69, %s70
    %p79 = scmp.eq.s32.totalorder %s17, 0
    %p80 = por %p78, %p79
    %p81 = scmp.ne.s32.totalorder %s69, %s70
    %p82 = scmp.eq.s32.totalorder %s18, 3
    %p83 = por %p81, %p82
    %p85 = scmp.ne.s32.totalorder %s70, %s84
    %p86 = scmp.eq.s32.totalorder %s18, 0
    %p87 = por %p85, %p86
    %s89 = sadd.s32 %s88, 1
    %p92 = scmp.eq.s32.totalorder %s12, 3
    %p93 = scmp.ne.s32.totalorder %s88, %s90
    %p94 = scmp.eq.s32.totalorder %s12, 0
    %p95 = por %p93, %p94
    %p96 = scmp.ne.s32.totalorder %s88, %s90
    %p97 = scmp.eq.s32.totalorder %s17, 3
    %p98 = por %p96, %p97
    %p99 = scmp.ne.s32.totalorder %s90, %s91
    %p100 = scmp.eq.s32.totalorder %s17, 0
    %p101 = por %p99, %p100
    %p102 = scmp.ne.s32.totalorder %s90, %s91
    %p103 = scmp.eq.s32.totalorder %s18, 3
    %p104 = por %p102, %p103
    %p106 = scmp.ne.s32.totalorder %s91, %s105
    %p107 = scmp.eq.s32.totalorder %s18, 0
    %p108 = por %p106, %p107
    %s110 = sadd.s32 %s109, 1
    %p113 = scmp.eq.s32.totalorder %s12, 3
    %p114 = scmp.ne.s32.totalorder %s109, %s111
    %p115 = scmp.eq.s32.totalorder %s12, 0
    %p116 = por %p114, %p115
    %p117 = scmp.ne.s32.totalorder %s109, %s111
    %p118 = scmp.eq.s32.totalorder %s17, 3
    %p119 = por %p117, %p118
    %p120 = scmp.ne.s32.totalorder %s111, %s112
    %p121 = scmp.eq.s32.totalorder %s17, 0
    %p122 = por %p120, %p121
    %p123 = scmp.ne.s32.totalorder %s111, %s112
    %p124 = scmp.eq.s32.totalorder %s18, 3
    %p125 = por %p123, %p124
    %p127 = scmp.ne.s32.totalorder %s112, %s126
    %p128 = scmp.eq.s32.totalorder %s18, 0
    %p129 = por %p127, %p128
    %s131 = sadd.s32 %s130, 1
    %p134 = scmp.eq.s32.totalorder %s12, 3
    %p135 = scmp.ne.s32.totalorder %s130, %s132
    %p136 = scmp.eq.s32.totalorder %s12, 0
    %p137 = por %p135, %p136
    %p138 = scmp.ne.s32.totalorder %s130, %s132
    %p139 = scmp.eq.s32.totalorder %s17, 3
    %p140 = por %p138, %p139
    %p141 = scmp.ne.s32.totalorder %s132, %s133
    %p142 = scmp.eq.s32.totalorder %s17, 0
    %p143 = por %p141, %p142
    %p144 = scmp.ne.s32.totalorder %s132, %s133
    %p145 = scmp.eq.s32.totalorder %s18, 3
    %p146 = por %p144, %p145
    %p148 = scmp.ne.s32.totalorder %s133, %s147
    %p149 = scmp.eq.s32.totalorder %s18, 0
    %p150 = por %p148, %p149
    %s151 = ssub.s32 %s12, %s19
    %p152 = scmp.eq.s32.totalorder %s151, 0
    %s154 = sadd.s32 %s153, 1
    %s155 = scalar_select %p152, %s153, %s154
    %p158 = pneg %p152
    %p159 = scmp.eq.s32.totalorder %s12, 3
    %p160 = por %p158, %p159
    %p161 = scmp.ne.s32.totalorder %s153, %s156
    %p162 = scmp.eq.s32.totalorder %s12, 0
    %p163 = por %p161, %p162
    %p164 = scmp.ne.s32.totalorder %s153, %s156
    %p165 = scmp.eq.s32.totalorder %s17, 3
    %p166 = por %p164, %p165
    %p167 = scmp.ne.s32.totalorder %s156, %s157
    %p168 = scmp.eq.s32.totalorder %s17, 0
    %p169 = por %p167, %p168
    %p170 = scmp.ne.s32.totalorder %s156, %s157
    %p171 = scmp.eq.s32.totalorder %s18, 3
    %p172 = por %p170, %p171
    %p174 = scmp.ne.s32.totalorder %s157, %s173
    %p175 = scmp.eq.s32.totalorder %s18, 0
    %p176 = por %p174, %p175
    %p177 = scmp.le.s32.totalorder 1, %s12
    %p178 = scmp.lt.s32.totalorder %s12, 5
    %p179 = pnand %p177, %p178
    %p180 = pneg %p179
    // Predicated region
    $region9: #{mdcnn_gru_forward.3} parent=5 // pred_check
      _
    $region10: #{mdcnn_gru_forward.3} parent=5 // pred_check_branch
      %182 = sbr.rel (%p179) target = $region12
    $region11: #{mdcnn_gru_forward.3} parent=5 // pred_region
      %s183 = ssub.s32 %s12, 1
      // Predicated region
      $region13: #{mdcnn_gru_forward.3} parent=11 // pred_check
        %p184 = pneg %p59
      $region14: #{mdcnn_gru_forward.3} parent=11 // pred_check_branch
        %186 = sbr.rel (%p184) target = $region16
      $region15: #{mdcnn_gru_forward.3} parent=11 // pred_region
        _
      $region16: #{mdcnn_gru_forward.3} parent=11 // pred_fallthru
        _
      // Predicated region
      $region17: #{mdcnn_gru_forward.3} parent=11 // pred_check
        %p187 = pneg %p80
      $region18: #{mdcnn_gru_forward.3} parent=11 // pred_check_branch
        %189 = sbr.rel (%p187) target = $region20
      $region19: #{mdcnn_gru_forward.3} parent=11 // pred_region
        _
      $region20: #{mdcnn_gru_forward.3} parent=11 // pred_fallthru
        _
      // Predicated region
      $region21: #{mdcnn_gru_forward.3} parent=11 // pred_check
        %p190 = pneg %p101
      $region22: #{mdcnn_gru_forward.3} parent=11 // pred_check_branch
        %192 = sbr.rel (%p190) target = $region24
      $region23: #{mdcnn_gru_forward.3} parent=11 // pred_region
        _
      $region24: #{mdcnn_gru_forward.3} parent=11 // pred_fallthru
        _
      // Predicated region
      $region25: #{mdcnn_gru_forward.3} parent=11 // pred_check
        %p193 = pneg %p122
      $region26: #{mdcnn_gru_forward.3} parent=11 // pred_check_branch
        %195 = sbr.rel (%p193) target = $region28
      $region27: #{mdcnn_gru_forward.3} parent=11 // pred_region
        _
      $region28: #{mdcnn_gru_forward.3} parent=11 // pred_fallthru
        _
      // Predicated region
      $region29: #{mdcnn_gru_forward.3} parent=11 // pred_check
        %p196 = pneg %p143
      $region30: #{mdcnn_gru_forward.3} parent=11 // pred_check_branch
        %198 = sbr.rel (%p196) target = $region32
      $region31: #{mdcnn_gru_forward.3} parent=11 // pred_region
        _
      $region32: #{mdcnn_gru_forward.3} parent=11 // pred_fallthru
        _
    $region12: #{mdcnn_gru_forward.3} parent=5 // pred_fallthru
      _
    %p199 = scmp.lt.s32.totalorder %s12, 4
    // Predicated region
    $region33: #{mdcnn_gru_forward.3} parent=5 // pred_check
      %p200 = pneg %p199
    $region34: #{mdcnn_gru_forward.3} parent=5 // pred_check_branch
      %202 = sbr.rel (%p200) target = $region36
    $region35: #{mdcnn_gru_forward.3} parent=5 // pred_region
      // Predicated region
      $region37: #{mdcnn_gru_forward.3} parent=35 // pred_check
        %p203 = pneg %p32
      $region38: #{mdcnn_gru_forward.3} parent=35 // pred_check_branch
        %205 = sbr.rel (%p203) target = $region40
      $region39: #{mdcnn_gru_forward.3} parent=35 // pred_region
        %p206 = scmp.lt.s32.totalorder %s12, 3
        %s207 = scalar_select %p206, %s12, 3
        %s208 = smul.addr %s207, 12
        %s209 = smul.addr %s208, 4
        %s210 = scalar_lea.vmem %s0, %s209
      $region40: #{mdcnn_gru_forward.3} parent=35 // pred_fallthru
        _
    $region36: #{mdcnn_gru_forward.3} parent=5 // pred_fallthru
      _
    %p211 = scmp.le.s32.totalorder 1, %s12
    %p212 = scmp.lt.s32.totalorder %s12, 5
    %p213 = pnand %p211, %p212
    %p214 = pneg %p213
    // Predicated region
    $region41: #{mdcnn_gru_forward.3} parent=5 // pred_check
      _
    $region42: #{mdcnn_gru_forward.3} parent=5 // pred_check_branch
      %216 = sbr.rel (%p213) target = $region44
    $region43: #{mdcnn_gru_forward.3} parent=5 // pred_region
      %s217 = ssub.s32 %s12, 1
      %p218 = scmp.lt.s32.totalorder %s17, 3
      %s219 = scalar_select %p218, %s17, 3
      %s220 = smul.addr %s219, 12
      %s221 = smul.addr %s220, 4
      %s222 = scalar_lea.vmem %s0, %s221
      %p223 = pneg %p38
      %p224 = pneg %p35
      %p225 = pneg %p59
      %p226 = pneg %p56
      %p227 = pneg %p80
      %p228 = pneg %p77
      %p229 = pneg %p101
      %p230 = pneg %p98
      %p231 = pneg %p122
      %p232 = pneg %p119
      %p233 = pneg %p143
      %p234 = pneg %p140
      %p235 = pneg %p169
      %p236 = pneg %p166
      %p237 = scmp.lt.s32.totalorder %s17, 3
      %s238 = scalar_select %p237, %s17, 3
      %s239 = smul.addr %s238, 8
      %s240 = scalar_lea.vmem %s6, %s239
      %p241 = scmp.lt.s32.totalorder %s17, 3
      %s242 = scalar_select %p241, %s17, 3
      %s243 = smul.addr %s242, 12
      %s244 = smul.addr %s243, 4
      %s245 = scalar_lea.vmem %s0, %s244
      %p246 = scmp.lt.s32.totalorder %s17, 3
      %s247 = scalar_select %p246, %s17, 3
      %s248 = smul.addr %s247, 8
      %s249 = scalar_lea.vmem %s6, %s248
      %p251 = scmp.eq.s32.totalorder %s17, 0
      // Predicated region
      $region45: #{mdcnn_gru_forward.3} parent=43 // pred_check
        %p252 = pneg %p251
      $region46: #{mdcnn_gru_forward.3} parent=43 // pred_check_branch
        %254 = sbr.rel (%p252) target = $region48
      $region47: #{mdcnn_gru_forward.3} parent=43 // pred_region
        %v255 = vld [vmem:[%s1] sm:$0xff]
        %256 = vst [vmem:[#allocation2] sm:$0xff] %v255
        %257 = vst [vmem:[#allocation3] sm:$0x3f] 0.0
        %258 = vst [vmem:[#allocation3 + $0x8] sm:$0x3f] 0.0
      $region48: #{mdcnn_gru_forward.3} parent=43 // pred_fallthru
        _
      %v259 = vld [vmem:[%s245] sm:$0xff]
      %v260 = vld [vmem:[%s245 + $0x8] sm:$0xff]
      %v261 = vld [vmem:[%s245 + $0x10] sm:$0xff]
      %v262 = vld [vmem:[%s245 + $0x18] sm:$0xff]
      %v263 = vld [vmem:[%s245 + $0x20] sm:$0xff]
      %v264 = vld [vmem:[%s245 + $0x28] sm:$0xff]
      %v265 = vld [vmem:[%s2] sm:$0xff]
      %v266 = vld [vmem:[%s2 + $0x8] sm:$0xf]
      %v267 = vld [vmem:[%s2 + $0xc] sm:$0xff]
      %v268 = vld [vmem:[%s2 + $0x14] sm:$0xf]
      %v269 = vld [vmem:[%s2 + $0x18] sm:$0xff]
      %v270 = vld [vmem:[%s2 + $0x20] sm:$0xf]
      %v271 = vld [vmem:[%s2 + $0x24] sm:$0xff]
      %v272 = vld [vmem:[%s2 + $0x2c] sm:$0xf]
      %v273 = vld [vmem:[%s2 + $0x30] sm:$0xff]
      %v274 = vld [vmem:[%s2 + $0x38] sm:$0xf]
      %v275 = vld [vmem:[%s2 + $0x3c] sm:$0xff]
      %v276 = vld [vmem:[%s2 + $0x44] sm:$0xf]
      %v277 = vld [vmem:[%s2 + $0x48] sm:$0xff]
      %v278 = vld [vmem:[%s2 + $0x50] sm:$0xf]
      %v279 = vld [vmem:[%s2 + $0x54] sm:$0xff]
      %v280 = vld [vmem:[%s2 + $0x5c] sm:$0xf]
      %v281 = vld [vmem:[%s2 + $0x60] sm:$0xff]
      %v282 = vld [vmem:[%s2 + $0x68] sm:$0xf]
      %v283 = vld [vmem:[%s2 + $0x6c] sm:$0xff]
      %v284 = vld [vmem:[%s2 + $0x74] sm:$0xf]
      %v285 = vld [vmem:[%s2 + $0x78] sm:$0xff]
      %v286 = vld [vmem:[%s2 + $0x80] sm:$0xf]
      %v287 = vld [vmem:[%s2 + $0x84] sm:$0xff]
      %v288 = vld [vmem:[%s2 + $0x8c] sm:$0xf]
      %v289 = vld [vmem:[%s2 + $0x90] sm:$0xff]
      %v290 = vld [vmem:[%s2 + $0x98] sm:$0xf]
      %v291 = vld [vmem:[%s2 + $0x9c] sm:$0xff]
      %v292 = vld [vmem:[%s2 + $0xa4] sm:$0xf]
      %v293 = vld [vmem:[%s2 + $0xa8] sm:$0xff]
      %v294 = vld [vmem:[%s2 + $0xb0] sm:$0xf]
      %v295 = vld [vmem:[%s2 + $0xb4] sm:$0xff]
      %v296 = vld [vmem:[%s2 + $0xbc] sm:$0xf]
      %v297 = vld [vmem:[%s2 + $0xc0] sm:$0xff]
      %v298 = vld [vmem:[%s2 + $0xc8] sm:$0xf]
      %v299 = vld [vmem:[%s2 + $0xcc] sm:$0xff]
      %v300 = vld [vmem:[%s2 + $0xd4] sm:$0xf]
      %v301 = vld [vmem:[%s2 + $0xd8] sm:$0xff]
      %v302 = vld [vmem:[%s2 + $0xe0] sm:$0xf]
      %v303 = vld [vmem:[%s2 + $0xe4] sm:$0xff]
      %v304 = vld [vmem:[%s2 + $0xec] sm:$0xf]
      %v305 = vld [vmem:[%s2 + $0xf0] sm:$0xff]
      %v306 = vld [vmem:[%s2 + $0xf8] sm:$0xf]
      %v307 = vld [vmem:[%s2 + $0xfc] sm:$0xff]
      %v308 = vld [vmem:[%s2 + $0x104] sm:$0xf]
      %v309 = vld [vmem:[%s2 + $0x108] sm:$0xff]
      %v310 = vld [vmem:[%s2 + $0x110] sm:$0xf]
      %v311 = vld [vmem:[%s2 + $0x114] sm:$0xff]
      %v312 = vld [vmem:[%s2 + $0x11c] sm:$0xf]
      %v313 = vld [vmem:[%s2 + $0x120] sm:$0xff]
      %v314 = vld [vmem:[%s2 + $0x128] sm:$0xf]
      %v315 = vld [vmem:[%s2 + $0x12c] sm:$0xff]
      %v316 = vld [vmem:[%s2 + $0x134] sm:$0xf]
      %v317 = vld [vmem:[%s2 + $0x138] sm:$0xff]
      %v318 = vld [vmem:[%s2 + $0x140] sm:$0xf]
      %v319 = vld [vmem:[%s2 + $0x144] sm:$0xff]
      %v320 = vld [vmem:[%s2 + $0x14c] sm:$0xf]
      %v321 = vld [vmem:[%s2 + $0x150] sm:$0xff]
      %v322 = vld [vmem:[%s2 + $0x158] sm:$0xf]
      %v323 = vld [vmem:[%s2 + $0x15c] sm:$0xff]
      %v324 = vld [vmem:[%s2 + $0x164] sm:$0xf]
      %v325 = vld [vmem:[%s2 + $0x168] sm:$0xff]
      %v326 = vld [vmem:[%s2 + $0x170] sm:$0xf]
      %v327 = vld [vmem:[%s2 + $0x174] sm:$0xff]
      %v328 = vld [vmem:[%s2 + $0x17c] sm:$0xf]
      %v329 = vld [vmem:[%s2 + $0x180] sm:$0xff]
      %v330 = vld [vmem:[%s2 + $0x188] sm:$0xf]
      %v331 = vld [vmem:[%s2 + $0x18c] sm:$0xff]
      %v332 = vld [vmem:[%s2 + $0x194] sm:$0xf]
      %v333 = vld [vmem:[%s2 + $0x198] sm:$0xff]
      %v334 = vld [vmem:[%s2 + $0x1a0] sm:$0xf]
      %v335 = vld [vmem:[%s2 + $0x1a4] sm:$0xff]
      %v336 = vld [vmem:[%s2 + $0x1ac] sm:$0xf]
      %v337 = vld [vmem:[%s2 + $0x1b0] sm:$0xff]
      %v338 = vld [vmem:[%s2 + $0x1b8] sm:$0xf]
      %v339 = vld [vmem:[%s2 + $0x1bc] sm:$0xff]
      %v340 = vld [vmem:[%s2 + $0x1c4] sm:$0xf]
      %v341 = vld [vmem:[%s2 + $0x1c8] sm:$0xff]
      %v342 = vld [vmem:[%s2 + $0x1d0] sm:$0xf]
      %v343 = vld [vmem:[%s2 + $0x1d4] sm:$0xff]
      %v344 = vld [vmem:[%s2 + $0x1dc] sm:$0xf]
      %v345 = vld [vmem:[%s2 + $0x1e0] sm:$0xff]
      %v346 = vld [vmem:[%s2 + $0x1e8] sm:$0xf]
      %v347 = vld [vmem:[%s2 + $0x1ec] sm:$0xff]
      %v348 = vld [vmem:[%s2 + $0x1f4] sm:$0xf]
      %v349 = vld [vmem:[%s2 + $0x1f8] sm:$0xff]
      %v350 = vld [vmem:[%s2 + $0x200] sm:$0xf]
      %v351 = vld [vmem:[%s2 + $0x204] sm:$0xff]
      %v352 = vld [vmem:[%s2 + $0x20c] sm:$0xf]
      %v353 = vld [vmem:[%s2 + $0x210] sm:$0xff]
      %v354 = vld [vmem:[%s2 + $0x218] sm:$0xf]
      %v355 = vld [vmem:[%s2 + $0x21c] sm:$0xff]
      %v356 = vld [vmem:[%s2 + $0x224] sm:$0xf]
      %v357 = vld [vmem:[%s2 + $0x228] sm:$0xff]
      %v358 = vld [vmem:[%s2 + $0x230] sm:$0xf]
      %v359 = vld [vmem:[%s2 + $0x234] sm:$0xff]
      %v360 = vld [vmem:[%s2 + $0x23c] sm:$0xf]
      %v361 = vld [vmem:[%s2 + $0x240] sm:$0xff]
      %v362 = vld [vmem:[%s2 + $0x248] sm:$0xf]
      %v363 = vld [vmem:[%s2 + $0x24c] sm:$0xff]
      %v364 = vld [vmem:[%s2 + $0x254] sm:$0xf]
      %v365 = vld [vmem:[%s2 + $0x258] sm:$0xff]
      %v366 = vld [vmem:[%s2 + $0x260] sm:$0xf]
      %v367 = vld [vmem:[%s2 + $0x264] sm:$0xff]
      %v368 = vld [vmem:[%s2 + $0x26c] sm:$0xf]
      %v369 = vld [vmem:[%s2 + $0x270] sm:$0xff]
      %v370 = vld [vmem:[%s2 + $0x278] sm:$0xf]
      %v371 = vld [vmem:[%s2 + $0x27c] sm:$0xff]
      %v372 = vld [vmem:[%s2 + $0x284] sm:$0xf]
      %v373 = vld [vmem:[%s2 + $0x288] sm:$0xff]
      %v374 = vld [vmem:[%s2 + $0x290] sm:$0xf]
      %v375 = vld [vmem:[%s2 + $0x294] sm:$0xff]
      %v376 = vld [vmem:[%s2 + $0x29c] sm:$0xf]
      %v377 = vld [vmem:[%s2 + $0x2a0] sm:$0xff]
      %v378 = vld [vmem:[%s2 + $0x2a8] sm:$0xf]
      %v379 = vld [vmem:[%s2 + $0x2ac] sm:$0xff]
      %v380 = vld [vmem:[%s2 + $0x2b4] sm:$0xf]
      %v381 = vld [vmem:[%s2 + $0x2b8] sm:$0xff]
      %v382 = vld [vmem:[%s2 + $0x2c0] sm:$0xf]
      %v383 = vld [vmem:[%s2 + $0x2c4] sm:$0xff]
      %v384 = vld [vmem:[%s2 + $0x2cc] sm:$0xf]
      %v385 = vld [vmem:[%s2 + $0x2d0] sm:$0xff]
      %v386 = vld [vmem:[%s2 + $0x2d8] sm:$0xf]
      %v387 = vld [vmem:[%s2 + $0x2dc] sm:$0xff]
      %v388 = vld [vmem:[%s2 + $0x2e4] sm:$0xf]
      %v389 = vld [vmem:[%s2 + $0x2e8] sm:$0xff]
      %v390 = vld [vmem:[%s2 + $0x2f0] sm:$0xf]
      %v391 = vld [vmem:[%s2 + $0x2f4] sm:$0xff]
      %v392 = vld [vmem:[%s2 + $0x2fc] sm:$0xf]
      %v393 = vld [vmem:[%s2 + $0x300] sm:$0xff]
      %v394 = vld [vmem:[%s2 + $0x308] sm:$0xf]
      %v395 = vld [vmem:[%s2 + $0x30c] sm:$0xff]
      %v396 = vld [vmem:[%s2 + $0x314] sm:$0xf]
      %v397 = vld [vmem:[%s2 + $0x318] sm:$0xff]
      %v398 = vld [vmem:[%s2 + $0x320] sm:$0xf]
      %v399 = vld [vmem:[%s2 + $0x324] sm:$0xff]
      %v400 = vld [vmem:[%s2 + $0x32c] sm:$0xf]
      %v401 = vld [vmem:[%s2 + $0x330] sm:$0xff]
      %v402 = vld [vmem:[%s2 + $0x338] sm:$0xf]
      %v403 = vld [vmem:[%s2 + $0x33c] sm:$0xff]
      %v404 = vld [vmem:[%s2 + $0x344] sm:$0xf]
      %v405 = vld [vmem:[%s2 + $0x348] sm:$0xff]
      %v406 = vld [vmem:[%s2 + $0x350] sm:$0xf]
      %v407 = vld [vmem:[%s2 + $0x354] sm:$0xff]
      %v408 = vld [vmem:[%s2 + $0x35c] sm:$0xf]
      %v409 = vld [vmem:[%s2 + $0x360] sm:$0xff]
      %v410 = vld [vmem:[%s2 + $0x368] sm:$0xf]
      %v411 = vld [vmem:[%s2 + $0x36c] sm:$0xff]
      %v412 = vld [vmem:[%s2 + $0x374] sm:$0xf]
      %v413 = vld [vmem:[%s2 + $0x378] sm:$0xff]
      %v414 = vld [vmem:[%s2 + $0x380] sm:$0xf]
      %v415 = vld [vmem:[%s2 + $0x384] sm:$0xff]
      %v416 = vld [vmem:[%s2 + $0x38c] sm:$0xf]
      %v417 = vld [vmem:[%s2 + $0x390] sm:$0xff]
      %v418 = vld [vmem:[%s2 + $0x398] sm:$0xf]
      %v419 = vld [vmem:[%s2 + $0x39c] sm:$0xff]
      %v420 = vld [vmem:[%s2 + $0x3a4] sm:$0xf]
      %v421 = vld [vmem:[%s2 + $0x3a8] sm:$0xff]
      %v422 = vld [vmem:[%s2 + $0x3b0] sm:$0xf]
      %v423 = vld [vmem:[%s2 + $0x3b4] sm:$0xff]
      %v424 = vld [vmem:[%s2 + $0x3bc] sm:$0xf]
      %v425 = vld [vmem:[%s2 + $0x3c0] sm:$0xff]
      %v426 = vld [vmem:[%s2 + $0x3c8] sm:$0xf]
      %v427 = vld [vmem:[%s2 + $0x3cc] sm:$0xff]
      %v428 = vld [vmem:[%s2 + $0x3d4] sm:$0xf]
      %v429 = vld [vmem:[%s2 + $0x3d8] sm:$0xff]
      %v430 = vld [vmem:[%s2 + $0x3e0] sm:$0xf]
      %v431 = vld [vmem:[%s2 + $0x3e4] sm:$0xff]
      %v432 = vld [vmem:[%s2 + $0x3ec] sm:$0xf]
      %v433 = vld [vmem:[%s2 + $0x3f0] sm:$0xff]
      %v434 = vld [vmem:[%s2 + $0x3f8] sm:$0xf]
      %v435 = vld [vmem:[%s2 + $0x3fc] sm:$0xff]
      %v436 = vld [vmem:[%s2 + $0x404] sm:$0xf]
      %v437 = vld [vmem:[%s2 + $0x408] sm:$0xff]
      %v438 = vld [vmem:[%s2 + $0x410] sm:$0xf]
      %v439 = vld [vmem:[%s2 + $0x414] sm:$0xff]
      %v440 = vld [vmem:[%s2 + $0x41c] sm:$0xf]
      %v441 = vld [vmem:[%s2 + $0x420] sm:$0xff]
      %v442 = vld [vmem:[%s2 + $0x428] sm:$0xf]
      %v443 = vld [vmem:[%s2 + $0x42c] sm:$0xff]
      %v444 = vld [vmem:[%s2 + $0x434] sm:$0xf]
      %v445 = vld [vmem:[%s2 + $0x438] sm:$0xff]
      %v446 = vld [vmem:[%s2 + $0x440] sm:$0xf]
      %v447 = vld [vmem:[%s2 + $0x444] sm:$0xff]
      %v448 = vld [vmem:[%s2 + $0x44c] sm:$0xf]
      %v449 = vld [vmem:[%s2 + $0x450] sm:$0xff]
      %v450 = vld [vmem:[%s2 + $0x458] sm:$0xf]
      %v451 = vld [vmem:[%s2 + $0x45c] sm:$0xff]
      %v452 = vld [vmem:[%s2 + $0x464] sm:$0xf]
      %v453 = vld [vmem:[%s2 + $0x468] sm:$0xff]
      %v454 = vld [vmem:[%s2 + $0x470] sm:$0xf]
      %v455 = vld [vmem:[%s2 + $0x474] sm:$0xff]
      %v456 = vld [vmem:[%s2 + $0x47c] sm:$0xf]
      %v457 = vld [vmem:[%s2 + $0x480] sm:$0xff]
      %v458 = vld [vmem:[%s2 + $0x488] sm:$0xf]
      %v459 = vld [vmem:[%s2 + $0x48c] sm:$0xff]
      %v460 = vld [vmem:[%s2 + $0x494] sm:$0xf]
      %v461 = vld [vmem:[%s2 + $0x498] sm:$0xff]
      %v462 = vld [vmem:[%s2 + $0x4a0] sm:$0xf]
      %v463 = vld [vmem:[%s2 + $0x4a4] sm:$0xff]
      %v464 = vld [vmem:[%s2 + $0x4ac] sm:$0xf]
      %v465 = vld [vmem:[%s2 + $0x4b0] sm:$0xff]
      %v466 = vld [vmem:[%s2 + $0x4b8] sm:$0xf]
      %v467 = vld [vmem:[%s2 + $0x4bc] sm:$0xff]
      %v468 = vld [vmem:[%s2 + $0x4c4] sm:$0xf]
      %v469 = vld [vmem:[%s2 + $0x4c8] sm:$0xff]
      %v470 = vld [vmem:[%s2 + $0x4d0] sm:$0xf]
      %v471 = vld [vmem:[%s2 + $0x4d4] sm:$0xff]
      %v472 = vld [vmem:[%s2 + $0x4dc] sm:$0xf]
      %v473 = vld [vmem:[%s2 + $0x4e0] sm:$0xff]
      %v474 = vld [vmem:[%s2 + $0x4e8] sm:$0xf]
      %v475 = vld [vmem:[%s2 + $0x4ec] sm:$0xff]
      %v476 = vld [vmem:[%s2 + $0x4f4] sm:$0xf]
      %v477 = vld [vmem:[%s2 + $0x4f8] sm:$0xff]
      %v478 = vld [vmem:[%s2 + $0x500] sm:$0xf]
      %v479 = vld [vmem:[%s2 + $0x504] sm:$0xff]
      %v480 = vld [vmem:[%s2 + $0x50c] sm:$0xf]
      %v481 = vld [vmem:[%s2 + $0x510] sm:$0xff]
      %v482 = vld [vmem:[%s2 + $0x518] sm:$0xf]
      %v483 = vld [vmem:[%s2 + $0x51c] sm:$0xff]
      %v484 = vld [vmem:[%s2 + $0x524] sm:$0xf]
      %v485 = vld [vmem:[%s2 + $0x528] sm:$0xff]
      %v486 = vld [vmem:[%s2 + $0x530] sm:$0xf]
      %v487 = vld [vmem:[%s2 + $0x534] sm:$0xff]
      %v488 = vld [vmem:[%s2 + $0x53c] sm:$0xf]
      %v489 = vld [vmem:[%s2 + $0x540] sm:$0xff]
      %v490 = vld [vmem:[%s2 + $0x548] sm:$0xf]
      %v491 = vld [vmem:[%s2 + $0x54c] sm:$0xff]
      %v492 = vld [vmem:[%s2 + $0x554] sm:$0xf]
      %v493 = vld [vmem:[%s2 + $0x558] sm:$0xff]
      %v494 = vld [vmem:[%s2 + $0x560] sm:$0xf]
      %v495 = vld [vmem:[%s2 + $0x564] sm:$0xff]
      %v496 = vld [vmem:[%s2 + $0x56c] sm:$0xf]
      %v497 = vld [vmem:[%s2 + $0x570] sm:$0xff]
      %v498 = vld [vmem:[%s2 + $0x578] sm:$0xf]
      %v499 = vld [vmem:[%s2 + $0x57c] sm:$0xff]
      %v500 = vld [vmem:[%s2 + $0x584] sm:$0xf]
      %v501 = vld [vmem:[%s2 + $0x588] sm:$0xff]
      %v502 = vld [vmem:[%s2 + $0x590] sm:$0xf]
      %v503 = vld [vmem:[%s2 + $0x594] sm:$0xff]
      %v504 = vld [vmem:[%s2 + $0x59c] sm:$0xf]
      %v505 = vld [vmem:[%s2 + $0x5a0] sm:$0xff]
      %v506 = vld [vmem:[%s2 + $0x5a8] sm:$0xf]
      %v507 = vld [vmem:[%s2 + $0x5ac] sm:$0xff]
      %v508 = vld [vmem:[%s2 + $0x5b4] sm:$0xf]
      %v509 = vld [vmem:[%s2 + $0x5b8] sm:$0xff]
      %v510 = vld [vmem:[%s2 + $0x5c0] sm:$0xf]
      %v511 = vld [vmem:[%s2 + $0x5c4] sm:$0xff]
      %v512 = vld [vmem:[%s2 + $0x5cc] sm:$0xf]
      %v513 = vld [vmem:[%s2 + $0x5d0] sm:$0xff]
      %v514 = vld [vmem:[%s2 + $0x5d8] sm:$0xf]
      %v515 = vld [vmem:[%s2 + $0x5dc] sm:$0xff]
      %v516 = vld [vmem:[%s2 + $0x5e4] sm:$0xf]
      %v517 = vld [vmem:[%s2 + $0x5e8] sm:$0xff]
      %v518 = vld [vmem:[%s2 + $0x5f0] sm:$0xf]
      %v519 = vld [vmem:[%s2 + $0x5f4] sm:$0xff]
      %v520 = vld [vmem:[%s2 + $0x5fc] sm:$0xf]
      %v521 = vld [vmem:[%s2 + $0x600] sm:$0xff]
      %v522 = vld [vmem:[%s2 + $0x608] sm:$0xf]
      %v523 = vld [vmem:[%s2 + $0x60c] sm:$0xff]
      %v524 = vld [vmem:[%s2 + $0x614] sm:$0xf]
      %v525 = vld [vmem:[%s2 + $0x618] sm:$0xff]
      %v526 = vld [vmem:[%s2 + $0x620] sm:$0xf]
      %v527 = vld [vmem:[%s2 + $0x624] sm:$0xff]
      %v528 = vld [vmem:[%s2 + $0x62c] sm:$0xf]
      %v529 = vld [vmem:[%s2 + $0x630] sm:$0xff]
      %v530 = vld [vmem:[%s2 + $0x638] sm:$0xf]
      %v531 = vld [vmem:[%s2 + $0x63c] sm:$0xff]
      %v532 = vld [vmem:[%s2 + $0x644] sm:$0xf]
      %v533 = vld [vmem:[%s2 + $0x648] sm:$0xff]
      %v534 = vld [vmem:[%s2 + $0x650] sm:$0xf]
      %v535 = vld [vmem:[%s2 + $0x654] sm:$0xff]
      %v536 = vld [vmem:[%s2 + $0x65c] sm:$0xf]
      %v537 = vld [vmem:[%s2 + $0x660] sm:$0xff]
      %v538 = vld [vmem:[%s2 + $0x668] sm:$0xf]
      %v539 = vld [vmem:[%s2 + $0x66c] sm:$0xff]
      %v540 = vld [vmem:[%s2 + $0x674] sm:$0xf]
      %v541 = vld [vmem:[%s2 + $0x678] sm:$0xff]
      %v542 = vld [vmem:[%s2 + $0x680] sm:$0xf]
      %v543 = vld [vmem:[%s2 + $0x684] sm:$0xff]
      %v544 = vld [vmem:[%s2 + $0x68c] sm:$0xf]
      %v545 = vld [vmem:[%s2 + $0x690] sm:$0xff]
      %v546 = vld [vmem:[%s2 + $0x698] sm:$0xf]
      %v547 = vld [vmem:[%s2 + $0x69c] sm:$0xff]
      %v548 = vld [vmem:[%s2 + $0x6a4] sm:$0xf]
      %v549 = vld [vmem:[%s2 + $0x6a8] sm:$0xff]
      %v550 = vld [vmem:[%s2 + $0x6b0] sm:$0xf]
      %v551 = vld [vmem:[%s2 + $0x6b4] sm:$0xff]
      %v552 = vld [vmem:[%s2 + $0x6bc] sm:$0xf]
      %v553 = vld [vmem:[%s2 + $0x6c0] sm:$0xff]
      %v554 = vld [vmem:[%s2 + $0x6c8] sm:$0xf]
      %v555 = vld [vmem:[%s2 + $0x6cc] sm:$0xff]
      %v556 = vld [vmem:[%s2 + $0x6d4] sm:$0xf]
      %v557 = vld [vmem:[%s2 + $0x6d8] sm:$0xff]
      %v558 = vld [vmem:[%s2 + $0x6e0] sm:$0xf]
      %v559 = vld [vmem:[%s2 + $0x6e4] sm:$0xff]
      %v560 = vld [vmem:[%s2 + $0x6ec] sm:$0xf]
      %v561 = vld [vmem:[%s2 + $0x6f0] sm:$0xff]
      %v562 = vld [vmem:[%s2 + $0x6f8] sm:$0xf]
      %v563 = vld [vmem:[%s2 + $0x6fc] sm:$0xff]
      %v564 = vld [vmem:[%s2 + $0x704] sm:$0xf]
      %v565 = vld [vmem:[%s2 + $0x708] sm:$0xff]
      %v566 = vld [vmem:[%s2 + $0x710] sm:$0xf]
      %v567 = vld [vmem:[%s2 + $0x714] sm:$0xff]
      %v568 = vld [vmem:[%s2 + $0x71c] sm:$0xf]
      %v569 = vld [vmem:[%s2 + $0x720] sm:$0xff]
      %v570 = vld [vmem:[%s2 + $0x728] sm:$0xf]
      %v571 = vld [vmem:[%s2 + $0x72c] sm:$0xff]
      %v572 = vld [vmem:[%s2 + $0x734] sm:$0xf]
      %v573 = vld [vmem:[%s2 + $0x738] sm:$0xff]
      %v574 = vld [vmem:[%s2 + $0x740] sm:$0xf]
      %v575 = vld [vmem:[%s2 + $0x744] sm:$0xff]
      %v576 = vld [vmem:[%s2 + $0x74c] sm:$0xf]
      %v577 = vld [vmem:[%s2 + $0x750] sm:$0xff]
      %v578 = vld [vmem:[%s2 + $0x758] sm:$0xf]
      %v579 = vld [vmem:[%s2 + $0x75c] sm:$0xff]
      %v580 = vld [vmem:[%s2 + $0x764] sm:$0xf]
      %v581 = vld [vmem:[%s2 + $0x768] sm:$0xff]
      %v582 = vld [vmem:[%s2 + $0x770] sm:$0xf]
      %v583 = vld [vmem:[%s2 + $0x774] sm:$0xff]
      %v584 = vld [vmem:[%s2 + $0x77c] sm:$0xf]
      %v585 = vld [vmem:[%s2 + $0x780] sm:$0xff]
      %v586 = vld [vmem:[%s2 + $0x788] sm:$0xf]
      %v587 = vld [vmem:[%s2 + $0x78c] sm:$0xff]
      %v588 = vld [vmem:[%s2 + $0x794] sm:$0xf]
      %v589 = vld [vmem:[%s2 + $0x798] sm:$0xff]
      %v590 = vld [vmem:[%s2 + $0x7a0] sm:$0xf]
      %v591 = vld [vmem:[%s2 + $0x7a4] sm:$0xff]
      %v592 = vld [vmem:[%s2 + $0x7ac] sm:$0xf]
      %v593 = vld [vmem:[%s2 + $0x7b0] sm:$0xff]
      %v594 = vld [vmem:[%s2 + $0x7b8] sm:$0xf]
      %v595 = vld [vmem:[%s2 + $0x7bc] sm:$0xff]
      %v596 = vld [vmem:[%s2 + $0x7c4] sm:$0xf]
      %v597 = vld [vmem:[%s2 + $0x7c8] sm:$0xff]
      %v598 = vld [vmem:[%s2 + $0x7d0] sm:$0xf]
      %v599 = vld [vmem:[%s2 + $0x7d4] sm:$0xff]
      %v600 = vld [vmem:[%s2 + $0x7dc] sm:$0xf]
      %v601 = vld [vmem:[%s2 + $0x7e0] sm:$0xff]
      %v602 = vld [vmem:[%s2 + $0x7e8] sm:$0xf]
      %v603 = vld [vmem:[%s2 + $0x7ec] sm:$0xff]
      %v604 = vld [vmem:[%s2 + $0x7f4] sm:$0xf]
      %v605 = vld [vmem:[%s2 + $0x7f8] sm:$0xff]
      %v606 = vld [vmem:[%s2 + $0x800] sm:$0xf]
      %v607 = vld [vmem:[%s2 + $0x804] sm:$0xff]
      %v608 = vld [vmem:[%s2 + $0x80c] sm:$0xf]
      %v609 = vld [vmem:[%s2 + $0x810] sm:$0xff]
      %v610 = vld [vmem:[%s2 + $0x818] sm:$0xf]
      %v611 = vld [vmem:[%s2 + $0x81c] sm:$0xff]
      %v612 = vld [vmem:[%s2 + $0x824] sm:$0xf]
      %v613 = vld [vmem:[%s2 + $0x828] sm:$0xff]
      %v614 = vld [vmem:[%s2 + $0x830] sm:$0xf]
      %v615 = vld [vmem:[%s2 + $0x834] sm:$0xff]
      %v616 = vld [vmem:[%s2 + $0x83c] sm:$0xf]
      %v617 = vld [vmem:[%s2 + $0x840] sm:$0xff]
      %v618 = vld [vmem:[%s2 + $0x848] sm:$0xf]
      %v619 = vld [vmem:[%s2 + $0x84c] sm:$0xff]
      %v620 = vld [vmem:[%s2 + $0x854] sm:$0xf]
      %v621 = vld [vmem:[%s2 + $0x858] sm:$0xff]
      %v622 = vld [vmem:[%s2 + $0x860] sm:$0xf]
      %v623 = vld [vmem:[%s2 + $0x864] sm:$0xff]
      %v624 = vld [vmem:[%s2 + $0x86c] sm:$0xf]
      %v625 = vld [vmem:[%s2 + $0x870] sm:$0xff]
      %v626 = vld [vmem:[%s2 + $0x878] sm:$0xf]
      %v627 = vld [vmem:[%s2 + $0x87c] sm:$0xff]
      %v628 = vld [vmem:[%s2 + $0x884] sm:$0xf]
      %v629 = vld [vmem:[%s2 + $0x888] sm:$0xff]
      %v630 = vld [vmem:[%s2 + $0x890] sm:$0xf]
      %v631 = vld [vmem:[%s2 + $0x894] sm:$0xff]
      %v632 = vld [vmem:[%s2 + $0x89c] sm:$0xf]
      %v633 = vld [vmem:[%s2 + $0x8a0] sm:$0xff]
      %v634 = vld [vmem:[%s2 + $0x8a8] sm:$0xf]
      %v635 = vld [vmem:[%s2 + $0x8ac] sm:$0xff]
      %v636 = vld [vmem:[%s2 + $0x8b4] sm:$0xf]
      %v637 = vld [vmem:[%s2 + $0x8b8] sm:$0xff]
      %v638 = vld [vmem:[%s2 + $0x8c0] sm:$0xf]
      %v639 = vld [vmem:[%s2 + $0x8c4] sm:$0xff]
      %v640 = vld [vmem:[%s2 + $0x8cc] sm:$0xf]
      %v641 = vld [vmem:[%s2 + $0x8d0] sm:$0xff]
      %v642 = vld [vmem:[%s2 + $0x8d8] sm:$0xf]
      %v643 = vld [vmem:[%s2 + $0x8dc] sm:$0xff]
      %v644 = vld [vmem:[%s2 + $0x8e4] sm:$0xf]
      %v645 = vld [vmem:[%s2 + $0x8e8] sm:$0xff]
      %v646 = vld [vmem:[%s2 + $0x8f0] sm:$0xf]
      %v647 = vld [vmem:[%s2 + $0x8f4] sm:$0xff]
      %v648 = vld [vmem:[%s2 + $0x8fc] sm:$0xf]
      %v649 = vld [vmem:[%s5] sm:$0x7]
      %v651 = vlaneseq
      %v652 = vshrl.u32 %v651, 7
      %v653 = vsub.s32 0, %v652
      %v654 = vrot.slane %v649, %v653
      %v655 = vlaneseq
      %v656 = vshrl.u32 %v655, 7
      %v657 = vsub.s32 1, %v656
      %v658 = vrot.slane %v649, %v657
      %v659 = vlaneseq
      %v660 = vshrl.u32 %v659, 7
      %v661 = vsub.s32 2, %v660
      %v662 = vrot.slane %v649, %v661
      %v672 = vunpack.c.l.b16 %v259
      %v673 = vunpack.c.h.b16 %v259
      %v674 = vunpack.c.l.b16 %v260
      %v675 = vunpack.c.h.b16 %v260
      %v676 = vunpack.c.l.b16 %v261
      %v677 = vunpack.c.h.b16 %v261
      %v678 = vunpack.c.l.b16 %v262
      %v679 = vunpack.c.h.b16 %v262
      %v680 = vunpack.c.l.b16 %v263
      %v681 = vunpack.c.h.b16 %v263
      %v682 = vunpack.c.l.b16 %v264
      %v683 = vunpack.c.h.b16 %v264
      %v684 = vpack.c.b16 %v672, %v672
      %v685 = vpack.c.b16 %v673, %v673
      %v686 = vpack.c.b16 %v674, %v674
      %v687 = vpack.c.b16 %v675, %v675
      %v688 = vpack.c.b16 %v676, %v676
      %v689 = vpack.c.b16 %v677, %v677
      %v690 = vpack.c.b16 %v678, %v678
      %v691 = vpack.c.b16 %v679, %v679
      %v692 = vpack.c.b16 %v680, %v680
      %v693 = vpack.c.b16 %v681, %v681
      %v694 = vpack.c.b16 %v682, %v682
      %v695 = vpack.c.b16 %v683, %v683
      %v1092 = vunpack.c.l.b16 %v265
      %v1093 = vunpack.c.h.b16 %v265
      %v1094 = vunpack.c.l.b16 %v266
      %v1095 = vunpack.c.l.b16 %v267
      %v1096 = vunpack.c.h.b16 %v267
      %v1097 = vunpack.c.l.b16 %v268
      %v1098 = vunpack.c.l.b16 %v269
      %v1099 = vunpack.c.h.b16 %v269
      %v1100 = vunpack.c.l.b16 %v270
      %v1101 = vunpack.c.l.b16 %v271
      %v1102 = vunpack.c.h.b16 %v271
      %v1103 = vunpack.c.l.b16 %v272
      %v1104 = vunpack.c.l.b16 %v273
      %v1105 = vunpack.c.h.b16 %v273
      %v1106 = vunpack.c.l.b16 %v274
      %v1107 = vunpack.c.l.b16 %v275
      %v1108 = vunpack.c.h.b16 %v275
      %v1109 = vunpack.c.l.b16 %v276
      %v1110 = vunpack.c.l.b16 %v277
      %v1111 = vunpack.c.h.b16 %v277
      %v1112 = vunpack.c.l.b16 %v278
      %v1113 = vunpack.c.l.b16 %v279
      %v1114 = vunpack.c.h.b16 %v279
      %v1115 = vunpack.c.l.b16 %v280
      %v1116 = vunpack.c.l.b16 %v281
      %v1117 = vunpack.c.h.b16 %v281
      %v1118 = vunpack.c.l.b16 %v282
      %v1119 = vunpack.c.l.b16 %v283
      %v1120 = vunpack.c.h.b16 %v283
      %v1121 = vunpack.c.l.b16 %v284
      %v1122 = vunpack.c.l.b16 %v285
      %v1123 = vunpack.c.h.b16 %v285
      %v1124 = vunpack.c.l.b16 %v286
      %v1125 = vunpack.c.l.b16 %v287
      %v1126 = vunpack.c.h.b16 %v287
      %v1127 = vunpack.c.l.b16 %v288
      %v1128 = vunpack.c.l.b16 %v289
      %v1129 = vunpack.c.h.b16 %v289
      %v1130 = vunpack.c.l.b16 %v290
      %v1131 = vunpack.c.l.b16 %v291
      %v1132 = vunpack.c.h.b16 %v291
      %v1133 = vunpack.c.l.b16 %v292
      %v1134 = vunpack.c.l.b16 %v293
      %v1135 = vunpack.c.h.b16 %v293
      %v1136 = vunpack.c.l.b16 %v294
      %v1137 = vunpack.c.l.b16 %v295
      %v1138 = vunpack.c.h.b16 %v295
      %v1139 = vunpack.c.l.b16 %v296
      %v1140 = vunpack.c.l.b16 %v297
      %v1141 = vunpack.c.h.b16 %v297
      %v1142 = vunpack.c.l.b16 %v298
      %v1143 = vunpack.c.l.b16 %v299
      %v1144 = vunpack.c.h.b16 %v299
      %v1145 = vunpack.c.l.b16 %v300
      %v1146 = vunpack.c.l.b16 %v301
      %v1147 = vunpack.c.h.b16 %v301
      %v1148 = vunpack.c.l.b16 %v302
      %v1149 = vunpack.c.l.b16 %v303
      %v1150 = vunpack.c.h.b16 %v303
      %v1151 = vunpack.c.l.b16 %v304
      %v1152 = vunpack.c.l.b16 %v305
      %v1153 = vunpack.c.h.b16 %v305
      %v1154 = vunpack.c.l.b16 %v306
      %v1155 = vunpack.c.l.b16 %v307
      %v1156 = vunpack.c.h.b16 %v307
      %v1157 = vunpack.c.l.b16 %v308
      %v1158 = vunpack.c.l.b16 %v309
      %v1159 = vunpack.c.h.b16 %v309
      %v1160 = vunpack.c.l.b16 %v310
      %v1161 = vunpack.c.l.b16 %v311
      %v1162 = vunpack.c.h.b16 %v311
      %v1163 = vunpack.c.l.b16 %v312
      %v1164 = vunpack.c.l.b16 %v313
      %v1165 = vunpack.c.h.b16 %v313
      %v1166 = vunpack.c.l.b16 %v314
      %v1167 = vunpack.c.l.b16 %v315
      %v1168 = vunpack.c.h.b16 %v315
      %v1169 = vunpack.c.l.b16 %v316
      %v1170 = vunpack.c.l.b16 %v317
      %v1171 = vunpack.c.h.b16 %v317
      %v1172 = vunpack.c.l.b16 %v318
      %v1173 = vunpack.c.l.b16 %v319
      %v1174 = vunpack.c.h.b16 %v319
      %v1175 = vunpack.c.l.b16 %v320
      %v1176 = vunpack.c.l.b16 %v321
      %v1177 = vunpack.c.h.b16 %v321
      %v1178 = vunpack.c.l.b16 %v322
      %v1179 = vunpack.c.l.b16 %v323
      %v1180 = vunpack.c.h.b16 %v323
      %v1181 = vunpack.c.l.b16 %v324
      %v1182 = vunpack.c.l.b16 %v325
      %v1183 = vunpack.c.h.b16 %v325
      %v1184 = vunpack.c.l.b16 %v326
      %v1185 = vunpack.c.l.b16 %v327
      %v1186 = vunpack.c.h.b16 %v327
      %v1187 = vunpack.c.l.b16 %v328
      %v1188 = vunpack.c.l.b16 %v329
      %v1189 = vunpack.c.h.b16 %v329
      %v1190 = vunpack.c.l.b16 %v330
      %v1191 = vunpack.c.l.b16 %v331
      %v1192 = vunpack.c.h.b16 %v331
      %v1193 = vunpack.c.l.b16 %v332
      %v1194 = vunpack.c.l.b16 %v333
      %v1195 = vunpack.c.h.b16 %v333
      %v1196 = vunpack.c.l.b16 %v334
      %v1197 = vunpack.c.l.b16 %v335
      %v1198 = vunpack.c.h.b16 %v335
      %v1199 = vunpack.c.l.b16 %v336
      %v1200 = vunpack.c.l.b16 %v337
      %v1201 = vunpack.c.h.b16 %v337
      %v1202 = vunpack.c.l.b16 %v338
      %v1203 = vunpack.c.l.b16 %v339
      %v1204 = vunpack.c.h.b16 %v339
      %v1205 = vunpack.c.l.b16 %v340
      %v1206 = vunpack.c.l.b16 %v341
      %v1207 = vunpack.c.h.b16 %v341
      %v1208 = vunpack.c.l.b16 %v342
      %v1209 = vunpack.c.l.b16 %v343
      %v1210 = vunpack.c.h.b16 %v343
      %v1211 = vunpack.c.l.b16 %v344
      %v1212 = vunpack.c.l.b16 %v345
      %v1213 = vunpack.c.h.b16 %v345
      %v1214 = vunpack.c.l.b16 %v346
      %v1215 = vunpack.c.l.b16 %v347
      %v1216 = vunpack.c.h.b16 %v347
      %v1217 = vunpack.c.l.b16 %v348
      %v1218 = vunpack.c.l.b16 %v349
      %v1219 = vunpack.c.h.b16 %v349
      %v1220 = vunpack.c.l.b16 %v350
      %v1221 = vunpack.c.l.b16 %v351
      %v1222 = vunpack.c.h.b16 %v351
      %v1223 = vunpack.c.l.b16 %v352
      %v1224 = vunpack.c.l.b16 %v353
      %v1225 = vunpack.c.h.b16 %v353
      %v1226 = vunpack.c.l.b16 %v354
      %v1227 = vunpack.c.l.b16 %v355
      %v1228 = vunpack.c.h.b16 %v355
      %v1229 = vunpack.c.l.b16 %v356
      %v1230 = vunpack.c.l.b16 %v357
      %v1231 = vunpack.c.h.b16 %v357
      %v1232 = vunpack.c.l.b16 %v358
      %v1233 = vunpack.c.l.b16 %v359
      %v1234 = vunpack.c.h.b16 %v359
      %v1235 = vunpack.c.l.b16 %v360
      %v1236 = vunpack.c.l.b16 %v361
      %v1237 = vunpack.c.h.b16 %v361
      %v1238 = vunpack.c.l.b16 %v362
      %v1239 = vunpack.c.l.b16 %v363
      %v1240 = vunpack.c.h.b16 %v363
      %v1241 = vunpack.c.l.b16 %v364
      %v1242 = vunpack.c.l.b16 %v365
      %v1243 = vunpack.c.h.b16 %v365
      %v1244 = vunpack.c.l.b16 %v366
      %v1245 = vunpack.c.l.b16 %v367
      %v1246 = vunpack.c.h.b16 %v367
      %v1247 = vunpack.c.l.b16 %v368
      %v1248 = vunpack.c.l.b16 %v369
      %v1249 = vunpack.c.h.b16 %v369
      %v1250 = vunpack.c.l.b16 %v370
      %v1251 = vunpack.c.l.b16 %v371
      %v1252 = vunpack.c.h.b16 %v371
      %v1253 = vunpack.c.l.b16 %v372
      %v1254 = vunpack.c.l.b16 %v373
      %v1255 = vunpack.c.h.b16 %v373
      %v1256 = vunpack.c.l.b16 %v374
      %v1257 = vunpack.c.l.b16 %v375
      %v1258 = vunpack.c.h.b16 %v375
      %v1259 = vunpack.c.l.b16 %v376
      %v1260 = vunpack.c.l.b16 %v377
      %v1261 = vunpack.c.h.b16 %v377
      %v1262 = vunpack.c.l.b16 %v378
      %v1263 = vunpack.c.l.b16 %v379
      %v1264 = vunpack.c.h.b16 %v379
      %v1265 = vunpack.c.l.b16 %v380
      %v1266 = vunpack.c.l.b16 %v381
      %v1267 = vunpack.c.h.b16 %v381
      %v1268 = vunpack.c.l.b16 %v382
      %v1269 = vunpack.c.l.b16 %v383
      %v1270 = vunpack.c.h.b16 %v383
      %v1271 = vunpack.c.l.b16 %v384
      %v1272 = vunpack.c.l.b16 %v385
      %v1273 = vunpack.c.h.b16 %v385
      %v1274 = vunpack.c.l.b16 %v386
      %v1275 = vunpack.c.l.b16 %v387
      %v1276 = vunpack.c.h.b16 %v387
      %v1277 = vunpack.c.l.b16 %v388
      %v1278 = vunpack.c.l.b16 %v389
      %v1279 = vunpack.c.h.b16 %v389
      %v1280 = vunpack.c.l.b16 %v390
      %v1281 = vunpack.c.l.b16 %v391
      %v1282 = vunpack.c.h.b16 %v391
      %v1283 = vunpack.c.l.b16 %v392
      %v1284 = vunpack.c.l.b16 %v393
      %v1285 = vunpack.c.h.b16 %v393
      %v1286 = vunpack.c.l.b16 %v394
      %v1287 = vunpack.c.l.b16 %v395
      %v1288 = vunpack.c.h.b16 %v395
      %v1289 = vunpack.c.l.b16 %v396
      %v1290 = vunpack.c.l.b16 %v397
      %v1291 = vunpack.c.h.b16 %v397
      %v1292 = vunpack.c.l.b16 %v398
      %v1293 = vunpack.c.l.b16 %v399
      %v1294 = vunpack.c.h.b16 %v399
      %v1295 = vunpack.c.l.b16 %v400
      %v1296 = vunpack.c.l.b16 %v401
      %v1297 = vunpack.c.h.b16 %v401
      %v1298 = vunpack.c.l.b16 %v402
      %v1299 = vunpack.c.l.b16 %v403
      %v1300 = vunpack.c.h.b16 %v403
      %v1301 = vunpack.c.l.b16 %v404
      %v1302 = vunpack.c.l.b16 %v405
      %v1303 = vunpack.c.h.b16 %v405
      %v1304 = vunpack.c.l.b16 %v406
      %v1305 = vunpack.c.l.b16 %v407
      %v1306 = vunpack.c.h.b16 %v407
      %v1307 = vunpack.c.l.b16 %v408
      %v1308 = vunpack.c.l.b16 %v409
      %v1309 = vunpack.c.h.b16 %v409
      %v1310 = vunpack.c.l.b16 %v410
      %v1311 = vunpack.c.l.b16 %v411
      %v1312 = vunpack.c.h.b16 %v411
      %v1313 = vunpack.c.l.b16 %v412
      %v1314 = vunpack.c.l.b16 %v413
      %v1315 = vunpack.c.h.b16 %v413
      %v1316 = vunpack.c.l.b16 %v414
      %v1317 = vunpack.c.l.b16 %v415
      %v1318 = vunpack.c.h.b16 %v415
      %v1319 = vunpack.c.l.b16 %v416
      %v1320 = vunpack.c.l.b16 %v417
      %v1321 = vunpack.c.h.b16 %v417
      %v1322 = vunpack.c.l.b16 %v418
      %v1323 = vunpack.c.l.b16 %v419
      %v1324 = vunpack.c.h.b16 %v419
      %v1325 = vunpack.c.l.b16 %v420
      %v1326 = vunpack.c.l.b16 %v421
      %v1327 = vunpack.c.h.b16 %v421
      %v1328 = vunpack.c.l.b16 %v422
      %v1329 = vunpack.c.l.b16 %v423
      %v1330 = vunpack.c.h.b16 %v423
      %v1331 = vunpack.c.l.b16 %v424
      %v1332 = vunpack.c.l.b16 %v425
      %v1333 = vunpack.c.h.b16 %v425
      %v1334 = vunpack.c.l.b16 %v426
      %v1335 = vunpack.c.l.b16 %v427
      %v1336 = vunpack.c.h.b16 %v427
      %v1337 = vunpack.c.l.b16 %v428
      %v1338 = vunpack.c.l.b16 %v429
      %v1339 = vunpack.c.h.b16 %v429
      %v1340 = vunpack.c.l.b16 %v430
      %v1341 = vunpack.c.l.b16 %v431
      %v1342 = vunpack.c.h.b16 %v431
      %v1343 = vunpack.c.l.b16 %v432
      %v1344 = vunpack.c.l.b16 %v433
      %v1345 = vunpack.c.h.b16 %v433
      %v1346 = vunpack.c.l.b16 %v434
      %v1347 = vunpack.c.l.b16 %v435
      %v1348 = vunpack.c.h.b16 %v435
      %v1349 = vunpack.c.l.b16 %v436
      %v1350 = vunpack.c.l.b16 %v437
      %v1351 = vunpack.c.h.b16 %v437
      %v1352 = vunpack.c.l.b16 %v438
      %v1353 = vunpack.c.l.b16 %v439
      %v1354 = vunpack.c.h.b16 %v439
      %v1355 = vunpack.c.l.b16 %v440
      %v1356 = vunpack.c.l.b16 %v441
      %v1357 = vunpack.c.h.b16 %v441
      %v1358 = vunpack.c.l.b16 %v442
      %v1359 = vunpack.c.l.b16 %v443
      %v1360 = vunpack.c.h.b16 %v443
      %v1361 = vunpack.c.l.b16 %v444
      %v1362 = vunpack.c.l.b16 %v445
      %v1363 = vunpack.c.h.b16 %v445
      %v1364 = vunpack.c.l.b16 %v446
      %v1365 = vunpack.c.l.b16 %v447
      %v1366 = vunpack.c.h.b16 %v447
      %v1367 = vunpack.c.l.b16 %v448
      %v1368 = vunpack.c.l.b16 %v449
      %v1369 = vunpack.c.h.b16 %v449
      %v1370 = vunpack.c.l.b16 %v450
      %v1371 = vunpack.c.l.b16 %v451
      %v1372 = vunpack.c.h.b16 %v451
      %v1373 = vunpack.c.l.b16 %v452
      %v1374 = vunpack.c.l.b16 %v453
      %v1375 = vunpack.c.h.b16 %v453
      %v1376 = vunpack.c.l.b16 %v454
      %v1377 = vunpack.c.l.b16 %v455
      %v1378 = vunpack.c.h.b16 %v455
      %v1379 = vunpack.c.l.b16 %v456
      %v1380 = vunpack.c.l.b16 %v457
      %v1381 = vunpack.c.h.b16 %v457
      %v1382 = vunpack.c.l.b16 %v458
      %v1383 = vunpack.c.l.b16 %v459
      %v1384 = vunpack.c.h.b16 %v459
      %v1385 = vunpack.c.l.b16 %v460
      %v1386 = vunpack.c.l.b16 %v461
      %v1387 = vunpack.c.h.b16 %v461
      %v1388 = vunpack.c.l.b16 %v462
      %v1389 = vunpack.c.l.b16 %v463
      %v1390 = vunpack.c.h.b16 %v463
      %v1391 = vunpack.c.l.b16 %v464
      %v1392 = vunpack.c.l.b16 %v465
      %v1393 = vunpack.c.h.b16 %v465
      %v1394 = vunpack.c.l.b16 %v466
      %v1395 = vunpack.c.l.b16 %v467
      %v1396 = vunpack.c.h.b16 %v467
      %v1397 = vunpack.c.l.b16 %v468
      %v1398 = vunpack.c.l.b16 %v469
      %v1399 = vunpack.c.h.b16 %v469
      %v1400 = vunpack.c.l.b16 %v470
      %v1401 = vunpack.c.l.b16 %v471
      %v1402 = vunpack.c.h.b16 %v471
      %v1403 = vunpack.c.l.b16 %v472
      %v1404 = vunpack.c.l.b16 %v473
      %v1405 = vunpack.c.h.b16 %v473
      %v1406 = vunpack.c.l.b16 %v474
      %v1407 = vunpack.c.l.b16 %v475
      %v1408 = vunpack.c.h.b16 %v475
      %v1409 = vunpack.c.l.b16 %v476
      %v1410 = vunpack.c.l.b16 %v477
      %v1411 = vunpack.c.h.b16 %v477
      %v1412 = vunpack.c.l.b16 %v478
      %v1413 = vunpack.c.l.b16 %v479
      %v1414 = vunpack.c.h.b16 %v479
      %v1415 = vunpack.c.l.b16 %v480
      %v1416 = vunpack.c.l.b16 %v481
      %v1417 = vunpack.c.h.b16 %v481
      %v1418 = vunpack.c.l.b16 %v482
      %v1419 = vunpack.c.l.b16 %v483
      %v1420 = vunpack.c.h.b16 %v483
      %v1421 = vunpack.c.l.b16 %v484
      %v1422 = vunpack.c.l.b16 %v485
      %v1423 = vunpack.c.h.b16 %v485
      %v1424 = vunpack.c.l.b16 %v486
      %v1425 = vunpack.c.l.b16 %v487
      %v1426 = vunpack.c.h.b16 %v487
      %v1427 = vunpack.c.l.b16 %v488
      %v1428 = vunpack.c.l.b16 %v489
      %v1429 = vunpack.c.h.b16 %v489
      %v1430 = vunpack.c.l.b16 %v490
      %v1431 = vunpack.c.l.b16 %v491
      %v1432 = vunpack.c.h.b16 %v491
      %v1433 = vunpack.c.l.b16 %v492
      %v1434 = vunpack.c.l.b16 %v493
      %v1435 = vunpack.c.h.b16 %v493
      %v1436 = vunpack.c.l.b16 %v494
      %v1437 = vunpack.c.l.b16 %v495
      %v1438 = vunpack.c.h.b16 %v495
      %v1439 = vunpack.c.l.b16 %v496
      %v1440 = vunpack.c.l.b16 %v497
      %v1441 = vunpack.c.h.b16 %v497
      %v1442 = vunpack.c.l.b16 %v498
      %v1443 = vunpack.c.l.b16 %v499
      %v1444 = vunpack.c.h.b16 %v499
      %v1445 = vunpack.c.l.b16 %v500
      %v1446 = vunpack.c.l.b16 %v501
      %v1447 = vunpack.c.h.b16 %v501
      %v1448 = vunpack.c.l.b16 %v502
      %v1449 = vunpack.c.l.b16 %v503
      %v1450 = vunpack.c.h.b16 %v503
      %v1451 = vunpack.c.l.b16 %v504
      %v1452 = vunpack.c.l.b16 %v505
      %v1453 = vunpack.c.h.b16 %v505
      %v1454 = vunpack.c.l.b16 %v506
      %v1455 = vunpack.c.l.b16 %v507
      %v1456 = vunpack.c.h.b16 %v507
      %v1457 = vunpack.c.l.b16 %v508
      %v1458 = vunpack.c.l.b16 %v509
      %v1459 = vunpack.c.h.b16 %v509
      %v1460 = vunpack.c.l.b16 %v510
      %v1461 = vunpack.c.l.b16 %v511
      %v1462 = vunpack.c.h.b16 %v511
      %v1463 = vunpack.c.l.b16 %v512
      %v1464 = vunpack.c.l.b16 %v513
      %v1465 = vunpack.c.h.b16 %v513
      %v1466 = vunpack.c.l.b16 %v514
      %v1467 = vunpack.c.l.b16 %v515
      %v1468 = vunpack.c.h.b16 %v515
      %v1469 = vunpack.c.l.b16 %v516
      %v1470 = vunpack.c.l.b16 %v517
      %v1471 = vunpack.c.h.b16 %v517
      %v1472 = vunpack.c.l.b16 %v518
      %v1473 = vunpack.c.l.b16 %v519
      %v1474 = vunpack.c.h.b16 %v519
      %v1475 = vunpack.c.l.b16 %v520
      %v1476 = vunpack.c.l.b16 %v521
      %v1477 = vunpack.c.h.b16 %v521
      %v1478 = vunpack.c.l.b16 %v522
      %v1479 = vunpack.c.l.b16 %v523
      %v1480 = vunpack.c.h.b16 %v523
      %v1481 = vunpack.c.l.b16 %v524
      %v1482 = vunpack.c.l.b16 %v525
      %v1483 = vunpack.c.h.b16 %v525
      %v1484 = vunpack.c.l.b16 %v526
      %v1485 = vunpack.c.l.b16 %v527
      %v1486 = vunpack.c.h.b16 %v527
      %v1487 = vunpack.c.l.b16 %v528
      %v1488 = vunpack.c.l.b16 %v529
      %v1489 = vunpack.c.h.b16 %v529
      %v1490 = vunpack.c.l.b16 %v530
      %v1491 = vunpack.c.l.b16 %v531
      %v1492 = vunpack.c.h.b16 %v531
      %v1493 = vunpack.c.l.b16 %v532
      %v1494 = vunpack.c.l.b16 %v533
      %v1495 = vunpack.c.h.b16 %v533
      %v1496 = vunpack.c.l.b16 %v534
      %v1497 = vunpack.c.l.b16 %v535
      %v1498 = vunpack.c.h.b16 %v535
      %v1499 = vunpack.c.l.b16 %v536
      %v1500 = vunpack.c.l.b16 %v537
      %v1501 = vunpack.c.h.b16 %v537
      %v1502 = vunpack.c.l.b16 %v538
      %v1503 = vunpack.c.l.b16 %v539
      %v1504 = vunpack.c.h.b16 %v539
      %v1505 = vunpack.c.l.b16 %v540
      %v1506 = vunpack.c.l.b16 %v541
      %v1507 = vunpack.c.h.b16 %v541
      %v1508 = vunpack.c.l.b16 %v542
      %v1509 = vunpack.c.l.b16 %v543
      %v1510 = vunpack.c.h.b16 %v543
      %v1511 = vunpack.c.l.b16 %v544
      %v1512 = vunpack.c.l.b16 %v545
      %v1513 = vunpack.c.h.b16 %v545
      %v1514 = vunpack.c.l.b16 %v546
      %v1515 = vunpack.c.l.b16 %v547
      %v1516 = vunpack.c.h.b16 %v547
      %v1517 = vunpack.c.l.b16 %v548
      %v1518 = vunpack.c.l.b16 %v549
      %v1519 = vunpack.c.h.b16 %v549
      %v1520 = vunpack.c.l.b16 %v550
      %v1521 = vunpack.c.l.b16 %v551
      %v1522 = vunpack.c.h.b16 %v551
      %v1523 = vunpack.c.l.b16 %v552
      %v1524 = vunpack.c.l.b16 %v553
      %v1525 = vunpack.c.h.b16 %v553
      %v1526 = vunpack.c.l.b16 %v554
      %v1527 = vunpack.c.l.b16 %v555
      %v1528 = vunpack.c.h.b16 %v555
      %v1529 = vunpack.c.l.b16 %v556
      %v1530 = vunpack.c.l.b16 %v557
      %v1531 = vunpack.c.h.b16 %v557
      %v1532 = vunpack.c.l.b16 %v558
      %v1533 = vunpack.c.l.b16 %v559
      %v1534 = vunpack.c.h.b16 %v559
      %v1535 = vunpack.c.l.b16 %v560
      %v1536 = vunpack.c.l.b16 %v561
      %v1537 = vunpack.c.h.b16 %v561
      %v1538 = vunpack.c.l.b16 %v562
      %v1539 = vunpack.c.l.b16 %v563
      %v1540 = vunpack.c.h.b16 %v563
      %v1541 = vunpack.c.l.b16 %v564
      %v1542 = vunpack.c.l.b16 %v565
      %v1543 = vunpack.c.h.b16 %v565
      %v1544 = vunpack.c.l.b16 %v566
      %v1545 = vunpack.c.l.b16 %v567
      %v1546 = vunpack.c.h.b16 %v567
      %v1547 = vunpack.c.l.b16 %v568
      %v1548 = vunpack.c.l.b16 %v569
      %v1549 = vunpack.c.h.b16 %v569
      %v1550 = vunpack.c.l.b16 %v570
      %v1551 = vunpack.c.l.b16 %v571
      %v1552 = vunpack.c.h.b16 %v571
      %v1553 = vunpack.c.l.b16 %v572
      %v1554 = vunpack.c.l.b16 %v573
      %v1555 = vunpack.c.h.b16 %v573
      %v1556 = vunpack.c.l.b16 %v574
      %v1557 = vunpack.c.l.b16 %v575
      %v1558 = vunpack.c.h.b16 %v575
      %v1559 = vunpack.c.l.b16 %v576
      %v1560 = vunpack.c.l.b16 %v577
      %v1561 = vunpack.c.h.b16 %v577
      %v1562 = vunpack.c.l.b16 %v578
      %v1563 = vunpack.c.l.b16 %v579
      %v1564 = vunpack.c.h.b16 %v579
      %v1565 = vunpack.c.l.b16 %v580
      %v1566 = vunpack.c.l.b16 %v581
      %v1567 = vunpack.c.h.b16 %v581
      %v1568 = vunpack.c.l.b16 %v582
      %v1569 = vunpack.c.l.b16 %v583
      %v1570 = vunpack.c.h.b16 %v583
      %v1571 = vunpack.c.l.b16 %v584
      %v1572 = vunpack.c.l.b16 %v585
      %v1573 = vunpack.c.h.b16 %v585
      %v1574 = vunpack.c.l.b16 %v586
      %v1575 = vunpack.c.l.b16 %v587
      %v1576 = vunpack.c.h.b16 %v587
      %v1577 = vunpack.c.l.b16 %v588
      %v1578 = vunpack.c.l.b16 %v589
      %v1579 = vunpack.c.h.b16 %v589
      %v1580 = vunpack.c.l.b16 %v590
      %v1581 = vunpack.c.l.b16 %v591
      %v1582 = vunpack.c.h.b16 %v591
      %v1583 = vunpack.c.l.b16 %v592
      %v1584 = vunpack.c.l.b16 %v593
      %v1585 = vunpack.c.h.b16 %v593
      %v1586 = vunpack.c.l.b16 %v594
      %v1587 = vunpack.c.l.b16 %v595
      %v1588 = vunpack.c.h.b16 %v595
      %v1589 = vunpack.c.l.b16 %v596
      %v1590 = vunpack.c.l.b16 %v597
      %v1591 = vunpack.c.h.b16 %v597
      %v1592 = vunpack.c.l.b16 %v598
      %v1593 = vunpack.c.l.b16 %v599
      %v1594 = vunpack.c.h.b16 %v599
      %v1595 = vunpack.c.l.b16 %v600
      %v1596 = vunpack.c.l.b16 %v601
      %v1597 = vunpack.c.h.b16 %v601
      %v1598 = vunpack.c.l.b16 %v602
      %v1599 = vunpack.c.l.b16 %v603
      %v1600 = vunpack.c.h.b16 %v603
      %v1601 = vunpack.c.l.b16 %v604
      %v1602 = vunpack.c.l.b16 %v605
      %v1603 = vunpack.c.h.b16 %v605
      %v1604 = vunpack.c.l.b16 %v606
      %v1605 = vunpack.c.l.b16 %v607
      %v1606 = vunpack.c.h.b16 %v607
      %v1607 = vunpack.c.l.b16 %v608
      %v1608 = vunpack.c.l.b16 %v609
      %v1609 = vunpack.c.h.b16 %v609
      %v1610 = vunpack.c.l.b16 %v610
      %v1611 = vunpack.c.l.b16 %v611
      %v1612 = vunpack.c.h.b16 %v611
      %v1613 = vunpack.c.l.b16 %v612
      %v1614 = vunpack.c.l.b16 %v613
      %v1615 = vunpack.c.h.b16 %v613
      %v1616 = vunpack.c.l.b16 %v614
      %v1617 = vunpack.c.l.b16 %v615
      %v1618 = vunpack.c.h.b16 %v615
      %v1619 = vunpack.c.l.b16 %v616
      %v1620 = vunpack.c.l.b16 %v617
      %v1621 = vunpack.c.h.b16 %v617
      %v1622 = vunpack.c.l.b16 %v618
      %v1623 = vunpack.c.l.b16 %v619
      %v1624 = vunpack.c.h.b16 %v619
      %v1625 = vunpack.c.l.b16 %v620
      %v1626 = vunpack.c.l.b16 %v621
      %v1627 = vunpack.c.h.b16 %v621
      %v1628 = vunpack.c.l.b16 %v622
      %v1629 = vunpack.c.l.b16 %v623
      %v1630 = vunpack.c.h.b16 %v623
      %v1631 = vunpack.c.l.b16 %v624
      %v1632 = vunpack.c.l.b16 %v625
      %v1633 = vunpack.c.h.b16 %v625
      %v1634 = vunpack.c.l.b16 %v626
      %v1635 = vunpack.c.l.b16 %v627
      %v1636 = vunpack.c.h.b16 %v627
      %v1637 = vunpack.c.l.b16 %v628
      %v1638 = vunpack.c.l.b16 %v629
      %v1639 = vunpack.c.h.b16 %v629
      %v1640 = vunpack.c.l.b16 %v630
      %v1641 = vunpack.c.l.b16 %v631
      %v1642 = vunpack.c.h.b16 %v631
      %v1643 = vunpack.c.l.b16 %v632
      %v1644 = vunpack.c.l.b16 %v633
      %v1645 = vunpack.c.h.b16 %v633
      %v1646 = vunpack.c.l.b16 %v634
      %v1647 = vunpack.c.l.b16 %v635
      %v1648 = vunpack.c.h.b16 %v635
      %v1649 = vunpack.c.l.b16 %v636
      %v1650 = vunpack.c.l.b16 %v637
      %v1651 = vunpack.c.h.b16 %v637
      %v1652 = vunpack.c.l.b16 %v638
      %v1653 = vunpack.c.l.b16 %v639
      %v1654 = vunpack.c.h.b16 %v639
      %v1655 = vunpack.c.l.b16 %v640
      %v1656 = vunpack.c.l.b16 %v641
      %v1657 = vunpack.c.h.b16 %v641
      %v1658 = vunpack.c.l.b16 %v642
      %v1659 = vunpack.c.l.b16 %v643
      %v1660 = vunpack.c.h.b16 %v643
      %v1661 = vunpack.c.l.b16 %v644
      %v1662 = vunpack.c.l.b16 %v645
      %v1663 = vunpack.c.h.b16 %v645
      %v1664 = vunpack.c.l.b16 %v646
      %v1665 = vunpack.c.l.b16 %v647
      %v1666 = vunpack.c.h.b16 %v647
      %v1667 = vunpack.c.l.b16 %v648
      %v1668 = vpack.c.b16 %v1095, %v1092
      %v1669 = vpack.c.b16 %v1096, %v1093
      %v1670 = vpack.c.b16 %v1097, %v1094
      %v1671 = vpack.c.b16 %v1101, %v1098
      %v1672 = vpack.c.b16 %v1102, %v1099
      %v1673 = vpack.c.b16 %v1103, %v1100
      %v1674 = vpack.c.b16 %v1107, %v1104
      %v1675 = vpack.c.b16 %v1108, %v1105
      %v1676 = vpack.c.b16 %v1109, %v1106
      %v1677 = vpack.c.b16 %v1113, %v1110
      %v1678 = vpack.c.b16 %v1114, %v1111
      %v1679 = vpack.c.b16 %v1115, %v1112
      %v1680 = vpack.c.b16 %v1119, %v1116
      %v1681 = vpack.c.b16 %v1120, %v1117
      %v1682 = vpack.c.b16 %v1121, %v1118
      %v1683 = vpack.c.b16 %v1125, %v1122
      %v1684 = vpack.c.b16 %v1126, %v1123
      %v1685 = vpack.c.b16 %v1127, %v1124
      %v1686 = vpack.c.b16 %v1131, %v1128
      %v1687 = vpack.c.b16 %v1132, %v1129
      %v1688 = vpack.c.b16 %v1133, %v1130
      %v1689 = vpack.c.b16 %v1137, %v1134
      %v1690 = vpack.c.b16 %v1138, %v1135
      %v1691 = vpack.c.b16 %v1139, %v1136
      %v1692 = vpack.c.b16 %v1143, %v1140
      %v1693 = vpack.c.b16 %v1144, %v1141
      %v1694 = vpack.c.b16 %v1145, %v1142
      %v1695 = vpack.c.b16 %v1149, %v1146
      %v1696 = vpack.c.b16 %v1150, %v1147
      %v1697 = vpack.c.b16 %v1151, %v1148
      %v1698 = vpack.c.b16 %v1155, %v1152
      %v1699 = vpack.c.b16 %v1156, %v1153
      %v1700 = vpack.c.b16 %v1157, %v1154
      %v1701 = vpack.c.b16 %v1161, %v1158
      %v1702 = vpack.c.b16 %v1162, %v1159
      %v1703 = vpack.c.b16 %v1163, %v1160
      %v1704 = vpack.c.b16 %v1167, %v1164
      %v1705 = vpack.c.b16 %v1168, %v1165
      %v1706 = vpack.c.b16 %v1169, %v1166
      %v1707 = vpack.c.b16 %v1173, %v1170
      %v1708 = vpack.c.b16 %v1174, %v1171
      %v1709 = vpack.c.b16 %v1175, %v1172
      %v1710 = vpack.c.b16 %v1179, %v1176
      %v1711 = vpack.c.b16 %v1180, %v1177
      %v1712 = vpack.c.b16 %v1181, %v1178
      %v1713 = vpack.c.b16 %v1185, %v1182
      %v1714 = vpack.c.b16 %v1186, %v1183
      %v1715 = vpack.c.b16 %v1187, %v1184
      %v1716 = vpack.c.b16 %v1191, %v1188
      %v1717 = vpack.c.b16 %v1192, %v1189
      %v1718 = vpack.c.b16 %v1193, %v1190
      %v1719 = vpack.c.b16 %v1197, %v1194
      %v1720 = vpack.c.b16 %v1198, %v1195
      %v1721 = vpack.c.b16 %v1199, %v1196
      %v1722 = vpack.c.b16 %v1203, %v1200
      %v1723 = vpack.c.b16 %v1204, %v1201
      %v1724 = vpack.c.b16 %v1205, %v1202
      %v1725 = vpack.c.b16 %v1209, %v1206
      %v1726 = vpack.c.b16 %v1210, %v1207
      %v1727 = vpack.c.b16 %v1211, %v1208
      %v1728 = vpack.c.b16 %v1215, %v1212
      %v1729 = vpack.c.b16 %v1216, %v1213
      %v1730 = vpack.c.b16 %v1217, %v1214
      %v1731 = vpack.c.b16 %v1221, %v1218
      %v1732 = vpack.c.b16 %v1222, %v1219
      %v1733 = vpack.c.b16 %v1223, %v1220
      %v1734 = vpack.c.b16 %v1227, %v1224
      %v1735 = vpack.c.b16 %v1228, %v1225
      %v1736 = vpack.c.b16 %v1229, %v1226
      %v1737 = vpack.c.b16 %v1233, %v1230
      %v1738 = vpack.c.b16 %v1234, %v1231
      %v1739 = vpack.c.b16 %v1235, %v1232
      %v1740 = vpack.c.b16 %v1239, %v1236
      %v1741 = vpack.c.b16 %v1240, %v1237
      %v1742 = vpack.c.b16 %v1241, %v1238
      %v1743 = vpack.c.b16 %v1245, %v1242
      %v1744 = vpack.c.b16 %v1246, %v1243
      %v1745 = vpack.c.b16 %v1247, %v1244
      %v1746 = vpack.c.b16 %v1251, %v1248
      %v1747 = vpack.c.b16 %v1252, %v1249
      %v1748 = vpack.c.b16 %v1253, %v1250
      %v1749 = vpack.c.b16 %v1257, %v1254
      %v1750 = vpack.c.b16 %v1258, %v1255
      %v1751 = vpack.c.b16 %v1259, %v1256
      %v1752 = vpack.c.b16 %v1263, %v1260
      %v1753 = vpack.c.b16 %v1264, %v1261
      %v1754 = vpack.c.b16 %v1265, %v1262
      %v1755 = vpack.c.b16 %v1269, %v1266
      %v1756 = vpack.c.b16 %v1270, %v1267
      %v1757 = vpack.c.b16 %v1271, %v1268
      %v1758 = vpack.c.b16 %v1275, %v1272
      %v1759 = vpack.c.b16 %v1276, %v1273
      %v1760 = vpack.c.b16 %v1277, %v1274
      %v1761 = vpack.c.b16 %v1281, %v1278
      %v1762 = vpack.c.b16 %v1282, %v1279
      %v1763 = vpack.c.b16 %v1283, %v1280
      %v1764 = vpack.c.b16 %v1287, %v1284
      %v1765 = vpack.c.b16 %v1288, %v1285
      %v1766 = vpack.c.b16 %v1289, %v1286
      %v1767 = vpack.c.b16 %v1293, %v1290
      %v1768 = vpack.c.b16 %v1294, %v1291
      %v1769 = vpack.c.b16 %v1295, %v1292
      %v1770 = vpack.c.b16 %v1299, %v1296
      %v1771 = vpack.c.b16 %v1300, %v1297
      %v1772 = vpack.c.b16 %v1301, %v1298
      %v1773 = vpack.c.b16 %v1305, %v1302
      %v1774 = vpack.c.b16 %v1306, %v1303
      %v1775 = vpack.c.b16 %v1307, %v1304
      %v1776 = vpack.c.b16 %v1311, %v1308
      %v1777 = vpack.c.b16 %v1312, %v1309
      %v1778 = vpack.c.b16 %v1313, %v1310
      %v1779 = vpack.c.b16 %v1317, %v1314
      %v1780 = vpack.c.b16 %v1318, %v1315
      %v1781 = vpack.c.b16 %v1319, %v1316
      %v1782 = vpack.c.b16 %v1323, %v1320
      %v1783 = vpack.c.b16 %v1324, %v1321
      %v1784 = vpack.c.b16 %v1325, %v1322
      %v1785 = vpack.c.b16 %v1329, %v1326
      %v1786 = vpack.c.b16 %v1330, %v1327
      %v1787 = vpack.c.b16 %v1331, %v1328
      %v1788 = vpack.c.b16 %v1335, %v1332
      %v1789 = vpack.c.b16 %v1336, %v1333
      %v1790 = vpack.c.b16 %v1337, %v1334
      %v1791 = vpack.c.b16 %v1341, %v1338
      %v1792 = vpack.c.b16 %v1342, %v1339
      %v1793 = vpack.c.b16 %v1343, %v1340
      %v1794 = vpack.c.b16 %v1347, %v1344
      %v1795 = vpack.c.b16 %v1348, %v1345
      %v1796 = vpack.c.b16 %v1349, %v1346
      %v1797 = vpack.c.b16 %v1353, %v1350
      %v1798 = vpack.c.b16 %v1354, %v1351
      %v1799 = vpack.c.b16 %v1355, %v1352
      %v1800 = vpack.c.b16 %v1359, %v1356
      %v1801 = vpack.c.b16 %v1360, %v1357
      %v1802 = vpack.c.b16 %v1361, %v1358
      %v1803 = vpack.c.b16 %v1365, %v1362
      %v1804 = vpack.c.b16 %v1366, %v1363
      %v1805 = vpack.c.b16 %v1367, %v1364
      %v1806 = vpack.c.b16 %v1371, %v1368
      %v1807 = vpack.c.b16 %v1372, %v1369
      %v1808 = vpack.c.b16 %v1373, %v1370
      %v1809 = vpack.c.b16 %v1377, %v1374
      %v1810 = vpack.c.b16 %v1378, %v1375
      %v1811 = vpack.c.b16 %v1379, %v1376
      %v1812 = vpack.c.b16 %v1383, %v1380
      %v1813 = vpack.c.b16 %v1384, %v1381
      %v1814 = vpack.c.b16 %v1385, %v1382
      %v1815 = vpack.c.b16 %v1389, %v1386
      %v1816 = vpack.c.b16 %v1390, %v1387
      %v1817 = vpack.c.b16 %v1391, %v1388
      %v1818 = vpack.c.b16 %v1395, %v1392
      %v1819 = vpack.c.b16 %v1396, %v1393
      %v1820 = vpack.c.b16 %v1397, %v1394
      %v1821 = vpack.c.b16 %v1401, %v1398
      %v1822 = vpack.c.b16 %v1402, %v1399
      %v1823 = vpack.c.b16 %v1403, %v1400
      %v1824 = vpack.c.b16 %v1407, %v1404
      %v1825 = vpack.c.b16 %v1408, %v1405
      %v1826 = vpack.c.b16 %v1409, %v1406
      %v1827 = vpack.c.b16 %v1413, %v1410
      %v1828 = vpack.c.b16 %v1414, %v1411
      %v1829 = vpack.c.b16 %v1415, %v1412
      %v1830 = vpack.c.b16 %v1419, %v1416
      %v1831 = vpack.c.b16 %v1420, %v1417
      %v1832 = vpack.c.b16 %v1421, %v1418
      %v1833 = vpack.c.b16 %v1425, %v1422
      %v1834 = vpack.c.b16 %v1426, %v1423
      %v1835 = vpack.c.b16 %v1427, %v1424
      %v1836 = vpack.c.b16 %v1431, %v1428
      %v1837 = vpack.c.b16 %v1432, %v1429
      %v1838 = vpack.c.b16 %v1433, %v1430
      %v1839 = vpack.c.b16 %v1437, %v1434
      %v1840 = vpack.c.b16 %v1438, %v1435
      %v1841 = vpack.c.b16 %v1439, %v1436
      %v1842 = vpack.c.b16 %v1443, %v1440
      %v1843 = vpack.c.b16 %v1444, %v1441
      %v1844 = vpack.c.b16 %v1445, %v1442
      %v1845 = vpack.c.b16 %v1449, %v1446
      %v1846 = vpack.c.b16 %v1450, %v1447
      %v1847 = vpack.c.b16 %v1451, %v1448
      %v1848 = vpack.c.b16 %v1455, %v1452
      %v1849 = vpack.c.b16 %v1456, %v1453
      %v1850 = vpack.c.b16 %v1457, %v1454
      %v1851 = vpack.c.b16 %v1461, %v1458
      %v1852 = vpack.c.b16 %v1462, %v1459
      %v1853 = vpack.c.b16 %v1463, %v1460
      %v1854 = vpack.c.b16 %v1467, %v1464
      %v1855 = vpack.c.b16 %v1468, %v1465
      %v1856 = vpack.c.b16 %v1469, %v1466
      %v1857 = vpack.c.b16 %v1473, %v1470
      %v1858 = vpack.c.b16 %v1474, %v1471
      %v1859 = vpack.c.b16 %v1475, %v1472
      %v1860 = vpack.c.b16 %v1479, %v1476
      %v1861 = vpack.c.b16 %v1480, %v1477
      %v1862 = vpack.c.b16 %v1481, %v1478
      %v1863 = vpack.c.b16 %v1485, %v1482
      %v1864 = vpack.c.b16 %v1486, %v1483
      %v1865 = vpack.c.b16 %v1487, %v1484
      %v1866 = vpack.c.b16 %v1491, %v1488
      %v1867 = vpack.c.b16 %v1492, %v1489
      %v1868 = vpack.c.b16 %v1493, %v1490
      %v1869 = vpack.c.b16 %v1497, %v1494
      %v1870 = vpack.c.b16 %v1498, %v1495
      %v1871 = vpack.c.b16 %v1499, %v1496
      %v1872 = vpack.c.b16 %v1503, %v1500
      %v1873 = vpack.c.b16 %v1504, %v1501
      %v1874 = vpack.c.b16 %v1505, %v1502
      %v1875 = vpack.c.b16 %v1509, %v1506
      %v1876 = vpack.c.b16 %v1510, %v1507
      %v1877 = vpack.c.b16 %v1511, %v1508
      %v1878 = vpack.c.b16 %v1515, %v1512
      %v1879 = vpack.c.b16 %v1516, %v1513
      %v1880 = vpack.c.b16 %v1517, %v1514
      %v1881 = vpack.c.b16 %v1521, %v1518
      %v1882 = vpack.c.b16 %v1522, %v1519
      %v1883 = vpack.c.b16 %v1523, %v1520
      %v1884 = vpack.c.b16 %v1527, %v1524
      %v1885 = vpack.c.b16 %v1528, %v1525
      %v1886 = vpack.c.b16 %v1529, %v1526
      %v1887 = vpack.c.b16 %v1533, %v1530
      %v1888 = vpack.c.b16 %v1534, %v1531
      %v1889 = vpack.c.b16 %v1535, %v1532
      %v1890 = vpack.c.b16 %v1539, %v1536
      %v1891 = vpack.c.b16 %v1540, %v1537
      %v1892 = vpack.c.b16 %v1541, %v1538
      %v1893 = vpack.c.b16 %v1545, %v1542
      %v1894 = vpack.c.b16 %v1546, %v1543
      %v1895 = vpack.c.b16 %v1547, %v1544
      %v1896 = vpack.c.b16 %v1551, %v1548
      %v1897 = vpack.c.b16 %v1552, %v1549
      %v1898 = vpack.c.b16 %v1553, %v1550
      %v1899 = vpack.c.b16 %v1557, %v1554
      %v1900 = vpack.c.b16 %v1558, %v1555
      %v1901 = vpack.c.b16 %v1559, %v1556
      %v1902 = vpack.c.b16 %v1563, %v1560
      %v1903 = vpack.c.b16 %v1564, %v1561
      %v1904 = vpack.c.b16 %v1565, %v1562
      %v1905 = vpack.c.b16 %v1569, %v1566
      %v1906 = vpack.c.b16 %v1570, %v1567
      %v1907 = vpack.c.b16 %v1571, %v1568
      %v1908 = vpack.c.b16 %v1575, %v1572
      %v1909 = vpack.c.b16 %v1576, %v1573
      %v1910 = vpack.c.b16 %v1577, %v1574
      %v1911 = vpack.c.b16 %v1581, %v1578
      %v1912 = vpack.c.b16 %v1582, %v1579
      %v1913 = vpack.c.b16 %v1583, %v1580
      %v1914 = vpack.c.b16 %v1587, %v1584
      %v1915 = vpack.c.b16 %v1588, %v1585
      %v1916 = vpack.c.b16 %v1589, %v1586
      %v1917 = vpack.c.b16 %v1593, %v1590
      %v1918 = vpack.c.b16 %v1594, %v1591
      %v1919 = vpack.c.b16 %v1595, %v1592
      %v1920 = vpack.c.b16 %v1599, %v1596
      %v1921 = vpack.c.b16 %v1600, %v1597
      %v1922 = vpack.c.b16 %v1601, %v1598
      %v1923 = vpack.c.b16 %v1605, %v1602
      %v1924 = vpack.c.b16 %v1606, %v1603
      %v1925 = vpack.c.b16 %v1607, %v1604
      %v1926 = vpack.c.b16 %v1611, %v1608
      %v1927 = vpack.c.b16 %v1612, %v1609
      %v1928 = vpack.c.b16 %v1613, %v1610
      %v1929 = vpack.c.b16 %v1617, %v1614
      %v1930 = vpack.c.b16 %v1618, %v1615
      %v1931 = vpack.c.b16 %v1619, %v1616
      %v1932 = vpack.c.b16 %v1623, %v1620
      %v1933 = vpack.c.b16 %v1624, %v1621
      %v1934 = vpack.c.b16 %v1625, %v1622
      %v1935 = vpack.c.b16 %v1629, %v1626
      %v1936 = vpack.c.b16 %v1630, %v1627
      %v1937 = vpack.c.b16 %v1631, %v1628
      %v1938 = vpack.c.b16 %v1635, %v1632
      %v1939 = vpack.c.b16 %v1636, %v1633
      %v1940 = vpack.c.b16 %v1637, %v1634
      %v1941 = vpack.c.b16 %v1641, %v1638
      %v1942 = vpack.c.b16 %v1642, %v1639
      %v1943 = vpack.c.b16 %v1643, %v1640
      %v1944 = vpack.c.b16 %v1647, %v1644
      %v1945 = vpack.c.b16 %v1648, %v1645
      %v1946 = vpack.c.b16 %v1649, %v1646
      %v1947 = vpack.c.b16 %v1653, %v1650
      %v1948 = vpack.c.b16 %v1654, %v1651
      %v1949 = vpack.c.b16 %v1655, %v1652
      %v1950 = vpack.c.b16 %v1659, %v1656
      %v1951 = vpack.c.b16 %v1660, %v1657
      %v1952 = vpack.c.b16 %v1661, %v1658
      %v1953 = vpack.c.b16 %v1665, %v1662
      %v1954 = vpack.c.b16 %v1666, %v1663
      %v1955 = vpack.c.b16 %v1667, %v1664
      %2244 = vmatprep.subr.bf16.mxu0 %v1690
      %2245 = vmatpush1.bf16.msra.mxu0 %v1689
      %2246 = vmatprep.subr.bf16.mxu0 %v1687
      %2247 = vmatpush1.bf16.msra.mxu0 %v1686
      %2248 = vmatprep.subr.bf16.mxu0 %v1684
      %2249 = vmatpush1.bf16.msra.mxu0 %v1683
      %2250 = vmatprep.subr.bf16.mxu0 %v1681
      %2251 = vmatpush1.bf16.msra.mxu0 %v1680
      %2252 = vmatprep.subr.bf16.mxu0 %v1678
      %2253 = vmatpush1.bf16.msra.mxu0 %v1677
      %2254 = vmatprep.subr.bf16.mxu0 %v1675
      %2255 = vmatpush1.bf16.msra.mxu0 %v1674
      %2256 = vmatprep.subr.bf16.mxu0 %v1672
      %2257 = vmatpush1.bf16.msra.mxu0 %v1671
      %2258 = vmatprep.subr.bf16.mxu0 %v1669
      %2259 = vmatpush1.bf16.msra.mxu0 %v1668
      %2260 = vmatprep.subr.bf16.mxu0 %v1714
      %2261 = vmatpush2.bf16.msra.mxu0 %v1713
      %2262 = vmatprep.subr.bf16.mxu0 %v1711
      %2263 = vmatpush2.bf16.msra.mxu0 %v1710
      %2264 = vmatprep.subr.bf16.mxu0 %v1708
      %2265 = vmatpush2.bf16.msra.mxu0 %v1707
      %2266 = vmatprep.subr.bf16.mxu0 %v1705
      %2267 = vmatpush2.bf16.msra.mxu0 %v1704
      %2268 = vmatprep.subr.bf16.mxu0 %v1702
      %2269 = vmatpush2.bf16.msra.mxu0 %v1701
      %2270 = vmatprep.subr.bf16.mxu0 %v1699
      %2271 = vmatpush2.bf16.msra.mxu0 %v1698
      %2272 = vmatprep.subr.bf16.mxu0 %v1696
      %2273 = vmatpush2.bf16.msra.mxu0 %v1695
      %2274 = vmatprep.subr.bf16.mxu0 %v1693
      %2275 = vmatpush2.bf16.msra.mxu0 %v1692
      %2276 = vmatprep.mubr.bf16.mxu0 %v685
      %2277 = vmatmul.mubr.bf16.gmra.mxu0 %v684
      %v2278 = vpop.f32.mrf.mxu0
      %v2279 = vadd.f32 %v654, %v2278
      %v2280 = vpop.f32.mrf.mxu0
      %v2281 = vadd.f32 %v658, %v2280
      %v2282 = vpop.f32.mrf.mxu0
      %v2283 = vpop.f32.mrf.mxu0
      %2284 = vdwg.mxu0
      %2285 = vmatprep.subr.bf16.mxu0 %v1738
      %2286 = vmatpush1.bf16.msra.mxu0 %v1737
      %2287 = vmatprep.subr.bf16.mxu0 %v1735
      %2288 = vmatpush1.bf16.msra.mxu0 %v1734
      %2289 = vmatprep.subr.bf16.mxu0 %v1732
      %2290 = vmatpush1.bf16.msra.mxu0 %v1731
      %2291 = vmatprep.subr.bf16.mxu0 %v1729
      %2292 = vmatpush1.bf16.msra.mxu0 %v1728
      %2293 = vmatprep.subr.bf16.mxu0 %v1726
      %2294 = vmatpush1.bf16.msra.mxu0 %v1725
      %2295 = vmatprep.subr.bf16.mxu0 %v1723
      %2296 = vmatpush1.bf16.msra.mxu0 %v1722
      %2297 = vmatprep.subr.bf16.mxu0 %v1720
      %2298 = vmatpush1.bf16.msra.mxu0 %v1719
      %2299 = vmatprep.subr.bf16.mxu0 %v1717
      %2300 = vmatpush1.bf16.msra.mxu0 %v1716
      %2301 = vmatprep.subr.bf16.mxu0 %v1762
      %2302 = vmatpush2.bf16.msra.mxu0 %v1761
      %2303 = vmatprep.subr.bf16.mxu0 %v1759
      %2304 = vmatpush2.bf16.msra.mxu0 %v1758
      %2305 = vmatprep.subr.bf16.mxu0 %v1756
      %2306 = vmatpush2.bf16.msra.mxu0 %v1755
      %2307 = vmatprep.subr.bf16.mxu0 %v1753
      %2308 = vmatpush2.bf16.msra.mxu0 %v1752
      %2309 = vmatprep.subr.bf16.mxu0 %v1750
      %2310 = vmatpush2.bf16.msra.mxu0 %v1749
      %2311 = vmatprep.subr.bf16.mxu0 %v1747
      %2312 = vmatpush2.bf16.msra.mxu0 %v1746
      %2313 = vmatprep.subr.bf16.mxu0 %v1744
      %2314 = vmatpush2.bf16.msra.mxu0 %v1743
      %2315 = vmatprep.subr.bf16.mxu0 %v1741
      %2316 = vmatpush2.bf16.msra.mxu0 %v1740
      %2317 = vmatprep.mubr.bf16.mxu0 %v687
      %2318 = vmatmul.mubr.bf16.gmra.mxu0 %v686
      %v2319 = vpop.f32.mrf.mxu0
      %v2320 = vadd.f32 %v2279, %v2319
      %v2321 = vpop.f32.mrf.mxu0
      %v2322 = vadd.f32 %v2281, %v2321
      %v2323 = vpop.f32.mrf.mxu0
      %v2324 = vpop.f32.mrf.mxu0
      %2325 = vdwg.mxu0
      %2326 = vmatprep.subr.bf16.mxu0 %v1786
      %2327 = vmatpush1.bf16.msra.mxu0 %v1785
      %2328 = vmatprep.subr.bf16.mxu0 %v1783
      %2329 = vmatpush1.bf16.msra.mxu0 %v1782
      %2330 = vmatprep.subr.bf16.mxu0 %v1780
      %2331 = vmatpush1.bf16.msra.mxu0 %v1779
      %2332 = vmatprep.subr.bf16.mxu0 %v1777
      %2333 = vmatpush1.bf16.msra.mxu0 %v1776
      %2334 = vmatprep.subr.bf16.mxu0 %v1774
      %2335 = vmatpush1.bf16.msra.mxu0 %v1773
      %2336 = vmatprep.subr.bf16.mxu0 %v1771
      %2337 = vmatpush1.bf16.msra.mxu0 %v1770
      %2338 = vmatprep.subr.bf16.mxu0 %v1768
      %2339 = vmatpush1.bf16.msra.mxu0 %v1767
      %2340 = vmatprep.subr.bf16.mxu0 %v1765
      %2341 = vmatpush1.bf16.msra.mxu0 %v1764
      %2342 = vmatprep.subr.bf16.mxu0 %v1810
      %2343 = vmatpush2.bf16.msra.mxu0 %v1809
      %2344 = vmatprep.subr.bf16.mxu0 %v1807
      %2345 = vmatpush2.bf16.msra.mxu0 %v1806
      %2346 = vmatprep.subr.bf16.mxu0 %v1804
      %2347 = vmatpush2.bf16.msra.mxu0 %v1803
      %2348 = vmatprep.subr.bf16.mxu0 %v1801
      %2349 = vmatpush2.bf16.msra.mxu0 %v1800
      %2350 = vmatprep.subr.bf16.mxu0 %v1798
      %2351 = vmatpush2.bf16.msra.mxu0 %v1797
      %2352 = vmatprep.subr.bf16.mxu0 %v1795
      %2353 = vmatpush2.bf16.msra.mxu0 %v1794
      %2354 = vmatprep.subr.bf16.mxu0 %v1792
      %2355 = vmatpush2.bf16.msra.mxu0 %v1791
      %2356 = vmatprep.subr.bf16.mxu0 %v1789
      %2357 = vmatpush2.bf16.msra.mxu0 %v1788
      %2358 = vmatprep.mubr.bf16.mxu0 %v689
      %2359 = vmatmul.mubr.bf16.gmra.mxu0 %v688
      %v2360 = vpop.f32.mrf.mxu0
      %v2361 = vadd.f32 %v2320, %v2360
      %v2362 = vpop.f32.mrf.mxu0
      %v2363 = vadd.f32 %v2322, %v2362
      %v2364 = vpop.f32.mrf.mxu0
      %v2365 = vpop.f32.mrf.mxu0
      %2366 = vdwg.mxu0
      %2367 = vmatprep.subr.bf16.mxu0 %v1834
      %2368 = vmatpush1.bf16.msra.mxu0 %v1833
      %2369 = vmatprep.subr.bf16.mxu0 %v1831
      %2370 = vmatpush1.bf16.msra.mxu0 %v1830
      %2371 = vmatprep.subr.bf16.mxu0 %v1828
      %2372 = vmatpush1.bf16.msra.mxu0 %v1827
      %2373 = vmatprep.subr.bf16.mxu0 %v1825
      %2374 = vmatpush1.bf16.msra.mxu0 %v1824
      %2375 = vmatprep.subr.bf16.mxu0 %v1822
      %2376 = vmatpush1.bf16.msra.mxu0 %v1821
      %2377 = vmatprep.subr.bf16.mxu0 %v1819
      %2378 = vmatpush1.bf16.msra.mxu0 %v1818
      %2379 = vmatprep.subr.bf16.mxu0 %v1816
      %2380 = vmatpush1.bf16.msra.mxu0 %v1815
      %2381 = vmatprep.subr.bf16.mxu0 %v1813
      %2382 = vmatpush1.bf16.msra.mxu0 %v1812
      %2383 = vmatprep.subr.bf16.mxu0 %v1858
      %2384 = vmatpush2.bf16.msra.mxu0 %v1857
      %2385 = vmatprep.subr.bf16.mxu0 %v1855
      %2386 = vmatpush2.bf16.msra.mxu0 %v1854
      %2387 = vmatprep.subr.bf16.mxu0 %v1852
      %2388 = vmatpush2.bf16.msra.mxu0 %v1851
      %2389 = vmatprep.subr.bf16.mxu0 %v1849
      %2390 = vmatpush2.bf16.msra.mxu0 %v1848
      %2391 = vmatprep.subr.bf16.mxu0 %v1846
      %2392 = vmatpush2.bf16.msra.mxu0 %v1845
      %2393 = vmatprep.subr.bf16.mxu0 %v1843
      %2394 = vmatpush2.bf16.msra.mxu0 %v1842
      %2395 = vmatprep.subr.bf16.mxu0 %v1840
      %2396 = vmatpush2.bf16.msra.mxu0 %v1839
      %2397 = vmatprep.subr.bf16.mxu0 %v1837
      %2398 = vmatpush2.bf16.msra.mxu0 %v1836
      %2399 = vmatprep.mubr.bf16.mxu0 %v691
      %2400 = vmatmul.mubr.bf16.gmra.mxu0 %v690
      %v2401 = vpop.f32.mrf.mxu0
      %v2402 = vadd.f32 %v2361, %v2401
      %v2403 = vpop.f32.mrf.mxu0
      %v2404 = vadd.f32 %v2363, %v2403
      %v2405 = vpop.f32.mrf.mxu0
      %v2406 = vpop.f32.mrf.mxu0
      %2407 = vdwg.mxu0
      %2408 = vmatprep.subr.bf16.mxu0 %v1882
      %2409 = vmatpush1.bf16.msra.mxu0 %v1881
      %2410 = vmatprep.subr.bf16.mxu0 %v1879
      %2411 = vmatpush1.bf16.msra.mxu0 %v1878
      %2412 = vmatprep.subr.bf16.mxu0 %v1876
      %2413 = vmatpush1.bf16.msra.mxu0 %v1875
      %2414 = vmatprep.subr.bf16.mxu0 %v1873
      %2415 = vmatpush1.bf16.msra.mxu0 %v1872
      %2416 = vmatprep.subr.bf16.mxu0 %v1870
      %2417 = vmatpush1.bf16.msra.mxu0 %v1869
      %2418 = vmatprep.subr.bf16.mxu0 %v1867
      %2419 = vmatpush1.bf16.msra.mxu0 %v1866
      %2420 = vmatprep.subr.bf16.mxu0 %v1864
      %2421 = vmatpush1.bf16.msra.mxu0 %v1863
      %2422 = vmatprep.subr.bf16.mxu0 %v1861
      %2423 = vmatpush1.bf16.msra.mxu0 %v1860
      %2424 = vmatprep.subr.bf16.mxu0 %v1906
      %2425 = vmatpush2.bf16.msra.mxu0 %v1905
      %2426 = vmatprep.subr.bf16.mxu0 %v1903
      %2427 = vmatpush2.bf16.msra.mxu0 %v1902
      %2428 = vmatprep.subr.bf16.mxu0 %v1900
      %2429 = vmatpush2.bf16.msra.mxu0 %v1899
      %2430 = vmatprep.subr.bf16.mxu0 %v1897
      %2431 = vmatpush2.bf16.msra.mxu0 %v1896
      %2432 = vmatprep.subr.bf16.mxu0 %v1894
      %2433 = vmatpush2.bf16.msra.mxu0 %v1893
      %2434 = vmatprep.subr.bf16.mxu0 %v1891
      %2435 = vmatpush2.bf16.msra.mxu0 %v1890
      %2436 = vmatprep.subr.bf16.mxu0 %v1888
      %2437 = vmatpush2.bf16.msra.mxu0 %v1887
      %2438 = vmatprep.subr.bf16.mxu0 %v1885
      %2439 = vmatpush2.bf16.msra.mxu0 %v1884
      %2440 = vmatprep.mubr.bf16.mxu0 %v693
      %2441 = vmatmul.mubr.bf16.gmra.mxu0 %v692
      %v2442 = vpop.f32.mrf.mxu0
      %v2443 = vadd.f32 %v2402, %v2442
      %v2444 = vpop.f32.mrf.mxu0
      %v2445 = vadd.f32 %v2404, %v2444
      %v2446 = vpop.f32.mrf.mxu0
      %v2447 = vpop.f32.mrf.mxu0
      %2448 = vdwg.mxu0
      %2449 = vmatprep.subr.bf16.mxu0 %v1930
      %2450 = vmatpush1.bf16.msra.mxu0 %v1929
      %2451 = vmatprep.subr.bf16.mxu0 %v1927
      %2452 = vmatpush1.bf16.msra.mxu0 %v1926
      %2453 = vmatprep.subr.bf16.mxu0 %v1924
      %2454 = vmatpush1.bf16.msra.mxu0 %v1923
      %2455 = vmatprep.subr.bf16.mxu0 %v1921
      %2456 = vmatpush1.bf16.msra.mxu0 %v1920
      %2457 = vmatprep.subr.bf16.mxu0 %v1918
      %2458 = vmatpush1.bf16.msra.mxu0 %v1917
      %2459 = vmatprep.subr.bf16.mxu0 %v1915
      %2460 = vmatpush1.bf16.msra.mxu0 %v1914
      %2461 = vmatprep.subr.bf16.mxu0 %v1912
      %2462 = vmatpush1.bf16.msra.mxu0 %v1911
      %2463 = vmatprep.subr.bf16.mxu0 %v1909
      %2464 = vmatpush1.bf16.msra.mxu0 %v1908
      %2465 = vmatprep.subr.bf16.mxu0 %v1954
      %2466 = vmatpush2.bf16.msra.mxu0 %v1953
      %2467 = vmatprep.subr.bf16.mxu0 %v1951
      %2468 = vmatpush2.bf16.msra.mxu0 %v1950
      %2469 = vmatprep.subr.bf16.mxu0 %v1948
      %2470 = vmatpush2.bf16.msra.mxu0 %v1947
      %2471 = vmatprep.subr.bf16.mxu0 %v1945
      %2472 = vmatpush2.bf16.msra.mxu0 %v1944
      %2473 = vmatprep.subr.bf16.mxu0 %v1942
      %2474 = vmatpush2.bf16.msra.mxu0 %v1941
      %2475 = vmatprep.subr.bf16.mxu0 %v1939
      %2476 = vmatpush2.bf16.msra.mxu0 %v1938
      %2477 = vmatprep.subr.bf16.mxu0 %v1936
      %2478 = vmatpush2.bf16.msra.mxu0 %v1935
      %2479 = vmatprep.subr.bf16.mxu0 %v1933
      %2480 = vmatpush2.bf16.msra.mxu0 %v1932
      %2481 = vmatprep.mubr.bf16.mxu0 %v695
      %2482 = vmatmul.mubr.bf16.gmra.mxu0 %v694
      %v2483 = vpop.f32.mrf.mxu0
      %v2484 = vadd.f32 %v2443, %v2483
      %v2485 = vpop.f32.mrf.mxu0
      %v2486 = vadd.f32 %v2445, %v2485
      %v2487 = vpop.f32.mrf.mxu0
      %v2488 = vpop.f32.mrf.mxu0
      %2489 = vdwg.mxu0
      %2490 = vmatprep.subr.bf16.mxu0 0
      %2491 = vmatpush1.bf16.msra.mxu0 %v1691
      %2492 = vmatprep.subr.bf16.mxu0 0
      %2493 = vmatpush1.bf16.msra.mxu0 %v1688
      %2494 = vmatprep.subr.bf16.mxu0 0
      %2495 = vmatpush1.bf16.msra.mxu0 %v1685
      %2496 = vmatprep.subr.bf16.mxu0 0
      %2497 = vmatpush1.bf16.msra.mxu0 %v1682
      %2498 = vmatprep.subr.bf16.mxu0 0
      %2499 = vmatpush1.bf16.msra.mxu0 %v1679
      %2500 = vmatprep.subr.bf16.mxu0 0
      %2501 = vmatpush1.bf16.msra.mxu0 %v1676
      %2502 = vmatprep.subr.bf16.mxu0 0
      %2503 = vmatpush1.bf16.msra.mxu0 %v1673
      %2504 = vmatprep.subr.bf16.mxu0 0
      %2505 = vmatpush1.bf16.msra.mxu0 %v1670
      %2506 = vmatprep.subr.bf16.mxu0 0
      %2507 = vmatpush2.bf16.msra.mxu0 %v1715
      %2508 = vmatprep.subr.bf16.mxu0 0
      %2509 = vmatpush2.bf16.msra.mxu0 %v1712
      %2510 = vmatprep.subr.bf16.mxu0 0
      %2511 = vmatpush2.bf16.msra.mxu0 %v1709
      %2512 = vmatprep.subr.bf16.mxu0 0
      %2513 = vmatpush2.bf16.msra.mxu0 %v1706
      %2514 = vmatprep.subr.bf16.mxu0 0
      %2515 = vmatpush2.bf16.msra.mxu0 %v1703
      %2516 = vmatprep.subr.bf16.mxu0 0
      %2517 = vmatpush2.bf16.msra.mxu0 %v1700
      %2518 = vmatprep.subr.bf16.mxu0 0
      %2519 = vmatpush2.bf16.msra.mxu0 %v1697
      %2520 = vmatprep.subr.bf16.mxu0 0
      %2521 = vmatpush2.bf16.msra.mxu0 %v1694
      %2522 = vmatprep.mubr.bf16.mxu0 %v685
      %2523 = vmatmul.mubr.bf16.gmra.mxu0 %v684
      %v2524 = vpop.f32.mrf.mxu0
      %v2525 = vadd.f32 %v662, %v2524
      %v2526 = vpop.f32.mrf.mxu0
      %v2527 = vpop.f32.mrf.mxu0
      %v2528 = vpop.f32.mrf.mxu0
      %2529 = vdwg.mxu0
      %2530 = vmatprep.subr.bf16.mxu0 0
      %2531 = vmatpush1.bf16.msra.mxu0 %v1739
      %2532 = vmatprep.subr.bf16.mxu0 0
      %2533 = vmatpush1.bf16.msra.mxu0 %v1736
      %2534 = vmatprep.subr.bf16.mxu0 0
      %2535 = vmatpush1.bf16.msra.mxu0 %v1733
      %2536 = vmatprep.subr.bf16.mxu0 0
      %2537 = vmatpush1.bf16.msra.mxu0 %v1730
      %2538 = vmatprep.subr.bf16.mxu0 0
      %2539 = vmatpush1.bf16.msra.mxu0 %v1727
      %2540 = vmatprep.subr.bf16.mxu0 0
      %2541 = vmatpush1.bf16.msra.mxu0 %v1724
      %2542 = vmatprep.subr.bf16.mxu0 0
      %2543 = vmatpush1.bf16.msra.mxu0 %v1721
      %2544 = vmatprep.subr.bf16.mxu0 0
      %2545 = vmatpush1.bf16.msra.mxu0 %v1718
      %2546 = vmatprep.subr.bf16.mxu0 0
      %2547 = vmatpush2.bf16.msra.mxu0 %v1763
      %2548 = vmatprep.subr.bf16.mxu0 0
      %2549 = vmatpush2.bf16.msra.mxu0 %v1760
      %2550 = vmatprep.subr.bf16.mxu0 0
      %2551 = vmatpush2.bf16.msra.mxu0 %v1757
      %2552 = vmatprep.subr.bf16.mxu0 0
      %2553 = vmatpush2.bf16.msra.mxu0 %v1754
      %2554 = vmatprep.subr.bf16.mxu0 0
      %2555 = vmatpush2.bf16.msra.mxu0 %v1751
      %2556 = vmatprep.subr.bf16.mxu0 0
      %2557 = vmatpush2.bf16.msra.mxu0 %v1748
      %2558 = vmatprep.subr.bf16.mxu0 0
      %2559 = vmatpush2.bf16.msra.mxu0 %v1745
      %2560 = vmatprep.subr.bf16.mxu0 0
      %2561 = vmatpush2.bf16.msra.mxu0 %v1742
      %2562 = vmatprep.mubr.bf16.mxu0 %v687
      %2563 = vmatmul.mubr.bf16.gmra.mxu0 %v686
      %v2564 = vpop.f32.mrf.mxu0
      %v2565 = vadd.f32 %v2525, %v2564
      %v2566 = vpop.f32.mrf.mxu0
      %v2567 = vpop.f32.mrf.mxu0
      %v2568 = vpop.f32.mrf.mxu0
      %2569 = vdwg.mxu0
      %2570 = vmatprep.subr.bf16.mxu0 0
      %2571 = vmatpush1.bf16.msra.mxu0 %v1787
      %2572 = vmatprep.subr.bf16.mxu0 0
      %2573 = vmatpush1.bf16.msra.mxu0 %v1784
      %2574 = vmatprep.subr.bf16.mxu0 0
      %2575 = vmatpush1.bf16.msra.mxu0 %v1781
      %2576 = vmatprep.subr.bf16.mxu0 0
      %2577 = vmatpush1.bf16.msra.mxu0 %v1778
      %2578 = vmatprep.subr.bf16.mxu0 0
      %2579 = vmatpush1.bf16.msra.mxu0 %v1775
      %2580 = vmatprep.subr.bf16.mxu0 0
      %2581 = vmatpush1.bf16.msra.mxu0 %v1772
      %2582 = vmatprep.subr.bf16.mxu0 0
      %2583 = vmatpush1.bf16.msra.mxu0 %v1769
      %2584 = vmatprep.subr.bf16.mxu0 0
      %2585 = vmatpush1.bf16.msra.mxu0 %v1766
      %2586 = vmatprep.subr.bf16.mxu0 0
      %2587 = vmatpush2.bf16.msra.mxu0 %v1811
      %2588 = vmatprep.subr.bf16.mxu0 0
      %2589 = vmatpush2.bf16.msra.mxu0 %v1808
      %2590 = vmatprep.subr.bf16.mxu0 0
      %2591 = vmatpush2.bf16.msra.mxu0 %v1805
      %2592 = vmatprep.subr.bf16.mxu0 0
      %2593 = vmatpush2.bf16.msra.mxu0 %v1802
      %2594 = vmatprep.subr.bf16.mxu0 0
      %2595 = vmatpush2.bf16.msra.mxu0 %v1799
      %2596 = vmatprep.subr.bf16.mxu0 0
      %2597 = vmatpush2.bf16.msra.mxu0 %v1796
      %2598 = vmatprep.subr.bf16.mxu0 0
      %2599 = vmatpush2.bf16.msra.mxu0 %v1793
      %2600 = vmatprep.subr.bf16.mxu0 0
      %2601 = vmatpush2.bf16.msra.mxu0 %v1790
      %2602 = vmatprep.mubr.bf16.mxu0 %v689
      %2603 = vmatmul.mubr.bf16.gmra.mxu0 %v688
      %v2604 = vpop.f32.mrf.mxu0
      %v2605 = vadd.f32 %v2565, %v2604
      %v2606 = vpop.f32.mrf.mxu0
      %v2607 = vpop.f32.mrf.mxu0
      %v2608 = vpop.f32.mrf.mxu0
      %2609 = vdwg.mxu0
      %2610 = vmatprep.subr.bf16.mxu0 0
      %2611 = vmatpush1.bf16.msra.mxu0 %v1835
      %2612 = vmatprep.subr.bf16.mxu0 0
      %2613 = vmatpush1.bf16.msra.mxu0 %v1832
      %2614 = vmatprep.subr.bf16.mxu0 0
      %2615 = vmatpush1.bf16.msra.mxu0 %v1829
      %2616 = vmatprep.subr.bf16.mxu0 0
      %2617 = vmatpush1.bf16.msra.mxu0 %v1826
      %2618 = vmatprep.subr.bf16.mxu0 0
      %2619 = vmatpush1.bf16.msra.mxu0 %v1823
      %2620 = vmatprep.subr.bf16.mxu0 0
      %2621 = vmatpush1.bf16.msra.mxu0 %v1820
      %2622 = vmatprep.subr.bf16.mxu0 0
      %2623 = vmatpush1.bf16.msra.mxu0 %v1817
      %2624 = vmatprep.subr.bf16.mxu0 0
      %2625 = vmatpush1.bf16.msra.mxu0 %v1814
      %2626 = vmatprep.subr.bf16.mxu0 0
      %2627 = vmatpush2.bf16.msra.mxu0 %v1859
      %2628 = vmatprep.subr.bf16.mxu0 0
      %2629 = vmatpush2.bf16.msra.mxu0 %v1856
      %2630 = vmatprep.subr.bf16.mxu0 0
      %2631 = vmatpush2.bf16.msra.mxu0 %v1853
      %2632 = vmatprep.subr.bf16.mxu0 0
      %2633 = vmatpush2.bf16.msra.mxu0 %v1850
      %2634 = vmatprep.subr.bf16.mxu0 0
      %2635 = vmatpush2.bf16.msra.mxu0 %v1847
      %2636 = vmatprep.subr.bf16.mxu0 0
      %2637 = vmatpush2.bf16.msra.mxu0 %v1844
      %2638 = vmatprep.subr.bf16.mxu0 0
      %2639 = vmatpush2.bf16.msra.mxu0 %v1841
      %2640 = vmatprep.subr.bf16.mxu0 0
      %2641 = vmatpush2.bf16.msra.mxu0 %v1838
      %2642 = vmatprep.mubr.bf16.mxu0 %v691
      %2643 = vmatmul.mubr.bf16.gmra.mxu0 %v690
      %v2644 = vpop.f32.mrf.mxu0
      %v2645 = vadd.f32 %v2605, %v2644
      %v2646 = vpop.f32.mrf.mxu0
      %v2647 = vpop.f32.mrf.mxu0
      %v2648 = vpop.f32.mrf.mxu0
      %2649 = vdwg.mxu0
      %2650 = vmatprep.subr.bf16.mxu0 0
      %2651 = vmatpush1.bf16.msra.mxu0 %v1883
      %2652 = vmatprep.subr.bf16.mxu0 0
      %2653 = vmatpush1.bf16.msra.mxu0 %v1880
      %2654 = vmatprep.subr.bf16.mxu0 0
      %2655 = vmatpush1.bf16.msra.mxu0 %v1877
      %2656 = vmatprep.subr.bf16.mxu0 0
      %2657 = vmatpush1.bf16.msra.mxu0 %v1874
      %2658 = vmatprep.subr.bf16.mxu0 0
      %2659 = vmatpush1.bf16.msra.mxu0 %v1871
      %2660 = vmatprep.subr.bf16.mxu0 0
      %2661 = vmatpush1.bf16.msra.mxu0 %v1868
      %2662 = vmatprep.subr.bf16.mxu0 0
      %2663 = vmatpush1.bf16.msra.mxu0 %v1865
      %2664 = vmatprep.subr.bf16.mxu0 0
      %2665 = vmatpush1.bf16.msra.mxu0 %v1862
      %2666 = vmatprep.subr.bf16.mxu0 0
      %2667 = vmatpush2.bf16.msra.mxu0 %v1907
      %2668 = vmatprep.subr.bf16.mxu0 0
      %2669 = vmatpush2.bf16.msra.mxu0 %v1904
      %2670 = vmatprep.subr.bf16.mxu0 0
      %2671 = vmatpush2.bf16.msra.mxu0 %v1901
      %2672 = vmatprep.subr.bf16.mxu0 0
      %2673 = vmatpush2.bf16.msra.mxu0 %v1898
      %2674 = vmatprep.subr.bf16.mxu0 0
      %2675 = vmatpush2.bf16.msra.mxu0 %v1895
      %2676 = vmatprep.subr.bf16.mxu0 0
      %2677 = vmatpush2.bf16.msra.mxu0 %v1892
      %2678 = vmatprep.subr.bf16.mxu0 0
      %2679 = vmatpush2.bf16.msra.mxu0 %v1889
      %2680 = vmatprep.subr.bf16.mxu0 0
      %2681 = vmatpush2.bf16.msra.mxu0 %v1886
      %2682 = vmatprep.mubr.bf16.mxu0 %v693
      %2683 = vmatmul.mubr.bf16.gmra.mxu0 %v692
      %v2684 = vpop.f32.mrf.mxu0
      %v2685 = vadd.f32 %v2645, %v2684
      %v2686 = vpop.f32.mrf.mxu0
      %v2687 = vpop.f32.mrf.mxu0
      %v2688 = vpop.f32.mrf.mxu0
      %2689 = vdwg.mxu0
      %2690 = vmatprep.subr.bf16.mxu0 0
      %2691 = vmatpush1.bf16.msra.mxu0 %v1931
      %2692 = vmatprep.subr.bf16.mxu0 0
      %2693 = vmatpush1.bf16.msra.mxu0 %v1928
      %2694 = vmatprep.subr.bf16.mxu0 0
      %2695 = vmatpush1.bf16.msra.mxu0 %v1925
      %2696 = vmatprep.subr.bf16.mxu0 0
      %2697 = vmatpush1.bf16.msra.mxu0 %v1922
      %2698 = vmatprep.subr.bf16.mxu0 0
      %2699 = vmatpush1.bf16.msra.mxu0 %v1919
      %2700 = vmatprep.subr.bf16.mxu0 0
      %2701 = vmatpush1.bf16.msra.mxu0 %v1916
      %2702 = vmatprep.subr.bf16.mxu0 0
      %2703 = vmatpush1.bf16.msra.mxu0 %v1913
      %2704 = vmatprep.subr.bf16.mxu0 0
      %2705 = vmatpush1.bf16.msra.mxu0 %v1910
      %2706 = vmatprep.subr.bf16.mxu0 0
      %2707 = vmatpush2.bf16.msra.mxu0 %v1955
      %2708 = vmatprep.subr.bf16.mxu0 0
      %2709 = vmatpush2.bf16.msra.mxu0 %v1952
      %2710 = vmatprep.subr.bf16.mxu0 0
      %2711 = vmatpush2.bf16.msra.mxu0 %v1949
      %2712 = vmatprep.subr.bf16.mxu0 0
      %2713 = vmatpush2.bf16.msra.mxu0 %v1946
      %2714 = vmatprep.subr.bf16.mxu0 0
      %2715 = vmatpush2.bf16.msra.mxu0 %v1943
      %2716 = vmatprep.subr.bf16.mxu0 0
      %2717 = vmatpush2.bf16.msra.mxu0 %v1940
      %2718 = vmatprep.subr.bf16.mxu0 0
      %2719 = vmatpush2.bf16.msra.mxu0 %v1937
      %2720 = vmatprep.subr.bf16.mxu0 0
      %2721 = vmatpush2.bf16.msra.mxu0 %v1934
      %2722 = vmatprep.mubr.bf16.mxu0 %v695
      %2723 = vmatmul.mubr.bf16.gmra.mxu0 %v694
      %v2724 = vpop.f32.mrf.mxu0
      %v2725 = vadd.f32 %v2685, %v2724
      %v2726 = vpop.f32.mrf.mxu0
      %v2727 = vpop.f32.mrf.mxu0
      %v2728 = vpop.f32.mrf.mxu0
      %2729 = vdwg.mxu0
      %v2730 = vld [vmem:[#allocation2] sm:$0xff]
      %v2732 = vcombine.high %v2730, %v2730
      %2734 = vst [vmem:[#allocation3 + $0x1] sm:$0xf] %v2730
      %2735 = vst [vmem:[#allocation3 + $0x9] sm:$0xf] %v2732
      %v2736 = vld [vmem:[#allocation3] sm:$0xf]
      %v2737 = vld [vmem:[#allocation3 + $0x8] sm:$0xf]
      %v2738 = vld [vmem:[#allocation3 + $0x1] sm:$0xf]
      %v2739 = vld [vmem:[#allocation3 + $0x9] sm:$0xf]
      %v2740 = vld [vmem:[#allocation3 + $0x2] sm:$0xf]
      %v2741 = vld [vmem:[#allocation3 + $0xa] sm:$0xf]
      %v2744 = vcombine.low %v2736, %v2737
      %v2748 = vcombine.low %v2738, %v2739
      %v2752 = vcombine.low %v2740, %v2741
      %v2754 = vpack.c.bf16 %v2744, %v2744
      %v2755 = vpack.c.bf16 %v2748, %v2748
      %v2756 = vpack.c.bf16 %v2752, %v2752
      %v2757 = vld [vmem:[%s3] sm:$0xff]
      %v2758 = vld [vmem:[%s3 + $0x8] sm:$0xff]
      %v2759 = vld [vmem:[%s3 + $0x10] sm:$0xff]
      %v2760 = vld [vmem:[%s3 + $0x18] sm:$0xff]
      %v2761 = vld [vmem:[%s3 + $0x20] sm:$0xff]
      %v2762 = vld [vmem:[%s3 + $0x28] sm:$0xff]
      %v2763 = vld [vmem:[%s3 + $0x30] sm:$0xff]
      %v2764 = vld [vmem:[%s3 + $0x38] sm:$0xff]
      %v2765 = vld [vmem:[%s3 + $0x40] sm:$0xff]
      %v2766 = vld [vmem:[%s3 + $0x48] sm:$0xff]
      %v2767 = vld [vmem:[%s3 + $0x50] sm:$0xff]
      %v2768 = vld [vmem:[%s3 + $0x58] sm:$0xff]
      %v2769 = vld [vmem:[%s3 + $0x60] sm:$0xff]
      %v2770 = vld [vmem:[%s3 + $0x68] sm:$0xff]
      %v2771 = vld [vmem:[%s3 + $0x70] sm:$0xff]
      %v2772 = vld [vmem:[%s3 + $0x78] sm:$0xff]
      %v2773 = vld [vmem:[%s3 + $0x80] sm:$0xff]
      %v2774 = vld [vmem:[%s3 + $0x88] sm:$0xff]
      %v2775 = vld [vmem:[%s3 + $0x90] sm:$0xff]
      %v2776 = vld [vmem:[%s3 + $0x98] sm:$0xff]
      %v2777 = vld [vmem:[%s3 + $0xa0] sm:$0xff]
      %v2778 = vld [vmem:[%s3 + $0xa8] sm:$0xff]
      %v2779 = vld [vmem:[%s3 + $0xb0] sm:$0xff]
      %v2780 = vld [vmem:[%s3 + $0xb8] sm:$0xff]
      %v2781 = vld [vmem:[%s3 + $0xc0] sm:$0xff]
      %v2782 = vld [vmem:[%s3 + $0xc8] sm:$0xff]
      %v2783 = vld [vmem:[%s3 + $0xd0] sm:$0xff]
      %v2784 = vld [vmem:[%s3 + $0xd8] sm:$0xff]
      %v2785 = vld [vmem:[%s3 + $0xe0] sm:$0xff]
      %v2786 = vld [vmem:[%s3 + $0xe8] sm:$0xff]
      %v2787 = vld [vmem:[%s3 + $0xf0] sm:$0xff]
      %v2788 = vld [vmem:[%s3 + $0xf8] sm:$0xff]
      %v2789 = vld [vmem:[%s3 + $0x100] sm:$0xff]
      %v2790 = vld [vmem:[%s3 + $0x108] sm:$0xff]
      %v2791 = vld [vmem:[%s3 + $0x110] sm:$0xff]
      %v2792 = vld [vmem:[%s3 + $0x118] sm:$0xff]
      %v2793 = vld [vmem:[%s3 + $0x120] sm:$0xff]
      %v2794 = vld [vmem:[%s3 + $0x128] sm:$0xff]
      %v2795 = vld [vmem:[%s3 + $0x130] sm:$0xff]
      %v2796 = vld [vmem:[%s3 + $0x138] sm:$0xff]
      %v2797 = vld [vmem:[%s3 + $0x140] sm:$0xff]
      %v2798 = vld [vmem:[%s3 + $0x148] sm:$0xff]
      %v2799 = vld [vmem:[%s3 + $0x150] sm:$0xff]
      %v2800 = vld [vmem:[%s3 + $0x158] sm:$0xff]
      %v2801 = vld [vmem:[%s3 + $0x160] sm:$0xff]
      %v2802 = vld [vmem:[%s3 + $0x168] sm:$0xff]
      %v2803 = vld [vmem:[%s3 + $0x170] sm:$0xff]
      %v2804 = vld [vmem:[%s3 + $0x178] sm:$0xff]
      %v2853 = vunpack.c.l.b16 %v2757
      %v2854 = vunpack.c.h.b16 %v2757
      %v2855 = vunpack.c.l.b16 %v2758
      %v2856 = vunpack.c.h.b16 %v2758
      %v2857 = vunpack.c.l.b16 %v2759
      %v2858 = vunpack.c.h.b16 %v2759
      %v2859 = vunpack.c.l.b16 %v2760
      %v2860 = vunpack.c.h.b16 %v2760
      %v2861 = vunpack.c.l.b16 %v2761
      %v2862 = vunpack.c.h.b16 %v2761
      %v2863 = vunpack.c.l.b16 %v2762
      %v2864 = vunpack.c.h.b16 %v2762
      %v2865 = vunpack.c.l.b16 %v2763
      %v2866 = vunpack.c.h.b16 %v2763
      %v2867 = vunpack.c.l.b16 %v2764
      %v2868 = vunpack.c.h.b16 %v2764
      %v2869 = vunpack.c.l.b16 %v2765
      %v2870 = vunpack.c.h.b16 %v2765
      %v2871 = vunpack.c.l.b16 %v2766
      %v2872 = vunpack.c.h.b16 %v2766
      %v2873 = vunpack.c.l.b16 %v2767
      %v2874 = vunpack.c.h.b16 %v2767
      %v2875 = vunpack.c.l.b16 %v2768
      %v2876 = vunpack.c.h.b16 %v2768
      %v2877 = vunpack.c.l.b16 %v2769
      %v2878 = vunpack.c.h.b16 %v2769
      %v2879 = vunpack.c.l.b16 %v2770
      %v2880 = vunpack.c.h.b16 %v2770
      %v2881 = vunpack.c.l.b16 %v2771
      %v2882 = vunpack.c.h.b16 %v2771
      %v2883 = vunpack.c.l.b16 %v2772
      %v2884 = vunpack.c.h.b16 %v2772
      %v2885 = vunpack.c.l.b16 %v2773
      %v2886 = vunpack.c.h.b16 %v2773
      %v2887 = vunpack.c.l.b16 %v2774
      %v2888 = vunpack.c.h.b16 %v2774
      %v2889 = vunpack.c.l.b16 %v2775
      %v2890 = vunpack.c.h.b16 %v2775
      %v2891 = vunpack.c.l.b16 %v2776
      %v2892 = vunpack.c.h.b16 %v2776
      %v2893 = vunpack.c.l.b16 %v2777
      %v2894 = vunpack.c.h.b16 %v2777
      %v2895 = vunpack.c.l.b16 %v2778
      %v2896 = vunpack.c.h.b16 %v2778
      %v2897 = vunpack.c.l.b16 %v2779
      %v2898 = vunpack.c.h.b16 %v2779
      %v2899 = vunpack.c.l.b16 %v2780
      %v2900 = vunpack.c.h.b16 %v2780
      %v2901 = vunpack.c.l.b16 %v2781
      %v2902 = vunpack.c.h.b16 %v2781
      %v2903 = vunpack.c.l.b16 %v2782
      %v2904 = vunpack.c.h.b16 %v2782
      %v2905 = vunpack.c.l.b16 %v2783
      %v2906 = vunpack.c.h.b16 %v2783
      %v2907 = vunpack.c.l.b16 %v2784
      %v2908 = vunpack.c.h.b16 %v2784
      %v2909 = vunpack.c.l.b16 %v2785
      %v2910 = vunpack.c.h.b16 %v2785
      %v2911 = vunpack.c.l.b16 %v2786
      %v2912 = vunpack.c.h.b16 %v2786
      %v2913 = vunpack.c.l.b16 %v2787
      %v2914 = vunpack.c.h.b16 %v2787
      %v2915 = vunpack.c.l.b16 %v2788
      %v2916 = vunpack.c.h.b16 %v2788
      %v2917 = vunpack.c.l.b16 %v2789
      %v2918 = vunpack.c.h.b16 %v2789
      %v2919 = vunpack.c.l.b16 %v2790
      %v2920 = vunpack.c.h.b16 %v2790
      %v2921 = vunpack.c.l.b16 %v2791
      %v2922 = vunpack.c.h.b16 %v2791
      %v2923 = vunpack.c.l.b16 %v2792
      %v2924 = vunpack.c.h.b16 %v2792
      %v2925 = vunpack.c.l.b16 %v2793
      %v2926 = vunpack.c.h.b16 %v2793
      %v2927 = vunpack.c.l.b16 %v2794
      %v2928 = vunpack.c.h.b16 %v2794
      %v2929 = vunpack.c.l.b16 %v2795
      %v2930 = vunpack.c.h.b16 %v2795
      %v2931 = vunpack.c.l.b16 %v2796
      %v2932 = vunpack.c.h.b16 %v2796
      %v2933 = vunpack.c.l.b16 %v2797
      %v2934 = vunpack.c.h.b16 %v2797
      %v2935 = vunpack.c.l.b16 %v2798
      %v2936 = vunpack.c.h.b16 %v2798
      %v2937 = vunpack.c.l.b16 %v2799
      %v2938 = vunpack.c.h.b16 %v2799
      %v2939 = vunpack.c.l.b16 %v2800
      %v2940 = vunpack.c.h.b16 %v2800
      %v2941 = vunpack.c.l.b16 %v2801
      %v2942 = vunpack.c.h.b16 %v2801
      %v2943 = vunpack.c.l.b16 %v2802
      %v2944 = vunpack.c.h.b16 %v2802
      %v2945 = vunpack.c.l.b16 %v2803
      %v2946 = vunpack.c.h.b16 %v2803
      %v2947 = vunpack.c.l.b16 %v2804
      %v2948 = vunpack.c.h.b16 %v2804
      %v2949 = vpack.c.b16 %v2855, %v2853
      %v2950 = vpack.c.b16 %v2856, %v2854
      %v2951 = vpack.c.b16 %v2859, %v2857
      %v2952 = vpack.c.b16 %v2860, %v2858
      %v2953 = vpack.c.b16 %v2863, %v2861
      %v2954 = vpack.c.b16 %v2864, %v2862
      %v2955 = vpack.c.b16 %v2867, %v2865
      %v2956 = vpack.c.b16 %v2868, %v2866
      %v2957 = vpack.c.b16 %v2871, %v2869
      %v2958 = vpack.c.b16 %v2872, %v2870
      %v2959 = vpack.c.b16 %v2875, %v2873
      %v2960 = vpack.c.b16 %v2876, %v2874
      %v2961 = vpack.c.b16 %v2879, %v2877
      %v2962 = vpack.c.b16 %v2880, %v2878
      %v2963 = vpack.c.b16 %v2883, %v2881
      %v2964 = vpack.c.b16 %v2884, %v2882
      %v2965 = vpack.c.b16 %v2887, %v2885
      %v2966 = vpack.c.b16 %v2888, %v2886
      %v2967 = vpack.c.b16 %v2891, %v2889
      %v2968 = vpack.c.b16 %v2892, %v2890
      %v2969 = vpack.c.b16 %v2895, %v2893
      %v2970 = vpack.c.b16 %v2896, %v2894
      %v2971 = vpack.c.b16 %v2899, %v2897
      %v2972 = vpack.c.b16 %v2900, %v2898
      %v2973 = vpack.c.b16 %v2903, %v2901
      %v2974 = vpack.c.b16 %v2904, %v2902
      %v2975 = vpack.c.b16 %v2907, %v2905
      %v2976 = vpack.c.b16 %v2908, %v2906
      %v2977 = vpack.c.b16 %v2911, %v2909
      %v2978 = vpack.c.b16 %v2912, %v2910
      %v2979 = vpack.c.b16 %v2915, %v2913
      %v2980 = vpack.c.b16 %v2916, %v2914
      %v2981 = vpack.c.b16 %v2919, %v2917
      %v2982 = vpack.c.b16 %v2920, %v2918
      %v2983 = vpack.c.b16 %v2923, %v2921
      %v2984 = vpack.c.b16 %v2924, %v2922
      %v2985 = vpack.c.b16 %v2927, %v2925
      %v2986 = vpack.c.b16 %v2928, %v2926
      %v2987 = vpack.c.b16 %v2931, %v2929
      %v2988 = vpack.c.b16 %v2932, %v2930
      %v2989 = vpack.c.b16 %v2935, %v2933
      %v2990 = vpack.c.b16 %v2936, %v2934
      %v2991 = vpack.c.b16 %v2939, %v2937
      %v2992 = vpack.c.b16 %v2940, %v2938
      %v2993 = vpack.c.b16 %v2943, %v2941
      %v2994 = vpack.c.b16 %v2944, %v2942
      %v2995 = vpack.c.b16 %v2947, %v2945
      %v2996 = vpack.c.b16 %v2948, %v2946
      %3045 = vmatprep.subr.bf16.mxu0 %v2964
      %3046 = vmatpush1.bf16.msra.mxu0 %v2963
      %3047 = vmatprep.subr.bf16.mxu0 %v2962
      %3048 = vmatpush1.bf16.msra.mxu0 %v2961
      %3049 = vmatprep.subr.bf16.mxu0 %v2960
      %3050 = vmatpush1.bf16.msra.mxu0 %v2959
      %3051 = vmatprep.subr.bf16.mxu0 %v2958
      %3052 = vmatpush1.bf16.msra.mxu0 %v2957
      %3053 = vmatprep.subr.bf16.mxu0 %v2956
      %3054 = vmatpush1.bf16.msra.mxu0 %v2955
      %3055 = vmatprep.subr.bf16.mxu0 %v2954
      %3056 = vmatpush1.bf16.msra.mxu0 %v2953
      %3057 = vmatprep.subr.bf16.mxu0 %v2952
      %3058 = vmatpush1.bf16.msra.mxu0 %v2951
      %3059 = vmatprep.subr.bf16.mxu0 %v2950
      %3060 = vmatpush1.bf16.msra.mxu0 %v2949
      %3061 = vmatprep.subr.bf16.mxu0 %v2980
      %3062 = vmatpush2.bf16.msra.mxu0 %v2979
      %3063 = vmatprep.subr.bf16.mxu0 %v2978
      %3064 = vmatpush2.bf16.msra.mxu0 %v2977
      %3065 = vmatprep.subr.bf16.mxu0 %v2976
      %3066 = vmatpush2.bf16.msra.mxu0 %v2975
      %3067 = vmatprep.subr.bf16.mxu0 %v2974
      %3068 = vmatpush2.bf16.msra.mxu0 %v2973
      %3069 = vmatprep.subr.bf16.mxu0 %v2972
      %3070 = vmatpush2.bf16.msra.mxu0 %v2971
      %3071 = vmatprep.subr.bf16.mxu0 %v2970
      %3072 = vmatpush2.bf16.msra.mxu0 %v2969
      %3073 = vmatprep.subr.bf16.mxu0 %v2968
      %3074 = vmatpush2.bf16.msra.mxu0 %v2967
      %3075 = vmatprep.subr.bf16.mxu0 %v2966
      %3076 = vmatpush2.bf16.msra.mxu0 %v2965
      %3077 = vmatprep.mubr.bf16.mxu0 %v2755
      %3078 = vmatmul.mubr.bf16.gmra.mxu0 %v2754
      %v3079 = vpop.f32.mrf.mxu0
      %v3080 = vadd.f32 0.0, %v3079
      %v3081 = vpop.f32.mrf.mxu0
      %v3082 = vadd.f32 0.0, %v3081
      %v3083 = vpop.f32.mrf.mxu0
      %v3084 = vpop.f32.mrf.mxu0
      %3085 = vdwg.mxu0
      %3086 = vmatprep.subr.bf16.mxu0 %v2996
      %3087 = vmatpush1.bf16.msra.mxu0 %v2995
      %3088 = vmatprep.subr.bf16.mxu0 %v2994
      %3089 = vmatpush1.bf16.msra.mxu0 %v2993
      %3090 = vmatprep.subr.bf16.mxu0 %v2992
      %3091 = vmatpush1.bf16.msra.mxu0 %v2991
      %3092 = vmatprep.subr.bf16.mxu0 %v2990
      %3093 = vmatpush1.bf16.msra.mxu0 %v2989
      %3094 = vmatprep.subr.bf16.mxu0 %v2988
      %3095 = vmatpush1.bf16.msra.mxu0 %v2987
      %3096 = vmatprep.subr.bf16.mxu0 %v2986
      %3097 = vmatpush1.bf16.msra.mxu0 %v2985
      %3098 = vmatprep.subr.bf16.mxu0 %v2984
      %3099 = vmatpush1.bf16.msra.mxu0 %v2983
      %3100 = vmatprep.subr.bf16.mxu0 %v2982
      %3101 = vmatpush1.bf16.msra.mxu0 %v2981
      %3102 = vmatprep.subr.bf16.mxu0 0
      %3103 = vmatpush2.bf16.msra.mxu0 0
      %3104 = vmatprep.subr.bf16.mxu0 0
      %3105 = vmatpush2.bf16.msra.mxu0 0
      %3106 = vmatprep.subr.bf16.mxu0 0
      %3107 = vmatpush2.bf16.msra.mxu0 0
      %3108 = vmatprep.subr.bf16.mxu0 0
      %3109 = vmatpush2.bf16.msra.mxu0 0
      %3110 = vmatprep.subr.bf16.mxu0 0
      %3111 = vmatpush2.bf16.msra.mxu0 0
      %3112 = vmatprep.subr.bf16.mxu0 0
      %3113 = vmatpush2.bf16.msra.mxu0 0
      %3114 = vmatprep.subr.bf16.mxu0 0
      %3115 = vmatpush2.bf16.msra.mxu0 0
      %3116 = vmatprep.subr.bf16.mxu0 0
      %3117 = vmatpush2.bf16.msra.mxu0 0
      %3118 = vmatprep.mubr.bf16.mxu0 0
      %3119 = vmatmul.mubr.bf16.gmra.mxu0 %v2756
      %v3120 = vpop.f32.mrf.mxu0
      %v3121 = vadd.f32 %v3080, %v3120
      %v3122 = vpop.f32.mrf.mxu0
      %v3123 = vadd.f32 %v3082, %v3122
      %v3124 = vpop.f32.mrf.mxu0
      %v3125 = vpop.f32.mrf.mxu0
      %3126 = vdwg.mxu0
      %v3127 = vadd.f32 %v2484, %v3121
      %v3128 = vxor.u32 %v3127, 2147483648
      %v3129 = vmul.f32 %v3128, 1.442695
      %v3130 = vpow.pop %v3129
      %v3131 = vadd.f32 %v3130, 1.0
      %v3132 = vrcp.pop %v3131
      %v3133 = vmul.f32 1.0, %v3132
      %v3134 = vadd.f32 %v2486, %v3123
      %v3135 = vxor.u32 %v3134, 2147483648
      %v3136 = vmul.f32 %v3135, 1.442695
      %v3137 = vpow.pop %v3136
      %v3138 = vadd.f32 %v3137, 1.0
      %v3139 = vrcp.pop %v3138
      %v3140 = vmul.f32 1.0, %v3139
      %v3141 = vmul.f32 %v2730, %v3140
      %v3143 = vcombine.high %v3141, %v3141
      %3145 = vst [vmem:[#allocation3 + $0x1] sm:$0xf] %v3141
      %3146 = vst [vmem:[#allocation3 + $0x9] sm:$0xf] %v3143
      %v3147 = vld [vmem:[#allocation3] sm:$0xf]
      %v3148 = vld [vmem:[#allocation3 + $0x8] sm:$0xf]
      %v3149 = vld [vmem:[#allocation3 + $0x1] sm:$0xf]
      %v3150 = vld [vmem:[#allocation3 + $0x9] sm:$0xf]
      %v3151 = vld [vmem:[#allocation3 + $0x2] sm:$0xf]
      %v3152 = vld [vmem:[#allocation3 + $0xa] sm:$0xf]
      %v3155 = vcombine.low %v3147, %v3148
      %v3159 = vcombine.low %v3149, %v3150
      %v3163 = vcombine.low %v3151, %v3152
      %v3165 = vpack.c.bf16 %v3155, %v3155
      %v3166 = vpack.c.bf16 %v3159, %v3159
      %v3167 = vpack.c.bf16 %v3163, %v3163
      %v3168 = vld [vmem:[%s4] sm:$0xf]
      %v3169 = vld [vmem:[%s4 + $0x4] sm:$0xf]
      %v3170 = vld [vmem:[%s4 + $0x8] sm:$0xf]
      %v3171 = vld [vmem:[%s4 + $0xc] sm:$0xf]
      %v3172 = vld [vmem:[%s4 + $0x10] sm:$0xf]
      %v3173 = vld [vmem:[%s4 + $0x14] sm:$0xf]
      %v3174 = vld [vmem:[%s4 + $0x18] sm:$0xf]
      %v3175 = vld [vmem:[%s4 + $0x1c] sm:$0xf]
      %v3176 = vld [vmem:[%s4 + $0x20] sm:$0xf]
      %v3177 = vld [vmem:[%s4 + $0x24] sm:$0xf]
      %v3178 = vld [vmem:[%s4 + $0x28] sm:$0xf]
      %v3179 = vld [vmem:[%s4 + $0x2c] sm:$0xf]
      %v3180 = vld [vmem:[%s4 + $0x30] sm:$0xf]
      %v3181 = vld [vmem:[%s4 + $0x34] sm:$0xf]
      %v3182 = vld [vmem:[%s4 + $0x38] sm:$0xf]
      %v3183 = vld [vmem:[%s4 + $0x3c] sm:$0xf]
      %v3184 = vld [vmem:[%s4 + $0x40] sm:$0xf]
      %v3185 = vld [vmem:[%s4 + $0x44] sm:$0xf]
      %v3186 = vld [vmem:[%s4 + $0x48] sm:$0xf]
      %v3187 = vld [vmem:[%s4 + $0x4c] sm:$0xf]
      %v3188 = vld [vmem:[%s4 + $0x50] sm:$0xf]
      %v3189 = vld [vmem:[%s4 + $0x54] sm:$0xf]
      %v3190 = vld [vmem:[%s4 + $0x58] sm:$0xf]
      %v3191 = vld [vmem:[%s4 + $0x5c] sm:$0xf]
      %v3192 = vld [vmem:[%s4 + $0x60] sm:$0xf]
      %v3193 = vld [vmem:[%s4 + $0x64] sm:$0xf]
      %v3194 = vld [vmem:[%s4 + $0x68] sm:$0xf]
      %v3195 = vld [vmem:[%s4 + $0x6c] sm:$0xf]
      %v3196 = vld [vmem:[%s4 + $0x70] sm:$0xf]
      %v3197 = vld [vmem:[%s4 + $0x74] sm:$0xf]
      %v3198 = vld [vmem:[%s4 + $0x78] sm:$0xf]
      %v3199 = vld [vmem:[%s4 + $0x7c] sm:$0xf]
      %v3200 = vld [vmem:[%s4 + $0x80] sm:$0xf]
      %v3201 = vld [vmem:[%s4 + $0x84] sm:$0xf]
      %v3202 = vld [vmem:[%s4 + $0x88] sm:$0xf]
      %v3203 = vld [vmem:[%s4 + $0x8c] sm:$0xf]
      %v3204 = vld [vmem:[%s4 + $0x90] sm:$0xf]
      %v3205 = vld [vmem:[%s4 + $0x94] sm:$0xf]
      %v3206 = vld [vmem:[%s4 + $0x98] sm:$0xf]
      %v3207 = vld [vmem:[%s4 + $0x9c] sm:$0xf]
      %v3208 = vld [vmem:[%s4 + $0xa0] sm:$0xf]
      %v3209 = vld [vmem:[%s4 + $0xa4] sm:$0xf]
      %v3210 = vld [vmem:[%s4 + $0xa8] sm:$0xf]
      %v3211 = vld [vmem:[%s4 + $0xac] sm:$0xf]
      %v3212 = vld [vmem:[%s4 + $0xb0] sm:$0xf]
      %v3213 = vld [vmem:[%s4 + $0xb4] sm:$0xf]
      %v3214 = vld [vmem:[%s4 + $0xb8] sm:$0xf]
      %v3215 = vld [vmem:[%s4 + $0xbc] sm:$0xf]
      %v3264 = vunpack.c.l.b16 %v3168
      %v3265 = vunpack.c.l.b16 %v3169
      %v3266 = vunpack.c.l.b16 %v3170
      %v3267 = vunpack.c.l.b16 %v3171
      %v3268 = vunpack.c.l.b16 %v3172
      %v3269 = vunpack.c.l.b16 %v3173
      %v3270 = vunpack.c.l.b16 %v3174
      %v3271 = vunpack.c.l.b16 %v3175
      %v3272 = vunpack.c.l.b16 %v3176
      %v3273 = vunpack.c.l.b16 %v3177
      %v3274 = vunpack.c.l.b16 %v3178
      %v3275 = vunpack.c.l.b16 %v3179
      %v3276 = vunpack.c.l.b16 %v3180
      %v3277 = vunpack.c.l.b16 %v3181
      %v3278 = vunpack.c.l.b16 %v3182
      %v3279 = vunpack.c.l.b16 %v3183
      %v3280 = vunpack.c.l.b16 %v3184
      %v3281 = vunpack.c.l.b16 %v3185
      %v3282 = vunpack.c.l.b16 %v3186
      %v3283 = vunpack.c.l.b16 %v3187
      %v3284 = vunpack.c.l.b16 %v3188
      %v3285 = vunpack.c.l.b16 %v3189
      %v3286 = vunpack.c.l.b16 %v3190
      %v3287 = vunpack.c.l.b16 %v3191
      %v3288 = vunpack.c.l.b16 %v3192
      %v3289 = vunpack.c.l.b16 %v3193
      %v3290 = vunpack.c.l.b16 %v3194
      %v3291 = vunpack.c.l.b16 %v3195
      %v3292 = vunpack.c.l.b16 %v3196
      %v3293 = vunpack.c.l.b16 %v3197
      %v3294 = vunpack.c.l.b16 %v3198
      %v3295 = vunpack.c.l.b16 %v3199
      %v3296 = vunpack.c.l.b16 %v3200
      %v3297 = vunpack.c.l.b16 %v3201
      %v3298 = vunpack.c.l.b16 %v3202
      %v3299 = vunpack.c.l.b16 %v3203
      %v3300 = vunpack.c.l.b16 %v3204
      %v3301 = vunpack.c.l.b16 %v3205
      %v3302 = vunpack.c.l.b16 %v3206
      %v3303 = vunpack.c.l.b16 %v3207
      %v3304 = vunpack.c.l.b16 %v3208
      %v3305 = vunpack.c.l.b16 %v3209
      %v3306 = vunpack.c.l.b16 %v3210
      %v3307 = vunpack.c.l.b16 %v3211
      %v3308 = vunpack.c.l.b16 %v3212
      %v3309 = vunpack.c.l.b16 %v3213
      %v3310 = vunpack.c.l.b16 %v3214
      %v3311 = vunpack.c.l.b16 %v3215
      %v3312 = vpack.c.b16 %v3265, %v3264
      %v3313 = vpack.c.b16 %v3267, %v3266
      %v3314 = vpack.c.b16 %v3269, %v3268
      %v3315 = vpack.c.b16 %v3271, %v3270
      %v3316 = vpack.c.b16 %v3273, %v3272
      %v3317 = vpack.c.b16 %v3275, %v3274
      %v3318 = vpack.c.b16 %v3277, %v3276
      %v3319 = vpack.c.b16 %v3279, %v3278
      %v3320 = vpack.c.b16 %v3281, %v3280
      %v3321 = vpack.c.b16 %v3283, %v3282
      %v3322 = vpack.c.b16 %v3285, %v3284
      %v3323 = vpack.c.b16 %v3287, %v3286
      %v3324 = vpack.c.b16 %v3289, %v3288
      %v3325 = vpack.c.b16 %v3291, %v3290
      %v3326 = vpack.c.b16 %v3293, %v3292
      %v3327 = vpack.c.b16 %v3295, %v3294
      %v3328 = vpack.c.b16 %v3297, %v3296
      %v3329 = vpack.c.b16 %v3299, %v3298
      %v3330 = vpack.c.b16 %v3301, %v3300
      %v3331 = vpack.c.b16 %v3303, %v3302
      %v3332 = vpack.c.b16 %v3305, %v3304
      %v3333 = vpack.c.b16 %v3307, %v3306
      %v3334 = vpack.c.b16 %v3309, %v3308
      %v3335 = vpack.c.b16 %v3311, %v3310
      %3360 = vmatprep.subr.bf16.mxu0 0
      %3361 = vmatpush1.bf16.msra.mxu0 %v3319
      %3362 = vmatprep.subr.bf16.mxu0 0
      %3363 = vmatpush1.bf16.msra.mxu0 %v3318
      %3364 = vmatprep.subr.bf16.mxu0 0
      %3365 = vmatpush1.bf16.msra.mxu0 %v3317
      %3366 = vmatprep.subr.bf16.mxu0 0
      %3367 = vmatpush1.bf16.msra.mxu0 %v3316
      %3368 = vmatprep.subr.bf16.mxu0 0
      %3369 = vmatpush1.bf16.msra.mxu0 %v3315
      %3370 = vmatprep.subr.bf16.mxu0 0
      %3371 = vmatpush1.bf16.msra.mxu0 %v3314
      %3372 = vmatprep.subr.bf16.mxu0 0
      %3373 = vmatpush1.bf16.msra.mxu0 %v3313
      %3374 = vmatprep.subr.bf16.mxu0 0
      %3375 = vmatpush1.bf16.msra.mxu0 %v3312
      %3376 = vmatprep.subr.bf16.mxu0 0
      %3377 = vmatpush2.bf16.msra.mxu0 %v3327
      %3378 = vmatprep.subr.bf16.mxu0 0
      %3379 = vmatpush2.bf16.msra.mxu0 %v3326
      %3380 = vmatprep.subr.bf16.mxu0 0
      %3381 = vmatpush2.bf16.msra.mxu0 %v3325
      %3382 = vmatprep.subr.bf16.mxu0 0
      %3383 = vmatpush2.bf16.msra.mxu0 %v3324
      %3384 = vmatprep.subr.bf16.mxu0 0
      %3385 = vmatpush2.bf16.msra.mxu0 %v3323
      %3386 = vmatprep.subr.bf16.mxu0 0
      %3387 = vmatpush2.bf16.msra.mxu0 %v3322
      %3388 = vmatprep.subr.bf16.mxu0 0
      %3389 = vmatpush2.bf16.msra.mxu0 %v3321
      %3390 = vmatprep.subr.bf16.mxu0 0
      %3391 = vmatpush2.bf16.msra.mxu0 %v3320
      %3392 = vmatprep.mubr.bf16.mxu0 %v3166
      %3393 = vmatmul.mubr.bf16.gmra.mxu0 %v3165
      %v3394 = vpop.f32.mrf.mxu0
      %v3395 = vadd.f32 0.0, %v3394
      %v3396 = vpop.f32.mrf.mxu0
      %v3397 = vpop.f32.mrf.mxu0
      %v3398 = vpop.f32.mrf.mxu0
      %3399 = vdwg.mxu0
      %3400 = vmatprep.subr.bf16.mxu0 0
      %3401 = vmatpush1.bf16.msra.mxu0 %v3335
      %3402 = vmatprep.subr.bf16.mxu0 0
      %3403 = vmatpush1.bf16.msra.mxu0 %v3334
      %3404 = vmatprep.subr.bf16.mxu0 0
      %3405 = vmatpush1.bf16.msra.mxu0 %v3333
      %3406 = vmatprep.subr.bf16.mxu0 0
      %3407 = vmatpush1.bf16.msra.mxu0 %v3332
      %3408 = vmatprep.subr.bf16.mxu0 0
      %3409 = vmatpush1.bf16.msra.mxu0 %v3331
      %3410 = vmatprep.subr.bf16.mxu0 0
      %3411 = vmatpush1.bf16.msra.mxu0 %v3330
      %3412 = vmatprep.subr.bf16.mxu0 0
      %3413 = vmatpush1.bf16.msra.mxu0 %v3329
      %3414 = vmatprep.subr.bf16.mxu0 0
      %3415 = vmatpush1.bf16.msra.mxu0 %v3328
      %3416 = vmatprep.subr.bf16.mxu0 0
      %3417 = vmatpush2.bf16.msra.mxu0 0
      %3418 = vmatprep.subr.bf16.mxu0 0
      %3419 = vmatpush2.bf16.msra.mxu0 0
      %3420 = vmatprep.subr.bf16.mxu0 0
      %3421 = vmatpush2.bf16.msra.mxu0 0
      %3422 = vmatprep.subr.bf16.mxu0 0
      %3423 = vmatpush2.bf16.msra.mxu0 0
      %3424 = vmatprep.subr.bf16.mxu0 0
      %3425 = vmatpush2.bf16.msra.mxu0 0
      %3426 = vmatprep.subr.bf16.mxu0 0
      %3427 = vmatpush2.bf16.msra.mxu0 0
      %3428 = vmatprep.subr.bf16.mxu0 0
      %3429 = vmatpush2.bf16.msra.mxu0 0
      %3430 = vmatprep.subr.bf16.mxu0 0
      %3431 = vmatpush2.bf16.msra.mxu0 0
      %3432 = vmatprep.mubr.bf16.mxu0 0
      %3433 = vmatmul.mubr.bf16.gmra.mxu0 %v3167
      %v3434 = vpop.f32.mrf.mxu0
      %v3435 = vadd.f32 %v3395, %v3434
      %v3436 = vpop.f32.mrf.mxu0
      %v3437 = vpop.f32.mrf.mxu0
      %v3438 = vpop.f32.mrf.mxu0
      %3439 = vdwg.mxu0
      %v3440 = vadd.f32 %v2725, %v3435
      %v3441 = vtanh.pop %v3440
      %v3442 = vsub.f32 1.0, %v3133
      %v3443 = vmul.f32 %v2730, %v3442
      %v3444 = vmul.f32 %v3441, %v3133
      %v3445 = vadd.f32 %v3443, %v3444
      %3446 = vst [vmem:[#allocation2] sm:$0xff] %v3445
      %3447 = vst [vmem:[%s249] sm:$0xff] %v3445
      %p3448 = scmp.lt.s32.totalorder %s17, 3
      %s3449 = scalar_select %p3448, %s17, 3
      %s3450 = smul.addr %s3449, 8
      %s3451 = scalar_lea.vmem %s6, %s3450
      // Predicated region
      $region49: #{mdcnn_gru_forward.3} parent=43 // pred_check
        %p3452 = pneg %p166
      $region50: #{mdcnn_gru_forward.3} parent=43 // pred_check_branch
        %3454 = sbr.rel (%p3452) target = $region52
      $region51: #{mdcnn_gru_forward.3} parent=43 // pred_region
        _
      $region52: #{mdcnn_gru_forward.3} parent=43 // pred_fallthru
        _
    $region44: #{mdcnn_gru_forward.3} parent=5 // pred_fallthru
      _
    %p3455 = scmp.le.s32.totalorder 2, %s12
    // Predicated region
    $region53: #{mdcnn_gru_forward.3} parent=5 // pred_check
      %p3456 = pneg %p3455
    $region54: #{mdcnn_gru_forward.3} parent=5 // pred_check_branch
      %3458 = sbr.rel (%p3456) target = $region56
    $region55: #{mdcnn_gru_forward.3} parent=5 // pred_region
      %s3459 = ssub.s32 %s12, 2
      // Predicated region
      $region57: #{mdcnn_gru_forward.3} parent=55 // pred_check
        %p3460 = pneg %p172
      $region58: #{mdcnn_gru_forward.3} parent=55 // pred_check_branch
        %3462 = sbr.rel (%p3460) target = $region60
      $region59: #{mdcnn_gru_forward.3} parent=55 // pred_region
        %p3463 = scmp.lt.s32.totalorder %s18, 3
        %s3464 = scalar_select %p3463, %s18, 3
        %s3465 = smul.addr %s3464, 8
        %s3466 = scalar_lea.vmem %s6, %s3465
      $region60: #{mdcnn_gru_forward.3} parent=55 // pred_fallthru
        _
    $region56: #{mdcnn_gru_forward.3} parent=5 // pred_fallthru
      _
  $region6: #{mdcnn_gru_forward.3} parent=0 // loop_footer
    %s16 = sadd.s32 1, %s12
  $region7: #{mdcnn_gru_forward.3} parent=0 // loop_footer_branch
    %11 = sbr.rel target = $region3
  $region8: #{mdcnn_gru_forward.3} parent=0 // loop_exit
    _

// kernel: squeeze.7
$region0: #{squeeze.7}
  %s0 = inlined_call_operand.vmem [shape: f32[1,8,128], index: 0, kind: input, shape index: {}]
  %s1 = inlined_call_operand.vmem [shape: f32[2,1,16,16,2], index: 1, kind: output, shape index: {}]
  %v2 = vld [vmem:[%s0] sm:$0xff]
  %vm3 = vcmask 15360
  %4 = vst.msk [vmem:[%s1] sm:$0x1] %vm3, %v2
  %s5 = scalar_lea.vmem %s1, 63
  %6 = vst.msk [vmem:[%s5] sm:$0x2] %vm3, %v2
  %s7 = scalar_lea.vmem %s1, 126
  %8 = vst.msk [vmem:[%s7] sm:$0x4] %vm3, %v2
  %s9 = scalar_lea.vmem %s1, 189
  %10 = vst.msk [vmem:[%s9] sm:$0x8] %vm3, %v2
  %s11 = scalar_lea.vmem %s1, 252
  %12 = vst.msk [vmem:[%s11] sm:$0x10] %vm3, %v2
  %s13 = scalar_lea.vmem %s1, 315
  %14 = vst.msk [vmem:[%s13] sm:$0x20] %vm3, %v2
  %s15 = scalar_lea.vmem %s1, 378
  %16 = vst.msk [vmem:[%s15] sm:$0x40] %vm3, %v2
  %s17 = scalar_lea.vmem %s1, 441
  %18 = vst.msk [vmem:[%s17] sm:$0x80] %vm3, %v2
  %v19 = vld [vmem:[%s0] sm:$0xff]
  %20 = vrot.lane.b32.xlu0 %v19, 126
  %v21 = vpop.permute.xlu0 %20
  %vm22 = vcmask 15360
  %s23 = scalar_lea.vmem %s1, 1
  %24 = vst.msk [vmem:[%s23] sm:$0x1] %vm22, %v21
  %s25 = scalar_lea.vmem %s1, 64
  %26 = vst.msk [vmem:[%s25] sm:$0x2] %vm22, %v21
  %s27 = scalar_lea.vmem %s1, 127
  %28 = vst.msk [vmem:[%s27] sm:$0x4] %vm22, %v21
  %s29 = scalar_lea.vmem %s1, 190
  %30 = vst.msk [vmem:[%s29] sm:$0x8] %vm22, %v21
  %s31 = scalar_lea.vmem %s1, 253
  %32 = vst.msk [vmem:[%s31] sm:$0x10] %vm22, %v21
  %s33 = scalar_lea.vmem %s1, 316
  %34 = vst.msk [vmem:[%s33] sm:$0x20] %vm22, %v21
  %s35 = scalar_lea.vmem %s1, 379
  %36 = vst.msk [vmem:[%s35] sm:$0x40] %vm22, %v21
  %s37 = scalar_lea.vmem %s1, 442
  %38 = vst.msk [vmem:[%s37] sm:$0x80] %vm22, %v21
  %v39 = vld [vmem:[%s0] sm:$0xff]
  %40 = vrot.lane.b32.xlu0 %v39, 124
  %v41 = vpop.permute.xlu0 %40
  %vm42 = vcmask 15360
  %s43 = scalar_lea.vmem %s1, 2
  %44 = vst.msk [vmem:[%s43] sm:$0x1] %vm42, %v41
  %s45 = scalar_lea.vmem %s1, 65
  %46 = vst.msk [vmem:[%s45] sm:$0x2] %vm42, %v41
  %s47 = scalar_lea.vmem %s1, 128
  %48 = vst.msk [vmem:[%s47] sm:$0x4] %vm42, %v41
  %s49 = scalar_lea.vmem %s1, 191
  %50 = vst.msk [vmem:[%s49] sm:$0x8] %vm42, %v41
  %s51 = scalar_lea.vmem %s1, 254
  %52 = vst.msk [vmem:[%s51] sm:$0x10] %vm42, %v41
  %s53 = scalar_lea.vmem %s1, 317
  %54 = vst.msk [vmem:[%s53] sm:$0x20] %vm42, %v41
  %s55 = scalar_lea.vmem %s1, 380
  %56 = vst.msk [vmem:[%s55] sm:$0x40] %vm42, %v41
  %s57 = scalar_lea.vmem %s1, 443
  %58 = vst.msk [vmem:[%s57] sm:$0x80] %vm42, %v41
  %v59 = vld [vmem:[%s0] sm:$0xff]
  %60 = vrot.lane.b32.xlu0 %v59, 122
  %v61 = vpop.permute.xlu0 %60
  %vm62 = vcmask 15360
  %s63 = scalar_lea.vmem %s1, 3
  %64 = vst.msk [vmem:[%s63] sm:$0x1] %vm62, %v61
  %s65 = scalar_lea.vmem %s1, 66
  %66 = vst.msk [vmem:[%s65] sm:$0x2] %vm62, %v61
  %s67 = scalar_lea.vmem %s1, 129
  %68 = vst.msk [vmem:[%s67] sm:$0x4] %vm62, %v61
  %s69 = scalar_lea.vmem %s1, 192
  %70 = vst.msk [vmem:[%s69] sm:$0x8] %vm62, %v61
  %s71 = scalar_lea.vmem %s1, 255
  %72 = vst.msk [vmem:[%s71] sm:$0x10] %vm62, %v61
  %s73 = scalar_lea.vmem %s1, 318
  %74 = vst.msk [vmem:[%s73] sm:$0x20] %vm62, %v61
  %s75 = scalar_lea.vmem %s1, 381
  %76 = vst.msk [vmem:[%s75] sm:$0x40] %vm62, %v61
  %s77 = scalar_lea.vmem %s1, 444
  %78 = vst.msk [vmem:[%s77] sm:$0x80] %vm62, %v61
  %v79 = vld [vmem:[%s0] sm:$0xff]
  %80 = vrot.lane.b32.xlu0 %v79, 120
  %v81 = vpop.permute.xlu0 %80
  %vm82 = vcmask 15360
  %s83 = scalar_lea.vmem %s1, 4
  %84 = vst.msk [vmem:[%s83] sm:$0x1] %vm82, %v81
  %s85 = scalar_lea.vmem %s1, 67
  %86 = vst.msk [vmem:[%s85] sm:$0x2] %vm82, %v81
  %s87 = scalar_lea.vmem %s1, 130
  %88 = vst.msk [vmem:[%s87] sm:$0x4] %vm82, %v81
  %s89 = scalar_lea.vmem %s1, 193
  %90 = vst.msk [vmem:[%s89] sm:$0x8] %vm82, %v81
  %s91 = scalar_lea.vmem %s1, 256
  %92 = vst.msk [vmem:[%s91] sm:$0x10] %vm82, %v81
  %s93 = scalar_lea.vmem %s1, 319
  %94 = vst.msk [vmem:[%s93] sm:$0x20] %vm82, %v81
  %s95 = scalar_lea.vmem %s1, 382
  %96 = vst.msk [vmem:[%s95] sm:$0x40] %vm82, %v81
  %s97 = scalar_lea.vmem %s1, 445
  %98 = vst.msk [vmem:[%s97] sm:$0x80] %vm82, %v81
  %v99 = vld [vmem:[%s0] sm:$0xff]
  %100 = vrot.lane.b32.xlu0 %v99, 118
  %v101 = vpop.permute.xlu0 %100
  %vm102 = vcmask 15360
  %s103 = scalar_lea.vmem %s1, 5
  %104 = vst.msk [vmem:[%s103] sm:$0x1] %vm102, %v101
  %s105 = scalar_lea.vmem %s1, 68
  %106 = vst.msk [vmem:[%s105] sm:$0x2] %vm102, %v101
  %s107 = scalar_lea.vmem %s1, 131
  %108 = vst.msk [vmem:[%s107] sm:$0x4] %vm102, %v101
  %s109 = scalar_lea.vmem %s1, 194
  %110 = vst.msk [vmem:[%s109] sm:$0x8] %vm102, %v101
  %s111 = scalar_lea.vmem %s1, 257
  %112 = vst.msk [vmem:[%s111] sm:$0x10] %vm102, %v101
  %s113 = scalar_lea.vmem %s1, 320
  %114 = vst.msk [vmem:[%s113] sm:$0x20] %vm102, %v101
  %s115 = scalar_lea.vmem %s1, 383
  %116 = vst.msk [vmem:[%s115] sm:$0x40] %vm102, %v101
  %s117 = scalar_lea.vmem %s1, 446
  %118 = vst.msk [vmem:[%s117] sm:$0x80] %vm102, %v101
  %v119 = vld [vmem:[%s0] sm:$0xff]
  %120 = vrot.lane.b32.xlu0 %v119, 116
  %v121 = vpop.permute.xlu0 %120
  %vm122 = vcmask 15360
  %s123 = scalar_lea.vmem %s1, 6
  %124 = vst.msk [vmem:[%s123] sm:$0x1] %vm122, %v121
  %s125 = scalar_lea.vmem %s1, 69
  %126 = vst.msk [vmem:[%s125] sm:$0x2] %vm122, %v121
  %s127 = scalar_lea.vmem %s1, 132
  %128 = vst.msk [vmem:[%s127] sm:$0x4] %vm122, %v121
  %s129 = scalar_lea.vmem %s1, 195
  %130 = vst.msk [vmem:[%s129] sm:$0x8] %vm122, %v121
  %s131 = scalar_lea.vmem %s1, 258
  %132 = vst.msk [vmem:[%s131] sm:$0x10] %vm122, %v121
  %s133 = scalar_lea.vmem %s1, 321
  %134 = vst.msk [vmem:[%s133] sm:$0x20] %vm122, %v121
  %s135 = scalar_lea.vmem %s1, 384
  %136 = vst.msk [vmem:[%s135] sm:$0x40] %vm122, %v121
  %s137 = scalar_lea.vmem %s1, 447
  %138 = vst.msk [vmem:[%s137] sm:$0x80] %vm122, %v121
  %v139 = vld [vmem:[%s0] sm:$0xff]
  %140 = vrot.lane.b32.xlu0 %v139, 114
  %v141 = vpop.permute.xlu0 %140
  %vm142 = vcmask 15360
  %s143 = scalar_lea.vmem %s1, 7
  %144 = vst.msk [vmem:[%s143] sm:$0x1] %vm142, %v141
  %s145 = scalar_lea.vmem %s1, 70
  %146 = vst.msk [vmem:[%s145] sm:$0x2] %vm142, %v141
  %s147 = scalar_lea.vmem %s1, 133
  %148 = vst.msk [vmem:[%s147] sm:$0x4] %vm142, %v141
  %s149 = scalar_lea.vmem %s1, 196
  %150 = vst.msk [vmem:[%s149] sm:$0x8] %vm142, %v141
  %s151 = scalar_lea.vmem %s1, 259
  %152 = vst.msk [vmem:[%s151] sm:$0x10] %vm142, %v141
  %s153 = scalar_lea.vmem %s1, 322
  %154 = vst.msk [vmem:[%s153] sm:$0x20] %vm142, %v141
  %s155 = scalar_lea.vmem %s1, 385
  %156 = vst.msk [vmem:[%s155] sm:$0x40] %vm142, %v141
  %s157 = scalar_lea.vmem %s1, 448
  %158 = vst.msk [vmem:[%s157] sm:$0x80] %vm142, %v141
  %v159 = vld [vmem:[%s0] sm:$0xff]
  %160 = vrot.lane.b32.xlu0 %v159, 112
  %v161 = vpop.permute.xlu0 %160
  %vm162 = vcmask 15360
  %s163 = scalar_lea.vmem %s1, 8
  %164 = vst.msk [vmem:[%s163] sm:$0x1] %vm162, %v161
  %s165 = scalar_lea.vmem %s1, 71
  %166 = vst.msk [vmem:[%s165] sm:$0x2] %vm162, %v161
  %s167 = scalar_lea.vmem %s1, 134
  %168 = vst.msk [vmem:[%s167] sm:$0x4] %vm162, %v161
  %s169 = scalar_lea.vmem %s1, 197
  %170 = vst.msk [vmem:[%s169] sm:$0x8] %vm162, %v161
  %s171 = scalar_lea.vmem %s1, 260
  %172 = vst.msk [vmem:[%s171] sm:$0x10] %vm162, %v161
  %s173 = scalar_lea.vmem %s1, 323
  %174 = vst.msk [vmem:[%s173] sm:$0x20] %vm162, %v161
  %s175 = scalar_lea.vmem %s1, 386
  %176 = vst.msk [vmem:[%s175] sm:$0x40] %vm162, %v161
  %s177 = scalar_lea.vmem %s1, 449
  %178 = vst.msk [vmem:[%s177] sm:$0x80] %vm162, %v161
  %v179 = vld [vmem:[%s0] sm:$0xff]
  %180 = vrot.lane.b32.xlu0 %v179, 110
  %v181 = vpop.permute.xlu0 %180
  %vm182 = vcmask 15360
  %s183 = scalar_lea.vmem %s1, 9
  %184 = vst.msk [vmem:[%s183] sm:$0x1] %vm182, %v181
  %s185 = scalar_lea.vmem %s1, 72
  %186 = vst.msk [vmem:[%s185] sm:$0x2] %vm182, %v181
  %s187 = scalar_lea.vmem %s1, 135
  %188 = vst.msk [vmem:[%s187] sm:$0x4] %vm182, %v181
  %s189 = scalar_lea.vmem %s1, 198
  %190 = vst.msk [vmem:[%s189] sm:$0x8] %vm182, %v181
  %s191 = scalar_lea.vmem %s1, 261
  %192 = vst.msk [vmem:[%s191] sm:$0x10] %vm182, %v181
  %s193 = scalar_lea.vmem %s1, 324
  %194 = vst.msk [vmem:[%s193] sm:$0x20] %vm182, %v181
  %s195 = scalar_lea.vmem %s1, 387
  %196 = vst.msk [vmem:[%s195] sm:$0x40] %vm182, %v181
  %s197 = scalar_lea.vmem %s1, 450
  %198 = vst.msk [vmem:[%s197] sm:$0x80] %vm182, %v181
  %v199 = vld [vmem:[%s0] sm:$0xff]
  %200 = vrot.lane.b32.xlu0 %v199, 108
  %v201 = vpop.permute.xlu0 %200
  %vm202 = vcmask 15360
  %s203 = scalar_lea.vmem %s1, 10
  %204 = vst.msk [vmem:[%s203] sm:$0x1] %vm202, %v201
  %s205 = scalar_lea.vmem %s1, 73
  %206 = vst.msk [vmem:[%s205] sm:$0x2] %vm202, %v201
  %s207 = scalar_lea.vmem %s1, 136
  %208 = vst.msk [vmem:[%s207] sm:$0x4] %vm202, %v201
  %s209 = scalar_lea.vmem %s1, 199
  %210 = vst.msk [vmem:[%s209] sm:$0x8] %vm202, %v201
  %s211 = scalar_lea.vmem %s1, 262
  %212 = vst.msk [vmem:[%s211] sm:$0x10] %vm202, %v201
  %s213 = scalar_lea.vmem %s1, 325
  %214 = vst.msk [vmem:[%s213] sm:$0x20] %vm202, %v201
  %s215 = scalar_lea.vmem %s1, 388
  %216 = vst.msk [vmem:[%s215] sm:$0x40] %vm202, %v201
  %s217 = scalar_lea.vmem %s1, 451
  %218 = vst.msk [vmem:[%s217] sm:$0x80] %vm202, %v201
  %v219 = vld [vmem:[%s0] sm:$0xff]
  %220 = vrot.lane.b32.xlu0 %v219, 106
  %v221 = vpop.permute.xlu0 %220
  %vm222 = vcmask 15360
  %s223 = scalar_lea.vmem %s1, 11
  %224 = vst.msk [vmem:[%s223] sm:$0x1] %vm222, %v221
  %s225 = scalar_lea.vmem %s1, 74
  %226 = vst.msk [vmem:[%s225] sm:$0x2] %vm222, %v221
  %s227 = scalar_lea.vmem %s1, 137
  %228 = vst.msk [vmem:[%s227] sm:$0x4] %vm222, %v221
  %s229 = scalar_lea.vmem %s1, 200
  %230 = vst.msk [vmem:[%s229] sm:$0x8] %vm222, %v221
  %s231 = scalar_lea.vmem %s1, 263
  %232 = vst.msk [vmem:[%s231] sm:$0x10] %vm222, %v221
  %s233 = scalar_lea.vmem %s1, 326
  %234 = vst.msk [vmem:[%s233] sm:$0x20] %vm222, %v221
  %s235 = scalar_lea.vmem %s1, 389
  %236 = vst.msk [vmem:[%s235] sm:$0x40] %vm222, %v221
  %s237 = scalar_lea.vmem %s1, 452
  %238 = vst.msk [vmem:[%s237] sm:$0x80] %vm222, %v221
  %v239 = vld [vmem:[%s0] sm:$0xff]
  %240 = vrot.lane.b32.xlu0 %v239, 104
  %v241 = vpop.permute.xlu0 %240
  %vm242 = vcmask 15360
  %s243 = scalar_lea.vmem %s1, 12
  %244 = vst.msk [vmem:[%s243] sm:$0x1] %vm242, %v241
  %s245 = scalar_lea.vmem %s1, 75
  %246 = vst.msk [vmem:[%s245] sm:$0x2] %vm242, %v241
  %s247 = scalar_lea.vmem %s1, 138
  %248 = vst.msk [vmem:[%s247] sm:$0x4] %vm242, %v241
  %s249 = scalar_lea.vmem %s1, 201
  %250 = vst.msk [vmem:[%s249] sm:$0x8] %vm242, %v241
  %s251 = scalar_lea.vmem %s1, 264
  %252 = vst.msk [vmem:[%s251] sm:$0x10] %vm242, %v241
  %s253 = scalar_lea.vmem %s1, 327
  %254 = vst.msk [vmem:[%s253] sm:$0x20] %vm242, %v241
  %s255 = scalar_lea.vmem %s1, 390
  %256 = vst.msk [vmem:[%s255] sm:$0x40] %vm242, %v241
  %s257 = scalar_lea.vmem %s1, 453
  %258 = vst.msk [vmem:[%s257] sm:$0x80] %vm242, %v241
  %v259 = vld [vmem:[%s0] sm:$0xff]
  %260 = vrot.lane.b32.xlu0 %v259, 102
  %v261 = vpop.permute.xlu0 %260
  %vm262 = vcmask 15360
  %s263 = scalar_lea.vmem %s1, 13
  %264 = vst.msk [vmem:[%s263] sm:$0x1] %vm262, %v261
  %s265 = scalar_lea.vmem %s1, 76
  %266 = vst.msk [vmem:[%s265] sm:$0x2] %vm262, %v261
  %s267 = scalar_lea.vmem %s1, 139
  %268 = vst.msk [vmem:[%s267] sm:$0x4] %vm262, %v261
  %s269 = scalar_lea.vmem %s1, 202
  %270 = vst.msk [vmem:[%s269] sm:$0x8] %vm262, %v261
  %s271 = scalar_lea.vmem %s1, 265
  %272 = vst.msk [vmem:[%s271] sm:$0x10] %vm262, %v261
  %s273 = scalar_lea.vmem %s1, 328
  %274 = vst.msk [vmem:[%s273] sm:$0x20] %vm262, %v261
  %s275 = scalar_lea.vmem %s1, 391
  %276 = vst.msk [vmem:[%s275] sm:$0x40] %vm262, %v261
  %s277 = scalar_lea.vmem %s1, 454
  %278 = vst.msk [vmem:[%s277] sm:$0x80] %vm262, %v261
  %v279 = vld [vmem:[%s0] sm:$0xff]
  %280 = vrot.lane.b32.xlu0 %v279, 100
  %v281 = vpop.permute.xlu0 %280
  %vm282 = vcmask 15360
  %s283 = scalar_lea.vmem %s1, 14
  %284 = vst.msk [vmem:[%s283] sm:$0x1] %vm282, %v281
  %s285 = scalar_lea.vmem %s1, 77
  %286 = vst.msk [vmem:[%s285] sm:$0x2] %vm282, %v281
  %s287 = scalar_lea.vmem %s1, 140
  %288 = vst.msk [vmem:[%s287] sm:$0x4] %vm282, %v281
  %s289 = scalar_lea.vmem %s1, 203
  %290 = vst.msk [vmem:[%s289] sm:$0x8] %vm282, %v281
  %s291 = scalar_lea.vmem %s1, 266
  %292 = vst.msk [vmem:[%s291] sm:$0x10] %vm282, %v281
  %s293 = scalar_lea.vmem %s1, 329
  %294 = vst.msk [vmem:[%s293] sm:$0x20] %vm282, %v281
  %s295 = scalar_lea.vmem %s1, 392
  %296 = vst.msk [vmem:[%s295] sm:$0x40] %vm282, %v281
  %s297 = scalar_lea.vmem %s1, 455
  %298 = vst.msk [vmem:[%s297] sm:$0x80] %vm282, %v281
  %v299 = vld [vmem:[%s0] sm:$0xff]
  %300 = vrot.lane.b32.xlu0 %v299, 98
  %v301 = vpop.permute.xlu0 %300
  %vm302 = vcmask 15360
  %s303 = scalar_lea.vmem %s1, 15
  %304 = vst.msk [vmem:[%s303] sm:$0x1] %vm302, %v301
  %s305 = scalar_lea.vmem %s1, 78
  %306 = vst.msk [vmem:[%s305] sm:$0x2] %vm302, %v301
  %s307 = scalar_lea.vmem %s1, 141
  %308 = vst.msk [vmem:[%s307] sm:$0x4] %vm302, %v301
  %s309 = scalar_lea.vmem %s1, 204
  %310 = vst.msk [vmem:[%s309] sm:$0x8] %vm302, %v301
  %s311 = scalar_lea.vmem %s1, 267
  %312 = vst.msk [vmem:[%s311] sm:$0x10] %vm302, %v301
  %s313 = scalar_lea.vmem %s1, 330
  %314 = vst.msk [vmem:[%s313] sm:$0x20] %vm302, %v301
  %s315 = scalar_lea.vmem %s1, 393
  %316 = vst.msk [vmem:[%s315] sm:$0x40] %vm302, %v301
  %s317 = scalar_lea.vmem %s1, 456
  %318 = vst.msk [vmem:[%s317] sm:$0x80] %vm302, %v301
  %v319 = vld [vmem:[%s0] sm:$0xff]
  %320 = vrot.lane.b32.xlu0 %v319, 96
  %v321 = vpop.permute.xlu0 %320
  %vm322 = vcmask 15360
  %s323 = scalar_lea.vmem %s1, 16
  %324 = vst.msk [vmem:[%s323] sm:$0x1] %vm322, %v321
  %s325 = scalar_lea.vmem %s1, 79
  %326 = vst.msk [vmem:[%s325] sm:$0x2] %vm322, %v321
  %s327 = scalar_lea.vmem %s1, 142
  %328 = vst.msk [vmem:[%s327] sm:$0x4] %vm322, %v321
  %s329 = scalar_lea.vmem %s1, 205
  %330 = vst.msk [vmem:[%s329] sm:$0x8] %vm322, %v321
  %s331 = scalar_lea.vmem %s1, 268
  %332 = vst.msk [vmem:[%s331] sm:$0x10] %vm322, %v321
  %s333 = scalar_lea.vmem %s1, 331
  %334 = vst.msk [vmem:[%s333] sm:$0x20] %vm322, %v321
  %s335 = scalar_lea.vmem %s1, 394
  %336 = vst.msk [vmem:[%s335] sm:$0x40] %vm322, %v321
  %s337 = scalar_lea.vmem %s1, 457
  %338 = vst.msk [vmem:[%s337] sm:$0x80] %vm322, %v321
  %v339 = vld [vmem:[%s0] sm:$0xff]
  %340 = vrot.lane.b32.xlu0 %v339, 94
  %v341 = vpop.permute.xlu0 %340
  %vm342 = vcmask 15360
  %s343 = scalar_lea.vmem %s1, 17
  %344 = vst.msk [vmem:[%s343] sm:$0x1] %vm342, %v341
  %s345 = scalar_lea.vmem %s1, 80
  %346 = vst.msk [vmem:[%s345] sm:$0x2] %vm342, %v341
  %s347 = scalar_lea.vmem %s1, 143
  %348 = vst.msk [vmem:[%s347] sm:$0x4] %vm342, %v341
  %s349 = scalar_lea.vmem %s1, 206
  %350 = vst.msk [vmem:[%s349] sm:$0x8] %vm342, %v341
  %s351 = scalar_lea.vmem %s1, 269
  %352 = vst.msk [vmem:[%s351] sm:$0x10] %vm342, %v341
  %s353 = scalar_lea.vmem %s1, 332
  %354 = vst.msk [vmem:[%s353] sm:$0x20] %vm342, %v341
  %s355 = scalar_lea.vmem %s1, 395
  %356 = vst.msk [vmem:[%s355] sm:$0x40] %vm342, %v341
  %s357 = scalar_lea.vmem %s1, 458
  %358 = vst.msk [vmem:[%s357] sm:$0x80] %vm342, %v341
  %v359 = vld [vmem:[%s0] sm:$0xff]
  %360 = vrot.lane.b32.xlu0 %v359, 92
  %v361 = vpop.permute.xlu0 %360
  %vm362 = vcmask 15360
  %s363 = scalar_lea.vmem %s1, 18
  %364 = vst.msk [vmem:[%s363] sm:$0x1] %vm362, %v361
  %s365 = scalar_lea.vmem %s1, 81
  %366 = vst.msk [vmem:[%s365] sm:$0x2] %vm362, %v361
  %s367 = scalar_lea.vmem %s1, 144
  %368 = vst.msk [vmem:[%s367] sm:$0x4] %vm362, %v361
  %s369 = scalar_lea.vmem %s1, 207
  %370 = vst.msk [vmem:[%s369] sm:$0x8] %vm362, %v361
  %s371 = scalar_lea.vmem %s1, 270
  %372 = vst.msk [vmem:[%s371] sm:$0x10] %vm362, %v361
  %s373 = scalar_lea.vmem %s1, 333
  %374 = vst.msk [vmem:[%s373] sm:$0x20] %vm362, %v361
  %s375 = scalar_lea.vmem %s1, 396
  %376 = vst.msk [vmem:[%s375] sm:$0x40] %vm362, %v361
  %s377 = scalar_lea.vmem %s1, 459
  %378 = vst.msk [vmem:[%s377] sm:$0x80] %vm362, %v361
  %v379 = vld [vmem:[%s0] sm:$0xff]
  %380 = vrot.lane.b32.xlu0 %v379, 90
  %v381 = vpop.permute.xlu0 %380
  %vm382 = vcmask 15360
  %s383 = scalar_lea.vmem %s1, 19
  %384 = vst.msk [vmem:[%s383] sm:$0x1] %vm382, %v381
  %s385 = scalar_lea.vmem %s1, 82
  %386 = vst.msk [vmem:[%s385] sm:$0x2] %vm382, %v381
  %s387 = scalar_lea.vmem %s1, 145
  %388 = vst.msk [vmem:[%s387] sm:$0x4] %vm382, %v381
  %s389 = scalar_lea.vmem %s1, 208
  %390 = vst.msk [vmem:[%s389] sm:$0x8] %vm382, %v381
  %s391 = scalar_lea.vmem %s1, 271
  %392 = vst.msk [vmem:[%s391] sm:$0x10] %vm382, %v381
  %s393 = scalar_lea.vmem %s1, 334
  %394 = vst.msk [vmem:[%s393] sm:$0x20] %vm382, %v381
  %s395 = scalar_lea.vmem %s1, 397
  %396 = vst.msk [vmem:[%s395] sm:$0x40] %vm382, %v381
  %s397 = scalar_lea.vmem %s1, 460
  %398 = vst.msk [vmem:[%s397] sm:$0x80] %vm382, %v381
  %v399 = vld [vmem:[%s0] sm:$0xff]
  %400 = vrot.lane.b32.xlu0 %v399, 88
  %v401 = vpop.permute.xlu0 %400
  %vm402 = vcmask 15360
  %s403 = scalar_lea.vmem %s1, 20
  %404 = vst.msk [vmem:[%s403] sm:$0x1] %vm402, %v401
  %s405 = scalar_lea.vmem %s1, 83
  %406 = vst.msk [vmem:[%s405] sm:$0x2] %vm402, %v401
  %s407 = scalar_lea.vmem %s1, 146
  %408 = vst.msk [vmem:[%s407] sm:$0x4] %vm402, %v401
  %s409 = scalar_lea.vmem %s1, 209
  %410 = vst.msk [vmem:[%s409] sm:$0x8] %vm402, %v401
  %s411 = scalar_lea.vmem %s1, 272
  %412 = vst.msk [vmem:[%s411] sm:$0x10] %vm402, %v401
  %s413 = scalar_lea.vmem %s1, 335
  %414 = vst.msk [vmem:[%s413] sm:$0x20] %vm402, %v401
  %s415 = scalar_lea.vmem %s1, 398
  %416 = vst.msk [vmem:[%s415] sm:$0x40] %vm402, %v401
  %s417 = scalar_lea.vmem %s1, 461
  %418 = vst.msk [vmem:[%s417] sm:$0x80] %vm402, %v401
  %v419 = vld [vmem:[%s0] sm:$0xff]
  %420 = vrot.lane.b32.xlu0 %v419, 86
  %v421 = vpop.permute.xlu0 %420
  %vm422 = vcmask 15360
  %s423 = scalar_lea.vmem %s1, 21
  %424 = vst.msk [vmem:[%s423] sm:$0x1] %vm422, %v421
  %s425 = scalar_lea.vmem %s1, 84
  %426 = vst.msk [vmem:[%s425] sm:$0x2] %vm422, %v421
  %s427 = scalar_lea.vmem %s1, 147
  %428 = vst.msk [vmem:[%s427] sm:$0x4] %vm422, %v421
  %s429 = scalar_lea.vmem %s1, 210
  %430 = vst.msk [vmem:[%s429] sm:$0x8] %vm422, %v421
  %s431 = scalar_lea.vmem %s1, 273
  %432 = vst.msk [vmem:[%s431] sm:$0x10] %vm422, %v421
  %s433 = scalar_lea.vmem %s1, 336
  %434 = vst.msk [vmem:[%s433] sm:$0x20] %vm422, %v421
  %s435 = scalar_lea.vmem %s1, 399
  %436 = vst.msk [vmem:[%s435] sm:$0x40] %vm422, %v421
  %s437 = scalar_lea.vmem %s1, 462
  %438 = vst.msk [vmem:[%s437] sm:$0x80] %vm422, %v421
  %v439 = vld [vmem:[%s0] sm:$0xff]
  %440 = vrot.lane.b32.xlu0 %v439, 84
  %v441 = vpop.permute.xlu0 %440
  %vm442 = vcmask 15360
  %s443 = scalar_lea.vmem %s1, 22
  %444 = vst.msk [vmem:[%s443] sm:$0x1] %vm442, %v441
  %s445 = scalar_lea.vmem %s1, 85
  %446 = vst.msk [vmem:[%s445] sm:$0x2] %vm442, %v441
  %s447 = scalar_lea.vmem %s1, 148
  %448 = vst.msk [vmem:[%s447] sm:$0x4] %vm442, %v441
  %s449 = scalar_lea.vmem %s1, 211
  %450 = vst.msk [vmem:[%s449] sm:$0x8] %vm442, %v441
  %s451 = scalar_lea.vmem %s1, 274
  %452 = vst.msk [vmem:[%s451] sm:$0x10] %vm442, %v441
  %s453 = scalar_lea.vmem %s1, 337
  %454 = vst.msk [vmem:[%s453] sm:$0x20] %vm442, %v441
  %s455 = scalar_lea.vmem %s1, 400
  %456 = vst.msk [vmem:[%s455] sm:$0x40] %vm442, %v441
  %s457 = scalar_lea.vmem %s1, 463
  %458 = vst.msk [vmem:[%s457] sm:$0x80] %vm442, %v441
  %v459 = vld [vmem:[%s0] sm:$0xff]
  %460 = vrot.lane.b32.xlu0 %v459, 82
  %v461 = vpop.permute.xlu0 %460
  %vm462 = vcmask 15360
  %s463 = scalar_lea.vmem %s1, 23
  %464 = vst.msk [vmem:[%s463] sm:$0x1] %vm462, %v461
  %s465 = scalar_lea.vmem %s1, 86
  %466 = vst.msk [vmem:[%s465] sm:$0x2] %vm462, %v461
  %s467 = scalar_lea.vmem %s1, 149
  %468 = vst.msk [vmem:[%s467] sm:$0x4] %vm462, %v461
  %s469 = scalar_lea.vmem %s1, 212
  %470 = vst.msk [vmem:[%s469] sm:$0x8] %vm462, %v461
  %s471 = scalar_lea.vmem %s1, 275
  %472 = vst.msk [vmem:[%s471] sm:$0x10] %vm462, %v461
  %s473 = scalar_lea.vmem %s1, 338
  %474 = vst.msk [vmem:[%s473] sm:$0x20] %vm462, %v461
  %s475 = scalar_lea.vmem %s1, 401
  %476 = vst.msk [vmem:[%s475] sm:$0x40] %vm462, %v461
  %s477 = scalar_lea.vmem %s1, 464
  %478 = vst.msk [vmem:[%s477] sm:$0x80] %vm462, %v461
  %v479 = vld [vmem:[%s0] sm:$0xff]
  %480 = vrot.lane.b32.xlu0 %v479, 80
  %v481 = vpop.permute.xlu0 %480
  %vm482 = vcmask 15360
  %s483 = scalar_lea.vmem %s1, 24
  %484 = vst.msk [vmem:[%s483] sm:$0x1] %vm482, %v481
  %s485 = scalar_lea.vmem %s1, 87
  %486 = vst.msk [vmem:[%s485] sm:$0x2] %vm482, %v481
  %s487 = scalar_lea.vmem %s1, 150
  %488 = vst.msk [vmem:[%s487] sm:$0x4] %vm482, %v481
  %s489 = scalar_lea.vmem %s1, 213
  %490 = vst.msk [vmem:[%s489] sm:$0x8] %vm482, %v481
  %s491 = scalar_lea.vmem %s1, 276
  %492 = vst.msk [vmem:[%s491] sm:$0x10] %vm482, %v481
  %s493 = scalar_lea.vmem %s1, 339
  %494 = vst.msk [vmem:[%s493] sm:$0x20] %vm482, %v481
  %s495 = scalar_lea.vmem %s1, 402
  %496 = vst.msk [vmem:[%s495] sm:$0x40] %vm482, %v481
  %s497 = scalar_lea.vmem %s1, 465
  %498 = vst.msk [vmem:[%s497] sm:$0x80] %vm482, %v481
  %v499 = vld [vmem:[%s0] sm:$0xff]
  %500 = vrot.lane.b32.xlu0 %v499, 78
  %v501 = vpop.permute.xlu0 %500
  %vm502 = vcmask 15360
  %s503 = scalar_lea.vmem %s1, 25
  %504 = vst.msk [vmem:[%s503] sm:$0x1] %vm502, %v501
  %s505 = scalar_lea.vmem %s1, 88
  %506 = vst.msk [vmem:[%s505] sm:$0x2] %vm502, %v501
  %s507 = scalar_lea.vmem %s1, 151
  %508 = vst.msk [vmem:[%s507] sm:$0x4] %vm502, %v501
  %s509 = scalar_lea.vmem %s1, 214
  %510 = vst.msk [vmem:[%s509] sm:$0x8] %vm502, %v501
  %s511 = scalar_lea.vmem %s1, 277
  %512 = vst.msk [vmem:[%s511] sm:$0x10] %vm502, %v501
  %s513 = scalar_lea.vmem %s1, 340
  %514 = vst.msk [vmem:[%s513] sm:$0x20] %vm502, %v501
  %s515 = scalar_lea.vmem %s1, 403
  %516 = vst.msk [vmem:[%s515] sm:$0x40] %vm502, %v501
  %s517 = scalar_lea.vmem %s1, 466
  %518 = vst.msk [vmem:[%s517] sm:$0x80] %vm502, %v501
  %v519 = vld [vmem:[%s0] sm:$0xff]
  %520 = vrot.lane.b32.xlu0 %v519, 76
  %v521 = vpop.permute.xlu0 %520
  %vm522 = vcmask 15360
  %s523 = scalar_lea.vmem %s1, 26
  %524 = vst.msk [vmem:[%s523] sm:$0x1] %vm522, %v521
  %s525 = scalar_lea.vmem %s1, 89
  %526 = vst.msk [vmem:[%s525] sm:$0x2] %vm522, %v521
  %s527 = scalar_lea.vmem %s1, 152
  %528 = vst.msk [vmem:[%s527] sm:$0x4] %vm522, %v521
  %s529 = scalar_lea.vmem %s1, 215
  %530 = vst.msk [vmem:[%s529] sm:$0x8] %vm522, %v521
  %s531 = scalar_lea.vmem %s1, 278
  %532 = vst.msk [vmem:[%s531] sm:$0x10] %vm522, %v521
  %s533 = scalar_lea.vmem %s1, 341
  %534 = vst.msk [vmem:[%s533] sm:$0x20] %vm522, %v521
  %s535 = scalar_lea.vmem %s1, 404
  %536 = vst.msk [vmem:[%s535] sm:$0x40] %vm522, %v521
  %s537 = scalar_lea.vmem %s1, 467
  %538 = vst.msk [vmem:[%s537] sm:$0x80] %vm522, %v521
  %v539 = vld [vmem:[%s0] sm:$0xff]
  %540 = vrot.lane.b32.xlu0 %v539, 74
  %v541 = vpop.permute.xlu0 %540
  %vm542 = vcmask 15360
  %s543 = scalar_lea.vmem %s1, 27
  %544 = vst.msk [vmem:[%s543] sm:$0x1] %vm542, %v541
  %s545 = scalar_lea.vmem %s1, 90
  %546 = vst.msk [vmem:[%s545] sm:$0x2] %vm542, %v541
  %s547 = scalar_lea.vmem %s1, 153
  %548 = vst.msk [vmem:[%s547] sm:$0x4] %vm542, %v541
  %s549 = scalar_lea.vmem %s1, 216
  %550 = vst.msk [vmem:[%s549] sm:$0x8] %vm542, %v541
  %s551 = scalar_lea.vmem %s1, 279
  %552 = vst.msk [vmem:[%s551] sm:$0x10] %vm542, %v541
  %s553 = scalar_lea.vmem %s1, 342
  %554 = vst.msk [vmem:[%s553] sm:$0x20] %vm542, %v541
  %s555 = scalar_lea.vmem %s1, 405
  %556 = vst.msk [vmem:[%s555] sm:$0x40] %vm542, %v541
  %s557 = scalar_lea.vmem %s1, 468
  %558 = vst.msk [vmem:[%s557] sm:$0x80] %vm542, %v541
  %v559 = vld [vmem:[%s0] sm:$0xff]
  %560 = vrot.lane.b32.xlu0 %v559, 72
  %v561 = vpop.permute.xlu0 %560
  %vm562 = vcmask 15360
  %s563 = scalar_lea.vmem %s1, 28
  %564 = vst.msk [vmem:[%s563] sm:$0x1] %vm562, %v561
  %s565 = scalar_lea.vmem %s1, 91
  %566 = vst.msk [vmem:[%s565] sm:$0x2] %vm562, %v561
  %s567 = scalar_lea.vmem %s1, 154
  %568 = vst.msk [vmem:[%s567] sm:$0x4] %vm562, %v561
  %s569 = scalar_lea.vmem %s1, 217
  %570 = vst.msk [vmem:[%s569] sm:$0x8] %vm562, %v561
  %s571 = scalar_lea.vmem %s1, 280
  %572 = vst.msk [vmem:[%s571] sm:$0x10] %vm562, %v561
  %s573 = scalar_lea.vmem %s1, 343
  %574 = vst.msk [vmem:[%s573] sm:$0x20] %vm562, %v561
  %s575 = scalar_lea.vmem %s1, 406
  %576 = vst.msk [vmem:[%s575] sm:$0x40] %vm562, %v561
  %s577 = scalar_lea.vmem %s1, 469
  %578 = vst.msk [vmem:[%s577] sm:$0x80] %vm562, %v561
  %v579 = vld [vmem:[%s0] sm:$0xff]
  %580 = vrot.lane.b32.xlu0 %v579, 70
  %v581 = vpop.permute.xlu0 %580
  %vm582 = vcmask 15360
  %s583 = scalar_lea.vmem %s1, 29
  %584 = vst.msk [vmem:[%s583] sm:$0x1] %vm582, %v581
  %s585 = scalar_lea.vmem %s1, 92
  %586 = vst.msk [vmem:[%s585] sm:$0x2] %vm582, %v581
  %s587 = scalar_lea.vmem %s1, 155
  %588 = vst.msk [vmem:[%s587] sm:$0x4] %vm582, %v581
  %s589 = scalar_lea.vmem %s1, 218
  %590 = vst.msk [vmem:[%s589] sm:$0x8] %vm582, %v581
  %s591 = scalar_lea.vmem %s1, 281
  %592 = vst.msk [vmem:[%s591] sm:$0x10] %vm582, %v581
  %s593 = scalar_lea.vmem %s1, 344
  %594 = vst.msk [vmem:[%s593] sm:$0x20] %vm582, %v581
  %s595 = scalar_lea.vmem %s1, 407
  %596 = vst.msk [vmem:[%s595] sm:$0x40] %vm582, %v581
  %s597 = scalar_lea.vmem %s1, 470
  %598 = vst.msk [vmem:[%s597] sm:$0x80] %vm582, %v581
  %v599 = vld [vmem:[%s0] sm:$0xff]
  %600 = vrot.lane.b32.xlu0 %v599, 68
  %v601 = vpop.permute.xlu0 %600
  %vm602 = vcmask 15360
  %s603 = scalar_lea.vmem %s1, 30
  %604 = vst.msk [vmem:[%s603] sm:$0x1] %vm602, %v601
  %s605 = scalar_lea.vmem %s1, 93
  %606 = vst.msk [vmem:[%s605] sm:$0x2] %vm602, %v601
  %s607 = scalar_lea.vmem %s1, 156
  %608 = vst.msk [vmem:[%s607] sm:$0x4] %vm602, %v601
  %s609 = scalar_lea.vmem %s1, 219
  %610 = vst.msk [vmem:[%s609] sm:$0x8] %vm602, %v601
  %s611 = scalar_lea.vmem %s1, 282
  %612 = vst.msk [vmem:[%s611] sm:$0x10] %vm602, %v601
  %s613 = scalar_lea.vmem %s1, 345
  %614 = vst.msk [vmem:[%s613] sm:$0x20] %vm602, %v601
  %s615 = scalar_lea.vmem %s1, 408
  %616 = vst.msk [vmem:[%s615] sm:$0x40] %vm602, %v601
  %s617 = scalar_lea.vmem %s1, 471
  %618 = vst.msk [vmem:[%s617] sm:$0x80] %vm602, %v601
  %v619 = vld [vmem:[%s0] sm:$0xff]
  %620 = vrot.lane.b32.xlu0 %v619, 66
  %v621 = vpop.permute.xlu0 %620
  %vm622 = vcmask 15360
  %s623 = scalar_lea.vmem %s1, 31
  %624 = vst.msk [vmem:[%s623] sm:$0x1] %vm622, %v621
  %s625 = scalar_lea.vmem %s1, 94
  %626 = vst.msk [vmem:[%s625] sm:$0x2] %vm622, %v621
  %s627 = scalar_lea.vmem %s1, 157
  %628 = vst.msk [vmem:[%s627] sm:$0x4] %vm622, %v621
  %s629 = scalar_lea.vmem %s1, 220
  %630 = vst.msk [vmem:[%s629] sm:$0x8] %vm622, %v621
  %s631 = scalar_lea.vmem %s1, 283
  %632 = vst.msk [vmem:[%s631] sm:$0x10] %vm622, %v621
  %s633 = scalar_lea.vmem %s1, 346
  %634 = vst.msk [vmem:[%s633] sm:$0x20] %vm622, %v621
  %s635 = scalar_lea.vmem %s1, 409
  %636 = vst.msk [vmem:[%s635] sm:$0x40] %vm622, %v621
  %s637 = scalar_lea.vmem %s1, 472
  %638 = vst.msk [vmem:[%s637] sm:$0x80] %vm622, %v621
  %v639 = vld [vmem:[%s0] sm:$0xff]
  %640 = vrot.lane.b32.xlu0 %v639, 64
  %v641 = vpop.permute.xlu0 %640
  %vm642 = vcmask 15360
  %s643 = scalar_lea.vmem %s1, 32
  %644 = vst.msk [vmem:[%s643] sm:$0x1] %vm642, %v641
  %s645 = scalar_lea.vmem %s1, 95
  %646 = vst.msk [vmem:[%s645] sm:$0x2] %vm642, %v641
  %s647 = scalar_lea.vmem %s1, 158
  %648 = vst.msk [vmem:[%s647] sm:$0x4] %vm642, %v641
  %s649 = scalar_lea.vmem %s1, 221
  %650 = vst.msk [vmem:[%s649] sm:$0x8] %vm642, %v641
  %s651 = scalar_lea.vmem %s1, 284
  %652 = vst.msk [vmem:[%s651] sm:$0x10] %vm642, %v641
  %s653 = scalar_lea.vmem %s1, 347
  %654 = vst.msk [vmem:[%s653] sm:$0x20] %vm642, %v641
  %s655 = scalar_lea.vmem %s1, 410
  %656 = vst.msk [vmem:[%s655] sm:$0x40] %vm642, %v641
  %s657 = scalar_lea.vmem %s1, 473
  %658 = vst.msk [vmem:[%s657] sm:$0x80] %vm642, %v641
  %v659 = vld [vmem:[%s0] sm:$0xff]
  %660 = vrot.lane.b32.xlu0 %v659, 62
  %v661 = vpop.permute.xlu0 %660
  %vm662 = vcmask 15360
  %s663 = scalar_lea.vmem %s1, 33
  %664 = vst.msk [vmem:[%s663] sm:$0x1] %vm662, %v661
  %s665 = scalar_lea.vmem %s1, 96
  %666 = vst.msk [vmem:[%s665] sm:$0x2] %vm662, %v661
  %s667 = scalar_lea.vmem %s1, 159
  %668 = vst.msk [vmem:[%s667] sm:$0x4] %vm662, %v661
  %s669 = scalar_lea.vmem %s1, 222
  %670 = vst.msk [vmem:[%s669] sm:$0x8] %vm662, %v661
  %s671 = scalar_lea.vmem %s1, 285
  %672 = vst.msk [vmem:[%s671] sm:$0x10] %vm662, %v661
  %s673 = scalar_lea.vmem %s1, 348
  %674 = vst.msk [vmem:[%s673] sm:$0x20] %vm662, %v661
  %s675 = scalar_lea.vmem %s1, 411
  %676 = vst.msk [vmem:[%s675] sm:$0x40] %vm662, %v661
  %s677 = scalar_lea.vmem %s1, 474
  %678 = vst.msk [vmem:[%s677] sm:$0x80] %vm662, %v661
  %v679 = vld [vmem:[%s0] sm:$0xff]
  %680 = vrot.lane.b32.xlu0 %v679, 60
  %v681 = vpop.permute.xlu0 %680
  %vm682 = vcmask 15360
  %s683 = scalar_lea.vmem %s1, 34
  %684 = vst.msk [vmem:[%s683] sm:$0x1] %vm682, %v681
  %s685 = scalar_lea.vmem %s1, 97
  %686 = vst.msk [vmem:[%s685] sm:$0x2] %vm682, %v681
  %s687 = scalar_lea.vmem %s1, 160
  %688 = vst.msk [vmem:[%s687] sm:$0x4] %vm682, %v681
  %s689 = scalar_lea.vmem %s1, 223
  %690 = vst.msk [vmem:[%s689] sm:$0x8] %vm682, %v681
  %s691 = scalar_lea.vmem %s1, 286
  %692 = vst.msk [vmem:[%s691] sm:$0x10] %vm682, %v681
  %s693 = scalar_lea.vmem %s1, 349
  %694 = vst.msk [vmem:[%s693] sm:$0x20] %vm682, %v681
  %s695 = scalar_lea.vmem %s1, 412
  %696 = vst.msk [vmem:[%s695] sm:$0x40] %vm682, %v681
  %s697 = scalar_lea.vmem %s1, 475
  %698 = vst.msk [vmem:[%s697] sm:$0x80] %vm682, %v681
  %v699 = vld [vmem:[%s0] sm:$0xff]
  %700 = vrot.lane.b32.xlu0 %v699, 58
  %v701 = vpop.permute.xlu0 %700
  %vm702 = vcmask 15360
  %s703 = scalar_lea.vmem %s1, 35
  %704 = vst.msk [vmem:[%s703] sm:$0x1] %vm702, %v701
  %s705 = scalar_lea.vmem %s1, 98
  %706 = vst.msk [vmem:[%s705] sm:$0x2] %vm702, %v701
  %s707 = scalar_lea.vmem %s1, 161
  %708 = vst.msk [vmem:[%s707] sm:$0x4] %vm702, %v701
  %s709 = scalar_lea.vmem %s1, 224
  %710 = vst.msk [vmem:[%s709] sm:$0x8] %vm702, %v701
  %s711 = scalar_lea.vmem %s1, 287
  %712 = vst.msk [vmem:[%s711] sm:$0x10] %vm702, %v701
  %s713 = scalar_lea.vmem %s1, 350
  %714 = vst.msk [vmem:[%s713] sm:$0x20] %vm702, %v701
  %s715 = scalar_lea.vmem %s1, 413
  %716 = vst.msk [vmem:[%s715] sm:$0x40] %vm702, %v701
  %s717 = scalar_lea.vmem %s1, 476
  %718 = vst.msk [vmem:[%s717] sm:$0x80] %vm702, %v701
  %v719 = vld [vmem:[%s0] sm:$0xff]
  %720 = vrot.lane.b32.xlu0 %v719, 56
  %v721 = vpop.permute.xlu0 %720
  %vm722 = vcmask 15360
  %s723 = scalar_lea.vmem %s1, 36
  %724 = vst.msk [vmem:[%s723] sm:$0x1] %vm722, %v721
  %s725 = scalar_lea.vmem %s1, 99
  %726 = vst.msk [vmem:[%s725] sm:$0x2] %vm722, %v721
  %s727 = scalar_lea.vmem %s1, 162
  %728 = vst.msk [vmem:[%s727] sm:$0x4] %vm722, %v721
  %s729 = scalar_lea.vmem %s1, 225
  %730 = vst.msk [vmem:[%s729] sm:$0x8] %vm722, %v721
  %s731 = scalar_lea.vmem %s1, 288
  %732 = vst.msk [vmem:[%s731] sm:$0x10] %vm722, %v721
  %s733 = scalar_lea.vmem %s1, 351
  %734 = vst.msk [vmem:[%s733] sm:$0x20] %vm722, %v721
  %s735 = scalar_lea.vmem %s1, 414
  %736 = vst.msk [vmem:[%s735] sm:$0x40] %vm722, %v721
  %s737 = scalar_lea.vmem %s1, 477
  %738 = vst.msk [vmem:[%s737] sm:$0x80] %vm722, %v721
  %v739 = vld [vmem:[%s0] sm:$0xff]
  %740 = vrot.lane.b32.xlu0 %v739, 54
  %v741 = vpop.permute.xlu0 %740
  %vm742 = vcmask 15360
  %s743 = scalar_lea.vmem %s1, 37
  %744 = vst.msk [vmem:[%s743] sm:$0x1] %vm742, %v741
  %s745 = scalar_lea.vmem %s1, 100
  %746 = vst.msk [vmem:[%s745] sm:$0x2] %vm742, %v741
  %s747 = scalar_lea.vmem %s1, 163
  %748 = vst.msk [vmem:[%s747] sm:$0x4] %vm742, %v741
  %s749 = scalar_lea.vmem %s1, 226
  %750 = vst.msk [vmem:[%s749] sm:$0x8] %vm742, %v741
  %s751 = scalar_lea.vmem %s1, 289
  %752 = vst.msk [vmem:[%s751] sm:$0x10] %vm742, %v741
  %s753 = scalar_lea.vmem %s1, 352
  %754 = vst.msk [vmem:[%s753] sm:$0x20] %vm742, %v741
  %s755 = scalar_lea.vmem %s1, 415
  %756 = vst.msk [vmem:[%s755] sm:$0x40] %vm742, %v741
  %s757 = scalar_lea.vmem %s1, 478
  %758 = vst.msk [vmem:[%s757] sm:$0x80] %vm742, %v741
  %v759 = vld [vmem:[%s0] sm:$0xff]
  %760 = vrot.lane.b32.xlu0 %v759, 52
  %v761 = vpop.permute.xlu0 %760
  %vm762 = vcmask 15360
  %s763 = scalar_lea.vmem %s1, 38
  %764 = vst.msk [vmem:[%s763] sm:$0x1] %vm762, %v761
  %s765 = scalar_lea.vmem %s1, 101
  %766 = vst.msk [vmem:[%s765] sm:$0x2] %vm762, %v761
  %s767 = scalar_lea.vmem %s1, 164
  %768 = vst.msk [vmem:[%s767] sm:$0x4] %vm762, %v761
  %s769 = scalar_lea.vmem %s1, 227
  %770 = vst.msk [vmem:[%s769] sm:$0x8] %vm762, %v761
  %s771 = scalar_lea.vmem %s1, 290
  %772 = vst.msk [vmem:[%s771] sm:$0x10] %vm762, %v761
  %s773 = scalar_lea.vmem %s1, 353
  %774 = vst.msk [vmem:[%s773] sm:$0x20] %vm762, %v761
  %s775 = scalar_lea.vmem %s1, 416
  %776 = vst.msk [vmem:[%s775] sm:$0x40] %vm762, %v761
  %s777 = scalar_lea.vmem %s1, 479
  %778 = vst.msk [vmem:[%s777] sm:$0x80] %vm762, %v761
  %v779 = vld [vmem:[%s0] sm:$0xff]
  %780 = vrot.lane.b32.xlu0 %v779, 50
  %v781 = vpop.permute.xlu0 %780
  %vm782 = vcmask 15360
  %s783 = scalar_lea.vmem %s1, 39
  %784 = vst.msk [vmem:[%s783] sm:$0x1] %vm782, %v781
  %s785 = scalar_lea.vmem %s1, 102
  %786 = vst.msk [vmem:[%s785] sm:$0x2] %vm782, %v781
  %s787 = scalar_lea.vmem %s1, 165
  %788 = vst.msk [vmem:[%s787] sm:$0x4] %vm782, %v781
  %s789 = scalar_lea.vmem %s1, 228
  %790 = vst.msk [vmem:[%s789] sm:$0x8] %vm782, %v781
  %s791 = scalar_lea.vmem %s1, 291
  %792 = vst.msk [vmem:[%s791] sm:$0x10] %vm782, %v781
  %s793 = scalar_lea.vmem %s1, 354
  %794 = vst.msk [vmem:[%s793] sm:$0x20] %vm782, %v781
  %s795 = scalar_lea.vmem %s1, 417
  %796 = vst.msk [vmem:[%s795] sm:$0x40] %vm782, %v781
  %s797 = scalar_lea.vmem %s1, 480
  %798 = vst.msk [vmem:[%s797] sm:$0x80] %vm782, %v781
  %v799 = vld [vmem:[%s0] sm:$0xff]
  %800 = vrot.lane.b32.xlu0 %v799, 48
  %v801 = vpop.permute.xlu0 %800
  %vm802 = vcmask 15360
  %s803 = scalar_lea.vmem %s1, 40
  %804 = vst.msk [vmem:[%s803] sm:$0x1] %vm802, %v801
  %s805 = scalar_lea.vmem %s1, 103
  %806 = vst.msk [vmem:[%s805] sm:$0x2] %vm802, %v801
  %s807 = scalar_lea.vmem %s1, 166
  %808 = vst.msk [vmem:[%s807] sm:$0x4] %vm802, %v801
  %s809 = scalar_lea.vmem %s1, 229
  %810 = vst.msk [vmem:[%s809] sm:$0x8] %vm802, %v801
  %s811 = scalar_lea.vmem %s1, 292
  %812 = vst.msk [vmem:[%s811] sm:$0x10] %vm802, %v801
  %s813 = scalar_lea.vmem %s1, 355
  %814 = vst.msk [vmem:[%s813] sm:$0x20] %vm802, %v801
  %s815 = scalar_lea.vmem %s1, 418
  %816 = vst.msk [vmem:[%s815] sm:$0x40] %vm802, %v801
  %s817 = scalar_lea.vmem %s1, 481
  %818 = vst.msk [vmem:[%s817] sm:$0x80] %vm802, %v801
  %v819 = vld [vmem:[%s0] sm:$0xff]
  %820 = vrot.lane.b32.xlu0 %v819, 46
  %v821 = vpop.permute.xlu0 %820
  %vm822 = vcmask 15360
  %s823 = scalar_lea.vmem %s1, 41
  %824 = vst.msk [vmem:[%s823] sm:$0x1] %vm822, %v821
  %s825 = scalar_lea.vmem %s1, 104
  %826 = vst.msk [vmem:[%s825] sm:$0x2] %vm822, %v821
  %s827 = scalar_lea.vmem %s1, 167
  %828 = vst.msk [vmem:[%s827] sm:$0x4] %vm822, %v821
  %s829 = scalar_lea.vmem %s1, 230
  %830 = vst.msk [vmem:[%s829] sm:$0x8] %vm822, %v821
  %s831 = scalar_lea.vmem %s1, 293
  %832 = vst.msk [vmem:[%s831] sm:$0x10] %vm822, %v821
  %s833 = scalar_lea.vmem %s1, 356
  %834 = vst.msk [vmem:[%s833] sm:$0x20] %vm822, %v821
  %s835 = scalar_lea.vmem %s1, 419
  %836 = vst.msk [vmem:[%s835] sm:$0x40] %vm822, %v821
  %s837 = scalar_lea.vmem %s1, 482
  %838 = vst.msk [vmem:[%s837] sm:$0x80] %vm822, %v821
  %v839 = vld [vmem:[%s0] sm:$0xff]
  %840 = vrot.lane.b32.xlu0 %v839, 44
  %v841 = vpop.permute.xlu0 %840
  %vm842 = vcmask 15360
  %s843 = scalar_lea.vmem %s1, 42
  %844 = vst.msk [vmem:[%s843] sm:$0x1] %vm842, %v841
  %s845 = scalar_lea.vmem %s1, 105
  %846 = vst.msk [vmem:[%s845] sm:$0x2] %vm842, %v841
  %s847 = scalar_lea.vmem %s1, 168
  %848 = vst.msk [vmem:[%s847] sm:$0x4] %vm842, %v841
  %s849 = scalar_lea.vmem %s1, 231
  %850 = vst.msk [vmem:[%s849] sm:$0x8] %vm842, %v841
  %s851 = scalar_lea.vmem %s1, 294
  %852 = vst.msk [vmem:[%s851] sm:$0x10] %vm842, %v841
  %s853 = scalar_lea.vmem %s1, 357
  %854 = vst.msk [vmem:[%s853] sm:$0x20] %vm842, %v841
  %s855 = scalar_lea.vmem %s1, 420
  %856 = vst.msk [vmem:[%s855] sm:$0x40] %vm842, %v841
  %s857 = scalar_lea.vmem %s1, 483
  %858 = vst.msk [vmem:[%s857] sm:$0x80] %vm842, %v841
  %v859 = vld [vmem:[%s0] sm:$0xff]
  %860 = vrot.lane.b32.xlu0 %v859, 42
  %v861 = vpop.permute.xlu0 %860
  %vm862 = vcmask 15360
  %s863 = scalar_lea.vmem %s1, 43
  %864 = vst.msk [vmem:[%s863] sm:$0x1] %vm862, %v861
  %s865 = scalar_lea.vmem %s1, 106
  %866 = vst.msk [vmem:[%s865] sm:$0x2] %vm862, %v861
  %s867 = scalar_lea.vmem %s1, 169
  %868 = vst.msk [vmem:[%s867] sm:$0x4] %vm862, %v861
  %s869 = scalar_lea.vmem %s1, 232
  %870 = vst.msk [vmem:[%s869] sm:$0x8] %vm862, %v861
  %s871 = scalar_lea.vmem %s1, 295
  %872 = vst.msk [vmem:[%s871] sm:$0x10] %vm862, %v861
  %s873 = scalar_lea.vmem %s1, 358
  %874 = vst.msk [vmem:[%s873] sm:$0x20] %vm862, %v861
  %s875 = scalar_lea.vmem %s1, 421
  %876 = vst.msk [vmem:[%s875] sm:$0x40] %vm862, %v861
  %s877 = scalar_lea.vmem %s1, 484
  %878 = vst.msk [vmem:[%s877] sm:$0x80] %vm862, %v861
  %v879 = vld [vmem:[%s0] sm:$0xff]
  %880 = vrot.lane.b32.xlu0 %v879, 40
  %v881 = vpop.permute.xlu0 %880
  %vm882 = vcmask 15360
  %s883 = scalar_lea.vmem %s1, 44
  %884 = vst.msk [vmem:[%s883] sm:$0x1] %vm882, %v881
  %s885 = scalar_lea.vmem %s1, 107
  %886 = vst.msk [vmem:[%s885] sm:$0x2] %vm882, %v881
  %s887 = scalar_lea.vmem %s1, 170
  %888 = vst.msk [vmem:[%s887] sm:$0x4] %vm882, %v881
  %s889 = scalar_lea.vmem %s1, 233
  %890 = vst.msk [vmem:[%s889] sm:$0x8] %vm882, %v881
  %s891 = scalar_lea.vmem %s1, 296
  %892 = vst.msk [vmem:[%s891] sm:$0x10] %vm882, %v881
  %s893 = scalar_lea.vmem %s1, 359
  %894 = vst.msk [vmem:[%s893] sm:$0x20] %vm882, %v881
  %s895 = scalar_lea.vmem %s1, 422
  %896 = vst.msk [vmem:[%s895] sm:$0x40] %vm882, %v881
  %s897 = scalar_lea.vmem %s1, 485
  %898 = vst.msk [vmem:[%s897] sm:$0x80] %vm882, %v881
  %v899 = vld [vmem:[%s0] sm:$0xff]
  %900 = vrot.lane.b32.xlu0 %v899, 38
  %v901 = vpop.permute.xlu0 %900
  %vm902 = vcmask 15360
  %s903 = scalar_lea.vmem %s1, 45
  %904 = vst.msk [vmem:[%s903] sm:$0x1] %vm902, %v901
  %s905 = scalar_lea.vmem %s1, 108
  %906 = vst.msk [vmem:[%s905] sm:$0x2] %vm902, %v901
  %s907 = scalar_lea.vmem %s1, 171
  %908 = vst.msk [vmem:[%s907] sm:$0x4] %vm902, %v901
  %s909 = scalar_lea.vmem %s1, 234
  %910 = vst.msk [vmem:[%s909] sm:$0x8] %vm902, %v901
  %s911 = scalar_lea.vmem %s1, 297
  %912 = vst.msk [vmem:[%s911] sm:$0x10] %vm902, %v901
  %s913 = scalar_lea.vmem %s1, 360
  %914 = vst.msk [vmem:[%s913] sm:$0x20] %vm902, %v901
  %s915 = scalar_lea.vmem %s1, 423
  %916 = vst.msk [vmem:[%s915] sm:$0x40] %vm902, %v901
  %s917 = scalar_lea.vmem %s1, 486
  %918 = vst.msk [vmem:[%s917] sm:$0x80] %vm902, %v901
  %v919 = vld [vmem:[%s0] sm:$0xff]
  %920 = vrot.lane.b32.xlu0 %v919, 36
  %v921 = vpop.permute.xlu0 %920
  %vm922 = vcmask 15360
  %s923 = scalar_lea.vmem %s1, 46
  %924 = vst.msk [vmem:[%s923] sm:$0x1] %vm922, %v921
  %s925 = scalar_lea.vmem %s1, 109
  %926 = vst.msk [vmem:[%s925] sm:$0x2] %vm922, %v921
  %s927 = scalar_lea.vmem %s1, 172
  %928 = vst.msk [vmem:[%s927] sm:$0x4] %vm922, %v921
  %s929 = scalar_lea.vmem %s1, 235
  %930 = vst.msk [vmem:[%s929] sm:$0x8] %vm922, %v921
  %s931 = scalar_lea.vmem %s1, 298
  %932 = vst.msk [vmem:[%s931] sm:$0x10] %vm922, %v921
  %s933 = scalar_lea.vmem %s1, 361
  %934 = vst.msk [vmem:[%s933] sm:$0x20] %vm922, %v921
  %s935 = scalar_lea.vmem %s1, 424
  %936 = vst.msk [vmem:[%s935] sm:$0x40] %vm922, %v921
  %s937 = scalar_lea.vmem %s1, 487
  %938 = vst.msk [vmem:[%s937] sm:$0x80] %vm922, %v921
  %v939 = vld [vmem:[%s0] sm:$0xff]
  %940 = vrot.lane.b32.xlu0 %v939, 34
  %v941 = vpop.permute.xlu0 %940
  %vm942 = vcmask 15360
  %s943 = scalar_lea.vmem %s1, 47
  %944 = vst.msk [vmem:[%s943] sm:$0x1] %vm942, %v941
  %s945 = scalar_lea.vmem %s1, 110
  %946 = vst.msk [vmem:[%s945] sm:$0x2] %vm942, %v941
  %s947 = scalar_lea.vmem %s1, 173
  %948 = vst.msk [vmem:[%s947] sm:$0x4] %vm942, %v941
  %s949 = scalar_lea.vmem %s1, 236
  %950 = vst.msk [vmem:[%s949] sm:$0x8] %vm942, %v941
  %s951 = scalar_lea.vmem %s1, 299
  %952 = vst.msk [vmem:[%s951] sm:$0x10] %vm942, %v941
  %s953 = scalar_lea.vmem %s1, 362
  %954 = vst.msk [vmem:[%s953] sm:$0x20] %vm942, %v941
  %s955 = scalar_lea.vmem %s1, 425
  %956 = vst.msk [vmem:[%s955] sm:$0x40] %vm942, %v941
  %s957 = scalar_lea.vmem %s1, 488
  %958 = vst.msk [vmem:[%s957] sm:$0x80] %vm942, %v941
  %v959 = vld [vmem:[%s0] sm:$0xff]
  %960 = vrot.lane.b32.xlu0 %v959, 32
  %v961 = vpop.permute.xlu0 %960
  %vm962 = vcmask 15360
  %s963 = scalar_lea.vmem %s1, 48
  %964 = vst.msk [vmem:[%s963] sm:$0x1] %vm962, %v961
  %s965 = scalar_lea.vmem %s1, 111
  %966 = vst.msk [vmem:[%s965] sm:$0x2] %vm962, %v961
  %s967 = scalar_lea.vmem %s1, 174
  %968 = vst.msk [vmem:[%s967] sm:$0x4] %vm962, %v961
  %s969 = scalar_lea.vmem %s1, 237
  %970 = vst.msk [vmem:[%s969] sm:$0x8] %vm962, %v961
  %s971 = scalar_lea.vmem %s1, 300
  %972 = vst.msk [vmem:[%s971] sm:$0x10] %vm962, %v961
  %s973 = scalar_lea.vmem %s1, 363
  %974 = vst.msk [vmem:[%s973] sm:$0x20] %vm962, %v961
  %s975 = scalar_lea.vmem %s1, 426
  %976 = vst.msk [vmem:[%s975] sm:$0x40] %vm962, %v961
  %s977 = scalar_lea.vmem %s1, 489
  %978 = vst.msk [vmem:[%s977] sm:$0x80] %vm962, %v961
  %v979 = vld [vmem:[%s0] sm:$0xff]
  %980 = vrot.lane.b32.xlu0 %v979, 30
  %v981 = vpop.permute.xlu0 %980
  %vm982 = vcmask 15360
  %s983 = scalar_lea.vmem %s1, 49
  %984 = vst.msk [vmem:[%s983] sm:$0x1] %vm982, %v981
  %s985 = scalar_lea.vmem %s1, 112
  %986 = vst.msk [vmem:[%s985] sm:$0x2] %vm982, %v981
  %s987 = scalar_lea.vmem %s1, 175
  %988 = vst.msk [vmem:[%s987] sm:$0x4] %vm982, %v981
  %s989 = scalar_lea.vmem %s1, 238
  %990 = vst.msk [vmem:[%s989] sm:$0x8] %vm982, %v981
  %s991 = scalar_lea.vmem %s1, 301
  %992 = vst.msk [vmem:[%s991] sm:$0x10] %vm982, %v981
  %s993 = scalar_lea.vmem %s1, 364
  %994 = vst.msk [vmem:[%s993] sm:$0x20] %vm982, %v981
  %s995 = scalar_lea.vmem %s1, 427
  %996 = vst.msk [vmem:[%s995] sm:$0x40] %vm982, %v981
  %s997 = scalar_lea.vmem %s1, 490
  %998 = vst.msk [vmem:[%s997] sm:$0x80] %vm982, %v981
  %v999 = vld [vmem:[%s0] sm:$0xff]
  %1000 = vrot.lane.b32.xlu0 %v999, 28
  %v1001 = vpop.permute.xlu0 %1000
  %vm1002 = vcmask 15360
  %s1003 = scalar_lea.vmem %s1, 50
  %1004 = vst.msk [vmem:[%s1003] sm:$0x1] %vm1002, %v1001
  %s1005 = scalar_lea.vmem %s1, 113
  %1006 = vst.msk [vmem:[%s1005] sm:$0x2] %vm1002, %v1001
  %s1007 = scalar_lea.vmem %s1, 176
  %1008 = vst.msk [vmem:[%s1007] sm:$0x4] %vm1002, %v1001
  %s1009 = scalar_lea.vmem %s1, 239
  %1010 = vst.msk [vmem:[%s1009] sm:$0x8] %vm1002, %v1001
  %s1011 = scalar_lea.vmem %s1, 302
  %1012 = vst.msk [vmem:[%s1011] sm:$0x10] %vm1002, %v1001
  %s1013 = scalar_lea.vmem %s1, 365
  %1014 = vst.msk [vmem:[%s1013] sm:$0x20] %vm1002, %v1001
  %s1015 = scalar_lea.vmem %s1, 428
  %1016 = vst.msk [vmem:[%s1015] sm:$0x40] %vm1002, %v1001
  %s1017 = scalar_lea.vmem %s1, 491
  %1018 = vst.msk [vmem:[%s1017] sm:$0x80] %vm1002, %v1001
  %v1019 = vld [vmem:[%s0] sm:$0xff]
  %1020 = vrot.lane.b32.xlu0 %v1019, 26
  %v1021 = vpop.permute.xlu0 %1020
  %vm1022 = vcmask 15360
  %s1023 = scalar_lea.vmem %s1, 51
  %1024 = vst.msk [vmem:[%s1023] sm:$0x1] %vm1022, %v1021
  %s1025 = scalar_lea.vmem %s1, 114
  %1026 = vst.msk [vmem:[%s1025] sm:$0x2] %vm1022, %v1021
  %s1027 = scalar_lea.vmem %s1, 177
  %1028 = vst.msk [vmem:[%s1027] sm:$0x4] %vm1022, %v1021
  %s1029 = scalar_lea.vmem %s1, 240
  %1030 = vst.msk [vmem:[%s1029] sm:$0x8] %vm1022, %v1021
  %s1031 = scalar_lea.vmem %s1, 303
  %1032 = vst.msk [vmem:[%s1031] sm:$0x10] %vm1022, %v1021
  %s1033 = scalar_lea.vmem %s1, 366
  %1034 = vst.msk [vmem:[%s1033] sm:$0x20] %vm1022, %v1021
  %s1035 = scalar_lea.vmem %s1, 429
  %1036 = vst.msk [vmem:[%s1035] sm:$0x40] %vm1022, %v1021
  %s1037 = scalar_lea.vmem %s1, 492
  %1038 = vst.msk [vmem:[%s1037] sm:$0x80] %vm1022, %v1021
  %v1039 = vld [vmem:[%s0] sm:$0xff]
  %1040 = vrot.lane.b32.xlu0 %v1039, 24
  %v1041 = vpop.permute.xlu0 %1040
  %vm1042 = vcmask 15360
  %s1043 = scalar_lea.vmem %s1, 52
  %1044 = vst.msk [vmem:[%s1043] sm:$0x1] %vm1042, %v1041
  %s1045 = scalar_lea.vmem %s1, 115
  %1046 = vst.msk [vmem:[%s1045] sm:$0x2] %vm1042, %v1041
  %s1047 = scalar_lea.vmem %s1, 178
  %1048 = vst.msk [vmem:[%s1047] sm:$0x4] %vm1042, %v1041
  %s1049 = scalar_lea.vmem %s1, 241
  %1050 = vst.msk [vmem:[%s1049] sm:$0x8] %vm1042, %v1041
  %s1051 = scalar_lea.vmem %s1, 304
  %1052 = vst.msk [vmem:[%s1051] sm:$0x10] %vm1042, %v1041
  %s1053 = scalar_lea.vmem %s1, 367
  %1054 = vst.msk [vmem:[%s1053] sm:$0x20] %vm1042, %v1041
  %s1055 = scalar_lea.vmem %s1, 430
  %1056 = vst.msk [vmem:[%s1055] sm:$0x40] %vm1042, %v1041
  %s1057 = scalar_lea.vmem %s1, 493
  %1058 = vst.msk [vmem:[%s1057] sm:$0x80] %vm1042, %v1041
  %v1059 = vld [vmem:[%s0] sm:$0xff]
  %1060 = vrot.lane.b32.xlu0 %v1059, 22
  %v1061 = vpop.permute.xlu0 %1060
  %vm1062 = vcmask 15360
  %s1063 = scalar_lea.vmem %s1, 53
  %1064 = vst.msk [vmem:[%s1063] sm:$0x1] %vm1062, %v1061
  %s1065 = scalar_lea.vmem %s1, 116
  %1066 = vst.msk [vmem:[%s1065] sm:$0x2] %vm1062, %v1061
  %s1067 = scalar_lea.vmem %s1, 179
  %1068 = vst.msk [vmem:[%s1067] sm:$0x4] %vm1062, %v1061
  %s1069 = scalar_lea.vmem %s1, 242
  %1070 = vst.msk [vmem:[%s1069] sm:$0x8] %vm1062, %v1061
  %s1071 = scalar_lea.vmem %s1, 305
  %1072 = vst.msk [vmem:[%s1071] sm:$0x10] %vm1062, %v1061
  %s1073 = scalar_lea.vmem %s1, 368
  %1074 = vst.msk [vmem:[%s1073] sm:$0x20] %vm1062, %v1061
  %s1075 = scalar_lea.vmem %s1, 431
  %1076 = vst.msk [vmem:[%s1075] sm:$0x40] %vm1062, %v1061
  %s1077 = scalar_lea.vmem %s1, 494
  %1078 = vst.msk [vmem:[%s1077] sm:$0x80] %vm1062, %v1061
  %v1079 = vld [vmem:[%s0] sm:$0xff]
  %1080 = vrot.lane.b32.xlu0 %v1079, 20
  %v1081 = vpop.permute.xlu0 %1080
  %vm1082 = vcmask 15360
  %s1083 = scalar_lea.vmem %s1, 54
  %1084 = vst.msk [vmem:[%s1083] sm:$0x1] %vm1082, %v1081
  %s1085 = scalar_lea.vmem %s1, 117
  %1086 = vst.msk [vmem:[%s1085] sm:$0x2] %vm1082, %v1081
  %s1087 = scalar_lea.vmem %s1, 180
  %1088 = vst.msk [vmem:[%s1087] sm:$0x4] %vm1082, %v1081
  %s1089 = scalar_lea.vmem %s1, 243
  %1090 = vst.msk [vmem:[%s1089] sm:$0x8] %vm1082, %v1081
  %s1091 = scalar_lea.vmem %s1, 306
  %1092 = vst.msk [vmem:[%s1091] sm:$0x10] %vm1082, %v1081
  %s1093 = scalar_lea.vmem %s1, 369
  %1094 = vst.msk [vmem:[%s1093] sm:$0x20] %vm1082, %v1081
  %s1095 = scalar_lea.vmem %s1, 432
  %1096 = vst.msk [vmem:[%s1095] sm:$0x40] %vm1082, %v1081
  %s1097 = scalar_lea.vmem %s1, 495
  %1098 = vst.msk [vmem:[%s1097] sm:$0x80] %vm1082, %v1081
  %v1099 = vld [vmem:[%s0] sm:$0xff]
  %1100 = vrot.lane.b32.xlu0 %v1099, 18
  %v1101 = vpop.permute.xlu0 %1100
  %vm1102 = vcmask 15360
  %s1103 = scalar_lea.vmem %s1, 55
  %1104 = vst.msk [vmem:[%s1103] sm:$0x1] %vm1102, %v1101
  %s1105 = scalar_lea.vmem %s1, 118
  %1106 = vst.msk [vmem:[%s1105] sm:$0x2] %vm1102, %v1101
  %s1107 = scalar_lea.vmem %s1, 181
  %1108 = vst.msk [vmem:[%s1107] sm:$0x4] %vm1102, %v1101
  %s1109 = scalar_lea.vmem %s1, 244
  %1110 = vst.msk [vmem:[%s1109] sm:$0x8] %vm1102, %v1101
  %s1111 = scalar_lea.vmem %s1, 307
  %1112 = vst.msk [vmem:[%s1111] sm:$0x10] %vm1102, %v1101
  %s1113 = scalar_lea.vmem %s1, 370
  %1114 = vst.msk [vmem:[%s1113] sm:$0x20] %vm1102, %v1101
  %s1115 = scalar_lea.vmem %s1, 433
  %1116 = vst.msk [vmem:[%s1115] sm:$0x40] %vm1102, %v1101
  %s1117 = scalar_lea.vmem %s1, 496
  %1118 = vst.msk [vmem:[%s1117] sm:$0x80] %vm1102, %v1101
  %v1119 = vld [vmem:[%s0] sm:$0xff]
  %1120 = vrot.lane.b32.xlu0 %v1119, 16
  %v1121 = vpop.permute.xlu0 %1120
  %vm1122 = vcmask 15360
  %s1123 = scalar_lea.vmem %s1, 56
  %1124 = vst.msk [vmem:[%s1123] sm:$0x1] %vm1122, %v1121
  %s1125 = scalar_lea.vmem %s1, 119
  %1126 = vst.msk [vmem:[%s1125] sm:$0x2] %vm1122, %v1121
  %s1127 = scalar_lea.vmem %s1, 182
  %1128 = vst.msk [vmem:[%s1127] sm:$0x4] %vm1122, %v1121
  %s1129 = scalar_lea.vmem %s1, 245
  %1130 = vst.msk [vmem:[%s1129] sm:$0x8] %vm1122, %v1121
  %s1131 = scalar_lea.vmem %s1, 308
  %1132 = vst.msk [vmem:[%s1131] sm:$0x10] %vm1122, %v1121
  %s1133 = scalar_lea.vmem %s1, 371
  %1134 = vst.msk [vmem:[%s1133] sm:$0x20] %vm1122, %v1121
  %s1135 = scalar_lea.vmem %s1, 434
  %1136 = vst.msk [vmem:[%s1135] sm:$0x40] %vm1122, %v1121
  %s1137 = scalar_lea.vmem %s1, 497
  %1138 = vst.msk [vmem:[%s1137] sm:$0x80] %vm1122, %v1121
  %v1139 = vld [vmem:[%s0] sm:$0xff]
  %1140 = vrot.lane.b32.xlu0 %v1139, 14
  %v1141 = vpop.permute.xlu0 %1140
  %vm1142 = vcmask 15360
  %s1143 = scalar_lea.vmem %s1, 57
  %1144 = vst.msk [vmem:[%s1143] sm:$0x1] %vm1142, %v1141
  %s1145 = scalar_lea.vmem %s1, 120
  %1146 = vst.msk [vmem:[%s1145] sm:$0x2] %vm1142, %v1141
  %s1147 = scalar_lea.vmem %s1, 183
  %1148 = vst.msk [vmem:[%s1147] sm:$0x4] %vm1142, %v1141
  %s1149 = scalar_lea.vmem %s1, 246
  %1150 = vst.msk [vmem:[%s1149] sm:$0x8] %vm1142, %v1141
  %s1151 = scalar_lea.vmem %s1, 309
  %1152 = vst.msk [vmem:[%s1151] sm:$0x10] %vm1142, %v1141
  %s1153 = scalar_lea.vmem %s1, 372
  %1154 = vst.msk [vmem:[%s1153] sm:$0x20] %vm1142, %v1141
  %s1155 = scalar_lea.vmem %s1, 435
  %1156 = vst.msk [vmem:[%s1155] sm:$0x40] %vm1142, %v1141
  %s1157 = scalar_lea.vmem %s1, 498
  %1158 = vst.msk [vmem:[%s1157] sm:$0x80] %vm1142, %v1141
  %v1159 = vld [vmem:[%s0] sm:$0xff]
  %1160 = vrot.lane.b32.xlu0 %v1159, 12
  %v1161 = vpop.permute.xlu0 %1160
  %vm1162 = vcmask 15360
  %s1163 = scalar_lea.vmem %s1, 58
  %1164 = vst.msk [vmem:[%s1163] sm:$0x1] %vm1162, %v1161
  %s1165 = scalar_lea.vmem %s1, 121
  %1166 = vst.msk [vmem:[%s1165] sm:$0x2] %vm1162, %v1161
  %s1167 = scalar_lea.vmem %s1, 184
  %1168 = vst.msk [vmem:[%s1167] sm:$0x4] %vm1162, %v1161
  %s1169 = scalar_lea.vmem %s1, 247
  %1170 = vst.msk [vmem:[%s1169] sm:$0x8] %vm1162, %v1161
  %s1171 = scalar_lea.vmem %s1, 310
  %1172 = vst.msk [vmem:[%s1171] sm:$0x10] %vm1162, %v1161
  %s1173 = scalar_lea.vmem %s1, 373
  %1174 = vst.msk [vmem:[%s1173] sm:$0x20] %vm1162, %v1161
  %s1175 = scalar_lea.vmem %s1, 436
  %1176 = vst.msk [vmem:[%s1175] sm:$0x40] %vm1162, %v1161
  %s1177 = scalar_lea.vmem %s1, 499
  %1178 = vst.msk [vmem:[%s1177] sm:$0x80] %vm1162, %v1161
  %v1179 = vld [vmem:[%s0] sm:$0xff]
  %1180 = vrot.lane.b32.xlu0 %v1179, 10
  %v1181 = vpop.permute.xlu0 %1180
  %vm1182 = vcmask 15360
  %s1183 = scalar_lea.vmem %s1, 59
  %1184 = vst.msk [vmem:[%s1183] sm:$0x1] %vm1182, %v1181
  %s1185 = scalar_lea.vmem %s1, 122
  %1186 = vst.msk [vmem:[%s1185] sm:$0x2] %vm1182, %v1181
  %s1187 = scalar_lea.vmem %s1, 185
  %1188 = vst.msk [vmem:[%s1187] sm:$0x4] %vm1182, %v1181
  %s1189 = scalar_lea.vmem %s1, 248
  %1190 = vst.msk [vmem:[%s1189] sm:$0x8] %vm1182, %v1181
  %s1191 = scalar_lea.vmem %s1, 311
  %1192 = vst.msk [vmem:[%s1191] sm:$0x10] %vm1182, %v1181
  %s1193 = scalar_lea.vmem %s1, 374
  %1194 = vst.msk [vmem:[%s1193] sm:$0x20] %vm1182, %v1181
  %s1195 = scalar_lea.vmem %s1, 437
  %1196 = vst.msk [vmem:[%s1195] sm:$0x40] %vm1182, %v1181
  %s1197 = scalar_lea.vmem %s1, 500
  %1198 = vst.msk [vmem:[%s1197] sm:$0x80] %vm1182, %v1181
  %v1199 = vld [vmem:[%s0] sm:$0xff]
  %1200 = vrot.lane.b32.xlu0 %v1199, 8
  %v1201 = vpop.permute.xlu0 %1200
  %vm1202 = vcmask 15360
  %s1203 = scalar_lea.vmem %s1, 60
  %1204 = vst.msk [vmem:[%s1203] sm:$0x1] %vm1202, %v1201
  %s1205 = scalar_lea.vmem %s1, 123
  %1206 = vst.msk [vmem:[%s1205] sm:$0x2] %vm1202, %v1201
  %s1207 = scalar_lea.vmem %s1, 186
  %1208 = vst.msk [vmem:[%s1207] sm:$0x4] %vm1202, %v1201
  %s1209 = scalar_lea.vmem %s1, 249
  %1210 = vst.msk [vmem:[%s1209] sm:$0x8] %vm1202, %v1201
  %s1211 = scalar_lea.vmem %s1, 312
  %1212 = vst.msk [vmem:[%s1211] sm:$0x10] %vm1202, %v1201
  %s1213 = scalar_lea.vmem %s1, 375
  %1214 = vst.msk [vmem:[%s1213] sm:$0x20] %vm1202, %v1201
  %s1215 = scalar_lea.vmem %s1, 438
  %1216 = vst.msk [vmem:[%s1215] sm:$0x40] %vm1202, %v1201
  %s1217 = scalar_lea.vmem %s1, 501
  %1218 = vst.msk [vmem:[%s1217] sm:$0x80] %vm1202, %v1201
  %v1219 = vld [vmem:[%s0] sm:$0xff]
  %1220 = vrot.lane.b32.xlu0 %v1219, 6
  %v1221 = vpop.permute.xlu0 %1220
  %vm1222 = vcmask 15360
  %s1223 = scalar_lea.vmem %s1, 61
  %1224 = vst.msk [vmem:[%s1223] sm:$0x1] %vm1222, %v1221
  %s1225 = scalar_lea.vmem %s1, 124
  %1226 = vst.msk [vmem:[%s1225] sm:$0x2] %vm1222, %v1221
  %s1227 = scalar_lea.vmem %s1, 187
  %1228 = vst.msk [vmem:[%s1227] sm:$0x4] %vm1222, %v1221
  %s1229 = scalar_lea.vmem %s1, 250
  %1230 = vst.msk [vmem:[%s1229] sm:$0x8] %vm1222, %v1221
  %s1231 = scalar_lea.vmem %s1, 313
  %1232 = vst.msk [vmem:[%s1231] sm:$0x10] %vm1222, %v1221
  %s1233 = scalar_lea.vmem %s1, 376
  %1234 = vst.msk [vmem:[%s1233] sm:$0x20] %vm1222, %v1221
  %s1235 = scalar_lea.vmem %s1, 439
  %1236 = vst.msk [vmem:[%s1235] sm:$0x40] %vm1222, %v1221
  %s1237 = scalar_lea.vmem %s1, 502
  %1238 = vst.msk [vmem:[%s1237] sm:$0x80] %vm1222, %v1221
  %v1239 = vld [vmem:[%s0] sm:$0xff]
  %1240 = vrot.lane.b32.xlu0 %v1239, 4
  %v1241 = vpop.permute.xlu0 %1240
  %vm1242 = vcmask 15360
  %s1243 = scalar_lea.vmem %s1, 62
  %1244 = vst.msk [vmem:[%s1243] sm:$0x1] %vm1242, %v1241
  %s1245 = scalar_lea.vmem %s1, 125
  %1246 = vst.msk [vmem:[%s1245] sm:$0x2] %vm1242, %v1241
  %s1247 = scalar_lea.vmem %s1, 188
  %1248 = vst.msk [vmem:[%s1247] sm:$0x4] %vm1242, %v1241
  %s1249 = scalar_lea.vmem %s1, 251
  %1250 = vst.msk [vmem:[%s1249] sm:$0x8] %vm1242, %v1241
  %s1251 = scalar_lea.vmem %s1, 314
  %1252 = vst.msk [vmem:[%s1251] sm:$0x10] %vm1242, %v1241
  %s1253 = scalar_lea.vmem %s1, 377
  %1254 = vst.msk [vmem:[%s1253] sm:$0x20] %vm1242, %v1241
  %s1255 = scalar_lea.vmem %s1, 440
  %1256 = vst.msk [vmem:[%s1255] sm:$0x40] %vm1242, %v1241
  %s1257 = scalar_lea.vmem %s1, 503
  %1258 = vst.msk [vmem:[%s1257] sm:$0x80] %vm1242, %v1241
  %v1259 = vld [vmem:[%s0] sm:$0xff]
  %1260 = vrot.lane.b32.xlu0 %v1259, 2
  %v1261 = vpop.permute.xlu0 %1260
  %vm1262 = vcmask 15360
  %s1263 = scalar_lea.vmem %s1, 63
  %1264 = vst.msk [vmem:[%s1263] sm:$0x1] %vm1262, %v1261
  %s1265 = scalar_lea.vmem %s1, 126
  %1266 = vst.msk [vmem:[%s1265] sm:$0x2] %vm1262, %v1261
  %s1267 = scalar_lea.vmem %s1, 189
  %1268 = vst.msk [vmem:[%s1267] sm:$0x4] %vm1262, %v1261
  %s1269 = scalar_lea.vmem %s1, 252
  %1270 = vst.msk [vmem:[%s1269] sm:$0x8] %vm1262, %v1261
  %s1271 = scalar_lea.vmem %s1, 315
  %1272 = vst.msk [vmem:[%s1271] sm:$0x10] %vm1262, %v1261
  %s1273 = scalar_lea.vmem %s1, 378
  %1274 = vst.msk [vmem:[%s1273] sm:$0x20] %vm1262, %v1261
  %s1275 = scalar_lea.vmem %s1, 441
  %1276 = vst.msk [vmem:[%s1275] sm:$0x40] %vm1262, %v1261
  %s1277 = scalar_lea.vmem %s1, 504
  %1278 = vst.msk [vmem:[%s1277] sm:$0x80] %vm1262, %v1261

// kernel: squeeze.6
$region0: #{squeeze.6}
  %s0 = inlined_call_operand.vmem [shape: f32[1,32,128], index: 0, kind: input, shape index: {}]
  %s1 = inlined_call_operand.vmem [shape: f32[2,16,16,4,2], index: 1, kind: output, shape index: {}]
  $region1: #{squeeze.6} parent=0
    #allocation0 [shape = 'u8[524288]{0}', space=vmem, size = 0x80000, scoped, tag = 'scoped mem for output reshape']
    %v2 = vld [vmem:[%s0] sm:$0xff]
    %vm3 = vcmask 130048
    %4 = vst.msk [vmem:[#allocation0] ss:$8 sm:$0xf] %vm3, %v2
    %5 = vst.msk [vmem:[#allocation0] ss:$8 sm:$0xf0] %vm3, %v2
    %s6 = scalar_lea.vmem %s0, 8
    %v7 = vld [vmem:[%s6] sm:$0xff]
    %vm8 = vcmask 130048
    %s9 = scalar_lea.vmem [#allocation0], 64
    %10 = vst.msk [vmem:[%s9] ss:$8 sm:$0xf] %vm8, %v7
    %s11 = scalar_lea.vmem [#allocation0], 64
    %12 = vst.msk [vmem:[%s11] ss:$8 sm:$0xf0] %vm8, %v7
    %s13 = scalar_lea.vmem %s0, 16
    %v14 = vld [vmem:[%s13] sm:$0xff]
    %vm15 = vcmask 130048
    %s16 = scalar_lea.vmem [#allocation0], 128
    %17 = vst.msk [vmem:[%s16] ss:$8 sm:$0xf] %vm15, %v14
    %s18 = scalar_lea.vmem [#allocation0], 128
    %19 = vst.msk [vmem:[%s18] ss:$8 sm:$0xf0] %vm15, %v14
    %s20 = scalar_lea.vmem %s0, 24
    %v21 = vld [vmem:[%s20] sm:$0xff]
    %vm22 = vcmask 130048
    %s23 = scalar_lea.vmem [#allocation0], 192
    %24 = vst.msk [vmem:[%s23] ss:$8 sm:$0xf] %vm22, %v21
    %s25 = scalar_lea.vmem [#allocation0], 192
    %26 = vst.msk [vmem:[%s25] ss:$8 sm:$0xf0] %vm22, %v21
    %s27 = scalar_lea.vmem %s0, 32
    %v28 = vld [vmem:[%s27] sm:$0xff]
    %vm29 = vcmask 130048
    %s30 = scalar_lea.vmem [#allocation0], 256
    %31 = vst.msk [vmem:[%s30] ss:$8 sm:$0xf] %vm29, %v28
    %s32 = scalar_lea.vmem [#allocation0], 256
    %33 = vst.msk [vmem:[%s32] ss:$8 sm:$0xf0] %vm29, %v28
    %s34 = scalar_lea.vmem %s0, 40
    %v35 = vld [vmem:[%s34] sm:$0xff]
    %vm36 = vcmask 130048
    %s37 = scalar_lea.vmem [#allocation0], 320
    %38 = vst.msk [vmem:[%s37] ss:$8 sm:$0xf] %vm36, %v35
    %s39 = scalar_lea.vmem [#allocation0], 320
    %40 = vst.msk [vmem:[%s39] ss:$8 sm:$0xf0] %vm36, %v35
    %s41 = scalar_lea.vmem %s0, 48
    %v42 = vld [vmem:[%s41] sm:$0xff]
    %vm43 = vcmask 130048
    %s44 = scalar_lea.vmem [#allocation0], 384
    %45 = vst.msk [vmem:[%s44] ss:$8 sm:$0xf] %vm43, %v42
    %s46 = scalar_lea.vmem [#allocation0], 384
    %47 = vst.msk [vmem:[%s46] ss:$8 sm:$0xf0] %vm43, %v42
    %s48 = scalar_lea.vmem %s0, 56
    %v49 = vld [vmem:[%s48] sm:$0xff]
    %vm50 = vcmask 130048
    %s51 = scalar_lea.vmem [#allocation0], 448
    %52 = vst.msk [vmem:[%s51] ss:$8 sm:$0xf] %vm50, %v49
    %s53 = scalar_lea.vmem [#allocation0], 448
    %54 = vst.msk [vmem:[%s53] ss:$8 sm:$0xf0] %vm50, %v49
    %s55 = scalar_lea.vmem %s0, 64
    %v56 = vld [vmem:[%s55] sm:$0xff]
    %vm57 = vcmask 130048
    %s58 = scalar_lea.vmem [#allocation0], 512
    %59 = vst.msk [vmem:[%s58] ss:$8 sm:$0xf] %vm57, %v56
    %s60 = scalar_lea.vmem [#allocation0], 512
    %61 = vst.msk [vmem:[%s60] ss:$8 sm:$0xf0] %vm57, %v56
    %s62 = scalar_lea.vmem %s0, 72
    %v63 = vld [vmem:[%s62] sm:$0xff]
    %vm64 = vcmask 130048
    %s65 = scalar_lea.vmem [#allocation0], 576
    %66 = vst.msk [vmem:[%s65] ss:$8 sm:$0xf] %vm64, %v63
    %s67 = scalar_lea.vmem [#allocation0], 576
    %68 = vst.msk [vmem:[%s67] ss:$8 sm:$0xf0] %vm64, %v63
    %s69 = scalar_lea.vmem %s0, 80
    %v70 = vld [vmem:[%s69] sm:$0xff]
    %vm71 = vcmask 130048
    %s72 = scalar_lea.vmem [#allocation0], 640
    %73 = vst.msk [vmem:[%s72] ss:$8 sm:$0xf] %vm71, %v70
    %s74 = scalar_lea.vmem [#allocation0], 640
    %75 = vst.msk [vmem:[%s74] ss:$8 sm:$0xf0] %vm71, %v70
    %s76 = scalar_lea.vmem %s0, 88
    %v77 = vld [vmem:[%s76] sm:$0xff]
    %vm78 = vcmask 130048
    %s79 = scalar_lea.vmem [#allocation0], 704
    %80 = vst.msk [vmem:[%s79] ss:$8 sm:$0xf] %vm78, %v77
    %s81 = scalar_lea.vmem [#allocation0], 704
    %82 = vst.msk [vmem:[%s81] ss:$8 sm:$0xf0] %vm78, %v77
    %s83 = scalar_lea.vmem %s0, 96
    %v84 = vld [vmem:[%s83] sm:$0xff]
    %vm85 = vcmask 130048
    %s86 = scalar_lea.vmem [#allocation0], 768
    %87 = vst.msk [vmem:[%s86] ss:$8 sm:$0xf] %vm85, %v84
    %s88 = scalar_lea.vmem [#allocation0], 768
    %89 = vst.msk [vmem:[%s88] ss:$8 sm:$0xf0] %vm85, %v84
    %s90 = scalar_lea.vmem %s0, 104
    %v91 = vld [vmem:[%s90] sm:$0xff]
    %vm92 = vcmask 130048
    %s93 = scalar_lea.vmem [#allocation0], 832
    %94 = vst.msk [vmem:[%s93] ss:$8 sm:$0xf] %vm92, %v91
    %s95 = scalar_lea.vmem [#allocation0], 832
    %96 = vst.msk [vmem:[%s95] ss:$8 sm:$0xf0] %vm92, %v91
    %s97 = scalar_lea.vmem %s0, 112
    %v98 = vld [vmem:[%s97] sm:$0xff]
    %vm99 = vcmask 130048
    %s100 = scalar_lea.vmem [#allocation0], 896
    %101 = vst.msk [vmem:[%s100] ss:$8 sm:$0xf] %vm99, %v98
    %s102 = scalar_lea.vmem [#allocation0], 896
    %103 = vst.msk [vmem:[%s102] ss:$8 sm:$0xf0] %vm99, %v98
    %s104 = scalar_lea.vmem %s0, 120
    %v105 = vld [vmem:[%s104] sm:$0xff]
    %vm106 = vcmask 130048
    %s107 = scalar_lea.vmem [#allocation0], 960
    %108 = vst.msk [vmem:[%s107] ss:$8 sm:$0xf] %vm106, %v105
    %s109 = scalar_lea.vmem [#allocation0], 960
    %110 = vst.msk [vmem:[%s109] ss:$8 sm:$0xf0] %vm106, %v105
    %v111 = vld [vmem:[%s0] sm:$0xff]
    %112 = vrot.lane.b32.xlu0 %v111, 112
    %v113 = vpop.permute.xlu0 %112
    %vm114 = vcmask 130048
    %s115 = scalar_lea.vmem [#allocation0], 1
    %116 = vst.msk [vmem:[%s115] ss:$8 sm:$0xf] %vm114, %v113
    %s117 = scalar_lea.vmem [#allocation0], 1
    %118 = vst.msk [vmem:[%s117] ss:$8 sm:$0xf0] %vm114, %v113
    %s119 = scalar_lea.vmem %s0, 8
    %v120 = vld [vmem:[%s119] sm:$0xff]
    %121 = vrot.lane.b32.xlu0 %v120, 112
    %v122 = vpop.permute.xlu0 %121
    %vm123 = vcmask 130048
    %s124 = scalar_lea.vmem [#allocation0], 65
    %125 = vst.msk [vmem:[%s124] ss:$8 sm:$0xf] %vm123, %v122
    %s126 = scalar_lea.vmem [#allocation0], 65
    %127 = vst.msk [vmem:[%s126] ss:$8 sm:$0xf0] %vm123, %v122
    %s128 = scalar_lea.vmem %s0, 16
    %v129 = vld [vmem:[%s128] sm:$0xff]
    %130 = vrot.lane.b32.xlu0 %v129, 112
    %v131 = vpop.permute.xlu0 %130
    %vm132 = vcmask 130048
    %s133 = scalar_lea.vmem [#allocation0], 129
    %134 = vst.msk [vmem:[%s133] ss:$8 sm:$0xf] %vm132, %v131
    %s135 = scalar_lea.vmem [#allocation0], 129
    %136 = vst.msk [vmem:[%s135] ss:$8 sm:$0xf0] %vm132, %v131
    %s137 = scalar_lea.vmem %s0, 24
    %v138 = vld [vmem:[%s137] sm:$0xff]
    %139 = vrot.lane.b32.xlu0 %v138, 112
    %v140 = vpop.permute.xlu0 %139
    %vm141 = vcmask 130048
    %s142 = scalar_lea.vmem [#allocation0], 193
    %143 = vst.msk [vmem:[%s142] ss:$8 sm:$0xf] %vm141, %v140
    %s144 = scalar_lea.vmem [#allocation0], 193
    %145 = vst.msk [vmem:[%s144] ss:$8 sm:$0xf0] %vm141, %v140
    %s146 = scalar_lea.vmem %s0, 32
    %v147 = vld [vmem:[%s146] sm:$0xff]
    %148 = vrot.lane.b32.xlu0 %v147, 112
    %v149 = vpop.permute.xlu0 %148
    %vm150 = vcmask 130048
    %s151 = scalar_lea.vmem [#allocation0], 257
    %152 = vst.msk [vmem:[%s151] ss:$8 sm:$0xf] %vm150, %v149
    %s153 = scalar_lea.vmem [#allocation0], 257
    %154 = vst.msk [vmem:[%s153] ss:$8 sm:$0xf0] %vm150, %v149
    %s155 = scalar_lea.vmem %s0, 40
    %v156 = vld [vmem:[%s155] sm:$0xff]
    %157 = vrot.lane.b32.xlu0 %v156, 112
    %v158 = vpop.permute.xlu0 %157
    %vm159 = vcmask 130048
    %s160 = scalar_lea.vmem [#allocation0], 321
    %161 = vst.msk [vmem:[%s160] ss:$8 sm:$0xf] %vm159, %v158
    %s162 = scalar_lea.vmem [#allocation0], 321
    %163 = vst.msk [vmem:[%s162] ss:$8 sm:$0xf0] %vm159, %v158
    %s164 = scalar_lea.vmem %s0, 48
    %v165 = vld [vmem:[%s164] sm:$0xff]
    %166 = vrot.lane.b32.xlu0 %v165, 112
    %v167 = vpop.permute.xlu0 %166
    %vm168 = vcmask 130048
    %s169 = scalar_lea.vmem [#allocation0], 385
    %170 = vst.msk [vmem:[%s169] ss:$8 sm:$0xf] %vm168, %v167
    %s171 = scalar_lea.vmem [#allocation0], 385
    %172 = vst.msk [vmem:[%s171] ss:$8 sm:$0xf0] %vm168, %v167
    %s173 = scalar_lea.vmem %s0, 56
    %v174 = vld [vmem:[%s173] sm:$0xff]
    %175 = vrot.lane.b32.xlu0 %v174, 112
    %v176 = vpop.permute.xlu0 %175
    %vm177 = vcmask 130048
    %s178 = scalar_lea.vmem [#allocation0], 449
    %179 = vst.msk [vmem:[%s178] ss:$8 sm:$0xf] %vm177, %v176
    %s180 = scalar_lea.vmem [#allocation0], 449
    %181 = vst.msk [vmem:[%s180] ss:$8 sm:$0xf0] %vm177, %v176
    %s182 = scalar_lea.vmem %s0, 64
    %v183 = vld [vmem:[%s182] sm:$0xff]
    %184 = vrot.lane.b32.xlu0 %v183, 112
    %v185 = vpop.permute.xlu0 %184
    %vm186 = vcmask 130048
    %s187 = scalar_lea.vmem [#allocation0], 513
    %188 = vst.msk [vmem:[%s187] ss:$8 sm:$0xf] %vm186, %v185
    %s189 = scalar_lea.vmem [#allocation0], 513
    %190 = vst.msk [vmem:[%s189] ss:$8 sm:$0xf0] %vm186, %v185
    %s191 = scalar_lea.vmem %s0, 72
    %v192 = vld [vmem:[%s191] sm:$0xff]
    %193 = vrot.lane.b32.xlu0 %v192, 112
    %v194 = vpop.permute.xlu0 %193
    %vm195 = vcmask 130048
    %s196 = scalar_lea.vmem [#allocation0], 577
    %197 = vst.msk [vmem:[%s196] ss:$8 sm:$0xf] %vm195, %v194
    %s198 = scalar_lea.vmem [#allocation0], 577
    %199 = vst.msk [vmem:[%s198] ss:$8 sm:$0xf0] %vm195, %v194
    %s200 = scalar_lea.vmem %s0, 80
    %v201 = vld [vmem:[%s200] sm:$0xff]
    %202 = vrot.lane.b32.xlu0 %v201, 112
    %v203 = vpop.permute.xlu0 %202
    %vm204 = vcmask 130048
    %s205 = scalar_lea.vmem [#allocation0], 641
    %206 = vst.msk [vmem:[%s205] ss:$8 sm:$0xf] %vm204, %v203
    %s207 = scalar_lea.vmem [#allocation0], 641
    %208 = vst.msk [vmem:[%s207] ss:$8 sm:$0xf0] %vm204, %v203
    %s209 = scalar_lea.vmem %s0, 88
    %v210 = vld [vmem:[%s209] sm:$0xff]
    %211 = vrot.lane.b32.xlu0 %v210, 112
    %v212 = vpop.permute.xlu0 %211
    %vm213 = vcmask 130048
    %s214 = scalar_lea.vmem [#allocation0], 705
    %215 = vst.msk [vmem:[%s214] ss:$8 sm:$0xf] %vm213, %v212
    %s216 = scalar_lea.vmem [#allocation0], 705
    %217 = vst.msk [vmem:[%s216] ss:$8 sm:$0xf0] %vm213, %v212
    %s218 = scalar_lea.vmem %s0, 96
    %v219 = vld [vmem:[%s218] sm:$0xff]
    %220 = vrot.lane.b32.xlu0 %v219, 112
    %v221 = vpop.permute.xlu0 %220
    %vm222 = vcmask 130048
    %s223 = scalar_lea.vmem [#allocation0], 769
    %224 = vst.msk [vmem:[%s223] ss:$8 sm:$0xf] %vm222, %v221
    %s225 = scalar_lea.vmem [#allocation0], 769
    %226 = vst.msk [vmem:[%s225] ss:$8 sm:$0xf0] %vm222, %v221
    %s227 = scalar_lea.vmem %s0, 104
    %v228 = vld [vmem:[%s227] sm:$0xff]
    %229 = vrot.lane.b32.xlu0 %v228, 112
    %v230 = vpop.permute.xlu0 %229
    %vm231 = vcmask 130048
    %s232 = scalar_lea.vmem [#allocation0], 833
    %233 = vst.msk [vmem:[%s232] ss:$8 sm:$0xf] %vm231, %v230
    %s234 = scalar_lea.vmem [#allocation0], 833
    %235 = vst.msk [vmem:[%s234] ss:$8 sm:$0xf0] %vm231, %v230
    %s236 = scalar_lea.vmem %s0, 112
    %v237 = vld [vmem:[%s236] sm:$0xff]
    %238 = vrot.lane.b32.xlu0 %v237, 112
    %v239 = vpop.permute.xlu0 %238
    %vm240 = vcmask 130048
    %s241 = scalar_lea.vmem [#allocation0], 897
    %242 = vst.msk [vmem:[%s241] ss:$8 sm:$0xf] %vm240, %v239
    %s243 = scalar_lea.vmem [#allocation0], 897
    %244 = vst.msk [vmem:[%s243] ss:$8 sm:$0xf0] %vm240, %v239
    %s245 = scalar_lea.vmem %s0, 120
    %v246 = vld [vmem:[%s245] sm:$0xff]
    %247 = vrot.lane.b32.xlu0 %v246, 112
    %v248 = vpop.permute.xlu0 %247
    %vm249 = vcmask 130048
    %s250 = scalar_lea.vmem [#allocation0], 961
    %251 = vst.msk [vmem:[%s250] ss:$8 sm:$0xf] %vm249, %v248
    %s252 = scalar_lea.vmem [#allocation0], 961
    %253 = vst.msk [vmem:[%s252] ss:$8 sm:$0xf0] %vm249, %v248
    %s255 = sshll.u32 1, 2
    %s256 = ssub.s32 %s255, 1
    %v258 = vld [vmem:[#allocation0] sm:%s256]
    %s259 = sshll.u32 1, 2
    %s260 = ssub.s32 %s259, 1
    %261 = vst [vmem:[%s1] sm:%s260] %v258
    %s262 = scalar_lea.vmem [#allocation0], 8
    %v263 = vld [vmem:[%s262] sm:%s256]
    %s264 = sshll.u32 1, 2
    %s265 = ssub.s32 %s264, 1
    %s266 = scalar_lea.vmem %s1, 2
    %267 = vst [vmem:[%s266] sm:%s265] %v263
    %s268 = scalar_lea.vmem [#allocation0], 16
    %v269 = vld [vmem:[%s268] sm:%s256]
    %s270 = sshll.u32 1, 2
    %s271 = ssub.s32 %s270, 1
    %s272 = smul.addr 2, 2
    %s273 = scalar_lea.vmem %s1, %s272
    %274 = vst [vmem:[%s273] sm:%s271] %v269
    %s275 = scalar_lea.vmem [#allocation0], 24
    %v276 = vld [vmem:[%s275] sm:%s256]
    %s277 = sshll.u32 1, 2
    %s278 = ssub.s32 %s277, 1
    %s279 = smul.addr 2, 3
    %s280 = scalar_lea.vmem %s1, %s279
    %281 = vst [vmem:[%s280] sm:%s278] %v276
    %s282 = scalar_lea.vmem [#allocation0], 32
    %v283 = vld [vmem:[%s282] sm:%s256]
    %s284 = sshll.u32 1, 2
    %s285 = ssub.s32 %s284, 1
    %s286 = smul.addr 2, 4
    %s287 = scalar_lea.vmem %s1, %s286
    %288 = vst [vmem:[%s287] sm:%s285] %v283
    %s289 = scalar_lea.vmem [#allocation0], 40
    %v290 = vld [vmem:[%s289] sm:%s256]
    %s291 = sshll.u32 1, 2
    %s292 = ssub.s32 %s291, 1
    %s293 = smul.addr 2, 5
    %s294 = scalar_lea.vmem %s1, %s293
    %295 = vst [vmem:[%s294] sm:%s292] %v290
    %s296 = scalar_lea.vmem [#allocation0], 48
    %v297 = vld [vmem:[%s296] sm:%s256]
    %s298 = sshll.u32 1, 2
    %s299 = ssub.s32 %s298, 1
    %s300 = smul.addr 2, 6
    %s301 = scalar_lea.vmem %s1, %s300
    %302 = vst [vmem:[%s301] sm:%s299] %v297
    %s303 = scalar_lea.vmem [#allocation0], 56
    %v304 = vld [vmem:[%s303] sm:%s256]
    %s305 = sshll.u32 1, 2
    %s306 = ssub.s32 %s305, 1
    %s307 = smul.addr 2, 7
    %s308 = scalar_lea.vmem %s1, %s307
    %309 = vst [vmem:[%s308] sm:%s306] %v304
    %s310 = scalar_lea.vmem [#allocation0], 64
    %v311 = vld [vmem:[%s310] sm:%s256]
    %s312 = sshll.u32 1, 2
    %s313 = ssub.s32 %s312, 1
    %s314 = smul.addr 2, 8
    %s315 = scalar_lea.vmem %s1, %s314
    %316 = vst [vmem:[%s315] sm:%s313] %v311
    %s317 = scalar_lea.vmem [#allocation0], 72
    %v318 = vld [vmem:[%s317] sm:%s256]
    %s319 = sshll.u32 1, 2
    %s320 = ssub.s32 %s319, 1
    %s321 = smul.addr 2, 9
    %s322 = scalar_lea.vmem %s1, %s321
    %323 = vst [vmem:[%s322] sm:%s320] %v318
    %s324 = scalar_lea.vmem [#allocation0], 80
    %v325 = vld [vmem:[%s324] sm:%s256]
    %s326 = sshll.u32 1, 2
    %s327 = ssub.s32 %s326, 1
    %s328 = smul.addr 2, 10
    %s329 = scalar_lea.vmem %s1, %s328
    %330 = vst [vmem:[%s329] sm:%s327] %v325
    %s331 = scalar_lea.vmem [#allocation0], 88
    %v332 = vld [vmem:[%s331] sm:%s256]
    %s333 = sshll.u32 1, 2
    %s334 = ssub.s32 %s333, 1
    %s335 = smul.addr 2, 11
    %s336 = scalar_lea.vmem %s1, %s335
    %337 = vst [vmem:[%s336] sm:%s334] %v332
    %s338 = scalar_lea.vmem [#allocation0], 96
    %v339 = vld [vmem:[%s338] sm:%s256]
    %s340 = sshll.u32 1, 2
    %s341 = ssub.s32 %s340, 1
    %s342 = smul.addr 2, 12
    %s343 = scalar_lea.vmem %s1, %s342
    %344 = vst [vmem:[%s343] sm:%s341] %v339
    %s345 = scalar_lea.vmem [#allocation0], 104
    %v346 = vld [vmem:[%s345] sm:%s256]
    %s347 = sshll.u32 1, 2
    %s348 = ssub.s32 %s347, 1
    %s349 = smul.addr 2, 13
    %s350 = scalar_lea.vmem %s1, %s349
    %351 = vst [vmem:[%s350] sm:%s348] %v346
    %s352 = scalar_lea.vmem [#allocation0], 112
    %v353 = vld [vmem:[%s352] sm:%s256]
    %s354 = sshll.u32 1, 2
    %s355 = ssub.s32 %s354, 1
    %s356 = smul.addr 2, 14
    %s357 = scalar_lea.vmem %s1, %s356
    %358 = vst [vmem:[%s357] sm:%s355] %v353
    %s359 = scalar_lea.vmem [#allocation0], 120
    %v360 = vld [vmem:[%s359] sm:%s256]
    %s361 = sshll.u32 1, 2
    %s362 = ssub.s32 %s361, 1
    %s363 = smul.addr 2, 15
    %s364 = scalar_lea.vmem %s1, %s363
    %365 = vst [vmem:[%s364] sm:%s362] %v360
    %s366 = scalar_lea.vmem [#allocation0], 128
    %v367 = vld [vmem:[%s366] sm:%s256]
    %s368 = sshll.u32 1, 2
    %s369 = ssub.s32 %s368, 1
    %s370 = smul.addr 2, 16
    %s371 = scalar_lea.vmem %s1, %s370
    %372 = vst [vmem:[%s371] sm:%s369] %v367
    %s373 = scalar_lea.vmem [#allocation0], 136
    %v374 = vld [vmem:[%s373] sm:%s256]
    %s375 = sshll.u32 1, 2
    %s376 = ssub.s32 %s375, 1
    %s377 = smul.addr 2, 17
    %s378 = scalar_lea.vmem %s1, %s377
    %379 = vst [vmem:[%s378] sm:%s376] %v374
    %s380 = scalar_lea.vmem [#allocation0], 144
    %v381 = vld [vmem:[%s380] sm:%s256]
    %s382 = sshll.u32 1, 2
    %s383 = ssub.s32 %s382, 1
    %s384 = smul.addr 2, 18
    %s385 = scalar_lea.vmem %s1, %s384
    %386 = vst [vmem:[%s385] sm:%s383] %v381
    %s387 = scalar_lea.vmem [#allocation0], 152
    %v388 = vld [vmem:[%s387] sm:%s256]
    %s389 = sshll.u32 1, 2
    %s390 = ssub.s32 %s389, 1
    %s391 = smul.addr 2, 19
    %s392 = scalar_lea.vmem %s1, %s391
    %393 = vst [vmem:[%s392] sm:%s390] %v388
    %s394 = scalar_lea.vmem [#allocation0], 160
    %v395 = vld [vmem:[%s394] sm:%s256]
    %s396 = sshll.u32 1, 2
    %s397 = ssub.s32 %s396, 1
    %s398 = smul.addr 2, 20
    %s399 = scalar_lea.vmem %s1, %s398
    %400 = vst [vmem:[%s399] sm:%s397] %v395
    %s401 = scalar_lea.vmem [#allocation0], 168
    %v402 = vld [vmem:[%s401] sm:%s256]
    %s403 = sshll.u32 1, 2
    %s404 = ssub.s32 %s403, 1
    %s405 = smul.addr 2, 21
    %s406 = scalar_lea.vmem %s1, %s405
    %407 = vst [vmem:[%s406] sm:%s404] %v402
    %s408 = scalar_lea.vmem [#allocation0], 176
    %v409 = vld [vmem:[%s408] sm:%s256]
    %s410 = sshll.u32 1, 2
    %s411 = ssub.s32 %s410, 1
    %s412 = smul.addr 2, 22
    %s413 = scalar_lea.vmem %s1, %s412
    %414 = vst [vmem:[%s413] sm:%s411] %v409
    %s415 = scalar_lea.vmem [#allocation0], 184
    %v416 = vld [vmem:[%s415] sm:%s256]
    %s417 = sshll.u32 1, 2
    %s418 = ssub.s32 %s417, 1
    %s419 = smul.addr 2, 23
    %s420 = scalar_lea.vmem %s1, %s419
    %421 = vst [vmem:[%s420] sm:%s418] %v416
    %s422 = scalar_lea.vmem [#allocation0], 192
    %v423 = vld [vmem:[%s422] sm:%s256]
    %s424 = sshll.u32 1, 2
    %s425 = ssub.s32 %s424, 1
    %s426 = smul.addr 2, 24
    %s427 = scalar_lea.vmem %s1, %s426
    %428 = vst [vmem:[%s427] sm:%s425] %v423
    %s429 = scalar_lea.vmem [#allocation0], 200
    %v430 = vld [vmem:[%s429] sm:%s256]
    %s431 = sshll.u32 1, 2
    %s432 = ssub.s32 %s431, 1
    %s433 = smul.addr 2, 25
    %s434 = scalar_lea.vmem %s1, %s433
    %435 = vst [vmem:[%s434] sm:%s432] %v430
    %s436 = scalar_lea.vmem [#allocation0], 208
    %v437 = vld [vmem:[%s436] sm:%s256]
    %s438 = sshll.u32 1, 2
    %s439 = ssub.s32 %s438, 1
    %s440 = smul.addr 2, 26
    %s441 = scalar_lea.vmem %s1, %s440
    %442 = vst [vmem:[%s441] sm:%s439] %v437
    %s443 = scalar_lea.vmem [#allocation0], 216
    %v444 = vld [vmem:[%s443] sm:%s256]
    %s445 = sshll.u32 1, 2
    %s446 = ssub.s32 %s445, 1
    %s447 = smul.addr 2, 27
    %s448 = scalar_lea.vmem %s1, %s447
    %449 = vst [vmem:[%s448] sm:%s446] %v444
    %s450 = scalar_lea.vmem [#allocation0], 224
    %v451 = vld [vmem:[%s450] sm:%s256]
    %s452 = sshll.u32 1, 2
    %s453 = ssub.s32 %s452, 1
    %s454 = smul.addr 2, 28
    %s455 = scalar_lea.vmem %s1, %s454
    %456 = vst [vmem:[%s455] sm:%s453] %v451
    %s457 = scalar_lea.vmem [#allocation0], 232
    %v458 = vld [vmem:[%s457] sm:%s256]
    %s459 = sshll.u32 1, 2
    %s460 = ssub.s32 %s459, 1
    %s461 = smul.addr 2, 29
    %s462 = scalar_lea.vmem %s1, %s461
    %463 = vst [vmem:[%s462] sm:%s460] %v458
    %s464 = scalar_lea.vmem [#allocation0], 240
    %v465 = vld [vmem:[%s464] sm:%s256]
    %s466 = sshll.u32 1, 2
    %s467 = ssub.s32 %s466, 1
    %s468 = smul.addr 2, 30
    %s469 = scalar_lea.vmem %s1, %s468
    %470 = vst [vmem:[%s469] sm:%s467] %v465
    %s471 = scalar_lea.vmem [#allocation0], 248
    %v472 = vld [vmem:[%s471] sm:%s256]
    %s473 = sshll.u32 1, 2
    %s474 = ssub.s32 %s473, 1
    %s475 = smul.addr 2, 31
    %s476 = scalar_lea.vmem %s1, %s475
    %477 = vst [vmem:[%s476] sm:%s474] %v472
    %s478 = scalar_lea.vmem [#allocation0], 256
    %v479 = vld [vmem:[%s478] sm:%s256]
    %s480 = sshll.u32 1, 2
    %s481 = ssub.s32 %s480, 1
    %s482 = smul.addr 2, 32
    %s483 = scalar_lea.vmem %s1, %s482
    %484 = vst [vmem:[%s483] sm:%s481] %v479
    %s485 = scalar_lea.vmem [#allocation0], 264
    %v486 = vld [vmem:[%s485] sm:%s256]
    %s487 = sshll.u32 1, 2
    %s488 = ssub.s32 %s487, 1
    %s489 = smul.addr 2, 33
    %s490 = scalar_lea.vmem %s1, %s489
    %491 = vst [vmem:[%s490] sm:%s488] %v486
    %s492 = scalar_lea.vmem [#allocation0], 272
    %v493 = vld [vmem:[%s492] sm:%s256]
    %s494 = sshll.u32 1, 2
    %s495 = ssub.s32 %s494, 1
    %s496 = smul.addr 2, 34
    %s497 = scalar_lea.vmem %s1, %s496
    %498 = vst [vmem:[%s497] sm:%s495] %v493
    %s499 = scalar_lea.vmem [#allocation0], 280
    %v500 = vld [vmem:[%s499] sm:%s256]
    %s501 = sshll.u32 1, 2
    %s502 = ssub.s32 %s501, 1
    %s503 = smul.addr 2, 35
    %s504 = scalar_lea.vmem %s1, %s503
    %505 = vst [vmem:[%s504] sm:%s502] %v500
    %s506 = scalar_lea.vmem [#allocation0], 288
    %v507 = vld [vmem:[%s506] sm:%s256]
    %s508 = sshll.u32 1, 2
    %s509 = ssub.s32 %s508, 1
    %s510 = smul.addr 2, 36
    %s511 = scalar_lea.vmem %s1, %s510
    %512 = vst [vmem:[%s511] sm:%s509] %v507
    %s513 = scalar_lea.vmem [#allocation0], 296
    %v514 = vld [vmem:[%s513] sm:%s256]
    %s515 = sshll.u32 1, 2
    %s516 = ssub.s32 %s515, 1
    %s517 = smul.addr 2, 37
    %s518 = scalar_lea.vmem %s1, %s517
    %519 = vst [vmem:[%s518] sm:%s516] %v514
    %s520 = scalar_lea.vmem [#allocation0], 304
    %v521 = vld [vmem:[%s520] sm:%s256]
    %s522 = sshll.u32 1, 2
    %s523 = ssub.s32 %s522, 1
    %s524 = smul.addr 2, 38
    %s525 = scalar_lea.vmem %s1, %s524
    %526 = vst [vmem:[%s525] sm:%s523] %v521
    %s527 = scalar_lea.vmem [#allocation0], 312
    %v528 = vld [vmem:[%s527] sm:%s256]
    %s529 = sshll.u32 1, 2
    %s530 = ssub.s32 %s529, 1
    %s531 = smul.addr 2, 39
    %s532 = scalar_lea.vmem %s1, %s531
    %533 = vst [vmem:[%s532] sm:%s530] %v528
    %s534 = scalar_lea.vmem [#allocation0], 320
    %v535 = vld [vmem:[%s534] sm:%s256]
    %s536 = sshll.u32 1, 2
    %s537 = ssub.s32 %s536, 1
    %s538 = smul.addr 2, 40
    %s539 = scalar_lea.vmem %s1, %s538
    %540 = vst [vmem:[%s539] sm:%s537] %v535
    %s541 = scalar_lea.vmem [#allocation0], 328
    %v542 = vld [vmem:[%s541] sm:%s256]
    %s543 = sshll.u32 1, 2
    %s544 = ssub.s32 %s543, 1
    %s545 = smul.addr 2, 41
    %s546 = scalar_lea.vmem %s1, %s545
    %547 = vst [vmem:[%s546] sm:%s544] %v542
    %s548 = scalar_lea.vmem [#allocation0], 336
    %v549 = vld [vmem:[%s548] sm:%s256]
    %s550 = sshll.u32 1, 2
    %s551 = ssub.s32 %s550, 1
    %s552 = smul.addr 2, 42
    %s553 = scalar_lea.vmem %s1, %s552
    %554 = vst [vmem:[%s553] sm:%s551] %v549
    %s555 = scalar_lea.vmem [#allocation0], 344
    %v556 = vld [vmem:[%s555] sm:%s256]
    %s557 = sshll.u32 1, 2
    %s558 = ssub.s32 %s557, 1
    %s559 = smul.addr 2, 43
    %s560 = scalar_lea.vmem %s1, %s559
    %561 = vst [vmem:[%s560] sm:%s558] %v556
    %s562 = scalar_lea.vmem [#allocation0], 352
    %v563 = vld [vmem:[%s562] sm:%s256]
    %s564 = sshll.u32 1, 2
    %s565 = ssub.s32 %s564, 1
    %s566 = smul.addr 2, 44
    %s567 = scalar_lea.vmem %s1, %s566
    %568 = vst [vmem:[%s567] sm:%s565] %v563
    %s569 = scalar_lea.vmem [#allocation0], 360
    %v570 = vld [vmem:[%s569] sm:%s256]
    %s571 = sshll.u32 1, 2
    %s572 = ssub.s32 %s571, 1
    %s573 = smul.addr 2, 45
    %s574 = scalar_lea.vmem %s1, %s573
    %575 = vst [vmem:[%s574] sm:%s572] %v570
    %s576 = scalar_lea.vmem [#allocation0], 368
    %v577 = vld [vmem:[%s576] sm:%s256]
    %s578 = sshll.u32 1, 2
    %s579 = ssub.s32 %s578, 1
    %s580 = smul.addr 2, 46
    %s581 = scalar_lea.vmem %s1, %s580
    %582 = vst [vmem:[%s581] sm:%s579] %v577
    %s583 = scalar_lea.vmem [#allocation0], 376
    %v584 = vld [vmem:[%s583] sm:%s256]
    %s585 = sshll.u32 1, 2
    %s586 = ssub.s32 %s585, 1
    %s587 = smul.addr 2, 47
    %s588 = scalar_lea.vmem %s1, %s587
    %589 = vst [vmem:[%s588] sm:%s586] %v584
    %s590 = scalar_lea.vmem [#allocation0], 384
    %v591 = vld [vmem:[%s590] sm:%s256]
    %s592 = sshll.u32 1, 2
    %s593 = ssub.s32 %s592, 1
    %s594 = smul.addr 2, 48
    %s595 = scalar_lea.vmem %s1, %s594
    %596 = vst [vmem:[%s595] sm:%s593] %v591
    %s597 = scalar_lea.vmem [#allocation0], 392
    %v598 = vld [vmem:[%s597] sm:%s256]
    %s599 = sshll.u32 1, 2
    %s600 = ssub.s32 %s599, 1
    %s601 = smul.addr 2, 49
    %s602 = scalar_lea.vmem %s1, %s601
    %603 = vst [vmem:[%s602] sm:%s600] %v598
    %s604 = scalar_lea.vmem [#allocation0], 400
    %v605 = vld [vmem:[%s604] sm:%s256]
    %s606 = sshll.u32 1, 2
    %s607 = ssub.s32 %s606, 1
    %s608 = smul.addr 2, 50
    %s609 = scalar_lea.vmem %s1, %s608
    %610 = vst [vmem:[%s609] sm:%s607] %v605
    %s611 = scalar_lea.vmem [#allocation0], 408
    %v612 = vld [vmem:[%s611] sm:%s256]
    %s613 = sshll.u32 1, 2
    %s614 = ssub.s32 %s613, 1
    %s615 = smul.addr 2, 51
    %s616 = scalar_lea.vmem %s1, %s615
    %617 = vst [vmem:[%s616] sm:%s614] %v612
    %s618 = scalar_lea.vmem [#allocation0], 416
    %v619 = vld [vmem:[%s618] sm:%s256]
    %s620 = sshll.u32 1, 2
    %s621 = ssub.s32 %s620, 1
    %s622 = smul.addr 2, 52
    %s623 = scalar_lea.vmem %s1, %s622
    %624 = vst [vmem:[%s623] sm:%s621] %v619
    %s625 = scalar_lea.vmem [#allocation0], 424
    %v626 = vld [vmem:[%s625] sm:%s256]
    %s627 = sshll.u32 1, 2
    %s628 = ssub.s32 %s627, 1
    %s629 = smul.addr 2, 53
    %s630 = scalar_lea.vmem %s1, %s629
    %631 = vst [vmem:[%s630] sm:%s628] %v626
    %s632 = scalar_lea.vmem [#allocation0], 432
    %v633 = vld [vmem:[%s632] sm:%s256]
    %s634 = sshll.u32 1, 2
    %s635 = ssub.s32 %s634, 1
    %s636 = smul.addr 2, 54
    %s637 = scalar_lea.vmem %s1, %s636
    %638 = vst [vmem:[%s637] sm:%s635] %v633
    %s639 = scalar_lea.vmem [#allocation0], 440
    %v640 = vld [vmem:[%s639] sm:%s256]
    %s641 = sshll.u32 1, 2
    %s642 = ssub.s32 %s641, 1
    %s643 = smul.addr 2, 55
    %s644 = scalar_lea.vmem %s1, %s643
    %645 = vst [vmem:[%s644] sm:%s642] %v640
    %s646 = scalar_lea.vmem [#allocation0], 448
    %v647 = vld [vmem:[%s646] sm:%s256]
    %s648 = sshll.u32 1, 2
    %s649 = ssub.s32 %s648, 1
    %s650 = smul.addr 2, 56
    %s651 = scalar_lea.vmem %s1, %s650
    %652 = vst [vmem:[%s651] sm:%s649] %v647
    %s653 = scalar_lea.vmem [#allocation0], 456
    %v654 = vld [vmem:[%s653] sm:%s256]
    %s655 = sshll.u32 1, 2
    %s656 = ssub.s32 %s655, 1
    %s657 = smul.addr 2, 57
    %s658 = scalar_lea.vmem %s1, %s657
    %659 = vst [vmem:[%s658] sm:%s656] %v654
    %s660 = scalar_lea.vmem [#allocation0], 464
    %v661 = vld [vmem:[%s660] sm:%s256]
    %s662 = sshll.u32 1, 2
    %s663 = ssub.s32 %s662, 1
    %s664 = smul.addr 2, 58
    %s665 = scalar_lea.vmem %s1, %s664
    %666 = vst [vmem:[%s665] sm:%s663] %v661
    %s667 = scalar_lea.vmem [#allocation0], 472
    %v668 = vld [vmem:[%s667] sm:%s256]
    %s669 = sshll.u32 1, 2
    %s670 = ssub.s32 %s669, 1
    %s671 = smul.addr 2, 59
    %s672 = scalar_lea.vmem %s1, %s671
    %673 = vst [vmem:[%s672] sm:%s670] %v668
    %s674 = scalar_lea.vmem [#allocation0], 480
    %v675 = vld [vmem:[%s674] sm:%s256]
    %s676 = sshll.u32 1, 2
    %s677 = ssub.s32 %s676, 1
    %s678 = smul.addr 2, 60
    %s679 = scalar_lea.vmem %s1, %s678
    %680 = vst [vmem:[%s679] sm:%s677] %v675
    %s681 = scalar_lea.vmem [#allocation0], 488
    %v682 = vld [vmem:[%s681] sm:%s256]
    %s683 = sshll.u32 1, 2
    %s684 = ssub.s32 %s683, 1
    %s685 = smul.addr 2, 61
    %s686 = scalar_lea.vmem %s1, %s685
    %687 = vst [vmem:[%s686] sm:%s684] %v682
    %s688 = scalar_lea.vmem [#allocation0], 496
    %v689 = vld [vmem:[%s688] sm:%s256]
    %s690 = sshll.u32 1, 2
    %s691 = ssub.s32 %s690, 1
    %s692 = smul.addr 2, 62
    %s693 = scalar_lea.vmem %s1, %s692
    %694 = vst [vmem:[%s693] sm:%s691] %v689
    %s695 = scalar_lea.vmem [#allocation0], 504
    %v696 = vld [vmem:[%s695] sm:%s256]
    %s697 = sshll.u32 1, 2
    %s698 = ssub.s32 %s697, 1
    %s699 = smul.addr 2, 63
    %s700 = scalar_lea.vmem %s1, %s699
    %701 = vst [vmem:[%s700] sm:%s698] %v696
    %s702 = scalar_lea.vmem [#allocation0], 512
    %v703 = vld [vmem:[%s702] sm:%s256]
    %s704 = sshll.u32 1, 2
    %s705 = ssub.s32 %s704, 1
    %s706 = smul.addr 2, 64
    %s707 = scalar_lea.vmem %s1, %s706
    %708 = vst [vmem:[%s707] sm:%s705] %v703
    %s709 = scalar_lea.vmem [#allocation0], 520
    %v710 = vld [vmem:[%s709] sm:%s256]
    %s711 = sshll.u32 1, 2
    %s712 = ssub.s32 %s711, 1
    %s713 = smul.addr 2, 65
    %s714 = scalar_lea.vmem %s1, %s713
    %715 = vst [vmem:[%s714] sm:%s712] %v710
    %s716 = scalar_lea.vmem [#allocation0], 528
    %v717 = vld [vmem:[%s716] sm:%s256]
    %s718 = sshll.u32 1, 2
    %s719 = ssub.s32 %s718, 1
    %s720 = smul.addr 2, 66
    %s721 = scalar_lea.vmem %s1, %s720
    %722 = vst [vmem:[%s721] sm:%s719] %v717
    %s723 = scalar_lea.vmem [#allocation0], 536
    %v724 = vld [vmem:[%s723] sm:%s256]
    %s725 = sshll.u32 1, 2
    %s726 = ssub.s32 %s725, 1
    %s727 = smul.addr 2, 67
    %s728 = scalar_lea.vmem %s1, %s727
    %729 = vst [vmem:[%s728] sm:%s726] %v724
    %s730 = scalar_lea.vmem [#allocation0], 544
    %v731 = vld [vmem:[%s730] sm:%s256]
    %s732 = sshll.u32 1, 2
    %s733 = ssub.s32 %s732, 1
    %s734 = smul.addr 2, 68
    %s735 = scalar_lea.vmem %s1, %s734
    %736 = vst [vmem:[%s735] sm:%s733] %v731
    %s737 = scalar_lea.vmem [#allocation0], 552
    %v738 = vld [vmem:[%s737] sm:%s256]
    %s739 = sshll.u32 1, 2
    %s740 = ssub.s32 %s739, 1
    %s741 = smul.addr 2, 69
    %s742 = scalar_lea.vmem %s1, %s741
    %743 = vst [vmem:[%s742] sm:%s740] %v738
    %s744 = scalar_lea.vmem [#allocation0], 560
    %v745 = vld [vmem:[%s744] sm:%s256]
    %s746 = sshll.u32 1, 2
    %s747 = ssub.s32 %s746, 1
    %s748 = smul.addr 2, 70
    %s749 = scalar_lea.vmem %s1, %s748
    %750 = vst [vmem:[%s749] sm:%s747] %v745
    %s751 = scalar_lea.vmem [#allocation0], 568
    %v752 = vld [vmem:[%s751] sm:%s256]
    %s753 = sshll.u32 1, 2
    %s754 = ssub.s32 %s753, 1
    %s755 = smul.addr 2, 71
    %s756 = scalar_lea.vmem %s1, %s755
    %757 = vst [vmem:[%s756] sm:%s754] %v752
    %s758 = scalar_lea.vmem [#allocation0], 576
    %v759 = vld [vmem:[%s758] sm:%s256]
    %s760 = sshll.u32 1, 2
    %s761 = ssub.s32 %s760, 1
    %s762 = smul.addr 2, 72
    %s763 = scalar_lea.vmem %s1, %s762
    %764 = vst [vmem:[%s763] sm:%s761] %v759
    %s765 = scalar_lea.vmem [#allocation0], 584
    %v766 = vld [vmem:[%s765] sm:%s256]
    %s767 = sshll.u32 1, 2
    %s768 = ssub.s32 %s767, 1
    %s769 = smul.addr 2, 73
    %s770 = scalar_lea.vmem %s1, %s769
    %771 = vst [vmem:[%s770] sm:%s768] %v766
    %s772 = scalar_lea.vmem [#allocation0], 592
    %v773 = vld [vmem:[%s772] sm:%s256]
    %s774 = sshll.u32 1, 2
    %s775 = ssub.s32 %s774, 1
    %s776 = smul.addr 2, 74
    %s777 = scalar_lea.vmem %s1, %s776
    %778 = vst [vmem:[%s777] sm:%s775] %v773
    %s779 = scalar_lea.vmem [#allocation0], 600
    %v780 = vld [vmem:[%s779] sm:%s256]
    %s781 = sshll.u32 1, 2
    %s782 = ssub.s32 %s781, 1
    %s783 = smul.addr 2, 75
    %s784 = scalar_lea.vmem %s1, %s783
    %785 = vst [vmem:[%s784] sm:%s782] %v780
    %s786 = scalar_lea.vmem [#allocation0], 608
    %v787 = vld [vmem:[%s786] sm:%s256]
    %s788 = sshll.u32 1, 2
    %s789 = ssub.s32 %s788, 1
    %s790 = smul.addr 2, 76
    %s791 = scalar_lea.vmem %s1, %s790
    %792 = vst [vmem:[%s791] sm:%s789] %v787
    %s793 = scalar_lea.vmem [#allocation0], 616
    %v794 = vld [vmem:[%s793] sm:%s256]
    %s795 = sshll.u32 1, 2
    %s796 = ssub.s32 %s795, 1
    %s797 = smul.addr 2, 77
    %s798 = scalar_lea.vmem %s1, %s797
    %799 = vst [vmem:[%s798] sm:%s796] %v794
    %s800 = scalar_lea.vmem [#allocation0], 624
    %v801 = vld [vmem:[%s800] sm:%s256]
    %s802 = sshll.u32 1, 2
    %s803 = ssub.s32 %s802, 1
    %s804 = smul.addr 2, 78
    %s805 = scalar_lea.vmem %s1, %s804
    %806 = vst [vmem:[%s805] sm:%s803] %v801
    %s807 = scalar_lea.vmem [#allocation0], 632
    %v808 = vld [vmem:[%s807] sm:%s256]
    %s809 = sshll.u32 1, 2
    %s810 = ssub.s32 %s809, 1
    %s811 = smul.addr 2, 79
    %s812 = scalar_lea.vmem %s1, %s811
    %813 = vst [vmem:[%s812] sm:%s810] %v808
    %s814 = scalar_lea.vmem [#allocation0], 640
    %v815 = vld [vmem:[%s814] sm:%s256]
    %s816 = sshll.u32 1, 2
    %s817 = ssub.s32 %s816, 1
    %s818 = smul.addr 2, 80
    %s819 = scalar_lea.vmem %s1, %s818
    %820 = vst [vmem:[%s819] sm:%s817] %v815
    %s821 = scalar_lea.vmem [#allocation0], 648
    %v822 = vld [vmem:[%s821] sm:%s256]
    %s823 = sshll.u32 1, 2
    %s824 = ssub.s32 %s823, 1
    %s825 = smul.addr 2, 81
    %s826 = scalar_lea.vmem %s1, %s825
    %827 = vst [vmem:[%s826] sm:%s824] %v822
    %s828 = scalar_lea.vmem [#allocation0], 656
    %v829 = vld [vmem:[%s828] sm:%s256]
    %s830 = sshll.u32 1, 2
    %s831 = ssub.s32 %s830, 1
    %s832 = smul.addr 2, 82
    %s833 = scalar_lea.vmem %s1, %s832
    %834 = vst [vmem:[%s833] sm:%s831] %v829
    %s835 = scalar_lea.vmem [#allocation0], 664
    %v836 = vld [vmem:[%s835] sm:%s256]
    %s837 = sshll.u32 1, 2
    %s838 = ssub.s32 %s837, 1
    %s839 = smul.addr 2, 83
    %s840 = scalar_lea.vmem %s1, %s839
    %841 = vst [vmem:[%s840] sm:%s838] %v836
    %s842 = scalar_lea.vmem [#allocation0], 672
    %v843 = vld [vmem:[%s842] sm:%s256]
    %s844 = sshll.u32 1, 2
    %s845 = ssub.s32 %s844, 1
    %s846 = smul.addr 2, 84
    %s847 = scalar_lea.vmem %s1, %s846
    %848 = vst [vmem:[%s847] sm:%s845] %v843
    %s849 = scalar_lea.vmem [#allocation0], 680
    %v850 = vld [vmem:[%s849] sm:%s256]
    %s851 = sshll.u32 1, 2
    %s852 = ssub.s32 %s851, 1
    %s853 = smul.addr 2, 85
    %s854 = scalar_lea.vmem %s1, %s853
    %855 = vst [vmem:[%s854] sm:%s852] %v850
    %s856 = scalar_lea.vmem [#allocation0], 688
    %v857 = vld [vmem:[%s856] sm:%s256]
    %s858 = sshll.u32 1, 2
    %s859 = ssub.s32 %s858, 1
    %s860 = smul.addr 2, 86
    %s861 = scalar_lea.vmem %s1, %s860
    %862 = vst [vmem:[%s861] sm:%s859] %v857
    %s863 = scalar_lea.vmem [#allocation0], 696
    %v864 = vld [vmem:[%s863] sm:%s256]
    %s865 = sshll.u32 1, 2
    %s866 = ssub.s32 %s865, 1
    %s867 = smul.addr 2, 87
    %s868 = scalar_lea.vmem %s1, %s867
    %869 = vst [vmem:[%s868] sm:%s866] %v864
    %s870 = scalar_lea.vmem [#allocation0], 704
    %v871 = vld [vmem:[%s870] sm:%s256]
    %s872 = sshll.u32 1, 2
    %s873 = ssub.s32 %s872, 1
    %s874 = smul.addr 2, 88
    %s875 = scalar_lea.vmem %s1, %s874
    %876 = vst [vmem:[%s875] sm:%s873] %v871
    %s877 = scalar_lea.vmem [#allocation0], 712
    %v878 = vld [vmem:[%s877] sm:%s256]
    %s879 = sshll.u32 1, 2
    %s880 = ssub.s32 %s879, 1
    %s881 = smul.addr 2, 89
    %s882 = scalar_lea.vmem %s1, %s881
    %883 = vst [vmem:[%s882] sm:%s880] %v878
    %s884 = scalar_lea.vmem [#allocation0], 720
    %v885 = vld [vmem:[%s884] sm:%s256]
    %s886 = sshll.u32 1, 2
    %s887 = ssub.s32 %s886, 1
    %s888 = smul.addr 2, 90
    %s889 = scalar_lea.vmem %s1, %s888
    %890 = vst [vmem:[%s889] sm:%s887] %v885
    %s891 = scalar_lea.vmem [#allocation0], 728
    %v892 = vld [vmem:[%s891] sm:%s256]
    %s893 = sshll.u32 1, 2
    %s894 = ssub.s32 %s893, 1
    %s895 = smul.addr 2, 91
    %s896 = scalar_lea.vmem %s1, %s895
    %897 = vst [vmem:[%s896] sm:%s894] %v892
    %s898 = scalar_lea.vmem [#allocation0], 736
    %v899 = vld [vmem:[%s898] sm:%s256]
    %s900 = sshll.u32 1, 2
    %s901 = ssub.s32 %s900, 1
    %s902 = smul.addr 2, 92
    %s903 = scalar_lea.vmem %s1, %s902
    %904 = vst [vmem:[%s903] sm:%s901] %v899
    %s905 = scalar_lea.vmem [#allocation0], 744
    %v906 = vld [vmem:[%s905] sm:%s256]
    %s907 = sshll.u32 1, 2
    %s908 = ssub.s32 %s907, 1
    %s909 = smul.addr 2, 93
    %s910 = scalar_lea.vmem %s1, %s909
    %911 = vst [vmem:[%s910] sm:%s908] %v906
    %s912 = scalar_lea.vmem [#allocation0], 752
    %v913 = vld [vmem:[%s912] sm:%s256]
    %s914 = sshll.u32 1, 2
    %s915 = ssub.s32 %s914, 1
    %s916 = smul.addr 2, 94
    %s917 = scalar_lea.vmem %s1, %s916
    %918 = vst [vmem:[%s917] sm:%s915] %v913
    %s919 = scalar_lea.vmem [#allocation0], 760
    %v920 = vld [vmem:[%s919] sm:%s256]
    %s921 = sshll.u32 1, 2
    %s922 = ssub.s32 %s921, 1
    %s923 = smul.addr 2, 95
    %s924 = scalar_lea.vmem %s1, %s923
    %925 = vst [vmem:[%s924] sm:%s922] %v920
    %s926 = scalar_lea.vmem [#allocation0], 768
    %v927 = vld [vmem:[%s926] sm:%s256]
    %s928 = sshll.u32 1, 2
    %s929 = ssub.s32 %s928, 1
    %s930 = smul.addr 2, 96
    %s931 = scalar_lea.vmem %s1, %s930
    %932 = vst [vmem:[%s931] sm:%s929] %v927
    %s933 = scalar_lea.vmem [#allocation0], 776
    %v934 = vld [vmem:[%s933] sm:%s256]
    %s935 = sshll.u32 1, 2
    %s936 = ssub.s32 %s935, 1
    %s937 = smul.addr 2, 97
    %s938 = scalar_lea.vmem %s1, %s937
    %939 = vst [vmem:[%s938] sm:%s936] %v934
    %s940 = scalar_lea.vmem [#allocation0], 784
    %v941 = vld [vmem:[%s940] sm:%s256]
    %s942 = sshll.u32 1, 2
    %s943 = ssub.s32 %s942, 1
    %s944 = smul.addr 2, 98
    %s945 = scalar_lea.vmem %s1, %s944
    %946 = vst [vmem:[%s945] sm:%s943] %v941
    %s947 = scalar_lea.vmem [#allocation0], 792
    %v948 = vld [vmem:[%s947] sm:%s256]
    %s949 = sshll.u32 1, 2
    %s950 = ssub.s32 %s949, 1
    %s951 = smul.addr 2, 99
    %s952 = scalar_lea.vmem %s1, %s951
    %953 = vst [vmem:[%s952] sm:%s950] %v948
    %s954 = scalar_lea.vmem [#allocation0], 800
    %v955 = vld [vmem:[%s954] sm:%s256]
    %s956 = sshll.u32 1, 2
    %s957 = ssub.s32 %s956, 1
    %s958 = smul.addr 2, 100
    %s959 = scalar_lea.vmem %s1, %s958
    %960 = vst [vmem:[%s959] sm:%s957] %v955
    %s961 = scalar_lea.vmem [#allocation0], 808
    %v962 = vld [vmem:[%s961] sm:%s256]
    %s963 = sshll.u32 1, 2
    %s964 = ssub.s32 %s963, 1
    %s965 = smul.addr 2, 101
    %s966 = scalar_lea.vmem %s1, %s965
    %967 = vst [vmem:[%s966] sm:%s964] %v962
    %s968 = scalar_lea.vmem [#allocation0], 816
    %v969 = vld [vmem:[%s968] sm:%s256]
    %s970 = sshll.u32 1, 2
    %s971 = ssub.s32 %s970, 1
    %s972 = smul.addr 2, 102
    %s973 = scalar_lea.vmem %s1, %s972
    %974 = vst [vmem:[%s973] sm:%s971] %v969
    %s975 = scalar_lea.vmem [#allocation0], 824
    %v976 = vld [vmem:[%s975] sm:%s256]
    %s977 = sshll.u32 1, 2
    %s978 = ssub.s32 %s977, 1
    %s979 = smul.addr 2, 103
    %s980 = scalar_lea.vmem %s1, %s979
    %981 = vst [vmem:[%s980] sm:%s978] %v976
    %s982 = scalar_lea.vmem [#allocation0], 832
    %v983 = vld [vmem:[%s982] sm:%s256]
    %s984 = sshll.u32 1, 2
    %s985 = ssub.s32 %s984, 1
    %s986 = smul.addr 2, 104
    %s987 = scalar_lea.vmem %s1, %s986
    %988 = vst [vmem:[%s987] sm:%s985] %v983
    %s989 = scalar_lea.vmem [#allocation0], 840
    %v990 = vld [vmem:[%s989] sm:%s256]
    %s991 = sshll.u32 1, 2
    %s992 = ssub.s32 %s991, 1
    %s993 = smul.addr 2, 105
    %s994 = scalar_lea.vmem %s1, %s993
    %995 = vst [vmem:[%s994] sm:%s992] %v990
    %s996 = scalar_lea.vmem [#allocation0], 848
    %v997 = vld [vmem:[%s996] sm:%s256]
    %s998 = sshll.u32 1, 2
    %s999 = ssub.s32 %s998, 1
    %s1000 = smul.addr 2, 106
    %s1001 = scalar_lea.vmem %s1, %s1000
    %1002 = vst [vmem:[%s1001] sm:%s999] %v997
    %s1003 = scalar_lea.vmem [#allocation0], 856
    %v1004 = vld [vmem:[%s1003] sm:%s256]
    %s1005 = sshll.u32 1, 2
    %s1006 = ssub.s32 %s1005, 1
    %s1007 = smul.addr 2, 107
    %s1008 = scalar_lea.vmem %s1, %s1007
    %1009 = vst [vmem:[%s1008] sm:%s1006] %v1004
    %s1010 = scalar_lea.vmem [#allocation0], 864
    %v1011 = vld [vmem:[%s1010] sm:%s256]
    %s1012 = sshll.u32 1, 2
    %s1013 = ssub.s32 %s1012, 1
    %s1014 = smul.addr 2, 108
    %s1015 = scalar_lea.vmem %s1, %s1014
    %1016 = vst [vmem:[%s1015] sm:%s1013] %v1011
    %s1017 = scalar_lea.vmem [#allocation0], 872
    %v1018 = vld [vmem:[%s1017] sm:%s256]
    %s1019 = sshll.u32 1, 2
    %s1020 = ssub.s32 %s1019, 1
    %s1021 = smul.addr 2, 109
    %s1022 = scalar_lea.vmem %s1, %s1021
    %1023 = vst [vmem:[%s1022] sm:%s1020] %v1018
    %s1024 = scalar_lea.vmem [#allocation0], 880
    %v1025 = vld [vmem:[%s1024] sm:%s256]
    %s1026 = sshll.u32 1, 2
    %s1027 = ssub.s32 %s1026, 1
    %s1028 = smul.addr 2, 110
    %s1029 = scalar_lea.vmem %s1, %s1028
    %1030 = vst [vmem:[%s1029] sm:%s1027] %v1025
    %s1031 = scalar_lea.vmem [#allocation0], 888
    %v1032 = vld [vmem:[%s1031] sm:%s256]
    %s1033 = sshll.u32 1, 2
    %s1034 = ssub.s32 %s1033, 1
    %s1035 = smul.addr 2, 111
    %s1036 = scalar_lea.vmem %s1, %s1035
    %1037 = vst [vmem:[%s1036] sm:%s1034] %v1032
    %s1038 = scalar_lea.vmem [#allocation0], 896
    %v1039 = vld [vmem:[%s1038] sm:%s256]
    %s1040 = sshll.u32 1, 2
    %s1041 = ssub.s32 %s1040, 1
    %s1042 = smul.addr 2, 112
    %s1043 = scalar_lea.vmem %s1, %s1042
    %1044 = vst [vmem:[%s1043] sm:%s1041] %v1039
    %s1045 = scalar_lea.vmem [#allocation0], 904
    %v1046 = vld [vmem:[%s1045] sm:%s256]
    %s1047 = sshll.u32 1, 2
    %s1048 = ssub.s32 %s1047, 1
    %s1049 = smul.addr 2, 113
    %s1050 = scalar_lea.vmem %s1, %s1049
    %1051 = vst [vmem:[%s1050] sm:%s1048] %v1046
    %s1052 = scalar_lea.vmem [#allocation0], 912
    %v1053 = vld [vmem:[%s1052] sm:%s256]
    %s1054 = sshll.u32 1, 2
    %s1055 = ssub.s32 %s1054, 1
    %s1056 = smul.addr 2, 114
    %s1057 = scalar_lea.vmem %s1, %s1056
    %1058 = vst [vmem:[%s1057] sm:%s1055] %v1053
    %s1059 = scalar_lea.vmem [#allocation0], 920
    %v1060 = vld [vmem:[%s1059] sm:%s256]
    %s1061 = sshll.u32 1, 2
    %s1062 = ssub.s32 %s1061, 1
    %s1063 = smul.addr 2, 115
    %s1064 = scalar_lea.vmem %s1, %s1063
    %1065 = vst [vmem:[%s1064] sm:%s1062] %v1060
    %s1066 = scalar_lea.vmem [#allocation0], 928
    %v1067 = vld [vmem:[%s1066] sm:%s256]
    %s1068 = sshll.u32 1, 2
    %s1069 = ssub.s32 %s1068, 1
    %s1070 = smul.addr 2, 116
    %s1071 = scalar_lea.vmem %s1, %s1070
    %1072 = vst [vmem:[%s1071] sm:%s1069] %v1067
    %s1073 = scalar_lea.vmem [#allocation0], 936
    %v1074 = vld [vmem:[%s1073] sm:%s256]
    %s1075 = sshll.u32 1, 2
    %s1076 = ssub.s32 %s1075, 1
    %s1077 = smul.addr 2, 117
    %s1078 = scalar_lea.vmem %s1, %s1077
    %1079 = vst [vmem:[%s1078] sm:%s1076] %v1074
    %s1080 = scalar_lea.vmem [#allocation0], 944
    %v1081 = vld [vmem:[%s1080] sm:%s256]
    %s1082 = sshll.u32 1, 2
    %s1083 = ssub.s32 %s1082, 1
    %s1084 = smul.addr 2, 118
    %s1085 = scalar_lea.vmem %s1, %s1084
    %1086 = vst [vmem:[%s1085] sm:%s1083] %v1081
    %s1087 = scalar_lea.vmem [#allocation0], 952
    %v1088 = vld [vmem:[%s1087] sm:%s256]
    %s1089 = sshll.u32 1, 2
    %s1090 = ssub.s32 %s1089, 1
    %s1091 = smul.addr 2, 119
    %s1092 = scalar_lea.vmem %s1, %s1091
    %1093 = vst [vmem:[%s1092] sm:%s1090] %v1088
    %s1094 = scalar_lea.vmem [#allocation0], 960
    %v1095 = vld [vmem:[%s1094] sm:%s256]
    %s1096 = sshll.u32 1, 2
    %s1097 = ssub.s32 %s1096, 1
    %s1098 = smul.addr 2, 120
    %s1099 = scalar_lea.vmem %s1, %s1098
    %1100 = vst [vmem:[%s1099] sm:%s1097] %v1095
    %s1101 = scalar_lea.vmem [#allocation0], 968
    %v1102 = vld [vmem:[%s1101] sm:%s256]
    %s1103 = sshll.u32 1, 2
    %s1104 = ssub.s32 %s1103, 1
    %s1105 = smul.addr 2, 121
    %s1106 = scalar_lea.vmem %s1, %s1105
    %1107 = vst [vmem:[%s1106] sm:%s1104] %v1102
    %s1108 = scalar_lea.vmem [#allocation0], 976
    %v1109 = vld [vmem:[%s1108] sm:%s256]
    %s1110 = sshll.u32 1, 2
    %s1111 = ssub.s32 %s1110, 1
    %s1112 = smul.addr 2, 122
    %s1113 = scalar_lea.vmem %s1, %s1112
    %1114 = vst [vmem:[%s1113] sm:%s1111] %v1109
    %s1115 = scalar_lea.vmem [#allocation0], 984
    %v1116 = vld [vmem:[%s1115] sm:%s256]
    %s1117 = sshll.u32 1, 2
    %s1118 = ssub.s32 %s1117, 1
    %s1119 = smul.addr 2, 123
    %s1120 = scalar_lea.vmem %s1, %s1119
    %1121 = vst [vmem:[%s1120] sm:%s1118] %v1116
    %s1122 = scalar_lea.vmem [#allocation0], 992
    %v1123 = vld [vmem:[%s1122] sm:%s256]
    %s1124 = sshll.u32 1, 2
    %s1125 = ssub.s32 %s1124, 1
    %s1126 = smul.addr 2, 124
    %s1127 = scalar_lea.vmem %s1, %s1126
    %1128 = vst [vmem:[%s1127] sm:%s1125] %v1123
    %s1129 = scalar_lea.vmem [#allocation0], 1000
    %v1130 = vld [vmem:[%s1129] sm:%s256]
    %s1131 = sshll.u32 1, 2
    %s1132 = ssub.s32 %s1131, 1
    %s1133 = smul.addr 2, 125
    %s1134 = scalar_lea.vmem %s1, %s1133
    %1135 = vst [vmem:[%s1134] sm:%s1132] %v1130
    %s1136 = scalar_lea.vmem [#allocation0], 1008
    %v1137 = vld [vmem:[%s1136] sm:%s256]
    %s1138 = sshll.u32 1, 2
    %s1139 = ssub.s32 %s1138, 1
    %s1140 = smul.addr 2, 126
    %s1141 = scalar_lea.vmem %s1, %s1140
    %1142 = vst [vmem:[%s1141] sm:%s1139] %v1137
    %s1143 = scalar_lea.vmem [#allocation0], 1016
    %v1144 = vld [vmem:[%s1143] sm:%s256]
    %s1145 = sshll.u32 1, 2
    %s1146 = ssub.s32 %s1145, 1
    %s1147 = smul.addr 2, 127
    %s1148 = scalar_lea.vmem %s1, %s1147
    %1149 = vst [vmem:[%s1148] sm:%s1146] %v1144

</llo_original>
